<compile_context>
chip_gen: v7x
topology: tpu7x:2x2x1
jax: 0.10.0
libtpu: 0.0.40
codegen_flags: <defaults>
</compile_context>

<pallas_src>
import math
import functools

import jax
import jax.numpy as jnp
from jax.experimental import pallas as pl
from jax.experimental.pallas import tpu as pltpu

# Set False to use exact division in the softmax (bit-accurate validation).
APPROX_SOFTMAX = True


# --------------------------------------------------------------- helpers
def _mish(x):
    sp = jnp.maximum(x, 0.0) + jnp.log(1.0 + jnp.exp(-jnp.abs(x)))
    return x * jnp.tanh(sp)


def sinusoidal_pos_emb(x, dim):
    half = dim // 2
    freq = math.log(10000.0) / (half - 1)
    emb = jnp.exp(jnp.arange(half, dtype=jnp.float32) * -freq)
    emb = x.astype(jnp.float32)[:, None] * emb[None, :]
    return jnp.concatenate([jnp.sin(emb), jnp.cos(emb)], axis=-1)


def _pad_rows(a, n):
    if a.shape[0] == n:
        return a
    return jnp.pad(a, [(0, n - a.shape[0])] + [(0, 0)] * (a.ndim - 1))


def _row_tiling(m, block_m=512, min_blocks=2):
    """Row-tile size: <= block_m, multiple of 8, >=2 grid steps when possible."""
    tm = min(block_m, m)
    if m > 8 and min_blocks > 1:
        tm = min(tm, -(-m // min_blocks))
    tm = -(-tm // 8) * 8
    mpad = -(-m // tm) * tm
    return tm, mpad


def _seq_blocking(n_seq, q_len, kv_len, target_rows=256):
    """Sequences per attention grid step; >=2 steps when possible, 8-aligned rows."""
    bs = max(1, target_rows // max(q_len, 1))
    bs = min(bs, n_seq)
    if n_seq >= 2:
        bs = min(bs, -(-n_seq // 2))
    bs = max(bs, 1)
    n_blocks = -(-n_seq // bs)
    if n_blocks > 1 and ((bs * q_len) % 8 != 0 or (bs * kv_len) % 8 != 0):
        bs, n_blocks = n_seq, 1
    return bs, n_blocks


def _block_diag_mask(n_rows, n_cols, row_len, col_len):
    """mask[r, c] = (r // row_len) == (c // col_len), built from 2-D iota (VPU only)."""
    r = jax.lax.broadcasted_iota(jnp.int32, (n_rows, n_cols), 0).astype(jnp.float32)
    c = jax.lax.broadcasted_iota(jnp.int32, (n_rows, n_cols), 1).astype(jnp.float32)
    rid = jnp.floor((r + 0.5) * (1.0 / row_len))
    cid = jnp.floor((c + 0.5) * (1.0 / col_len))
    return rid == cid


def _parallel():
    return pltpu.CompilerParams(dimension_semantics=("parallel",))


# ----------------------------------------------- fused MLP Pallas kernels
def _mlp2_kernel(x_ref, w1_ref, b1_ref, w2_ref, b2_ref, o_ref):
    h = _mish(jnp.dot(x_ref[...], w1_ref[...], preferred_element_type=jnp.float32)
              + b1_ref[...])
    y = jnp.dot(h, w2_ref[...], preferred_element_type=jnp.float32) + b2_ref[...]
    o_ref[...] = y.astype(o_ref.dtype)


def mlp2(x2d, p, block_m=512):
    m, k = x2d.shape
    kh, n = p["w1"].shape[1], p["w2"].shape[1]
    tm, mpad = _row_tiling(m, block_m)
    out = pl.pallas_call(
        _mlp2_kernel,
        out_shape=jax.ShapeDtypeStruct((mpad, n), jnp.float32),
        grid=(mpad // tm,),
        in_specs=[pl.BlockSpec((tm, k), lambda i: (i, 0)),
                  pl.BlockSpec((k, kh), lambda i: (0, 0)),
                  pl.BlockSpec((1, kh), lambda i: (0, 0)),
                  pl.BlockSpec((kh, n), lambda i: (0, 0)),
                  pl.BlockSpec((1, n), lambda i: (0, 0))],
        out_specs=pl.BlockSpec((tm, n), lambda i: (i, 0)),
        compiler_params=_parallel(),
    )(_pad_rows(x2d, mpad), p["w1"], p["b1"].reshape(1, -1),
      p["w2"], p["b2"].reshape(1, -1))
    return out if mpad == m else out[:m]


def _mlp3_kernel(x_ref, w1_ref, b1_ref, w2_ref, b2_ref, w3_ref, b3_ref, o_ref):
    h = _mish(jnp.dot(x_ref[...], w1_ref[...], preferred_element_type=jnp.float32)
              + b1_ref[...])
    h = _mish(jnp.dot(h, w2_ref[...], preferred_element_type=jnp.float32) + b2_ref[...])
    y = jnp.dot(h, w3_ref[...], preferred_element_type=jnp.float32) + b3_ref[...]
    o_ref[...] = y.astype(o_ref.dtype)


def mlp3(x2d, p, block_m=512):
    m, k = x2d.shape
    k1, k2, n = p["w1"].shape[1], p["w2"].shape[1], p["w3"].shape[1]
    tm, mpad = _row_tiling(m, block_m)
    out = pl.pallas_call(
        _mlp3_kernel,
        out_shape=jax.ShapeDtypeStruct((mpad, n), jnp.float32),
        grid=(mpad // tm,),
        in_specs=[pl.BlockSpec((tm, k), lambda i: (i, 0)),
                  pl.BlockSpec((k, k1), lambda i: (0, 0)),
                  pl.BlockSpec((1, k1), lambda i: (0, 0)),
                  pl.BlockSpec((k1, k2), lambda i: (0, 0)),
                  pl.BlockSpec((1, k2), lambda i: (0, 0)),
                  pl.BlockSpec((k2, n), lambda i: (0, 0)),
                  pl.BlockSpec((1, n), lambda i: (0, 0))],
        out_specs=pl.BlockSpec((tm, n), lambda i: (i, 0)),
        compiler_params=_parallel(),
    )(_pad_rows(x2d, mpad), p["w1"], p["b1"].reshape(1, -1),
      p["w2"], p["b2"].reshape(1, -1), p["w3"], p["b3"].reshape(1, -1))
    return out if mpad == m else out[:m]


def _mish_linear_kernel(x_ref, w_ref, b_ref, o_ref):
    h = _mish(x_ref[...])
    o_ref[...] = (jnp.dot(h, w_ref[...], preferred_element_type=jnp.float32)
                  + b_ref[...]).astype(o_ref.dtype)


def mish_linear(x2d, w, b, block_m=512):
    """Shared mish(t_embed) @ packed-time-weight projection for a whole block."""
    m, k = x2d.shape
    n = w.shape[1]
    tm, mpad = _row_tiling(m, block_m)
    out = pl.pallas_call(
        _mish_linear_kernel,
        out_shape=jax.ShapeDtypeStruct((mpad, n), jnp.float32),
        grid=(mpad // tm,),
        in_specs=[pl.BlockSpec((tm, k), lambda i: (i, 0)),
                  pl.BlockSpec((k, n), lambda i: (0, 0)),
                  pl.BlockSpec((1, n), lambda i: (0, 0))],
        out_specs=pl.BlockSpec((tm, n), lambda i: (i, 0)),
        compiler_params=_parallel(),
    )(_pad_rows(x2d, mpad), w, b)
    return out if mpad == m else out[:m]


def _gn_mlp_kernel(x_ref, g_ref, bb_ref, w1_ref, b1_ref, w2_ref, b2_ref, o_ref):
    # norm5 affine + Linear->Mish->Linear + residual, fused
    h0 = x_ref[...] * g_ref[...] + bb_ref[...]
    h = _mish(jnp.dot(h0, w1_ref[...], preferred_element_type=jnp.float32) + b1_ref[...])
    y = jnp.dot(h, w2_ref[...], preferred_element_type=jnp.float32) + b2_ref[...] + h0
    o_ref[...] = y.astype(o_ref.dtype)


def gn_affine_mlp(xhat2d, gamma_row, beta_row, p, block_m=512):
    m, c = xhat2d.shape
    kh = p["w1"].shape[1]
    tm, mpad = _row_tiling(m, block_m)
    out = pl.pallas_call(
        _gn_mlp_kernel,
        out_shape=jax.ShapeDtypeStruct((mpad, c), jnp.float32),
        grid=(mpad // tm,),
        in_specs=[pl.BlockSpec((tm, c), lambda i: (i, 0)),
                  pl.BlockSpec((1, c), lambda i: (0, 0)),
                  pl.BlockSpec((1, c), lambda i: (0, 0)),
                  pl.BlockSpec((c, kh), lambda i: (0, 0)),
                  pl.BlockSpec((1, kh), lambda i: (0, 0)),
                  pl.BlockSpec((kh, c), lambda i: (0, 0)),
                  pl.BlockSpec((1, c), lambda i: (0, 0))],
        out_specs=pl.BlockSpec((tm, c), lambda i: (i, 0)),
        compiler_params=_parallel(),
    )(_pad_rows(xhat2d, mpad), gamma_row, beta_row,
      p["w1"], p["b1"].reshape(1, -1), p["w2"], p["b2"].reshape(1, -1))
    return out if mpad == m else out[:m]


# ------------------------------------------ GroupNorm stats (no affine) kernel
def _gn_kernel(x_ref, oh_ref, oht_ref, o_ref, *, eps, inv_count):
    x = x_ref[0]                                                   # (S, C)
    ch_sum = jnp.sum(x, axis=0, keepdims=True)                     # (1, C)
    grp_mean = jnp.dot(ch_sum, oh_ref[...],
                       preferred_element_type=jnp.float32) * inv_count
    mean_c = jnp.dot(grp_mean, oht_ref[...], preferred_element_type=jnp.float32)
    d = x - mean_c
    ch_ss = jnp.sum(d * d, axis=0, keepdims=True)
    grp_var = jnp.dot(ch_ss, oh_ref[...],
                      preferred_element_type=jnp.float32) * inv_count
    var_c = jnp.dot(grp_var, oht_ref[...], preferred_element_type=jnp.float32)
    o_ref[0] = (d * jax.lax.rsqrt(var_c + eps)).astype(o_ref.dtype)


def groupnorm_hat(x_bsc, n_groups=8, eps=1e-5):
    """Channels-last GroupNorm statistics (x - mu)/sigma; affine folded downstream."""
    b, s, c = x_bsc.shape
    cg = c // n_groups
    onehot = (jnp.arange(c)[:, None] // cg ==
              jnp.arange(n_groups)[None, :]).astype(jnp.float32)   # (C, G)
    kern = functools.partial(_gn_kernel, eps=eps, inv_count=1.0 / (cg * s))
    return pl.pallas_call(
        kern,
        out_shape=jax.ShapeDtypeStruct((b, s, c), jnp.float32),
        grid=(b,),
        in_specs=[pl.BlockSpec((1, s, c), lambda i: (i, 0, 0)),
                  pl.BlockSpec((c, n_groups), lambda i: (0, 0)),
                  pl.BlockSpec((n_groups, c), lambda i: (0, 0))],
        out_specs=pl.BlockSpec((1, s, c), lambda i: (i, 0, 0)),
        compiler_params=_parallel(),
    )(x_bsc, onehot, onehot.T)


# ------------------------------------------------ fused attention kernels
def _softmax_rows(s, approx):
    s = s - jnp.max(s, axis=-1, keepdims=True)
    p = jnp.exp(s)
    den = jnp.sum(p, axis=-1, keepdims=True)
    if approx:
        return p * pl.reciprocal(den, approx=True)
    return p / den


def _self_attn_kernel(x_ref, tp_ref, wx_ref, bx_ref, wo_ref, bo_ref, *rest,
                      heads, dim, seq_len, approx):
    if len(rest) == 2:
        res_ref, o_ref = rest
    else:
        (o_ref,) = rest
    p_hd = heads * dim
    # one fused lane-dense QKV projection; GN affine + softmax scale prefolded
    qkv = (jnp.dot(x_ref[...], wx_ref[...], preferred_element_type=jnp.float32)
           + bx_ref[...] + tp_ref[...])                            # (R, 3P)
    rows = qkv.shape[0]
    mask = _block_diag_mask(rows, rows, seq_len, seq_len)
    outs = []
    for h in range(heads):
        qh = qkv[:, h * dim:(h + 1) * dim]
        kh = qkv[:, p_hd + h * dim:p_hd + (h + 1) * dim]
        vh = qkv[:, 2 * p_hd + h * dim:2 * p_hd + (h + 1) * dim]
        s = jnp.dot(qh, kh.T, preferred_element_type=jnp.float32)
        s = jnp.where(mask, s, -1e30)
        outs.append(jnp.dot(_softmax_rows(s, approx), vh,
                            preferred_element_type=jnp.float32))
    y = jnp.dot(jnp.concatenate(outs, axis=-1), wo_ref[...],
                preferred_element_type=jnp.float32) + bo_ref[...]
    if len(rest) == 2:
        y = y + res_ref[...]
    o_ref[...] = y.astype(o_ref.dtype)


def fused_self_attention(x2d, tp2d, pk, *, seq_len, n_seq, heads, dim,
                         res2d=None, target_rows=256, approx=APPROX_SOFTMAX):
    rows, f = x2d.shape
    p_hd = heads * dim
    h_out = pk["wo"].shape[1]
    bs, n_blocks = _seq_blocking(n_seq, seq_len, seq_len, target_rows)
    rb = bs * seq_len
    rows_pad = n_blocks * rb
    has_res = res2d is not None
    in_specs = [pl.BlockSpec((rb, f), lambda i: (i, 0)),
                pl.BlockSpec((rb, 3 * p_hd), lambda i: (i, 0)),
                pl.BlockSpec((f, 3 * p_hd), lambda i: (0, 0)),
                pl.BlockSpec((1, 3 * p_hd), lambda i: (0, 0)),
                pl.BlockSpec((p_hd, h_out), lambda i: (0, 0)),
                pl.BlockSpec((1, h_out), lambda i: (0, 0))]
    args = [_pad_rows(x2d, rows_pad), _pad_rows(tp2d, rows_pad),
            pk["wx"], pk["bx"], pk["wo"], pk["bo"]]
    if has_res:
        in_specs.append(pl.BlockSpec((rb, h_out), lambda i: (i, 0)))
        args.append(_pad_rows(res2d, rows_pad))
    out = pl.pallas_call(
        functools.partial(_self_attn_kernel, heads=heads, dim=dim,
                          seq_len=seq_len, approx=approx),
        out_shape=jax.ShapeDtypeStruct((rows_pad, h_out), jnp.float32),
        grid=(n_blocks,),
        in_specs=in_specs,
        out_specs=pl.BlockSpec((rb, h_out), lambda i: (i, 0)),
        compiler_params=_parallel(),
    )(*args)
    return out if rows_pad == rows else out[:rows]


def _cross_attn_kernel(xq_ref, tq_ref, xkv_ref, tkv_ref, wq_ref, bq_ref,
                       wkv_ref, bkv_ref, wo_ref, bo_ref, o_ref,
                       *, heads, dim, q_len, kv_len, approx):
    p_hd = heads * dim
    q = (jnp.dot(xq_ref[...], wq_ref[...], preferred_element_type=jnp.float32)
         + bq_ref[...] + tq_ref[...])                              # (Rq, P)
    kv = (jnp.dot(xkv_ref[...], wkv_ref[...], preferred_element_type=jnp.float32)
          + bkv_ref[...] + tkv_ref[...])                           # (Rk, 2P)
    rq, rk = q.shape[0], kv.shape[0]
    mask = _block_diag_mask(rq, rk, q_len, kv_len)
    outs = []
    for h in range(heads):
        qh = q[:, h * dim:(h + 1) * dim]
        kh = kv[:, h * dim:(h + 1) * dim]
        vh = kv[:, p_hd + h * dim:p_hd + (h + 1) * dim]
        s = jnp.dot(qh, kh.T, preferred_element_type=jnp.float32)
        s = jnp.where(mask, s, -1e30)
        outs.append(jnp.dot(_softmax_rows(s, approx), vh,
                            preferred_element_type=jnp.float32))
    y = jnp.dot(jnp.concatenate(outs, axis=-1), wo_ref[...],
                preferred_element_type=jnp.float32) + bo_ref[...]
    o_ref[...] = y.astype(o_ref.dtype)


def fused_cross_attention(q2d, tq2d, kv2d, tkv2d, pk, *, q_len, kv_len, n_seq,
                          heads, dim, target_rows=256, approx=APPROX_SOFTMAX):
    rows_q, f = q2d.shape
    p_hd = heads * dim
    h_out = pk["wo"].shape[1]
    bs, n_blocks = _seq_blocking(n_seq, q_len, kv_len, target_rows)
    rq, rk = bs * q_len, bs * kv_len
    q_pad, kv_pad = n_blocks * rq, n_blocks * rk
    out = pl.pallas_call(
        functools.partial(_cross_attn_kernel, heads=heads, dim=dim,
                          q_len=q_len, kv_len=kv_len, approx=approx),
        out_shape=jax.ShapeDtypeStruct((q_pad, h_out), jnp.float32),
        grid=(n_blocks,),
        in_specs=[pl.BlockSpec((rq, f), lambda i: (i, 0)),
                  pl.BlockSpec((rq, p_hd), lambda i: (i, 0)),
                  pl.BlockSpec((rk, f), lambda i: (i, 0)),
                  pl.BlockSpec((rk, 2 * p_hd), lambda i: (i, 0)),
                  pl.BlockSpec((f, p_hd), lambda i: (0, 0)),
                  pl.BlockSpec((1, p_hd), lambda i: (0, 0)),
                  pl.BlockSpec((f, 2 * p_hd), lambda i: (0, 0)),
                  pl.BlockSpec((1, 2 * p_hd), lambda i: (0, 0)),
                  pl.BlockSpec((p_hd, h_out), lambda i: (0, 0)),
                  pl.BlockSpec((1, h_out), lambda i: (0, 0))],
        out_specs=pl.BlockSpec((rq, h_out), lambda i: (i, 0)),
        compiler_params=_parallel(),
    )(_pad_rows(q2d, q_pad), _pad_rows(tq2d, q_pad),
      _pad_rows(kv2d, kv_pad), _pad_rows(tkv2d, kv_pad),
      pk["wq"], pk["bq"], pk["wkv"], pk["bkv"], pk["wo"], pk["bo"])
    return out if q_pad == rows_q else out[:rows_q]


# ------------------------------------------------------ module wrappers
def spatio_attention(xhat, x_res, tproj, pk, heads, dim):
    b, t, l, f = xhat.shape
    h_out = pk["wo"].shape[1]
    rows = b * t * l
    xq = xhat.reshape(rows, f)
    tp = jnp.broadcast_to(tproj[:, None, :],
                          (b * t, l, tproj.shape[-1])).reshape(rows, -1)
    res = x_res.reshape(rows, h_out)
    out = fused_self_attention(xq, tp, pk, seq_len=l, n_seq=b * t,
                               heads=heads, dim=dim, res2d=res)     # = x + spat_val
    return out.reshape(b, t, l, h_out)


def temporal_attention(xhat, tproj, pk, heads, dim):
    b, t, l, f = xhat.shape
    h_out = pk["wo"].shape[1]
    xq = jnp.transpose(xhat, (0, 2, 1, 3)).reshape(b * l * t, f)
    tp = jnp.broadcast_to(tproj.reshape(b, 1, t, -1),
                          (b, l, t, tproj.shape[-1])).reshape(b * l * t, -1)
    out = fused_self_attention(xq, tp, pk, seq_len=t, n_seq=b * l,
                               heads=heads, dim=dim)
    return jnp.transpose(out.reshape(b, l, t, h_out), (0, 2, 1, 3))


def comm_attention(xhat_q, n_hat, t_q, t_kv, pk, heads, dim):
    b, t, l, f = xhat_q.shape
    _, n, tp_, lp_, _ = n_hat.shape
    assert n == l and tp_ <= t
    p_hd = heads * dim
    h_out = pk["wo"].shape[1]
    q2 = jnp.transpose(xhat_q, (0, 2, 1, 3)).reshape(b * l * t, f)
    kv2 = n_hat.reshape(b * n * tp_ * lp_, f)
    tq = jnp.broadcast_to(t_q.reshape(b, 1, t, p_hd),
                          (b, l, t, p_hd)).reshape(b * l * t, p_hd)
    tkv = jnp.broadcast_to(t_kv.reshape(b, t, 2 * p_hd)[:, None, :tp_, None, :],
                           (b, n, tp_, lp_, 2 * p_hd)).reshape(b * n * tp_ * lp_,
                                                               2 * p_hd)
    out = fused_cross_attention(q2, tq, kv2, tkv, pk, q_len=t, kv_len=tp_ * lp_,
                                n_seq=b * l, heads=heads, dim=dim)
    return jnp.transpose(out.reshape(b, l, t, h_out), (0, 2, 1, 3))


# ------------------------------------------------------ parameter packing
def pack_block(bp, heads, dim, scale):
    """Fold GN affines + softmax scale into packed projection weights (host/XLA side)."""
    p_hd = heads * dim
    qscale = jnp.concatenate([jnp.full((p_hd,), scale, jnp.float32),
                              jnp.ones((2 * p_hd,), jnp.float32)])[None, :]

    def pack_self(a, gamma, beta):
        w3 = jnp.concatenate([a["wq"], a["wk"], a["wv"]], axis=1)
        wt3 = jnp.concatenate([a["wtq"], a["wtk"], a["wtv"]], axis=1)
        bt3 = jnp.concatenate([a["btq"], a["btk"], a["btv"]])[None, :]
        return {"wx": gamma[:, None] * w3 * qscale,
                "bx": (beta @ w3)[None, :] * qscale,
                "wt": wt3 * qscale, "bt": bt3 * qscale,
                "wo": a["wo"], "bo": a["bo"][None, :]}

    spat = pack_self(bp["spat"], bp["g3"], bp["b3"])
    temp = pack_self(bp["temp"], bp["g4"], bp["b4"])

    c = bp["comm"]
    wkv = jnp.concatenate([c["wk"], c["wv"]], axis=1)
    comm = {"wq": bp["g1"][:, None] * c["wq"] * scale,
            "bq": (bp["b1"] @ c["wq"])[None, :] * scale,
            "wkv": bp["g2"][:, None] * wkv,
            "bkv": (bp["b2"] @ wkv)[None, :],
            "wo": c["wo"], "bo": c["bo"][None, :]}
    wtq = c["wtq"] * scale
    btq = (c["btq"] * scale)[None, :]
    wtkv = jnp.concatenate([c["wtk"], c["wtv"]], axis=1)
    btkv = jnp.concatenate([c["btk"], c["btv"]])[None, :]

    w_time = jnp.concatenate([spat["wt"], temp["wt"], wtq, wtkv], axis=1)   # (F, 9P)
    b_time = jnp.concatenate([spat["bt"], temp["bt"], btq, btkv], axis=1)   # (1, 9P)

    return {"w_time": w_time, "b_time": b_time,
            "spat": {k: spat[k] for k in ("wx", "bx", "wo", "bo")},
            "temp": {k: temp[k] for k in ("wx", "bx", "wo", "bo")},
            "comm": comm,
            "g5": bp["g5"][None, :], "b5": bp["b5"][None, :],
            "mlp": bp["mlp"]}


def transformer_block(pk, x, n_hat, t2d, heads, dim, n_groups=8):
    b, t, l, c = x.shape
    p_hd = heads * dim
    tproj = mish_linear(t2d, pk["w_time"], pk["b_time"])            # (b*t, 9P), once/block
    t_spat, t_temp = tproj[:, :3 * p_hd], tproj[:, 3 * p_hd:6 * p_hd]
    t_commq, t_commkv = tproj[:, 6 * p_hd:7 * p_hd], tproj[:, 7 * p_hd:]

    if n_hat is not None:
        xhat1 = groupnorm_hat(x.reshape(b, t * l, c), n_groups).reshape(b, t, l, c)
        x = x + comm_attention(xhat1, n_hat, t_commq, t_commkv, pk["comm"], heads, dim)

    # norm3 and norm4 share statistics: one GN pass, affines folded into weights
    xhat = groupnorm_hat(x.reshape(b, t * l, c), n_groups).reshape(b, t, l, c)
    spat = spatio_attention(xhat, x, t_spat, pk["spat"], heads, dim)   # x + spat_val
    temp = temporal_attention(xhat, t_temp, pk["temp"], heads, dim)
    x = spat + temp

    xhat5 = groupnorm_hat(x.reshape(b, t * l, c), n_groups)
    y = gn_affine_mlp(xhat5.reshape(b * t * l, c), pk["g5"], pk["b5"], pk["mlp"])
    return y.reshape(b, t, l, c)


def stformer_forward(params, x, neighbor_x, diffuse_time, horizon, hidden,
                     heads=3, n_groups=8):
    b, t, l, td = x.shape
    assert t == horizon
    dim = hidden
    scale = 1.0 / math.sqrt(dim)

    dpe = sinusoidal_pos_emb(diffuse_time.astype(jnp.float32), hidden)   # (b, H)
    d = mlp2(dpe, params["dt"])
    spe = sinusoidal_pos_emb(jnp.arange(horizon, dtype=jnp.float32), hidden)
    s = mlp2(spe, params["st"])
    t_embed = d[:, None, :] + s[None, :, :]                              # (b, t, H)
    t2d = t_embed.reshape(b * t, hidden)
    # TODO(synk): reward_mlp + Bernoulli condition dropout (reward_condition=True,
    # training-only) not implemented; reward_embed = None path only.

    x_h = mlp2(x.reshape(-1, td), params["x"]).reshape(b, t, l, hidden)
    nb, nn, ntp, nlp, _ = neighbor_x.shape
    assert nn == l
    n_h = mlp2(neighbor_x.reshape(-1, td), params["nx"]).reshape(nb, nn, ntp, nlp, hidden)
    # neighbor GroupNorm statistics are parameter-free -> hoisted out of the loop
    n_hat = groupnorm_hat(n_h.reshape(nb, nn * ntp * nlp, hidden),
                          n_groups).reshape(nb, nn, ntp, nlp, hidden)

    for bp in params["blocks"]:
        pk = pack_block(bp, heads, dim, scale)
        x_h = transformer_block(pk, x_h, n_hat, t2d, heads, dim, n_groups)

    o = mlp3(x_h.reshape(-1, hidden), params["out"])
    return o.reshape(b, t, l, -1)


# ------------------------------------------------------ parameter init
def _uniform(key, shape, bound):
    return jax.random.uniform(key, shape, jnp.float32, -bound, bound)


def init_mlp2(key, k_in, k_hidden, k_out):
    ks = jax.random.split(key, 4)
    b1, b2 = 1.0 / math.sqrt(k_in), 1.0 / math.sqrt(k_hidden)
    return {"w1": _uniform(ks[0], (k_in, k_hidden), b1),
            "b1": _uniform(ks[1], (k_hidden,), b1),
            "w2": _uniform(ks[2], (k_hidden, k_out), b2),
            "b2": _uniform(ks[3], (k_out,), b2)}


def init_mlp3(key, k_in, k1, k2, k_out):
    ks = jax.random.split(key, 6)
    bo1, bo2, bo3 = 1.0 / math.sqrt(k_in), 1.0 / math.sqrt(k1), 1.0 / math.sqrt(k2)
    return {"w1": _uniform(ks[0], (k_in, k1), bo1), "b1": _uniform(ks[1], (k1,), bo1),
            "w2": _uniform(ks[2], (k1, k2), bo2), "b2": _uniform(ks[3], (k2,), bo2),
            "w3": _uniform(ks[4], (k2, k_out), bo3), "b3": _uniform(ks[5], (k_out,), bo3)}


def init_attn(key, dim, heads):
    p_hd = dim * heads
    ks = jax.random.split(key, 11)
    bd, bp = 1.0 / math.sqrt(dim), 1.0 / math.sqrt(p_hd)
    return {"wq": _uniform(ks[0], (dim, p_hd), bd),
            "wk": _uniform(ks[1], (dim, p_hd), bd),
            "wv": _uniform(ks[2], (dim, p_hd), bd),
            "wtq": _uniform(ks[3], (dim, p_hd), bd), "btq": _uniform(ks[4], (p_hd,), bd),
            "wtk": _uniform(ks[5], (dim, p_hd), bd), "btk": _uniform(ks[6], (p_hd,), bd),
            "wtv": _uniform(ks[7], (dim, p_hd), bd), "btv": _uniform(ks[8], (p_hd,), bd),
            "wo": _uniform(ks[9], (p_hd, dim), bp), "bo": _uniform(ks[10], (dim,), bp)}


def init_block(key, dim, heads):
    ks = jax.random.split(key, 4)
    ones = jnp.ones((dim,), jnp.float32)
    zeros = jnp.zeros((dim,), jnp.float32)
    return {"g1": ones, "b1": zeros, "g2": ones, "b2": zeros, "g3": ones, "b3": zeros,
            "g4": ones, "b4": zeros, "g5": ones, "b5": zeros,
            "comm": init_attn(ks[0], dim, heads),
            "spat": init_attn(ks[1], dim, heads),
            "temp": init_attn(ks[2], dim, heads),
            "mlp": init_mlp2(ks[3], dim, dim * 4, dim)}


def init_stformer(key, transition_dim, hidden, depth, heads=3):
    ks = jax.random.split(key, 5 + depth)
    return {"dt": init_mlp2(ks[0], hidden, hidden * 4, hidden),
            "st": init_mlp2(ks[1], hidden, hidden * 4, hidden),
            "x": init_mlp2(ks[2], transition_dim, hidden * 4, hidden),
            "nx": init_mlp2(ks[3], transition_dim, hidden * 4, hidden),
            "out": init_mlp3(ks[4], hidden, hidden * 4, hidden, transition_dim),
            "blocks": [init_block(ks[5 + i], hidden, heads) for i in range(depth)]}


# ------------------------------------------------------------------ main
if __name__ == "__main__":
    key = jax.random.PRNGKey(0)
    b, horizon, cond_step = 2, 8, 4
    l, lp = 4, 3                       # n == l (CommAttention constraint)
    transition_dim, hidden = 6, 32
    block_depth = 2
    heads = 3

    kp, kx, kn, kt = jax.random.split(key, 4)
    params = init_stformer(kp, transition_dim, hidden, block_depth, heads)

    x = jax.random.normal(kx, (b, horizon, l, transition_dim), jnp.float32)
    neighbor_x = jax.random.normal(kn, (b, l, cond_step, lp, transition_dim), jnp.float32)
    diffuse_time = jax.random.randint(kt, (b,), 0, 100).astype(jnp.float32)

    fwd = jax.jit(stformer_forward, static_argnames=("horizon", "hidden", "heads"))
    out = fwd(params, x, neighbor_x, diffuse_time,
              horizon=horizon, hidden=hidden, heads=heads)
    out = jax.block_until_ready(out)
    assert out.shape == (b, horizon, l, transition_dim)
    assert bool(jnp.all(jnp.isfinite(out)))
    print("KERNEL_OK")
</pallas_src>

<mosaic_0001>
module attributes {stable_mosaic.version = 11 : i64} {
  func.func @_mlp2_kernel(%arg0: i32, %arg1: memref<8x32xf32, #tpu.memory_space<vmem>>, %arg2: memref<32x128xf32, #tpu.memory_space<vmem>>, %arg3: memref<1x128xf32, #tpu.memory_space<vmem>>, %arg4: memref<128x32xf32, #tpu.memory_space<vmem>>, %arg5: memref<1x32xf32, #tpu.memory_space<vmem>>, %arg6: memref<8x32xf32, #tpu.memory_space<vmem>>) attributes {dimension_semantics = [#tpu.dimension_semantics<parallel>], iteration_bounds = array<i64: 1>, scalar_prefetch = 0 : i64, scratch_operands = 0 : i64, tpu.core_type = #tpu.core_type<tc>, window_params = [{transform_indices = @transform_0, window_bounds = array<i64: 8, 32>}, {pipeline_mode = #tpu.pipeline_mode<synchronous>, transform_indices = @transform_1, window_bounds = array<i64: 32, 128>}, {pipeline_mode = #tpu.pipeline_mode<synchronous>, transform_indices = @transform_2, window_bounds = array<i64: 1, 128>}, {pipeline_mode = #tpu.pipeline_mode<synchronous>, transform_indices = @transform_3, window_bounds = array<i64: 128, 32>}, {pipeline_mode = #tpu.pipeline_mode<synchronous>, transform_indices = @transform_4, window_bounds = array<i64: 1, 32>}, {transform_indices = @transform_5, window_bounds = array<i64: 8, 32>}]} {
    %c0 = arith.constant 0 : index
    %c0_0 = arith.constant 0 : index
    %0 = vector.load %arg1[%c0, %c0_0] : memref<8x32xf32, #tpu.memory_space<vmem>>, vector<8x32xf32>
    %c0_1 = arith.constant 0 : index
    %c0_2 = arith.constant 0 : index
    %1 = vector.load %arg2[%c0_1, %c0_2] : memref<32x128xf32, #tpu.memory_space<vmem>>, vector<32x128xf32>
    %cst = arith.constant dense<0.000000e+00> : vector<8x128xf32>
    %2 = tpu.matmul %0, %1, %cst {dimension_numbers = #tpu.dot_dimension_numbers<[1], [0], [0], [1], [0, 0, 1, 1], [], []>} : vector<8x32xf32>, vector<32x128xf32>, vector<8x128xf32> -> vector<8x128xf32>
    %c0_3 = arith.constant 0 : index
    %c0_4 = arith.constant 0 : index
    %3 = vector.load %arg3[%c0_3, %c0_4] : memref<1x128xf32, #tpu.memory_space<vmem>>, vector<1x128xf32>
    %4 = vector.broadcast %3 : vector<1x128xf32> to vector<8x128xf32>
    %5 = arith.addf %2, %4 : vector<8x128xf32>
    %cst_5 = arith.constant 0.000000e+00 : f32
    %6 = vector.broadcast %cst_5 : f32 to vector<8x128xf32>
    %7 = arith.maximumf %5, %6 : vector<8x128xf32>
    %8 = math.absf %5 : vector<8x128xf32>
    %cst_6 = arith.constant 0.000000e+00 : f32
    %9 = vector.broadcast %cst_6 : f32 to vector<8x128xf32>
    %10 = arith.subf %9, %8 : vector<8x128xf32>
    %11 = math.exp %10 : vector<8x128xf32>
    %cst_7 = arith.constant 1.000000e+00 : f32
    %12 = vector.broadcast %cst_7 : f32 to vector<8x128xf32>
    %13 = arith.addf %12, %11 : vector<8x128xf32>
    %14 = math.log %13 : vector<8x128xf32>
    %15 = arith.addf %7, %14 : vector<8x128xf32>
    %16 = math.tanh %15 : vector<8x128xf32>
    %17 = arith.mulf %5, %16 : vector<8x128xf32>
    %c0_8 = arith.constant 0 : index
    %c0_9 = arith.constant 0 : index
    %18 = vector.load %arg4[%c0_8, %c0_9] : memref<128x32xf32, #tpu.memory_space<vmem>>, vector<128x32xf32>
    %cst_10 = arith.constant dense<0.000000e+00> : vector<8x32xf32>
    %19 = tpu.matmul %17, %18, %cst_10 {dimension_numbers = #tpu.dot_dimension_numbers<[1], [0], [0], [1], [0, 0, 1, 1], [], []>} : vector<8x128xf32>, vector<128x32xf32>, vector<8x32xf32> -> vector<8x32xf32>
    %c0_11 = arith.constant 0 : index
    %c0_12 = arith.constant 0 : index
    %20 = vector.load %arg5[%c0_11, %c0_12] : memref<1x32xf32, #tpu.memory_space<vmem>>, vector<1x32xf32>
    %21 = vector.broadcast %20 : vector<1x32xf32> to vector<8x32xf32>
    %22 = arith.addf %19, %21 : vector<8x32xf32>
    %c0_13 = arith.constant 0 : index
    %c0_14 = arith.constant 0 : index
    %23 = vector.load %arg6[%c0_13, %c0_14] : memref<8x32xf32, #tpu.memory_space<vmem>>, vector<8x32xf32>
    tpu.vector_store %arg6[%c0_13, %c0_14], %22 {strides = array<i32>} : memref<8x32xf32, #tpu.memory_space<vmem>>, vector<8x32xf32>,
    return
  }
  func.func @transform_0(%arg0: i32) -> (i32, i32) {
    %c0_i32 = arith.constant 0 : i32
    %c0_i32_0 = arith.constant 0 : i32
    return %arg0, %c0_i32 : i32, i32
  }
  func.func @transform_1(%arg0: i32) -> (i32, i32) {
    %c0_i32 = arith.constant 0 : i32
    %c0_i32_0 = arith.constant 0 : i32
    %c0_i32_1 = arith.constant 0 : i32
    return %c0_i32, %c0_i32_0 : i32, i32
  }
  func.func @transform_2(%arg0: i32) -> (i32, i32) {
    %c0_i32 = arith.constant 0 : i32
    %c0_i32_0 = arith.constant 0 : i32
    %c0_i32_1 = arith.constant 0 : i32
    return %c0_i32, %c0_i32_0 : i32, i32
  }
  func.func @transform_3(%arg0: i32) -> (i32, i32) {
    %c0_i32 = arith.constant 0 : i32
    %c0_i32_0 = arith.constant 0 : i32
    %c0_i32_1 = arith.constant 0 : i32
    return %c0_i32, %c0_i32_0 : i32, i32
  }
  func.func @transform_4(%arg0: i32) -> (i32, i32) {
    %c0_i32 = arith.constant 0 : i32
    %c0_i32_0 = arith.constant 0 : i32
    %c0_i32_1 = arith.constant 0 : i32
    return %c0_i32, %c0_i32_0 : i32, i32
  }
  func.func @transform_5(%arg0: i32) -> (i32, i32) {
    %c0_i32 = arith.constant 0 : i32
    %c0_i32_0 = arith.constant 0 : i32
    return %arg0, %c0_i32 : i32, i32
  }
}

module attributes {stable_mosaic.version = 11 : i64} {
  func.func @_mish_linear_kernel(%arg0: i32, %arg1: memref<8x32xf32, #tpu.memory_space<vmem>>, %arg2: memref<32x864xf32, #tpu.memory_space<vmem>>, %arg3: memref<1x864xf32, #tpu.memory_space<vmem>>, %arg4: memref<8x864xf32, #tpu.memory_space<vmem>>) attributes {dimension_semantics = [#tpu.dimension_semantics<parallel>], iteration_bounds = array<i64: 2>, scalar_prefetch = 0 : i64, scratch_operands = 0 : i64, tpu.core_type = #tpu.core_type<tc>, window_params = [{transform_indices = @transform_0, window_bounds = array<i64: 8, 32>}, {pipeline_mode = #tpu.pipeline_mode<synchronous>, transform_indices = @transform_1, window_bounds = array<i64: 32, 864>}, {pipeline_mode = #tpu.pipeline_mode<synchronous>, transform_indices = @transform_2, window_bounds = array<i64: 1, 864>}, {transform_indices = @transform_3, window_bounds = array<i64: 8, 864>}]} {
    %c0 = arith.constant 0 : index
    %c0_0 = arith.constant 0 : index
    %0 = vector.load %arg1[%c0, %c0_0] : memref<8x32xf32, #tpu.memory_space<vmem>>, vector<8x32xf32>
    %cst = arith.constant 0.000000e+00 : f32
    %1 = vector.broadcast %cst : f32 to vector<8x32xf32>
    %2 = arith.maximumf %0, %1 : vector<8x32xf32>
    %3 = math.absf %0 : vector<8x32xf32>
    %cst_1 = arith.constant 0.000000e+00 : f32
    %4 = vector.broadcast %cst_1 : f32 to vector<8x32xf32>
    %5 = arith.subf %4, %3 : vector<8x32xf32>
    %6 = math.exp %5 : vector<8x32xf32>
    %cst_2 = arith.constant 1.000000e+00 : f32
    %7 = vector.broadcast %cst_2 : f32 to vector<8x32xf32>
    %8 = arith.addf %7, %6 : vector<8x32xf32>
    %9 = math.log %8 : vector<8x32xf32>
    %10 = arith.addf %2, %9 : vector<8x32xf32>
    %11 = math.tanh %10 : vector<8x32xf32>
    %12 = arith.mulf %0, %11 : vector<8x32xf32>
    %c0_3 = arith.constant 0 : index
    %c0_4 = arith.constant 0 : index
    %13 = vector.load %arg2[%c0_3, %c0_4] : memref<32x864xf32, #tpu.memory_space<vmem>>, vector<32x864xf32>
    %cst_5 = arith.constant dense<0.000000e+00> : vector<8x864xf32>
    %14 = tpu.matmul %12, %13, %cst_5 {dimension_numbers = #tpu.dot_dimension_numbers<[1], [0], [0], [1], [0, 0, 1, 1], [], []>} : vector<8x32xf32>, vector<32x864xf32>, vector<8x864xf32> -> vector<8x864xf32>
    %c0_6 = arith.constant 0 : index
    %c0_7 = arith.constant 0 : index
    %15 = vector.load %arg3[%c0_6, %c0_7] : memref<1x864xf32, #tpu.memory_space<vmem>>, vector<1x864xf32>
    %16 = vector.broadcast %15 : vector<1x864xf32> to vector<8x864xf32>
    %17 = arith.addf %14, %16 : vector<8x864xf32>
    %c0_8 = arith.constant 0 : index
    %c0_9 = arith.constant 0 : index
    %18 = vector.load %arg4[%c0_8, %c0_9] : memref<8x864xf32, #tpu.memory_space<vmem>>, vector<8x864xf32>
    tpu.vector_store %arg4[%c0_8, %c0_9], %17 {strides = array<i32>} : memref<8x864xf32, #tpu.memory_space<vmem>>, vector<8x864xf32>,
    return
  }
  func.func @transform_0(%arg0: i32) -> (i32, i32) {
    %c0_i32 = arith.constant 0 : i32
    %c0_i32_0 = arith.constant 0 : i32
    return %arg0, %c0_i32 : i32, i32
  }
  func.func @transform_1(%arg0: i32) -> (i32, i32) {
    %c0_i32 = arith.constant 0 : i32
    %c0_i32_0 = arith.constant 0 : i32
    %c0_i32_1 = arith.constant 0 : i32
    return %c0_i32, %c0_i32_0 : i32, i32
  }
  func.func @transform_2(%arg0: i32) -> (i32, i32) {
    %c0_i32 = arith.constant 0 : i32
    %c0_i32_0 = arith.constant 0 : i32
    %c0_i32_1 = arith.constant 0 : i32
    return %c0_i32, %c0_i32_0 : i32, i32
  }
  func.func @transform_3(%arg0: i32) -> (i32, i32) {
    %c0_i32 = arith.constant 0 : i32
    %c0_i32_0 = arith.constant 0 : i32
    return %arg0, %c0_i32 : i32, i32
  }
}

module attributes {stable_mosaic.version = 11 : i64} {
  func.func @_mlp2_kernel(%arg0: i32, %arg1: memref<48x6xf32, #tpu.memory_space<vmem>>, %arg2: memref<6x128xf32, #tpu.memory_space<vmem>>, %arg3: memref<1x128xf32, #tpu.memory_space<vmem>>, %arg4: memref<128x32xf32, #tpu.memory_space<vmem>>, %arg5: memref<1x32xf32, #tpu.memory_space<vmem>>, %arg6: memref<48x32xf32, #tpu.memory_space<vmem>>) attributes {dimension_semantics = [#tpu.dimension_semantics<parallel>], iteration_bounds = array<i64: 2>, scalar_prefetch = 0 : i64, scratch_operands = 0 : i64, tpu.core_type = #tpu.core_type<tc>, window_params = [{transform_indices = @transform_0, window_bounds = array<i64: 48, 6>}, {pipeline_mode = #tpu.pipeline_mode<synchronous>, transform_indices = @transform_1, window_bounds = array<i64: 6, 128>}, {pipeline_mode = #tpu.pipeline_mode<synchronous>, transform_indices = @transform_2, window_bounds = array<i64: 1, 128>}, {pipeline_mode = #tpu.pipeline_mode<synchronous>, transform_indices = @transform_3, window_bounds = array<i64: 128, 32>}, {pipeline_mode = #tpu.pipeline_mode<synchronous>, transform_indices = @transform_4, window_bounds = array<i64: 1, 32>}, {transform_indices = @transform_5, window_bounds = array<i64: 48, 32>}]} {
    %c0 = arith.constant 0 : index
    %c0_0 = arith.constant 0 : index
    %0 = vector.load %arg1[%c0, %c0_0] : memref<48x6xf32, #tpu.memory_space<vmem>>, vector<48x6xf32>
    %c0_1 = arith.constant 0 : index
    %c0_2 = arith.constant 0 : index
    %1 = vector.load %arg2[%c0_1, %c0_2] : memref<6x128xf32, #tpu.memory_space<vmem>>, vector<6x128xf32>
    %cst = arith.constant dense<0.000000e+00> : vector<48x128xf32>
    %2 = tpu.matmul %0, %1, %cst {dimension_numbers = #tpu.dot_dimension_numbers<[1], [0], [0], [1], [0, 0, 1, 1], [], []>} : vector<48x6xf32>, vector<6x128xf32>, vector<48x128xf32> -> vector<48x128xf32>
    %c0_3 = arith.constant 0 : index
    %c0_4 = arith.constant 0 : index
    %3 = vector.load %arg3[%c0_3, %c0_4] : memref<1x128xf32, #tpu.memory_space<vmem>>, vector<1x128xf32>
    %4 = vector.broadcast %3 : vector<1x128xf32> to vector<48x128xf32>
    %5 = arith.addf %2, %4 : vector<48x128xf32>
    %cst_5 = arith.constant 0.000000e+00 : f32
    %6 = vector.broadcast %cst_5 : f32 to vector<48x128xf32>
    %7 = arith.maximumf %5, %6 : vector<48x128xf32>
    %8 = math.absf %5 : vector<48x128xf32>
    %cst_6 = arith.constant 0.000000e+00 : f32
    %9 = vector.broadcast %cst_6 : f32 to vector<48x128xf32>
    %10 = arith.subf %9, %8 : vector<48x128xf32>
    %11 = math.exp %10 : vector<48x128xf32>
    %cst_7 = arith.constant 1.000000e+00 : f32
    %12 = vector.broadcast %cst_7 : f32 to vector<48x128xf32>
    %13 = arith.addf %12, %11 : vector<48x128xf32>
    %14 = math.log %13 : vector<48x128xf32>
    %15 = arith.addf %7, %14 : vector<48x128xf32>
    %16 = math.tanh %15 : vector<48x128xf32>
    %17 = arith.mulf %5, %16 : vector<48x128xf32>
    %c0_8 = arith.constant 0 : index
    %c0_9 = arith.constant 0 : index
    %18 = vector.load %arg4[%c0_8, %c0_9] : memref<128x32xf32, #tpu.memory_space<vmem>>, vector<128x32xf32>
    %cst_10 = arith.constant dense<0.000000e+00> : vector<48x32xf32>
    %19 = tpu.matmul %17, %18, %cst_10 {dimension_numbers = #tpu.dot_dimension_numbers<[1], [0], [0], [1], [0, 0, 1, 1], [], []>} : vector<48x128xf32>, vector<128x32xf32>, vector<48x32xf32> -> vector<48x32xf32>
    %c0_11 = arith.constant 0 : index
    %c0_12 = arith.constant 0 : index
    %20 = vector.load %arg5[%c0_11, %c0_12] : memref<1x32xf32, #tpu.memory_space<vmem>>, vector<1x32xf32>
    %21 = vector.broadcast %20 : vector<1x32xf32> to vector<48x32xf32>
    %22 = arith.addf %19, %21 : vector<48x32xf32>
    %c0_13 = arith.constant 0 : index
    %c0_14 = arith.constant 0 : index
    %23 = vector.load %arg6[%c0_13, %c0_14] : memref<48x32xf32, #tpu.memory_space<vmem>>, vector<48x32xf32>
    tpu.vector_store %arg6[%c0_13, %c0_14], %22 {strides = array<i32>} : memref<48x32xf32, #tpu.memory_space<vmem>>, vector<48x32xf32>,
    return
  }
  func.func @transform_0(%arg0: i32) -> (i32, i32) {
    %c0_i32 = arith.constant 0 : i32
    %c0_i32_0 = arith.constant 0 : i32
    return %arg0, %c0_i32 : i32, i32
  }
  func.func @transform_1(%arg0: i32) -> (i32, i32) {
    %c0_i32 = arith.constant 0 : i32
    %c0_i32_0 = arith.constant 0 : i32
    %c0_i32_1 = arith.constant 0 : i32
    return %c0_i32, %c0_i32_0 : i32, i32
  }
  func.func @transform_2(%arg0: i32) -> (i32, i32) {
    %c0_i32 = arith.constant 0 : i32
    %c0_i32_0 = arith.constant 0 : i32
    %c0_i32_1 = arith.constant 0 : i32
    return %c0_i32, %c0_i32_0 : i32, i32
  }
  func.func @transform_3(%arg0: i32) -> (i32, i32) {
    %c0_i32 = arith.constant 0 : i32
    %c0_i32_0 = arith.constant 0 : i32
    %c0_i32_1 = arith.constant 0 : i32
    return %c0_i32, %c0_i32_0 : i32, i32
  }
  func.func @transform_4(%arg0: i32) -> (i32, i32) {
    %c0_i32 = arith.constant 0 : i32
    %c0_i32_0 = arith.constant 0 : i32
    %c0_i32_1 = arith.constant 0 : i32
    return %c0_i32, %c0_i32_0 : i32, i32
  }
  func.func @transform_5(%arg0: i32) -> (i32, i32) {
    %c0_i32 = arith.constant 0 : i32
    %c0_i32_0 = arith.constant 0 : i32
    return %arg0, %c0_i32 : i32, i32
  }
}

module attributes {stable_mosaic.version = 11 : i64} {
  func.func @_gn_kernel(%arg0: i32, %arg1: memref<1x48x32xf32, #tpu.memory_space<vmem>>, %arg2: memref<32x8xf32, #tpu.memory_space<vmem>>, %arg3: memref<8x32xf32, #tpu.memory_space<vmem>>, %arg4: memref<1x48x32xf32, #tpu.memory_space<vmem>>) attributes {dimension_semantics = [#tpu.dimension_semantics<parallel>], iteration_bounds = array<i64: 2>, scalar_prefetch = 0 : i64, scratch_operands = 0 : i64, tpu.core_type = #tpu.core_type<tc>, window_params = [{transform_indices = @transform_0, window_bounds = array<i64: 1, 48, 32>}, {pipeline_mode = #tpu.pipeline_mode<synchronous>, transform_indices = @transform_1, window_bounds = array<i64: 32, 8>}, {pipeline_mode = #tpu.pipeline_mode<synchronous>, transform_indices = @transform_2, window_bounds = array<i64: 8, 32>}, {transform_indices = @transform_3, window_bounds = array<i64: 1, 48, 32>}]} {
    %c0 = arith.constant 0 : index
    %c0_0 = arith.constant 0 : index
    %c0_1 = arith.constant 0 : index
    %0 = vector.load %arg1[%c0, %c0_0, %c0_1] : memref<1x48x32xf32, #tpu.memory_space<vmem>>, vector<1x48x32xf32>
    %1 = vector.shape_cast %0 : vector<1x48x32xf32> to vector<48x32xf32>
    %cst = arith.constant dense<0.000000e+00> : vector<32xf32>
    %2 = vector.multi_reduction <add>, %1, %cst [0] : vector<48x32xf32> to vector<32xf32>
    %3 = vector.shape_cast %2 : vector<32xf32> to vector<1x32xf32>
    %c0_2 = arith.constant 0 : index
    %c0_3 = arith.constant 0 : index
    %4 = vector.load %arg2[%c0_2, %c0_3] : memref<32x8xf32, #tpu.memory_space<vmem>>, vector<32x8xf32>
    %cst_4 = arith.constant dense<0.000000e+00> : vector<1x8xf32>
    %5 = tpu.matmul %3, %4, %cst_4 {dimension_numbers = #tpu.dot_dimension_numbers<[1], [0], [0], [1], [0, 0, 1, 1], [], []>} : vector<1x32xf32>, vector<32x8xf32>, vector<1x8xf32> -> vector<1x8xf32>
    %cst_5 = arith.constant 0.00520833349 : f32
    %6 = vector.broadcast %cst_5 : f32 to vector<1x8xf32>
    %7 = arith.mulf %5, %6 : vector<1x8xf32>
    %c0_6 = arith.constant 0 : index
    %c0_7 = arith.constant 0 : index
    %8 = vector.load %arg3[%c0_6, %c0_7] : memref<8x32xf32, #tpu.memory_space<vmem>>, vector<8x32xf32>
    %cst_8 = arith.constant dense<0.000000e+00> : vector<1x32xf32>
    %9 = tpu.matmul %7, %8, %cst_8 {dimension_numbers = #tpu.dot_dimension_numbers<[1], [0], [0], [1], [0, 0, 1, 1], [], []>} : vector<1x8xf32>, vector<8x32xf32>, vector<1x32xf32> -> vector<1x32xf32>
    %10 = vector.broadcast %9 : vector<1x32xf32> to vector<48x32xf32>
    %11 = arith.subf %1, %10 : vector<48x32xf32>
    %12 = arith.mulf %11, %11 : vector<48x32xf32>
    %cst_9 = arith.constant dense<0.000000e+00> : vector<32xf32>
    %13 = vector.multi_reduction <add>, %12, %cst_9 [0] : vector<48x32xf32> to vector<32xf32>
    %14 = vector.shape_cast %13 : vector<32xf32> to vector<1x32xf32>
    %c0_10 = arith.constant 0 : index
    %c0_11 = arith.constant 0 : index
    %15 = vector.load %arg2[%c0_10, %c0_11] : memref<32x8xf32, #tpu.memory_space<vmem>>, vector<32x8xf32>
    %cst_12 = arith.constant dense<0.000000e+00> : vector<1x8xf32>
    %16 = tpu.matmul %14, %15, %cst_12 {dimension_numbers = #tpu.dot_dimension_numbers<[1], [0], [0], [1], [0, 0, 1, 1], [], []>} : vector<1x32xf32>, vector<32x8xf32>, vector<1x8xf32> -> vector<1x8xf32>
    %cst_13 = arith.constant 0.00520833349 : f32
    %17 = vector.broadcast %cst_13 : f32 to vector<1x8xf32>
    %18 = arith.mulf %16, %17 : vector<1x8xf32>
    %c0_14 = arith.constant 0 : index
    %c0_15 = arith.constant 0 : index
    %19 = vector.load %arg3[%c0_14, %c0_15] : memref<8x32xf32, #tpu.memory_space<vmem>>, vector<8x32xf32>
    %cst_16 = arith.constant dense<0.000000e+00> : vector<1x32xf32>
    %20 = tpu.matmul %18, %19, %cst_16 {dimension_numbers = #tpu.dot_dimension_numbers<[1], [0], [0], [1], [0, 0, 1, 1], [], []>} : vector<1x8xf32>, vector<8x32xf32>, vector<1x32xf32> -> vector<1x32xf32>
    %cst_17 = arith.constant 9.99999974E-6 : f32
    %21 = vector.broadcast %cst_17 : f32 to vector<1x32xf32>
    %22 = arith.addf %20, %21 : vector<1x32xf32>
    %23 = math.rsqrt %22 : vector<1x32xf32>
    %24 = vector.broadcast %23 : vector<1x32xf32> to vector<48x32xf32>
    %25 = arith.mulf %11, %24 : vector<48x32xf32>
    %c0_18 = arith.constant 0 : index
    %c0_19 = arith.constant 0 : index
    %c0_20 = arith.constant 0 : index
    %26 = vector.load %arg4[%c0_18, %c0_19, %c0_20] : memref<1x48x32xf32, #tpu.memory_space<vmem>>, vector<1x48x32xf32>
    %27 = vector.shape_cast %26 : vector<1x48x32xf32> to vector<48x32xf32>
    %28 = vector.shape_cast %25 : vector<48x32xf32> to vector<1x48x32xf32>
    tpu.vector_store %arg4[%c0_18, %c0_19, %c0_20], %28 {strides = array<i32>} : memref<1x48x32xf32, #tpu.memory_space<vmem>>, vector<1x48x32xf32>,
    return
  }
  func.func @transform_0(%arg0: i32) -> (i32, i32, i32) {
    %c0_i32 = arith.constant 0 : i32
    %c0_i32_0 = arith.constant 0 : i32
    %c0_i32_1 = arith.constant 0 : i32
    return %arg0, %c0_i32, %c0_i32_0 : i32, i32, i32
  }
  func.func @transform_1(%arg0: i32) -> (i32, i32) {
    %c0_i32 = arith.constant 0 : i32
    %c0_i32_0 = arith.constant 0 : i32
    %c0_i32_1 = arith.constant 0 : i32
    return %c0_i32, %c0_i32_0 : i32, i32
  }
  func.func @transform_2(%arg0: i32) -> (i32, i32) {
    %c0_i32 = arith.constant 0 : i32
    %c0_i32_0 = arith.constant 0 : i32
    %c0_i32_1 = arith.constant 0 : i32
    return %c0_i32, %c0_i32_0 : i32, i32
  }
  func.func @transform_3(%arg0: i32) -> (i32, i32, i32) {
    %c0_i32 = arith.constant 0 : i32
    %c0_i32_0 = arith.constant 0 : i32
    %c0_i32_1 = arith.constant 0 : i32
    return %arg0, %c0_i32, %c0_i32_0 : i32, i32, i32
  }
}

module attributes {stable_mosaic.version = 11 : i64} {
  func.func @_mlp2_kernel(%arg0: i32, %arg1: memref<32x6xf32, #tpu.memory_space<vmem>>, %arg2: memref<6x128xf32, #tpu.memory_space<vmem>>, %arg3: memref<1x128xf32, #tpu.memory_space<vmem>>, %arg4: memref<128x32xf32, #tpu.memory_space<vmem>>, %arg5: memref<1x32xf32, #tpu.memory_space<vmem>>, %arg6: memref<32x32xf32, #tpu.memory_space<vmem>>) attributes {dimension_semantics = [#tpu.dimension_semantics<parallel>], iteration_bounds = array<i64: 2>, scalar_prefetch = 0 : i64, scratch_operands = 0 : i64, tpu.core_type = #tpu.core_type<tc>, window_params = [{transform_indices = @transform_0, window_bounds = array<i64: 32, 6>}, {pipeline_mode = #tpu.pipeline_mode<synchronous>, transform_indices = @transform_1, window_bounds = array<i64: 6, 128>}, {pipeline_mode = #tpu.pipeline_mode<synchronous>, transform_indices = @transform_2, window_bounds = array<i64: 1, 128>}, {pipeline_mode = #tpu.pipeline_mode<synchronous>, transform_indices = @transform_3, window_bounds = array<i64: 128, 32>}, {pipeline_mode = #tpu.pipeline_mode<synchronous>, transform_indices = @transform_4, window_bounds = array<i64: 1, 32>}, {transform_indices = @transform_5, window_bounds = array<i64: 32, 32>}]} {
    %c0 = arith.constant 0 : index
    %c0_0 = arith.constant 0 : index
    %0 = vector.load %arg1[%c0, %c0_0] : memref<32x6xf32, #tpu.memory_space<vmem>>, vector<32x6xf32>
    %c0_1 = arith.constant 0 : index
    %c0_2 = arith.constant 0 : index
    %1 = vector.load %arg2[%c0_1, %c0_2] : memref<6x128xf32, #tpu.memory_space<vmem>>, vector<6x128xf32>
    %cst = arith.constant dense<0.000000e+00> : vector<32x128xf32>
    %2 = tpu.matmul %0, %1, %cst {dimension_numbers = #tpu.dot_dimension_numbers<[1], [0], [0], [1], [0, 0, 1, 1], [], []>} : vector<32x6xf32>, vector<6x128xf32>, vector<32x128xf32> -> vector<32x128xf32>
    %c0_3 = arith.constant 0 : index
    %c0_4 = arith.constant 0 : index
    %3 = vector.load %arg3[%c0_3, %c0_4] : memref<1x128xf32, #tpu.memory_space<vmem>>, vector<1x128xf32>
    %4 = vector.broadcast %3 : vector<1x128xf32> to vector<32x128xf32>
    %5 = arith.addf %2, %4 : vector<32x128xf32>
    %cst_5 = arith.constant 0.000000e+00 : f32
    %6 = vector.broadcast %cst_5 : f32 to vector<32x128xf32>
    %7 = arith.maximumf %5, %6 : vector<32x128xf32>
    %8 = math.absf %5 : vector<32x128xf32>
    %cst_6 = arith.constant 0.000000e+00 : f32
    %9 = vector.broadcast %cst_6 : f32 to vector<32x128xf32>
    %10 = arith.subf %9, %8 : vector<32x128xf32>
    %11 = math.exp %10 : vector<32x128xf32>
    %cst_7 = arith.constant 1.000000e+00 : f32
    %12 = vector.broadcast %cst_7 : f32 to vector<32x128xf32>
    %13 = arith.addf %12, %11 : vector<32x128xf32>
    %14 = math.log %13 : vector<32x128xf32>
    %15 = arith.addf %7, %14 : vector<32x128xf32>
    %16 = math.tanh %15 : vector<32x128xf32>
    %17 = arith.mulf %5, %16 : vector<32x128xf32>
    %c0_8 = arith.constant 0 : index
    %c0_9 = arith.constant 0 : index
    %18 = vector.load %arg4[%c0_8, %c0_9] : memref<128x32xf32, #tpu.memory_space<vmem>>, vector<128x32xf32>
    %cst_10 = arith.constant dense<0.000000e+00> : vector<32x32xf32>
    %19 = tpu.matmul %17, %18, %cst_10 {dimension_numbers = #tpu.dot_dimension_numbers<[1], [0], [0], [1], [0, 0, 1, 1], [], []>} : vector<32x128xf32>, vector<128x32xf32>, vector<32x32xf32> -> vector<32x32xf32>
    %c0_11 = arith.constant 0 : index
    %c0_12 = arith.constant 0 : index
    %20 = vector.load %arg5[%c0_11, %c0_12] : memref<1x32xf32, #tpu.memory_space<vmem>>, vector<1x32xf32>
    %21 = vector.broadcast %20 : vector<1x32xf32> to vector<32x32xf32>
    %22 = arith.addf %19, %21 : vector<32x32xf32>
    %c0_13 = arith.constant 0 : index
    %c0_14 = arith.constant 0 : index
    %23 = vector.load %arg6[%c0_13, %c0_14] : memref<32x32xf32, #tpu.memory_space<vmem>>, vector<32x32xf32>
    tpu.vector_store %arg6[%c0_13, %c0_14], %22 {strides = array<i32>} : memref<32x32xf32, #tpu.memory_space<vmem>>, vector<32x32xf32>,
    return
  }
  func.func @transform_0(%arg0: i32) -> (i32, i32) {
    %c0_i32 = arith.constant 0 : i32
    %c0_i32_0 = arith.constant 0 : i32
    return %arg0, %c0_i32 : i32, i32
  }
  func.func @transform_1(%arg0: i32) -> (i32, i32) {
    %c0_i32 = arith.constant 0 : i32
    %c0_i32_0 = arith.constant 0 : i32
    %c0_i32_1 = arith.constant 0 : i32
    return %c0_i32, %c0_i32_0 : i32, i32
  }
  func.func @transform_2(%arg0: i32) -> (i32, i32) {
    %c0_i32 = arith.constant 0 : i32
    %c0_i32_0 = arith.constant 0 : i32
    %c0_i32_1 = arith.constant 0 : i32
    return %c0_i32, %c0_i32_0 : i32, i32
  }
  func.func @transform_3(%arg0: i32) -> (i32, i32) {
    %c0_i32 = arith.constant 0 : i32
    %c0_i32_0 = arith.constant 0 : i32
    %c0_i32_1 = arith.constant 0 : i32
    return %c0_i32, %c0_i32_0 : i32, i32
  }
  func.func @transform_4(%arg0: i32) -> (i32, i32) {
    %c0_i32 = arith.constant 0 : i32
    %c0_i32_0 = arith.constant 0 : i32
    %c0_i32_1 = arith.constant 0 : i32
    return %c0_i32, %c0_i32_0 : i32, i32
  }
  func.func @transform_5(%arg0: i32) -> (i32, i32) {
    %c0_i32 = arith.constant 0 : i32
    %c0_i32_0 = arith.constant 0 : i32
    return %arg0, %c0_i32 : i32, i32
  }
}

module attributes {stable_mosaic.version = 11 : i64} {
  func.func @_gn_kernel(%arg0: i32, %arg1: memref<1x32x32xf32, #tpu.memory_space<vmem>>, %arg2: memref<32x8xf32, #tpu.memory_space<vmem>>, %arg3: memref<8x32xf32, #tpu.memory_space<vmem>>, %arg4: memref<1x32x32xf32, #tpu.memory_space<vmem>>) attributes {dimension_semantics = [#tpu.dimension_semantics<parallel>], iteration_bounds = array<i64: 2>, scalar_prefetch = 0 : i64, scratch_operands = 0 : i64, tpu.core_type = #tpu.core_type<tc>, window_params = [{transform_indices = @transform_0, window_bounds = array<i64: 1, 32, 32>}, {pipeline_mode = #tpu.pipeline_mode<synchronous>, transform_indices = @transform_1, window_bounds = array<i64: 32, 8>}, {pipeline_mode = #tpu.pipeline_mode<synchronous>, transform_indices = @transform_2, window_bounds = array<i64: 8, 32>}, {transform_indices = @transform_3, window_bounds = array<i64: 1, 32, 32>}]} {
    %c0 = arith.constant 0 : index
    %c0_0 = arith.constant 0 : index
    %c0_1 = arith.constant 0 : index
    %0 = vector.load %arg1[%c0, %c0_0, %c0_1] : memref<1x32x32xf32, #tpu.memory_space<vmem>>, vector<1x32x32xf32>
    %1 = vector.shape_cast %0 : vector<1x32x32xf32> to vector<32x32xf32>
    %cst = arith.constant dense<0.000000e+00> : vector<32xf32>
    %2 = vector.multi_reduction <add>, %1, %cst [0] : vector<32x32xf32> to vector<32xf32>
    %3 = vector.shape_cast %2 : vector<32xf32> to vector<1x32xf32>
    %c0_2 = arith.constant 0 : index
    %c0_3 = arith.constant 0 : index
    %4 = vector.load %arg2[%c0_2, %c0_3] : memref<32x8xf32, #tpu.memory_space<vmem>>, vector<32x8xf32>
    %cst_4 = arith.constant dense<0.000000e+00> : vector<1x8xf32>
    %5 = tpu.matmul %3, %4, %cst_4 {dimension_numbers = #tpu.dot_dimension_numbers<[1], [0], [0], [1], [0, 0, 1, 1], [], []>} : vector<1x32xf32>, vector<32x8xf32>, vector<1x8xf32> -> vector<1x8xf32>
    %cst_5 = arith.constant 7.812500e-03 : f32
    %6 = vector.broadcast %cst_5 : f32 to vector<1x8xf32>
    %7 = arith.mulf %5, %6 : vector<1x8xf32>
    %c0_6 = arith.constant 0 : index
    %c0_7 = arith.constant 0 : index
    %8 = vector.load %arg3[%c0_6, %c0_7] : memref<8x32xf32, #tpu.memory_space<vmem>>, vector<8x32xf32>
    %cst_8 = arith.constant dense<0.000000e+00> : vector<1x32xf32>
    %9 = tpu.matmul %7, %8, %cst_8 {dimension_numbers = #tpu.dot_dimension_numbers<[1], [0], [0], [1], [0, 0, 1, 1], [], []>} : vector<1x8xf32>, vector<8x32xf32>, vector<1x32xf32> -> vector<1x32xf32>
    %10 = vector.broadcast %9 : vector<1x32xf32> to vector<32x32xf32>
    %11 = arith.subf %1, %10 : vector<32x32xf32>
    %12 = arith.mulf %11, %11 : vector<32x32xf32>
    %cst_9 = arith.constant dense<0.000000e+00> : vector<32xf32>
    %13 = vector.multi_reduction <add>, %12, %cst_9 [0] : vector<32x32xf32> to vector<32xf32>
    %14 = vector.shape_cast %13 : vector<32xf32> to vector<1x32xf32>
    %c0_10 = arith.constant 0 : index
    %c0_11 = arith.constant 0 : index
    %15 = vector.load %arg2[%c0_10, %c0_11] : memref<32x8xf32, #tpu.memory_space<vmem>>, vector<32x8xf32>
    %cst_12 = arith.constant dense<0.000000e+00> : vector<1x8xf32>
    %16 = tpu.matmul %14, %15, %cst_12 {dimension_numbers = #tpu.dot_dimension_numbers<[1], [0], [0], [1], [0, 0, 1, 1], [], []>} : vector<1x32xf32>, vector<32x8xf32>, vector<1x8xf32> -> vector<1x8xf32>
    %cst_13 = arith.constant 7.812500e-03 : f32
    %17 = vector.broadcast %cst_13 : f32 to vector<1x8xf32>
    %18 = arith.mulf %16, %17 : vector<1x8xf32>
    %c0_14 = arith.constant 0 : index
    %c0_15 = arith.constant 0 : index
    %19 = vector.load %arg3[%c0_14, %c0_15] : memref<8x32xf32, #tpu.memory_space<vmem>>, vector<8x32xf32>
    %cst_16 = arith.constant dense<0.000000e+00> : vector<1x32xf32>
    %20 = tpu.matmul %18, %19, %cst_16 {dimension_numbers = #tpu.dot_dimension_numbers<[1], [0], [0], [1], [0, 0, 1, 1], [], []>} : vector<1x8xf32>, vector<8x32xf32>, vector<1x32xf32> -> vector<1x32xf32>
    %cst_17 = arith.constant 9.99999974E-6 : f32
    %21 = vector.broadcast %cst_17 : f32 to vector<1x32xf32>
    %22 = arith.addf %20, %21 : vector<1x32xf32>
    %23 = math.rsqrt %22 : vector<1x32xf32>
    %24 = vector.broadcast %23 : vector<1x32xf32> to vector<32x32xf32>
    %25 = arith.mulf %11, %24 : vector<32x32xf32>
    %c0_18 = arith.constant 0 : index
    %c0_19 = arith.constant 0 : index
    %c0_20 = arith.constant 0 : index
    %26 = vector.load %arg4[%c0_18, %c0_19, %c0_20] : memref<1x32x32xf32, #tpu.memory_space<vmem>>, vector<1x32x32xf32>
    %27 = vector.shape_cast %26 : vector<1x32x32xf32> to vector<32x32xf32>
    %28 = vector.shape_cast %25 : vector<32x32xf32> to vector<1x32x32xf32>
    tpu.vector_store %arg4[%c0_18, %c0_19, %c0_20], %28 {strides = array<i32>} : memref<1x32x32xf32, #tpu.memory_space<vmem>>, vector<1x32x32xf32>,
    return
  }
  func.func @transform_0(%arg0: i32) -> (i32, i32, i32) {
    %c0_i32 = arith.constant 0 : i32
    %c0_i32_0 = arith.constant 0 : i32
    %c0_i32_1 = arith.constant 0 : i32
    return %arg0, %c0_i32, %c0_i32_0 : i32, i32, i32
  }
  func.func @transform_1(%arg0: i32) -> (i32, i32) {
    %c0_i32 = arith.constant 0 : i32
    %c0_i32_0 = arith.constant 0 : i32
    %c0_i32_1 = arith.constant 0 : i32
    return %c0_i32, %c0_i32_0 : i32, i32
  }
  func.func @transform_2(%arg0: i32) -> (i32, i32) {
    %c0_i32 = arith.constant 0 : i32
    %c0_i32_0 = arith.constant 0 : i32
    %c0_i32_1 = arith.constant 0 : i32
    return %c0_i32, %c0_i32_0 : i32, i32
  }
  func.func @transform_3(%arg0: i32) -> (i32, i32, i32) {
    %c0_i32 = arith.constant 0 : i32
    %c0_i32_0 = arith.constant 0 : i32
    %c0_i32_1 = arith.constant 0 : i32
    return %arg0, %c0_i32, %c0_i32_0 : i32, i32, i32
  }
}

module attributes {stable_mosaic.version = 11 : i64} {
  func.func @_cross_attn_kernel(%arg0: i32, %arg1: memref<32x32xf32, #tpu.memory_space<vmem>>, %arg2: memref<32x96xf32, #tpu.memory_space<vmem>>, %arg3: memref<48x32xf32, #tpu.memory_space<vmem>>, %arg4: memref<48x192xf32, #tpu.memory_space<vmem>>, %arg5: memref<32x96xf32, #tpu.memory_space<vmem>>, %arg6: memref<1x96xf32, #tpu.memory_space<vmem>>, %arg7: memref<32x192xf32, #tpu.memory_space<vmem>>, %arg8: memref<1x192xf32, #tpu.memory_space<vmem>>, %arg9: memref<96x32xf32, #tpu.memory_space<vmem>>, %arg10: memref<1x32xf32, #tpu.memory_space<vmem>>, %arg11: memref<32x32xf32, #tpu.memory_space<vmem>>) attributes {dimension_semantics = [#tpu.dimension_semantics<parallel>], iteration_bounds = array<i64: 2>, scalar_prefetch = 0 : i64, scratch_operands = 0 : i64, tpu.core_type = #tpu.core_type<tc>, window_params = [{transform_indices = @transform_0, window_bounds = array<i64: 32, 32>}, {transform_indices = @transform_1, window_bounds = array<i64: 32, 96>}, {transform_indices = @transform_2, window_bounds = array<i64: 48, 32>}, {transform_indices = @transform_3, window_bounds = array<i64: 48, 192>}, {pipeline_mode = #tpu.pipeline_mode<synchronous>, transform_indices = @transform_4, window_bounds = array<i64: 32, 96>}, {pipeline_mode = #tpu.pipeline_mode<synchronous>, transform_indices = @transform_5, window_bounds = array<i64: 1, 96>}, {pipeline_mode = #tpu.pipeline_mode<synchronous>, transform_indices = @transform_6, window_bounds = array<i64: 32, 192>}, {pipeline_mode = #tpu.pipeline_mode<synchronous>, transform_indices = @transform_7, window_bounds = array<i64: 1, 192>}, {pipeline_mode = #tpu.pipeline_mode<synchronous>, transform_indices = @transform_8, window_bounds = array<i64: 96, 32>}, {pipeline_mode = #tpu.pipeline_mode<synchronous>, transform_indices = @transform_9, window_bounds = array<i64: 1, 32>}, {transform_indices = @transform_10, window_bounds = array<i64: 32, 32>}]} {
    %c0 = arith.constant 0 : index
    %c0_0 = arith.constant 0 : index
    %0 = vector.load %arg1[%c0, %c0_0] : memref<32x32xf32, #tpu.memory_space<vmem>>, vector<32x32xf32>
    %c0_1 = arith.constant 0 : index
    %c0_2 = arith.constant 0 : index
    %1 = vector.load %arg5[%c0_1, %c0_2] : memref<32x96xf32, #tpu.memory_space<vmem>>, vector<32x96xf32>
    %cst = arith.constant dense<0.000000e+00> : vector<32x96xf32>
    %2 = tpu.matmul %0, %1, %cst {dimension_numbers = #tpu.dot_dimension_numbers<[1], [0], [0], [1], [0, 0, 1, 1], [], []>} : vector<32x32xf32>, vector<32x96xf32>, vector<32x96xf32> -> vector<32x96xf32>
    %c0_3 = arith.constant 0 : index
    %c0_4 = arith.constant 0 : index
    %3 = vector.load %arg6[%c0_3, %c0_4] : memref<1x96xf32, #tpu.memory_space<vmem>>, vector<1x96xf32>
    %4 = vector.broadcast %3 : vector<1x96xf32> to vector<32x96xf32>
    %5 = arith.addf %2, %4 : vector<32x96xf32>
    %c0_5 = arith.constant 0 : index
    %c0_6 = arith.constant 0 : index
    %6 = vector.load %arg2[%c0_5, %c0_6] : memref<32x96xf32, #tpu.memory_space<vmem>>, vector<32x96xf32>
    %7 = arith.addf %5, %6 : vector<32x96xf32>
    %c0_7 = arith.constant 0 : index
    %c0_8 = arith.constant 0 : index
    %8 = vector.load %arg3[%c0_7, %c0_8] : memref<48x32xf32, #tpu.memory_space<vmem>>, vector<48x32xf32>
    %c0_9 = arith.constant 0 : index
    %c0_10 = arith.constant 0 : index
    %9 = vector.load %arg7[%c0_9, %c0_10] : memref<32x192xf32, #tpu.memory_space<vmem>>, vector<32x192xf32>
    %cst_11 = arith.constant dense<0.000000e+00> : vector<48x192xf32>
    %10 = tpu.matmul %8, %9, %cst_11 {dimension_numbers = #tpu.dot_dimension_numbers<[1], [0], [0], [1], [0, 0, 1, 1], [], []>} : vector<48x32xf32>, vector<32x192xf32>, vector<48x192xf32> -> vector<48x192xf32>
    %c0_12 = arith.constant 0 : index
    %c0_13 = arith.constant 0 : index
    %11 = vector.load %arg8[%c0_12, %c0_13] : memref<1x192xf32, #tpu.memory_space<vmem>>, vector<1x192xf32>
    %12 = vector.broadcast %11 : vector<1x192xf32> to vector<48x192xf32>
    %13 = arith.addf %10, %12 : vector<48x192xf32>
    %c0_14 = arith.constant 0 : index
    %c0_15 = arith.constant 0 : index
    %14 = vector.load %arg4[%c0_14, %c0_15] : memref<48x192xf32, #tpu.memory_space<vmem>>, vector<48x192xf32>
    %15 = arith.addf %13, %14 : vector<48x192xf32>
    %16 = tpu.iota {dimensions = array<i32: 0>} : vector<32x48xi32>
    %17 = arith.sitofp %16 : vector<32x48xi32> to vector<32x48xf32>
    %18 = tpu.iota {dimensions = array<i32: 1>} : vector<32x48xi32>
    %19 = arith.sitofp %18 : vector<32x48xi32> to vector<32x48xf32>
    %cst_16 = arith.constant 5.000000e-01 : f32
    %20 = vector.broadcast %cst_16 : f32 to vector<32x48xf32>
    %21 = arith.addf %17, %20 : vector<32x48xf32>
    %cst_17 = arith.constant 1.250000e-01 : f32
    %22 = vector.broadcast %cst_17 : f32 to vector<32x48xf32>
    %23 = arith.mulf %21, %22 : vector<32x48xf32>
    %24 = math.floor %23 : vector<32x48xf32>
    %cst_18 = arith.constant 5.000000e-01 : f32
    %25 = vector.broadcast %cst_18 : f32 to vector<32x48xf32>
    %26 = arith.addf %19, %25 : vector<32x48xf32>
    %cst_19 = arith.constant 0.0833333358 : f32
    %27 = vector.broadcast %cst_19 : f32 to vector<32x48xf32>
    %28 = arith.mulf %26, %27 : vector<32x48xf32>
    %29 = math.floor %28 : vector<32x48xf32>
    %30 = arith.cmpf oeq, %24, %29 : vector<32x48xf32>
    %31 = vector.extract_strided_slice %7 {offsets = [0, 0], sizes = [32, 32], strides = [1, 1]} : vector<32x96xf32> to vector<32x32xf32>
    %32 = vector.extract_strided_slice %15 {offsets = [0, 0], sizes = [48, 32], strides = [1, 1]} : vector<48x192xf32> to vector<48x32xf32>
    %33 = vector.extract_strided_slice %15 {offsets = [0, 96], sizes = [48, 32], strides = [1, 1]} : vector<48x192xf32> to vector<48x32xf32>
    %34 = tpu.transpose %32, [1, 0] : vector<48x32xf32> -> vector<32x48xf32>
    %cst_20 = arith.constant dense<0.000000e+00> : vector<32x48xf32>
    %35 = tpu.matmul %31, %34, %cst_20 {dimension_numbers = #tpu.dot_dimension_numbers<[1], [0], [0], [1], [0, 0, 1, 1], [], []>} : vector<32x32xf32>, vector<32x48xf32>, vector<32x48xf32> -> vector<32x48xf32>
    %cst_21 = arith.constant -1.000000e+30 : f32
    %36 = vector.broadcast %cst_21 : f32 to vector<32x48xf32>
    %37 = arith.select %30, %35, %36 : vector<32x48xi1>, vector<32x48xf32>
    %cst_22 = arith.constant dense<0xFF800000> : vector<32xf32>
    %38 = vector.multi_reduction <maximumf>, %37, %cst_22 [1] : vector<32x48xf32> to vector<32xf32>
    %39 = vector.shape_cast %38 : vector<32xf32> to vector<32x1xf32>
    %40 = vector.broadcast %39 : vector<32x1xf32> to vector<32x48xf32>
    %41 = arith.subf %37, %40 : vector<32x48xf32>
    %42 = math.exp %41 : vector<32x48xf32>
    %cst_23 = arith.constant dense<0.000000e+00> : vector<32xf32>
    %43 = vector.multi_reduction <add>, %42, %cst_23 [1] : vector<32x48xf32> to vector<32xf32>
    %44 = vector.shape_cast %43 : vector<32xf32> to vector<32x1xf32>
    %45 = tpu.reciprocal %44 {approx = true} : vector<32x1xf32> -> vector<32x1xf32>
    %46 = vector.broadcast %45 : vector<32x1xf32> to vector<32x48xf32>
    %47 = arith.mulf %42, %46 : vector<32x48xf32>
    %cst_24 = arith.constant dense<0.000000e+00> : vector<32x32xf32>
    %48 = tpu.matmul %47, %33, %cst_24 {dimension_numbers = #tpu.dot_dimension_numbers<[1], [0], [0], [1], [0, 0, 1, 1], [], []>} : vector<32x48xf32>, vector<48x32xf32>, vector<32x32xf32> -> vector<32x32xf32>
    %49 = vector.extract_strided_slice %7 {offsets = [0, 32], sizes = [32, 32], strides = [1, 1]} : vector<32x96xf32> to vector<32x32xf32>
    %50 = vector.extract_strided_slice %15 {offsets = [0, 32], sizes = [48, 32], strides = [1, 1]} : vector<48x192xf32> to vector<48x32xf32>
    %51 = vector.extract_strided_slice %15 {offsets = [0, 128], sizes = [48, 32], strides = [1, 1]} : vector<48x192xf32> to vector<48x32xf32>
    %52 = tpu.transpose %50, [1, 0] : vector<48x32xf32> -> vector<32x48xf32>
    %cst_25 = arith.constant dense<0.000000e+00> : vector<32x48xf32>
    %53 = tpu.matmul %49, %52, %cst_25 {dimension_numbers = #tpu.dot_dimension_numbers<[1], [0], [0], [1], [0, 0, 1, 1], [], []>} : vector<32x32xf32>, vector<32x48xf32>, vector<32x48xf32> -> vector<32x48xf32>
    %cst_26 = arith.constant -1.000000e+30 : f32
    %54 = vector.broadcast %cst_26 : f32 to vector<32x48xf32>
    %55 = arith.select %30, %53, %54 : vector<32x48xi1>, vector<32x48xf32>
    %cst_27 = arith.constant dense<0xFF800000> : vector<32xf32>
    %56 = vector.multi_reduction <maximumf>, %55, %cst_27 [1] : vector<32x48xf32> to vector<32xf32>
    %57 = vector.shape_cast %56 : vector<32xf32> to vector<32x1xf32>
    %58 = vector.broadcast %57 : vector<32x1xf32> to vector<32x48xf32>
    %59 = arith.subf %55, %58 : vector<32x48xf32>
    %60 = math.exp %59 : vector<32x48xf32>
    %cst_28 = arith.constant dense<0.000000e+00> : vector<32xf32>
    %61 = vector.multi_reduction <add>, %60, %cst_28 [1] : vector<32x48xf32> to vector<32xf32>
    %62 = vector.shape_cast %61 : vector<32xf32> to vector<32x1xf32>
    %63 = tpu.reciprocal %62 {approx = true} : vector<32x1xf32> -> vector<32x1xf32>
    %64 = vector.broadcast %63 : vector<32x1xf32> to vector<32x48xf32>
    %65 = arith.mulf %60, %64 : vector<32x48xf32>
    %cst_29 = arith.constant dense<0.000000e+00> : vector<32x32xf32>
    %66 = tpu.matmul %65, %51, %cst_29 {dimension_numbers = #tpu.dot_dimension_numbers<[1], [0], [0], [1], [0, 0, 1, 1], [], []>} : vector<32x48xf32>, vector<48x32xf32>, vector<32x32xf32> -> vector<32x32xf32>
    %67 = vector.extract_strided_slice %7 {offsets = [0, 64], sizes = [32, 32], strides = [1, 1]} : vector<32x96xf32> to vector<32x32xf32>
    %68 = vector.extract_strided_slice %15 {offsets = [0, 64], sizes = [48, 32], strides = [1, 1]} : vector<48x192xf32> to vector<48x32xf32>
    %69 = vector.extract_strided_slice %15 {offsets = [0, 160], sizes = [48, 32], strides = [1, 1]} : vector<48x192xf32> to vector<48x32xf32>
    %70 = tpu.transpose %68, [1, 0] : vector<48x32xf32> -> vector<32x48xf32>
    %cst_30 = arith.constant dense<0.000000e+00> : vector<32x48xf32>
    %71 = tpu.matmul %67, %70, %cst_30 {dimension_numbers = #tpu.dot_dimension_numbers<[1], [0], [0], [1], [0, 0, 1, 1], [], []>} : vector<32x32xf32>, vector<32x48xf32>, vector<32x48xf32> -> vector<32x48xf32>
    %cst_31 = arith.constant -1.000000e+30 : f32
    %72 = vector.broadcast %cst_31 : f32 to vector<32x48xf32>
    %73 = arith.select %30, %71, %72 : vector<32x48xi1>, vector<32x48xf32>
    %cst_32 = arith.constant dense<0xFF800000> : vector<32xf32>
    %74 = vector.multi_reduction <maximumf>, %73, %cst_32 [1] : vector<32x48xf32> to vector<32xf32>
    %75 = vector.shape_cast %74 : vector<32xf32> to vector<32x1xf32>
    %76 = vector.broadcast %75 : vector<32x1xf32> to vector<32x48xf32>
    %77 = arith.subf %73, %76 : vector<32x48xf32>
    %78 = math.exp %77 : vector<32x48xf32>
    %cst_33 = arith.constant dense<0.000000e+00> : vector<32xf32>
    %79 = vector.multi_reduction <add>, %78, %cst_33 [1] : vector<32x48xf32> to vector<32xf32>
    %80 = vector.shape_cast %79 : vector<32xf32> to vector<32x1xf32>
    %81 = tpu.reciprocal %80 {approx = true} : vector<32x1xf32> -> vector<32x1xf32>
    %82 = vector.broadcast %81 : vector<32x1xf32> to vector<32x48xf32>
    %83 = arith.mulf %78, %82 : vector<32x48xf32>
    %cst_34 = arith.constant dense<0.000000e+00> : vector<32x32xf32>
    %84 = tpu.matmul %83, %69, %cst_34 {dimension_numbers = #tpu.dot_dimension_numbers<[1], [0], [0], [1], [0, 0, 1, 1], [], []>} : vector<32x48xf32>, vector<48x32xf32>, vector<32x32xf32> -> vector<32x32xf32>
    %85 = tpu.concatenate %48, %66, %84 in 1 : vector<32x32xf32>, vector<32x32xf32>, vector<32x32xf32> -> vector<32x96xf32>
    %c0_35 = arith.constant 0 : index
    %c0_36 = arith.constant 0 : index
    %86 = vector.load %arg9[%c0_35, %c0_36] : memref<96x32xf32, #tpu.memory_space<vmem>>, vector<96x32xf32>
    %cst_37 = arith.constant dense<0.000000e+00> : vector<32x32xf32>
    %87 = tpu.matmul %85, %86, %cst_37 {dimension_numbers = #tpu.dot_dimension_numbers<[1], [0], [0], [1], [0, 0, 1, 1], [], []>} : vector<32x96xf32>, vector<96x32xf32>, vector<32x32xf32> -> vector<32x32xf32>
    %c0_38 = arith.constant 0 : index
    %c0_39 = arith.constant 0 : index
    %88 = vector.load %arg10[%c0_38, %c0_39] : memref<1x32xf32, #tpu.memory_space<vmem>>, vector<1x32xf32>
    %89 = vector.broadcast %88 : vector<1x32xf32> to vector<32x32xf32>
    %90 = arith.addf %87, %89 : vector<32x32xf32>
    %c0_40 = arith.constant 0 : index
    %c0_41 = arith.constant 0 : index
    %91 = vector.load %arg11[%c0_40, %c0_41] : memref<32x32xf32, #tpu.memory_space<vmem>>, vector<32x32xf32>
    tpu.vector_store %arg11[%c0_40, %c0_41], %90 {strides = array<i32>} : memref<32x32xf32, #tpu.memory_space<vmem>>, vector<32x32xf32>,
    return
  }
  func.func @transform_0(%arg0: i32) -> (i32, i32) {
    %c0_i32 = arith.constant 0 : i32
    %c0_i32_0 = arith.constant 0 : i32
    return %arg0, %c0_i32 : i32, i32
  }
  func.func @transform_1(%arg0: i32) -> (i32, i32) {
    %c0_i32 = arith.constant 0 : i32
    %c0_i32_0 = arith.constant 0 : i32
    return %arg0, %c0_i32 : i32, i32
  }
  func.func @transform_2(%arg0: i32) -> (i32, i32) {
    %c0_i32 = arith.constant 0 : i32
    %c0_i32_0 = arith.constant 0 : i32
    return %arg0, %c0_i32 : i32, i32
  }
  func.func @transform_3(%arg0: i32) -> (i32, i32) {
    %c0_i32 = arith.constant 0 : i32
    %c0_i32_0 = arith.constant 0 : i32
    return %arg0, %c0_i32 : i32, i32
  }
  func.func @transform_4(%arg0: i32) -> (i32, i32) {
    %c0_i32 = arith.constant 0 : i32
    %c0_i32_0 = arith.constant 0 : i32
    %c0_i32_1 = arith.constant 0 : i32
    return %c0_i32, %c0_i32_0 : i32, i32
  }
  func.func @transform_5(%arg0: i32) -> (i32, i32) {
    %c0_i32 = arith.constant 0 : i32
    %c0_i32_0 = arith.constant 0 : i32
    %c0_i32_1 = arith.constant 0 : i32
    return %c0_i32, %c0_i32_0 : i32, i32
  }
  func.func @transform_6(%arg0: i32) -> (i32, i32) {
    %c0_i32 = arith.constant 0 : i32
    %c0_i32_0 = arith.constant 0 : i32
    %c0_i32_1 = arith.constant 0 : i32
    return %c0_i32, %c0_i32_0 : i32, i32
  }
  func.func @transform_7(%arg0: i32) -> (i32, i32) {
    %c0_i32 = arith.constant 0 : i32
    %c0_i32_0 = arith.constant 0 : i32
    %c0_i32_1 = arith.constant 0 : i32
    return %c0_i32, %c0_i32_0 : i32, i32
  }
  func.func @transform_8(%arg0: i32) -> (i32, i32) {
    %c0_i32 = arith.constant 0 : i32
    %c0_i32_0 = arith.constant 0 : i32
    %c0_i32_1 = arith.constant 0 : i32
    return %c0_i32, %c0_i32_0 : i32, i32
  }
  func.func @transform_9(%arg0: i32) -> (i32, i32) {
    %c0_i32 = arith.constant 0 : i32
    %c0_i32_0 = arith.constant 0 : i32
    %c0_i32_1 = arith.constant 0 : i32
    return %c0_i32, %c0_i32_0 : i32, i32
  }
  func.func @transform_10(%arg0: i32) -> (i32, i32) {
    %c0_i32 = arith.constant 0 : i32
    %c0_i32_0 = arith.constant 0 : i32
    return %arg0, %c0_i32 : i32, i32
  }
}

module attributes {stable_mosaic.version = 11 : i64} {
  func.func @_self_attn_kernel(%arg0: i32, %arg1: memref<32x32xf32, #tpu.memory_space<vmem>>, %arg2: memref<32x288xf32, #tpu.memory_space<vmem>>, %arg3: memref<32x288xf32, #tpu.memory_space<vmem>>, %arg4: memref<1x288xf32, #tpu.memory_space<vmem>>, %arg5: memref<96x32xf32, #tpu.memory_space<vmem>>, %arg6: memref<1x32xf32, #tpu.memory_space<vmem>>, %arg7: memref<32x32xf32, #tpu.memory_space<vmem>>, %arg8: memref<32x32xf32, #tpu.memory_space<vmem>>) attributes {dimension_semantics = [#tpu.dimension_semantics<parallel>], iteration_bounds = array<i64: 2>, scalar_prefetch = 0 : i64, scratch_operands = 0 : i64, tpu.core_type = #tpu.core_type<tc>, window_params = [{transform_indices = @transform_0, window_bounds = array<i64: 32, 32>}, {transform_indices = @transform_1, window_bounds = array<i64: 32, 288>}, {pipeline_mode = #tpu.pipeline_mode<synchronous>, transform_indices = @transform_2, window_bounds = array<i64: 32, 288>}, {pipeline_mode = #tpu.pipeline_mode<synchronous>, transform_indices = @transform_3, window_bounds = array<i64: 1, 288>}, {pipeline_mode = #tpu.pipeline_mode<synchronous>, transform_indices = @transform_4, window_bounds = array<i64: 96, 32>}, {pipeline_mode = #tpu.pipeline_mode<synchronous>, transform_indices = @transform_5, window_bounds = array<i64: 1, 32>}, {transform_indices = @transform_6, window_bounds = array<i64: 32, 32>}, {transform_indices = @transform_7, window_bounds = array<i64: 32, 32>}]} {
    %c0 = arith.constant 0 : index
    %c0_0 = arith.constant 0 : index
    %0 = vector.load %arg1[%c0, %c0_0] : memref<32x32xf32, #tpu.memory_space<vmem>>, vector<32x32xf32>
    %c0_1 = arith.constant 0 : index
    %c0_2 = arith.constant 0 : index
    %1 = vector.load %arg3[%c0_1, %c0_2] : memref<32x288xf32, #tpu.memory_space<vmem>>, vector<32x288xf32>
    %cst = arith.constant dense<0.000000e+00> : vector<32x288xf32>
    %2 = tpu.matmul %0, %1, %cst {dimension_numbers = #tpu.dot_dimension_numbers<[1], [0], [0], [1], [0, 0, 1, 1], [], []>} : vector<32x32xf32>, vector<32x288xf32>, vector<32x288xf32> -> vector<32x288xf32>
    %c0_3 = arith.constant 0 : index
    %c0_4 = arith.constant 0 : index
    %3 = vector.load %arg4[%c0_3, %c0_4] : memref<1x288xf32, #tpu.memory_space<vmem>>, vector<1x288xf32>
    %4 = vector.broadcast %3 : vector<1x288xf32> to vector<32x288xf32>
    %5 = arith.addf %2, %4 : vector<32x288xf32>
    %c0_5 = arith.constant 0 : index
    %c0_6 = arith.constant 0 : index
    %6 = vector.load %arg2[%c0_5, %c0_6] : memref<32x288xf32, #tpu.memory_space<vmem>>, vector<32x288xf32>
    %7 = arith.addf %5, %6 : vector<32x288xf32>
    %8 = tpu.iota {dimensions = array<i32: 0>} : vector<32x32xi32>
    %9 = arith.sitofp %8 : vector<32x32xi32> to vector<32x32xf32>
    %10 = tpu.iota {dimensions = array<i32: 1>} : vector<32x32xi32>
    %11 = arith.sitofp %10 : vector<32x32xi32> to vector<32x32xf32>
    %cst_7 = arith.constant 5.000000e-01 : f32
    %12 = vector.broadcast %cst_7 : f32 to vector<32x32xf32>
    %13 = arith.addf %9, %12 : vector<32x32xf32>
    %cst_8 = arith.constant 2.500000e-01 : f32
    %14 = vector.broadcast %cst_8 : f32 to vector<32x32xf32>
    %15 = arith.mulf %13, %14 : vector<32x32xf32>
    %16 = math.floor %15 : vector<32x32xf32>
    %cst_9 = arith.constant 5.000000e-01 : f32
    %17 = vector.broadcast %cst_9 : f32 to vector<32x32xf32>
    %18 = arith.addf %11, %17 : vector<32x32xf32>
    %cst_10 = arith.constant 2.500000e-01 : f32
    %19 = vector.broadcast %cst_10 : f32 to vector<32x32xf32>
    %20 = arith.mulf %18, %19 : vector<32x32xf32>
    %21 = math.floor %20 : vector<32x32xf32>
    %22 = arith.cmpf oeq, %16, %21 : vector<32x32xf32>
    %23 = vector.extract_strided_slice %7 {offsets = [0, 0], sizes = [32, 32], strides = [1, 1]} : vector<32x288xf32> to vector<32x32xf32>
    %24 = vector.extract_strided_slice %7 {offsets = [0, 96], sizes = [32, 32], strides = [1, 1]} : vector<32x288xf32> to vector<32x32xf32>
    %25 = vector.extract_strided_slice %7 {offsets = [0, 192], sizes = [32, 32], strides = [1, 1]} : vector<32x288xf32> to vector<32x32xf32>
    %26 = tpu.transpose %24, [1, 0] : vector<32x32xf32> -> vector<32x32xf32>
    %cst_11 = arith.constant dense<0.000000e+00> : vector<32x32xf32>
    %27 = tpu.matmul %23, %26, %cst_11 {dimension_numbers = #tpu.dot_dimension_numbers<[1], [0], [0], [1], [0, 0, 1, 1], [], []>} : vector<32x32xf32>, vector<32x32xf32>, vector<32x32xf32> -> vector<32x32xf32>
    %cst_12 = arith.constant -1.000000e+30 : f32
    %28 = vector.broadcast %cst_12 : f32 to vector<32x32xf32>
    %29 = arith.select %22, %27, %28 : vector<32x32xi1>, vector<32x32xf32>
    %cst_13 = arith.constant dense<0xFF800000> : vector<32xf32>
    %30 = vector.multi_reduction <maximumf>, %29, %cst_13 [1] : vector<32x32xf32> to vector<32xf32>
    %31 = vector.shape_cast %30 : vector<32xf32> to vector<32x1xf32>
    %32 = vector.broadcast %31 : vector<32x1xf32> to vector<32x32xf32>
    %33 = arith.subf %29, %32 : vector<32x32xf32>
    %34 = math.exp %33 : vector<32x32xf32>
    %cst_14 = arith.constant dense<0.000000e+00> : vector<32xf32>
    %35 = vector.multi_reduction <add>, %34, %cst_14 [1] : vector<32x32xf32> to vector<32xf32>
    %36 = vector.shape_cast %35 : vector<32xf32> to vector<32x1xf32>
    %37 = tpu.reciprocal %36 {approx = true} : vector<32x1xf32> -> vector<32x1xf32>
    %38 = vector.broadcast %37 : vector<32x1xf32> to vector<32x32xf32>
    %39 = arith.mulf %34, %38 : vector<32x32xf32>
    %cst_15 = arith.constant dense<0.000000e+00> : vector<32x32xf32>
    %40 = tpu.matmul %39, %25, %cst_15 {dimension_numbers = #tpu.dot_dimension_numbers<[1], [0], [0], [1], [0, 0, 1, 1], [], []>} : vector<32x32xf32>, vector<32x32xf32>, vector<32x32xf32> -> vector<32x32xf32>
    %41 = vector.extract_strided_slice %7 {offsets = [0, 32], sizes = [32, 32], strides = [1, 1]} : vector<32x288xf32> to vector<32x32xf32>
    %42 = vector.extract_strided_slice %7 {offsets = [0, 128], sizes = [32, 32], strides = [1, 1]} : vector<32x288xf32> to vector<32x32xf32>
    %43 = vector.extract_strided_slice %7 {offsets = [0, 224], sizes = [32, 32], strides = [1, 1]} : vector<32x288xf32> to vector<32x32xf32>
    %44 = tpu.transpose %42, [1, 0] : vector<32x32xf32> -> vector<32x32xf32>
    %cst_16 = arith.constant dense<0.000000e+00> : vector<32x32xf32>
    %45 = tpu.matmul %41, %44, %cst_16 {dimension_numbers = #tpu.dot_dimension_numbers<[1], [0], [0], [1], [0, 0, 1, 1], [], []>} : vector<32x32xf32>, vector<32x32xf32>, vector<32x32xf32> -> vector<32x32xf32>
    %cst_17 = arith.constant -1.000000e+30 : f32
    %46 = vector.broadcast %cst_17 : f32 to vector<32x32xf32>
    %47 = arith.select %22, %45, %46 : vector<32x32xi1>, vector<32x32xf32>
    %cst_18 = arith.constant dense<0xFF800000> : vector<32xf32>
    %48 = vector.multi_reduction <maximumf>, %47, %cst_18 [1] : vector<32x32xf32> to vector<32xf32>
    %49 = vector.shape_cast %48 : vector<32xf32> to vector<32x1xf32>
    %50 = vector.broadcast %49 : vector<32x1xf32> to vector<32x32xf32>
    %51 = arith.subf %47, %50 : vector<32x32xf32>
    %52 = math.exp %51 : vector<32x32xf32>
    %cst_19 = arith.constant dense<0.000000e+00> : vector<32xf32>
    %53 = vector.multi_reduction <add>, %52, %cst_19 [1] : vector<32x32xf32> to vector<32xf32>
    %54 = vector.shape_cast %53 : vector<32xf32> to vector<32x1xf32>
    %55 = tpu.reciprocal %54 {approx = true} : vector<32x1xf32> -> vector<32x1xf32>
    %56 = vector.broadcast %55 : vector<32x1xf32> to vector<32x32xf32>
    %57 = arith.mulf %52, %56 : vector<32x32xf32>
    %cst_20 = arith.constant dense<0.000000e+00> : vector<32x32xf32>
    %58 = tpu.matmul %57, %43, %cst_20 {dimension_numbers = #tpu.dot_dimension_numbers<[1], [0], [0], [1], [0, 0, 1, 1], [], []>} : vector<32x32xf32>, vector<32x32xf32>, vector<32x32xf32> -> vector<32x32xf32>
    %59 = vector.extract_strided_slice %7 {offsets = [0, 64], sizes = [32, 32], strides = [1, 1]} : vector<32x288xf32> to vector<32x32xf32>
    %60 = vector.extract_strided_slice %7 {offsets = [0, 160], sizes = [32, 32], strides = [1, 1]} : vector<32x288xf32> to vector<32x32xf32>
    %61 = vector.extract_strided_slice %7 {offsets = [0, 256], sizes = [32, 32], strides = [1, 1]} : vector<32x288xf32> to vector<32x32xf32>
    %62 = tpu.transpose %60, [1, 0] : vector<32x32xf32> -> vector<32x32xf32>
    %cst_21 = arith.constant dense<0.000000e+00> : vector<32x32xf32>
    %63 = tpu.matmul %59, %62, %cst_21 {dimension_numbers = #tpu.dot_dimension_numbers<[1], [0], [0], [1], [0, 0, 1, 1], [], []>} : vector<32x32xf32>, vector<32x32xf32>, vector<32x32xf32> -> vector<32x32xf32>
    %cst_22 = arith.constant -1.000000e+30 : f32
    %64 = vector.broadcast %cst_22 : f32 to vector<32x32xf32>
    %65 = arith.select %22, %63, %64 : vector<32x32xi1>, vector<32x32xf32>
    %cst_23 = arith.constant dense<0xFF800000> : vector<32xf32>
    %66 = vector.multi_reduction <maximumf>, %65, %cst_23 [1] : vector<32x32xf32> to vector<32xf32>
    %67 = vector.shape_cast %66 : vector<32xf32> to vector<32x1xf32>
    %68 = vector.broadcast %67 : vector<32x1xf32> to vector<32x32xf32>
    %69 = arith.subf %65, %68 : vector<32x32xf32>
    %70 = math.exp %69 : vector<32x32xf32>
    %cst_24 = arith.constant dense<0.000000e+00> : vector<32xf32>
    %71 = vector.multi_reduction <add>, %70, %cst_24 [1] : vector<32x32xf32> to vector<32xf32>
    %72 = vector.shape_cast %71 : vector<32xf32> to vector<32x1xf32>
    %73 = tpu.reciprocal %72 {approx = true} : vector<32x1xf32> -> vector<32x1xf32>
    %74 = vector.broadcast %73 : vector<32x1xf32> to vector<32x32xf32>
    %75 = arith.mulf %70, %74 : vector<32x32xf32>
    %cst_25 = arith.constant dense<0.000000e+00> : vector<32x32xf32>
    %76 = tpu.matmul %75, %61, %cst_25 {dimension_numbers = #tpu.dot_dimension_numbers<[1], [0], [0], [1], [0, 0, 1, 1], [], []>} : vector<32x32xf32>, vector<32x32xf32>, vector<32x32xf32> -> vector<32x32xf32>
    %77 = tpu.concatenate %40, %58, %76 in 1 : vector<32x32xf32>, vector<32x32xf32>, vector<32x32xf32> -> vector<32x96xf32>
    %c0_26 = arith.constant 0 : index
    %c0_27 = arith.constant 0 : index
    %78 = vector.load %arg5[%c0_26, %c0_27] : memref<96x32xf32, #tpu.memory_space<vmem>>, vector<96x32xf32>
    %cst_28 = arith.constant dense<0.000000e+00> : vector<32x32xf32>
    %79 = tpu.matmul %77, %78, %cst_28 {dimension_numbers = #tpu.dot_dimension_numbers<[1], [0], [0], [1], [0, 0, 1, 1], [], []>} : vector<32x96xf32>, vector<96x32xf32>, vector<32x32xf32> -> vector<32x32xf32>
    %c0_29 = arith.constant 0 : index
    %c0_30 = arith.constant 0 : index
    %80 = vector.load %arg6[%c0_29, %c0_30] : memref<1x32xf32, #tpu.memory_space<vmem>>, vector<1x32xf32>
    %81 = vector.broadcast %80 : vector<1x32xf32> to vector<32x32xf32>
    %82 = arith.addf %79, %81 : vector<32x32xf32>
    %c0_31 = arith.constant 0 : index
    %c0_32 = arith.constant 0 : index
    %83 = vector.load %arg7[%c0_31, %c0_32] : memref<32x32xf32, #tpu.memory_space<vmem>>, vector<32x32xf32>
    %84 = arith.addf %82, %83 : vector<32x32xf32>
    %c0_33 = arith.constant 0 : index
    %c0_34 = arith.constant 0 : index
    %85 = vector.load %arg8[%c0_33, %c0_34] : memref<32x32xf32, #tpu.memory_space<vmem>>, vector<32x32xf32>
    tpu.vector_store %arg8[%c0_33, %c0_34], %84 {strides = array<i32>} : memref<32x32xf32, #tpu.memory_space<vmem>>, vector<32x32xf32>,
    return
  }
  func.func @transform_0(%arg0: i32) -> (i32, i32) {
    %c0_i32 = arith.constant 0 : i32
    %c0_i32_0 = arith.constant 0 : i32
    return %arg0, %c0_i32 : i32, i32
  }
  func.func @transform_1(%arg0: i32) -> (i32, i32) {
    %c0_i32 = arith.constant 0 : i32
    %c0_i32_0 = arith.constant 0 : i32
    return %arg0, %c0_i32 : i32, i32
  }
  func.func @transform_2(%arg0: i32) -> (i32, i32) {
    %c0_i32 = arith.constant 0 : i32
    %c0_i32_0 = arith.constant 0 : i32
    %c0_i32_1 = arith.constant 0 : i32
    return %c0_i32, %c0_i32_0 : i32, i32
  }
  func.func @transform_3(%arg0: i32) -> (i32, i32) {
    %c0_i32 = arith.constant 0 : i32
    %c0_i32_0 = arith.constant 0 : i32
    %c0_i32_1 = arith.constant 0 : i32
    return %c0_i32, %c0_i32_0 : i32, i32
  }
  func.func @transform_4(%arg0: i32) -> (i32, i32) {
    %c0_i32 = arith.constant 0 : i32
    %c0_i32_0 = arith.constant 0 : i32
    %c0_i32_1 = arith.constant 0 : i32
    return %c0_i32, %c0_i32_0 : i32, i32
  }
  func.func @transform_5(%arg0: i32) -> (i32, i32) {
    %c0_i32 = arith.constant 0 : i32
    %c0_i32_0 = arith.constant 0 : i32
    %c0_i32_1 = arith.constant 0 : i32
    return %c0_i32, %c0_i32_0 : i32, i32
  }
  func.func @transform_6(%arg0: i32) -> (i32, i32) {
    %c0_i32 = arith.constant 0 : i32
    %c0_i32_0 = arith.constant 0 : i32
    return %arg0, %c0_i32 : i32, i32
  }
  func.func @transform_7(%arg0: i32) -> (i32, i32) {
    %c0_i32 = arith.constant 0 : i32
    %c0_i32_0 = arith.constant 0 : i32
    return %arg0, %c0_i32 : i32, i32
  }
}

module attributes {stable_mosaic.version = 11 : i64} {
  func.func @_self_attn_kernel(%arg0: i32, %arg1: memref<32x32xf32, #tpu.memory_space<vmem>>, %arg2: memref<32x288xf32, #tpu.memory_space<vmem>>, %arg3: memref<32x288xf32, #tpu.memory_space<vmem>>, %arg4: memref<1x288xf32, #tpu.memory_space<vmem>>, %arg5: memref<96x32xf32, #tpu.memory_space<vmem>>, %arg6: memref<1x32xf32, #tpu.memory_space<vmem>>, %arg7: memref<32x32xf32, #tpu.memory_space<vmem>>) attributes {dimension_semantics = [#tpu.dimension_semantics<parallel>], iteration_bounds = array<i64: 2>, scalar_prefetch = 0 : i64, scratch_operands = 0 : i64, tpu.core_type = #tpu.core_type<tc>, window_params = [{transform_indices = @transform_0, window_bounds = array<i64: 32, 32>}, {transform_indices = @transform_1, window_bounds = array<i64: 32, 288>}, {pipeline_mode = #tpu.pipeline_mode<synchronous>, transform_indices = @transform_2, window_bounds = array<i64: 32, 288>}, {pipeline_mode = #tpu.pipeline_mode<synchronous>, transform_indices = @transform_3, window_bounds = array<i64: 1, 288>}, {pipeline_mode = #tpu.pipeline_mode<synchronous>, transform_indices = @transform_4, window_bounds = array<i64: 96, 32>}, {pipeline_mode = #tpu.pipeline_mode<synchronous>, transform_indices = @transform_5, window_bounds = array<i64: 1, 32>}, {transform_indices = @transform_6, window_bounds = array<i64: 32, 32>}]} {
    %c0 = arith.constant 0 : index
    %c0_0 = arith.constant 0 : index
    %0 = vector.load %arg1[%c0, %c0_0] : memref<32x32xf32, #tpu.memory_space<vmem>>, vector<32x32xf32>
    %c0_1 = arith.constant 0 : index
    %c0_2 = arith.constant 0 : index
    %1 = vector.load %arg3[%c0_1, %c0_2] : memref<32x288xf32, #tpu.memory_space<vmem>>, vector<32x288xf32>
    %cst = arith.constant dense<0.000000e+00> : vector<32x288xf32>
    %2 = tpu.matmul %0, %1, %cst {dimension_numbers = #tpu.dot_dimension_numbers<[1], [0], [0], [1], [0, 0, 1, 1], [], []>} : vector<32x32xf32>, vector<32x288xf32>, vector<32x288xf32> -> vector<32x288xf32>
    %c0_3 = arith.constant 0 : index
    %c0_4 = arith.constant 0 : index
    %3 = vector.load %arg4[%c0_3, %c0_4] : memref<1x288xf32, #tpu.memory_space<vmem>>, vector<1x288xf32>
    %4 = vector.broadcast %3 : vector<1x288xf32> to vector<32x288xf32>
    %5 = arith.addf %2, %4 : vector<32x288xf32>
    %c0_5 = arith.constant 0 : index
    %c0_6 = arith.constant 0 : index
    %6 = vector.load %arg2[%c0_5, %c0_6] : memref<32x288xf32, #tpu.memory_space<vmem>>, vector<32x288xf32>
    %7 = arith.addf %5, %6 : vector<32x288xf32>
    %8 = tpu.iota {dimensions = array<i32: 0>} : vector<32x32xi32>
    %9 = arith.sitofp %8 : vector<32x32xi32> to vector<32x32xf32>
    %10 = tpu.iota {dimensions = array<i32: 1>} : vector<32x32xi32>
    %11 = arith.sitofp %10 : vector<32x32xi32> to vector<32x32xf32>
    %cst_7 = arith.constant 5.000000e-01 : f32
    %12 = vector.broadcast %cst_7 : f32 to vector<32x32xf32>
    %13 = arith.addf %9, %12 : vector<32x32xf32>
    %cst_8 = arith.constant 1.250000e-01 : f32
    %14 = vector.broadcast %cst_8 : f32 to vector<32x32xf32>
    %15 = arith.mulf %13, %14 : vector<32x32xf32>
    %16 = math.floor %15 : vector<32x32xf32>
    %cst_9 = arith.constant 5.000000e-01 : f32
    %17 = vector.broadcast %cst_9 : f32 to vector<32x32xf32>
    %18 = arith.addf %11, %17 : vector<32x32xf32>
    %cst_10 = arith.constant 1.250000e-01 : f32
    %19 = vector.broadcast %cst_10 : f32 to vector<32x32xf32>
    %20 = arith.mulf %18, %19 : vector<32x32xf32>
    %21 = math.floor %20 : vector<32x32xf32>
    %22 = arith.cmpf oeq, %16, %21 : vector<32x32xf32>
    %23 = vector.extract_strided_slice %7 {offsets = [0, 0], sizes = [32, 32], strides = [1, 1]} : vector<32x288xf32> to vector<32x32xf32>
    %24 = vector.extract_strided_slice %7 {offsets = [0, 96], sizes = [32, 32], strides = [1, 1]} : vector<32x288xf32> to vector<32x32xf32>
    %25 = vector.extract_strided_slice %7 {offsets = [0, 192], sizes = [32, 32], strides = [1, 1]} : vector<32x288xf32> to vector<32x32xf32>
    %26 = tpu.transpose %24, [1, 0] : vector<32x32xf32> -> vector<32x32xf32>
    %cst_11 = arith.constant dense<0.000000e+00> : vector<32x32xf32>
    %27 = tpu.matmul %23, %26, %cst_11 {dimension_numbers = #tpu.dot_dimension_numbers<[1], [0], [0], [1], [0, 0, 1, 1], [], []>} : vector<32x32xf32>, vector<32x32xf32>, vector<32x32xf32> -> vector<32x32xf32>
    %cst_12 = arith.constant -1.000000e+30 : f32
    %28 = vector.broadcast %cst_12 : f32 to vector<32x32xf32>
    %29 = arith.select %22, %27, %28 : vector<32x32xi1>, vector<32x32xf32>
    %cst_13 = arith.constant dense<0xFF800000> : vector<32xf32>
    %30 = vector.multi_reduction <maximumf>, %29, %cst_13 [1] : vector<32x32xf32> to vector<32xf32>
    %31 = vector.shape_cast %30 : vector<32xf32> to vector<32x1xf32>
    %32 = vector.broadcast %31 : vector<32x1xf32> to vector<32x32xf32>
    %33 = arith.subf %29, %32 : vector<32x32xf32>
    %34 = math.exp %33 : vector<32x32xf32>
    %cst_14 = arith.constant dense<0.000000e+00> : vector<32xf32>
    %35 = vector.multi_reduction <add>, %34, %cst_14 [1] : vector<32x32xf32> to vector<32xf32>
    %36 = vector.shape_cast %35 : vector<32xf32> to vector<32x1xf32>
    %37 = tpu.reciprocal %36 {approx = true} : vector<32x1xf32> -> vector<32x1xf32>
    %38 = vector.broadcast %37 : vector<32x1xf32> to vector<32x32xf32>
    %39 = arith.mulf %34, %38 : vector<32x32xf32>
    %cst_15 = arith.constant dense<0.000000e+00> : vector<32x32xf32>
    %40 = tpu.matmul %39, %25, %cst_15 {dimension_numbers = #tpu.dot_dimension_numbers<[1], [0], [0], [1], [0, 0, 1, 1], [], []>} : vector<32x32xf32>, vector<32x32xf32>, vector<32x32xf32> -> vector<32x32xf32>
    %41 = vector.extract_strided_slice %7 {offsets = [0, 32], sizes = [32, 32], strides = [1, 1]} : vector<32x288xf32> to vector<32x32xf32>
    %42 = vector.extract_strided_slice %7 {offsets = [0, 128], sizes = [32, 32], strides = [1, 1]} : vector<32x288xf32> to vector<32x32xf32>
    %43 = vector.extract_strided_slice %7 {offsets = [0, 224], sizes = [32, 32], strides = [1, 1]} : vector<32x288xf32> to vector<32x32xf32>
    %44 = tpu.transpose %42, [1, 0] : vector<32x32xf32> -> vector<32x32xf32>
    %cst_16 = arith.constant dense<0.000000e+00> : vector<32x32xf32>
    %45 = tpu.matmul %41, %44, %cst_16 {dimension_numbers = #tpu.dot_dimension_numbers<[1], [0], [0], [1], [0, 0, 1, 1], [], []>} : vector<32x32xf32>, vector<32x32xf32>, vector<32x32xf32> -> vector<32x32xf32>
    %cst_17 = arith.constant -1.000000e+30 : f32
    %46 = vector.broadcast %cst_17 : f32 to vector<32x32xf32>
    %47 = arith.select %22, %45, %46 : vector<32x32xi1>, vector<32x32xf32>
    %cst_18 = arith.constant dense<0xFF800000> : vector<32xf32>
    %48 = vector.multi_reduction <maximumf>, %47, %cst_18 [1] : vector<32x32xf32> to vector<32xf32>
    %49 = vector.shape_cast %48 : vector<32xf32> to vector<32x1xf32>
    %50 = vector.broadcast %49 : vector<32x1xf32> to vector<32x32xf32>
    %51 = arith.subf %47, %50 : vector<32x32xf32>
    %52 = math.exp %51 : vector<32x32xf32>
    %cst_19 = arith.constant dense<0.000000e+00> : vector<32xf32>
    %53 = vector.multi_reduction <add>, %52, %cst_19 [1] : vector<32x32xf32> to vector<32xf32>
    %54 = vector.shape_cast %53 : vector<32xf32> to vector<32x1xf32>
    %55 = tpu.reciprocal %54 {approx = true} : vector<32x1xf32> -> vector<32x1xf32>
    %56 = vector.broadcast %55 : vector<32x1xf32> to vector<32x32xf32>
    %57 = arith.mulf %52, %56 : vector<32x32xf32>
    %cst_20 = arith.constant dense<0.000000e+00> : vector<32x32xf32>
    %58 = tpu.matmul %57, %43, %cst_20 {dimension_numbers = #tpu.dot_dimension_numbers<[1], [0], [0], [1], [0, 0, 1, 1], [], []>} : vector<32x32xf32>, vector<32x32xf32>, vector<32x32xf32> -> vector<32x32xf32>
    %59 = vector.extract_strided_slice %7 {offsets = [0, 64], sizes = [32, 32], strides = [1, 1]} : vector<32x288xf32> to vector<32x32xf32>
    %60 = vector.extract_strided_slice %7 {offsets = [0, 160], sizes = [32, 32], strides = [1, 1]} : vector<32x288xf32> to vector<32x32xf32>
    %61 = vector.extract_strided_slice %7 {offsets = [0, 256], sizes = [32, 32], strides = [1, 1]} : vector<32x288xf32> to vector<32x32xf32>
    %62 = tpu.transpose %60, [1, 0] : vector<32x32xf32> -> vector<32x32xf32>
    %cst_21 = arith.constant dense<0.000000e+00> : vector<32x32xf32>
    %63 = tpu.matmul %59, %62, %cst_21 {dimension_numbers = #tpu.dot_dimension_numbers<[1], [0], [0], [1], [0, 0, 1, 1], [], []>} : vector<32x32xf32>, vector<32x32xf32>, vector<32x32xf32> -> vector<32x32xf32>
    %cst_22 = arith.constant -1.000000e+30 : f32
    %64 = vector.broadcast %cst_22 : f32 to vector<32x32xf32>
    %65 = arith.select %22, %63, %64 : vector<32x32xi1>, vector<32x32xf32>
    %cst_23 = arith.constant dense<0xFF800000> : vector<32xf32>
    %66 = vector.multi_reduction <maximumf>, %65, %cst_23 [1] : vector<32x32xf32> to vector<32xf32>
    %67 = vector.shape_cast %66 : vector<32xf32> to vector<32x1xf32>
    %68 = vector.broadcast %67 : vector<32x1xf32> to vector<32x32xf32>
    %69 = arith.subf %65, %68 : vector<32x32xf32>
    %70 = math.exp %69 : vector<32x32xf32>
    %cst_24 = arith.constant dense<0.000000e+00> : vector<32xf32>
    %71 = vector.multi_reduction <add>, %70, %cst_24 [1] : vector<32x32xf32> to vector<32xf32>
    %72 = vector.shape_cast %71 : vector<32xf32> to vector<32x1xf32>
    %73 = tpu.reciprocal %72 {approx = true} : vector<32x1xf32> -> vector<32x1xf32>
    %74 = vector.broadcast %73 : vector<32x1xf32> to vector<32x32xf32>
    %75 = arith.mulf %70, %74 : vector<32x32xf32>
    %cst_25 = arith.constant dense<0.000000e+00> : vector<32x32xf32>
    %76 = tpu.matmul %75, %61, %cst_25 {dimension_numbers = #tpu.dot_dimension_numbers<[1], [0], [0], [1], [0, 0, 1, 1], [], []>} : vector<32x32xf32>, vector<32x32xf32>, vector<32x32xf32> -> vector<32x32xf32>
    %77 = tpu.concatenate %40, %58, %76 in 1 : vector<32x32xf32>, vector<32x32xf32>, vector<32x32xf32> -> vector<32x96xf32>
    %c0_26 = arith.constant 0 : index
    %c0_27 = arith.constant 0 : index
    %78 = vector.load %arg5[%c0_26, %c0_27] : memref<96x32xf32, #tpu.memory_space<vmem>>, vector<96x32xf32>
    %cst_28 = arith.constant dense<0.000000e+00> : vector<32x32xf32>
    %79 = tpu.matmul %77, %78, %cst_28 {dimension_numbers = #tpu.dot_dimension_numbers<[1], [0], [0], [1], [0, 0, 1, 1], [], []>} : vector<32x96xf32>, vector<96x32xf32>, vector<32x32xf32> -> vector<32x32xf32>
    %c0_29 = arith.constant 0 : index
    %c0_30 = arith.constant 0 : index
    %80 = vector.load %arg6[%c0_29, %c0_30] : memref<1x32xf32, #tpu.memory_space<vmem>>, vector<1x32xf32>
    %81 = vector.broadcast %80 : vector<1x32xf32> to vector<32x32xf32>
    %82 = arith.addf %79, %81 : vector<32x32xf32>
    %c0_31 = arith.constant 0 : index
    %c0_32 = arith.constant 0 : index
    %83 = vector.load %arg7[%c0_31, %c0_32] : memref<32x32xf32, #tpu.memory_space<vmem>>, vector<32x32xf32>
    tpu.vector_store %arg7[%c0_31, %c0_32], %82 {strides = array<i32>} : memref<32x32xf32, #tpu.memory_space<vmem>>, vector<32x32xf32>,
    return
  }
  func.func @transform_0(%arg0: i32) -> (i32, i32) {
    %c0_i32 = arith.constant 0 : i32
    %c0_i32_0 = arith.constant 0 : i32
    return %arg0, %c0_i32 : i32, i32
  }
  func.func @transform_1(%arg0: i32) -> (i32, i32) {
    %c0_i32 = arith.constant 0 : i32
    %c0_i32_0 = arith.constant 0 : i32
    return %arg0, %c0_i32 : i32, i32
  }
  func.func @transform_2(%arg0: i32) -> (i32, i32) {
    %c0_i32 = arith.constant 0 : i32
    %c0_i32_0 = arith.constant 0 : i32
    %c0_i32_1 = arith.constant 0 : i32
    return %c0_i32, %c0_i32_0 : i32, i32
  }
  func.func @transform_3(%arg0: i32) -> (i32, i32) {
    %c0_i32 = arith.constant 0 : i32
    %c0_i32_0 = arith.constant 0 : i32
    %c0_i32_1 = arith.constant 0 : i32
    return %c0_i32, %c0_i32_0 : i32, i32
  }
  func.func @transform_4(%arg0: i32) -> (i32, i32) {
    %c0_i32 = arith.constant 0 : i32
    %c0_i32_0 = arith.constant 0 : i32
    %c0_i32_1 = arith.constant 0 : i32
    return %c0_i32, %c0_i32_0 : i32, i32
  }
  func.func @transform_5(%arg0: i32) -> (i32, i32) {
    %c0_i32 = arith.constant 0 : i32
    %c0_i32_0 = arith.constant 0 : i32
    %c0_i32_1 = arith.constant 0 : i32
    return %c0_i32, %c0_i32_0 : i32, i32
  }
  func.func @transform_6(%arg0: i32) -> (i32, i32) {
    %c0_i32 = arith.constant 0 : i32
    %c0_i32_0 = arith.constant 0 : i32
    return %arg0, %c0_i32 : i32, i32
  }
}

module attributes {stable_mosaic.version = 11 : i64} {
  func.func @_gn_mlp_kernel(%arg0: i32, %arg1: memref<32x32xf32, #tpu.memory_space<vmem>>, %arg2: memref<1x32xf32, #tpu.memory_space<vmem>>, %arg3: memref<1x32xf32, #tpu.memory_space<vmem>>, %arg4: memref<32x128xf32, #tpu.memory_space<vmem>>, %arg5: memref<1x128xf32, #tpu.memory_space<vmem>>, %arg6: memref<128x32xf32, #tpu.memory_space<vmem>>, %arg7: memref<1x32xf32, #tpu.memory_space<vmem>>, %arg8: memref<32x32xf32, #tpu.memory_space<vmem>>) attributes {dimension_semantics = [#tpu.dimension_semantics<parallel>], iteration_bounds = array<i64: 2>, scalar_prefetch = 0 : i64, scratch_operands = 0 : i64, tpu.core_type = #tpu.core_type<tc>, window_params = [{transform_indices = @transform_0, window_bounds = array<i64: 32, 32>}, {pipeline_mode = #tpu.pipeline_mode<synchronous>, transform_indices = @transform_1, window_bounds = array<i64: 1, 32>}, {pipeline_mode = #tpu.pipeline_mode<synchronous>, transform_indices = @transform_2, window_bounds = array<i64: 1, 32>}, {pipeline_mode = #tpu.pipeline_mode<synchronous>, transform_indices = @transform_3, window_bounds = array<i64: 32, 128>}, {pipeline_mode = #tpu.pipeline_mode<synchronous>, transform_indices = @transform_4, window_bounds = array<i64: 1, 128>}, {pipeline_mode = #tpu.pipeline_mode<synchronous>, transform_indices = @transform_5, window_bounds = array<i64: 128, 32>}, {pipeline_mode = #tpu.pipeline_mode<synchronous>, transform_indices = @transform_6, window_bounds = array<i64: 1, 32>}, {transform_indices = @transform_7, window_bounds = array<i64: 32, 32>}]} {
    %c0 = arith.constant 0 : index
    %c0_0 = arith.constant 0 : index
    %0 = vector.load %arg1[%c0, %c0_0] : memref<32x32xf32, #tpu.memory_space<vmem>>, vector<32x32xf32>
    %c0_1 = arith.constant 0 : index
    %c0_2 = arith.constant 0 : index
    %1 = vector.load %arg2[%c0_1, %c0_2] : memref<1x32xf32, #tpu.memory_space<vmem>>, vector<1x32xf32>
    %2 = vector.broadcast %1 : vector<1x32xf32> to vector<32x32xf32>
    %3 = arith.mulf %0, %2 : vector<32x32xf32>
    %c0_3 = arith.constant 0 : index
    %c0_4 = arith.constant 0 : index
    %4 = vector.load %arg3[%c0_3, %c0_4] : memref<1x32xf32, #tpu.memory_space<vmem>>, vector<1x32xf32>
    %5 = vector.broadcast %4 : vector<1x32xf32> to vector<32x32xf32>
    %6 = arith.addf %3, %5 : vector<32x32xf32>
    %c0_5 = arith.constant 0 : index
    %c0_6 = arith.constant 0 : index
    %7 = vector.load %arg4[%c0_5, %c0_6] : memref<32x128xf32, #tpu.memory_space<vmem>>, vector<32x128xf32>
    %cst = arith.constant dense<0.000000e+00> : vector<32x128xf32>
    %8 = tpu.matmul %6, %7, %cst {dimension_numbers = #tpu.dot_dimension_numbers<[1], [0], [0], [1], [0, 0, 1, 1], [], []>} : vector<32x32xf32>, vector<32x128xf32>, vector<32x128xf32> -> vector<32x128xf32>
    %c0_7 = arith.constant 0 : index
    %c0_8 = arith.constant 0 : index
    %9 = vector.load %arg5[%c0_7, %c0_8] : memref<1x128xf32, #tpu.memory_space<vmem>>, vector<1x128xf32>
    %10 = vector.broadcast %9 : vector<1x128xf32> to vector<32x128xf32>
    %11 = arith.addf %8, %10 : vector<32x128xf32>
    %cst_9 = arith.constant 0.000000e+00 : f32
    %12 = vector.broadcast %cst_9 : f32 to vector<32x128xf32>
    %13 = arith.maximumf %11, %12 : vector<32x128xf32>
    %14 = math.absf %11 : vector<32x128xf32>
    %cst_10 = arith.constant 0.000000e+00 : f32
    %15 = vector.broadcast %cst_10 : f32 to vector<32x128xf32>
    %16 = arith.subf %15, %14 : vector<32x128xf32>
    %17 = math.exp %16 : vector<32x128xf32>
    %cst_11 = arith.constant 1.000000e+00 : f32
    %18 = vector.broadcast %cst_11 : f32 to vector<32x128xf32>
    %19 = arith.addf %18, %17 : vector<32x128xf32>
    %20 = math.log %19 : vector<32x128xf32>
    %21 = arith.addf %13, %20 : vector<32x128xf32>
    %22 = math.tanh %21 : vector<32x128xf32>
    %23 = arith.mulf %11, %22 : vector<32x128xf32>
    %c0_12 = arith.constant 0 : index
    %c0_13 = arith.constant 0 : index
    %24 = vector.load %arg6[%c0_12, %c0_13] : memref<128x32xf32, #tpu.memory_space<vmem>>, vector<128x32xf32>
    %cst_14 = arith.constant dense<0.000000e+00> : vector<32x32xf32>
    %25 = tpu.matmul %23, %24, %cst_14 {dimension_numbers = #tpu.dot_dimension_numbers<[1], [0], [0], [1], [0, 0, 1, 1], [], []>} : vector<32x128xf32>, vector<128x32xf32>, vector<32x32xf32> -> vector<32x32xf32>
    %c0_15 = arith.constant 0 : index
    %c0_16 = arith.constant 0 : index
    %26 = vector.load %arg7[%c0_15, %c0_16] : memref<1x32xf32, #tpu.memory_space<vmem>>, vector<1x32xf32>
    %27 = vector.broadcast %26 : vector<1x32xf32> to vector<32x32xf32>
    %28 = arith.addf %25, %27 : vector<32x32xf32>
    %29 = arith.addf %28, %6 : vector<32x32xf32>
    %c0_17 = arith.constant 0 : index
    %c0_18 = arith.constant 0 : index
    %30 = vector.load %arg8[%c0_17, %c0_18] : memref<32x32xf32, #tpu.memory_space<vmem>>, vector<32x32xf32>
    tpu.vector_store %arg8[%c0_17, %c0_18], %29 {strides = array<i32>} : memref<32x32xf32, #tpu.memory_space<vmem>>, vector<32x32xf32>,
    return
  }
  func.func @transform_0(%arg0: i32) -> (i32, i32) {
    %c0_i32 = arith.constant 0 : i32
    %c0_i32_0 = arith.constant 0 : i32
    return %arg0, %c0_i32 : i32, i32
  }
  func.func @transform_1(%arg0: i32) -> (i32, i32) {
    %c0_i32 = arith.constant 0 : i32
    %c0_i32_0 = arith.constant 0 : i32
    %c0_i32_1 = arith.constant 0 : i32
    return %c0_i32, %c0_i32_0 : i32, i32
  }
  func.func @transform_2(%arg0: i32) -> (i32, i32) {
    %c0_i32 = arith.constant 0 : i32
    %c0_i32_0 = arith.constant 0 : i32
    %c0_i32_1 = arith.constant 0 : i32
    return %c0_i32, %c0_i32_0 : i32, i32
  }
  func.func @transform_3(%arg0: i32) -> (i32, i32) {
    %c0_i32 = arith.constant 0 : i32
    %c0_i32_0 = arith.constant 0 : i32
    %c0_i32_1 = arith.constant 0 : i32
    return %c0_i32, %c0_i32_0 : i32, i32
  }
  func.func @transform_4(%arg0: i32) -> (i32, i32) {
    %c0_i32 = arith.constant 0 : i32
    %c0_i32_0 = arith.constant 0 : i32
    %c0_i32_1 = arith.constant 0 : i32
    return %c0_i32, %c0_i32_0 : i32, i32
  }
  func.func @transform_5(%arg0: i32) -> (i32, i32) {
    %c0_i32 = arith.constant 0 : i32
    %c0_i32_0 = arith.constant 0 : i32
    %c0_i32_1 = arith.constant 0 : i32
    return %c0_i32, %c0_i32_0 : i32, i32
  }
  func.func @transform_6(%arg0: i32) -> (i32, i32) {
    %c0_i32 = arith.constant 0 : i32
    %c0_i32_0 = arith.constant 0 : i32
    %c0_i32_1 = arith.constant 0 : i32
    return %c0_i32, %c0_i32_0 : i32, i32
  }
  func.func @transform_7(%arg0: i32) -> (i32, i32) {
    %c0_i32 = arith.constant 0 : i32
    %c0_i32_0 = arith.constant 0 : i32
    return %arg0, %c0_i32 : i32, i32
  }
}

module attributes {stable_mosaic.version = 11 : i64} {
  func.func @_mlp3_kernel(%arg0: i32, %arg1: memref<32x32xf32, #tpu.memory_space<vmem>>, %arg2: memref<32x128xf32, #tpu.memory_space<vmem>>, %arg3: memref<1x128xf32, #tpu.memory_space<vmem>>, %arg4: memref<128x32xf32, #tpu.memory_space<vmem>>, %arg5: memref<1x32xf32, #tpu.memory_space<vmem>>, %arg6: memref<32x6xf32, #tpu.memory_space<vmem>>, %arg7: memref<1x6xf32, #tpu.memory_space<vmem>>, %arg8: memref<32x6xf32, #tpu.memory_space<vmem>>) attributes {dimension_semantics = [#tpu.dimension_semantics<parallel>], iteration_bounds = array<i64: 2>, scalar_prefetch = 0 : i64, scratch_operands = 0 : i64, tpu.core_type = #tpu.core_type<tc>, window_params = [{transform_indices = @transform_0, window_bounds = array<i64: 32, 32>}, {pipeline_mode = #tpu.pipeline_mode<synchronous>, transform_indices = @transform_1, window_bounds = array<i64: 32, 128>}, {pipeline_mode = #tpu.pipeline_mode<synchronous>, transform_indices = @transform_2, window_bounds = array<i64: 1, 128>}, {pipeline_mode = #tpu.pipeline_mode<synchronous>, transform_indices = @transform_3, window_bounds = array<i64: 128, 32>}, {pipeline_mode = #tpu.pipeline_mode<synchronous>, transform_indices = @transform_4, window_bounds = array<i64: 1, 32>}, {pipeline_mode = #tpu.pipeline_mode<synchronous>, transform_indices = @transform_5, window_bounds = array<i64: 32, 6>}, {pipeline_mode = #tpu.pipeline_mode<synchronous>, transform_indices = @transform_6, window_bounds = array<i64: 1, 6>}, {transform_indices = @transform_7, window_bounds = array<i64: 32, 6>}]} {
    %c0 = arith.constant 0 : index
    %c0_0 = arith.constant 0 : index
    %0 = vector.load %arg1[%c0, %c0_0] : memref<32x32xf32, #tpu.memory_space<vmem>>, vector<32x32xf32>
    %c0_1 = arith.constant 0 : index
    %c0_2 = arith.constant 0 : index
    %1 = vector.load %arg2[%c0_1, %c0_2] : memref<32x128xf32, #tpu.memory_space<vmem>>, vector<32x128xf32>
    %cst = arith.constant dense<0.000000e+00> : vector<32x128xf32>
    %2 = tpu.matmul %0, %1, %cst {dimension_numbers = #tpu.dot_dimension_numbers<[1], [0], [0], [1], [0, 0, 1, 1], [], []>} : vector<32x32xf32>, vector<32x128xf32>, vector<32x128xf32> -> vector<32x128xf32>
    %c0_3 = arith.constant 0 : index
    %c0_4 = arith.constant 0 : index
    %3 = vector.load %arg3[%c0_3, %c0_4] : memref<1x128xf32, #tpu.memory_space<vmem>>, vector<1x128xf32>
    %4 = vector.broadcast %3 : vector<1x128xf32> to vector<32x128xf32>
    %5 = arith.addf %2, %4 : vector<32x128xf32>
    %cst_5 = arith.constant 0.000000e+00 : f32
    %6 = vector.broadcast %cst_5 : f32 to vector<32x128xf32>
    %7 = arith.maximumf %5, %6 : vector<32x128xf32>
    %8 = math.absf %5 : vector<32x128xf32>
    %cst_6 = arith.constant 0.000000e+00 : f32
    %9 = vector.broadcast %cst_6 : f32 to vector<32x128xf32>
    %10 = arith.subf %9, %8 : vector<32x128xf32>
    %11 = math.exp %10 : vector<32x128xf32>
    %cst_7 = arith.constant 1.000000e+00 : f32
    %12 = vector.broadcast %cst_7 : f32 to vector<32x128xf32>
    %13 = arith.addf %12, %11 : vector<32x128xf32>
    %14 = math.log %13 : vector<32x128xf32>
    %15 = arith.addf %7, %14 : vector<32x128xf32>
    %16 = math.tanh %15 : vector<32x128xf32>
    %17 = arith.mulf %5, %16 : vector<32x128xf32>
    %c0_8 = arith.constant 0 : index
    %c0_9 = arith.constant 0 : index
    %18 = vector.load %arg4[%c0_8, %c0_9] : memref<128x32xf32, #tpu.memory_space<vmem>>, vector<128x32xf32>
    %cst_10 = arith.constant dense<0.000000e+00> : vector<32x32xf32>
    %19 = tpu.matmul %17, %18, %cst_10 {dimension_numbers = #tpu.dot_dimension_numbers<[1], [0], [0], [1], [0, 0, 1, 1], [], []>} : vector<32x128xf32>, vector<128x32xf32>, vector<32x32xf32> -> vector<32x32xf32>
    %c0_11 = arith.constant 0 : index
    %c0_12 = arith.constant 0 : index
    %20 = vector.load %arg5[%c0_11, %c0_12] : memref<1x32xf32, #tpu.memory_space<vmem>>, vector<1x32xf32>
    %21 = vector.broadcast %20 : vector<1x32xf32> to vector<32x32xf32>
    %22 = arith.addf %19, %21 : vector<32x32xf32>
    %cst_13 = arith.constant 0.000000e+00 : f32
    %23 = vector.broadcast %cst_13 : f32 to vector<32x32xf32>
    %24 = arith.maximumf %22, %23 : vector<32x32xf32>
    %25 = math.absf %22 : vector<32x32xf32>
    %cst_14 = arith.constant 0.000000e+00 : f32
    %26 = vector.broadcast %cst_14 : f32 to vector<32x32xf32>
    %27 = arith.subf %26, %25 : vector<32x32xf32>
    %28 = math.exp %27 : vector<32x32xf32>
    %cst_15 = arith.constant 1.000000e+00 : f32
    %29 = vector.broadcast %cst_15 : f32 to vector<32x32xf32>
    %30 = arith.addf %29, %28 : vector<32x32xf32>
    %31 = math.log %30 : vector<32x32xf32>
    %32 = arith.addf %24, %31 : vector<32x32xf32>
    %33 = math.tanh %32 : vector<32x32xf32>
    %34 = arith.mulf %22, %33 : vector<32x32xf32>
    %c0_16 = arith.constant 0 : index
    %c0_17 = arith.constant 0 : index
    %35 = vector.load %arg6[%c0_16, %c0_17] : memref<32x6xf32, #tpu.memory_space<vmem>>, vector<32x6xf32>
    %cst_18 = arith.constant dense<0.000000e+00> : vector<32x6xf32>
    %36 = tpu.matmul %34, %35, %cst_18 {dimension_numbers = #tpu.dot_dimension_numbers<[1], [0], [0], [1], [0, 0, 1, 1], [], []>} : vector<32x32xf32>, vector<32x6xf32>, vector<32x6xf32> -> vector<32x6xf32>
    %c0_19 = arith.constant 0 : index
    %c0_20 = arith.constant 0 : index
    %37 = vector.load %arg7[%c0_19, %c0_20] : memref<1x6xf32, #tpu.memory_space<vmem>>, vector<1x6xf32>
    %38 = vector.broadcast %37 : vector<1x6xf32> to vector<32x6xf32>
    %39 = arith.addf %36, %38 : vector<32x6xf32>
    %c0_21 = arith.constant 0 : index
    %c0_22 = arith.constant 0 : index
    %40 = vector.load %arg8[%c0_21, %c0_22] : memref<32x6xf32, #tpu.memory_space<vmem>>, vector<32x6xf32>
    tpu.vector_store %arg8[%c0_21, %c0_22], %39 {strides = array<i32>} : memref<32x6xf32, #tpu.memory_space<vmem>>, vector<32x6xf32>,
    return
  }
  func.func @transform_0(%arg0: i32) -> (i32, i32) {
    %c0_i32 = arith.constant 0 : i32
    %c0_i32_0 = arith.constant 0 : i32
    return %arg0, %c0_i32 : i32, i32
  }
  func.func @transform_1(%arg0: i32) -> (i32, i32) {
    %c0_i32 = arith.constant 0 : i32
    %c0_i32_0 = arith.constant 0 : i32
    %c0_i32_1 = arith.constant 0 : i32
    return %c0_i32, %c0_i32_0 : i32, i32
  }
  func.func @transform_2(%arg0: i32) -> (i32, i32) {
    %c0_i32 = arith.constant 0 : i32
    %c0_i32_0 = arith.constant 0 : i32
    %c0_i32_1 = arith.constant 0 : i32
    return %c0_i32, %c0_i32_0 : i32, i32
  }
  func.func @transform_3(%arg0: i32) -> (i32, i32) {
    %c0_i32 = arith.constant 0 : i32
    %c0_i32_0 = arith.constant 0 : i32
    %c0_i32_1 = arith.constant 0 : i32
    return %c0_i32, %c0_i32_0 : i32, i32
  }
  func.func @transform_4(%arg0: i32) -> (i32, i32) {
    %c0_i32 = arith.constant 0 : i32
    %c0_i32_0 = arith.constant 0 : i32
    %c0_i32_1 = arith.constant 0 : i32
    return %c0_i32, %c0_i32_0 : i32, i32
  }
  func.func @transform_5(%arg0: i32) -> (i32, i32) {
    %c0_i32 = arith.constant 0 : i32
    %c0_i32_0 = arith.constant 0 : i32
    %c0_i32_1 = arith.constant 0 : i32
    return %c0_i32, %c0_i32_0 : i32, i32
  }
  func.func @transform_6(%arg0: i32) -> (i32, i32) {
    %c0_i32 = arith.constant 0 : i32
    %c0_i32_0 = arith.constant 0 : i32
    %c0_i32_1 = arith.constant 0 : i32
    return %c0_i32, %c0_i32_0 : i32, i32
  }
  func.func @transform_7(%arg0: i32) -> (i32, i32) {
    %c0_i32 = arith.constant 0 : i32
    %c0_i32_0 = arith.constant 0 : i32
    return %arg0, %c0_i32 : i32, i32
  }
}

</mosaic_0001>

<llo_original>
// kernel: stformer_forward.23
$region0: #{stformer_forward.23}
  #allocation0 [shape = 'u32[]', space=smem, size = 0x4, offset = 0x4, fixed_abs, tag = 'smem constant byte address 0x4 - core index']
  #allocation1 [shape = 'u32[144,128]{1,0:T(1,128)}', space=vmem, size = 0x12000, scoped, tag = 'internal scratch']
  %s0 = inlined_call_operand.vmem [shape: f32[8,32], index: 0, kind: input, shape index: {}]
  %s1 = inlined_call_operand.vmem [shape: f32[32,128], index: 1, kind: input, shape index: {}]
  %s2 = inlined_call_operand.vmem [shape: f32[1,128], index: 2, kind: input, shape index: {}]
  %s3 = inlined_call_operand.vmem [shape: f32[128,32], index: 3, kind: input, shape index: {}]
  %s4 = inlined_call_operand.vmem [shape: f32[1,32], index: 4, kind: input, shape index: {}]
  %s5 = inlined_call_operand.vmem [shape: f32[8,32], index: 5, kind: output, shape index: {}]
  %s6 = sld [smem:[#allocation0]]
  $region30: #{stformer_forward.23} parent=0
    _
  %s8 = ssub.s32 1, %s6
  %s9 = scalar_select 0, %s8, %s6
  // Predicated region
  $region2: #{stformer_forward.23} parent=0 // pred_check
    _
  $region3: #{stformer_forward.23} parent=0 // pred_check_branch
    %11 = sbr.rel (0) target = $region5
  $region4: #{stformer_forward.23} parent=0 // pred_region
    _
  $region5: #{stformer_forward.23} parent=0 // pred_fallthru
    _
  // Predicated region
  $region6: #{stformer_forward.23} parent=0 // pred_check
    _
  $region7: #{stformer_forward.23} parent=0 // pred_check_branch
    %13 = sbr.rel (0) target = $region9
  $region8: #{stformer_forward.23} parent=0 // pred_region
    _
  $region9: #{stformer_forward.23} parent=0 // pred_fallthru
    _
  // Predicated region
  $region10: #{stformer_forward.23} parent=0 // pred_check
    _
  $region11: #{stformer_forward.23} parent=0 // pred_check_branch
    %15 = sbr.rel (0) target = $region13
  $region12: #{stformer_forward.23} parent=0 // pred_region
    _
  $region13: #{stformer_forward.23} parent=0 // pred_fallthru
    _
  // Predicated region
  $region14: #{stformer_forward.23} parent=0 // pred_check
    _
  $region15: #{stformer_forward.23} parent=0 // pred_check_branch
    %17 = sbr.rel (0) target = $region17
  $region16: #{stformer_forward.23} parent=0 // pred_region
    _
  $region17: #{stformer_forward.23} parent=0 // pred_fallthru
    _
  // Predicated region
  $region18: #{stformer_forward.23} parent=0 // pred_check
    _
  $region19: #{stformer_forward.23} parent=0 // pred_check_branch
    %19 = sbr.rel (0) target = $region21
  $region20: #{stformer_forward.23} parent=0 // pred_region
    _
  $region21: #{stformer_forward.23} parent=0 // pred_fallthru
    _
  %v20 = vld [vmem:[%s0] sm:$0xff]
  %v21 = vld [vmem:[%s1] sm:$0xff]
  %v22 = vld [vmem:[%s1 + $0x8] sm:$0xff]
  %v23 = vld [vmem:[%s1 + $0x10] sm:$0xff]
  %v24 = vld [vmem:[%s1 + $0x18] sm:$0xff]
  %v25 = vld [vmem:[%s2] sm:$0x1]
  %v27 = vlaneseq
  %v28 = vshrl.u32 %v27, 7
  %v29 = vsub.s32 0, %v28
  %v30 = vrot.slane %v25, %v29
  %vm32 = vcmask 261120
  %v34 = vsel %vm32, %v20, 0
  %36 = vmatprep.subr.mxu0 0.0
  %37 = vmatpush1.msra.mxu0 %v21
  %38 = vmatprep.subr.mxu0 0.0
  %39 = vmatpush1.msra.mxu0 %v22
  %40 = vmatprep.subr.mxu0 0.0
  %41 = vmatpush1.msra.mxu0 %v23
  %42 = vmatprep.subr.mxu0 0.0
  %43 = vmatpush1.msra.mxu0 %v24
  %44 = vmatprep.subr.mxu0 0.0
  %45 = vmatpush1.msra.mxu0 0.0
  %46 = vmatprep.subr.mxu0 0.0
  %47 = vmatpush1.msra.mxu0 0.0
  %48 = vmatprep.subr.mxu0 0.0
  %49 = vmatpush1.msra.mxu0 0.0
  %50 = vmatprep.subr.mxu0 0.0
  %51 = vmatpush1.msra.mxu0 0.0
  %52 = vmatprep.subr.mxu0 0.0
  %53 = vmatpush1.msra.mxu0 0.0
  %54 = vmatprep.subr.mxu0 0.0
  %55 = vmatpush1.msra.mxu0 0.0
  %56 = vmatprep.subr.mxu0 0.0
  %57 = vmatpush1.msra.mxu0 0.0
  %58 = vmatprep.subr.mxu0 0.0
  %59 = vmatpush1.msra.mxu0 0.0
  %60 = vmatprep.subr.mxu0 0.0
  %61 = vmatpush1.msra.mxu0 0.0
  %62 = vmatprep.subr.mxu0 0.0
  %63 = vmatpush1.msra.mxu0 0.0
  %64 = vmatprep.subr.mxu0 0.0
  %65 = vmatpush1.msra.mxu0 0.0
  %66 = vmatprep.subr.mxu0 0.0
  %67 = vmatpush1.msra.mxu0 0.0
  %68 = vmatprep.subr.mxu0 0.0
  %69 = vmatpush1.msra.mxu0 0.0
  %70 = vmatprep.subr.mxu0 0.0
  %71 = vmatpush1.msra.mxu0 0.0
  %72 = vmatprep.subr.mxu0 0.0
  %73 = vmatpush1.msra.mxu0 0.0
  %74 = vmatprep.subr.mxu0 0.0
  %75 = vmatpush1.msra.mxu0 0.0
  %76 = vmatprep.subr.mxu0 0.0
  %77 = vmatpush1.msra.mxu0 0.0
  %78 = vmatprep.subr.mxu0 0.0
  %79 = vmatpush1.msra.mxu0 0.0
  %80 = vmatprep.subr.mxu0 0.0
  %81 = vmatpush1.msra.mxu0 0.0
  %82 = vmatprep.subr.mxu0 0.0
  %83 = vmatpush1.msra.mxu0 0.0
  %84 = vmatprep.subr.mxu0 0.0
  %85 = vmatpush1.msra.mxu0 0.0
  %86 = vmatprep.subr.mxu0 0.0
  %87 = vmatpush1.msra.mxu0 0.0
  %88 = vmatprep.subr.mxu0 0.0
  %89 = vmatpush1.msra.mxu0 0.0
  %90 = vmatprep.subr.mxu0 0.0
  %91 = vmatpush1.msra.mxu0 0.0
  %92 = vmatprep.subr.mxu0 0.0
  %93 = vmatpush1.msra.mxu0 0.0
  %94 = vmatprep.subr.mxu0 0.0
  %95 = vmatpush1.msra.mxu0 0.0
  %96 = vmatprep.subr.mxu0 0.0
  %97 = vmatpush1.msra.mxu0 0.0
  %98 = vmatprep.subr.mxu0 0.0
  %99 = vmatpush1.msra.mxu0 0.0
  %100 = vmatprep.mubr.f32.mxu0 0.0
  %101 = vmatmul.mubr.f32.gmra.mrb[0].mxu0 %v34
  %v102 = vpop.f32.mrb[0].mxu0
  %v103 = vadd.f32 %v30, %v102
  %v104 = vpop.f32.mrb[0].mxu0
  %105 = vdwg.mxu0
  %v106 = vmax.f32 %v103, 0.0
  %v107 = vand.u32 2147483647, %v103
  %v108 = vsub.f32 0.0, %v107
  %v109 = vmul.f32 %v108, 1.442695
  %v110 = vpow.pop %v109
  %v111 = vadd.f32 %v110, 1.0
  %v112 = vlog2.pop %v111
  %v113 = vmul.f32 %v112, 0.6931472
  %v114 = vadd.f32 %v106, %v113
  %v115 = vtanh.pop %v114
  %v116 = vmul.f32 %v103, %v115
  %v117 = vld [vmem:[%s3] sm:$0xff]
  %v118 = vld [vmem:[%s3 + $0x8] sm:$0xff]
  %v119 = vld [vmem:[%s3 + $0x10] sm:$0xff]
  %v120 = vld [vmem:[%s3 + $0x18] sm:$0xff]
  %v121 = vld [vmem:[%s3 + $0x20] sm:$0xff]
  %v122 = vld [vmem:[%s3 + $0x28] sm:$0xff]
  %v123 = vld [vmem:[%s3 + $0x30] sm:$0xff]
  %v124 = vld [vmem:[%s3 + $0x38] sm:$0xff]
  %v125 = vld [vmem:[%s3 + $0x40] sm:$0xff]
  %v126 = vld [vmem:[%s3 + $0x48] sm:$0xff]
  %v127 = vld [vmem:[%s3 + $0x50] sm:$0xff]
  %v128 = vld [vmem:[%s3 + $0x58] sm:$0xff]
  %v129 = vld [vmem:[%s3 + $0x60] sm:$0xff]
  %v130 = vld [vmem:[%s3 + $0x68] sm:$0xff]
  %v131 = vld [vmem:[%s3 + $0x70] sm:$0xff]
  %v132 = vld [vmem:[%s3 + $0x78] sm:$0xff]
  %v133 = vld [vmem:[%s4] sm:$0x1]
  %v135 = vlaneseq
  %v136 = vshrl.u32 %v135, 7
  %v137 = vsub.s32 0, %v136
  %v138 = vrot.slane %v133, %v137
  %140 = vmatprep.subr.mxu0 0.0
  %141 = vmatpush1.msra.mxu0 %v117
  %142 = vmatprep.subr.mxu0 0.0
  %143 = vmatpush1.msra.mxu0 %v118
  %144 = vmatprep.subr.mxu0 0.0
  %145 = vmatpush1.msra.mxu0 %v119
  %146 = vmatprep.subr.mxu0 0.0
  %147 = vmatpush1.msra.mxu0 %v120
  %148 = vmatprep.subr.mxu0 0.0
  %149 = vmatpush1.msra.mxu0 %v121
  %150 = vmatprep.subr.mxu0 0.0
  %151 = vmatpush1.msra.mxu0 %v122
  %152 = vmatprep.subr.mxu0 0.0
  %153 = vmatpush1.msra.mxu0 %v123
  %154 = vmatprep.subr.mxu0 0.0
  %155 = vmatpush1.msra.mxu0 %v124
  %156 = vmatprep.subr.mxu0 0.0
  %157 = vmatpush1.msra.mxu0 %v125
  %158 = vmatprep.subr.mxu0 0.0
  %159 = vmatpush1.msra.mxu0 %v126
  %160 = vmatprep.subr.mxu0 0.0
  %161 = vmatpush1.msra.mxu0 %v127
  %162 = vmatprep.subr.mxu0 0.0
  %163 = vmatpush1.msra.mxu0 %v128
  %164 = vmatprep.subr.mxu0 0.0
  %165 = vmatpush1.msra.mxu0 %v129
  %166 = vmatprep.subr.mxu0 0.0
  %167 = vmatpush1.msra.mxu0 %v130
  %168 = vmatprep.subr.mxu0 0.0
  %169 = vmatpush1.msra.mxu0 %v131
  %170 = vmatprep.subr.mxu0 0.0
  %171 = vmatpush1.msra.mxu0 %v132
  %172 = vmatprep.subr.mxu0 0.0
  %173 = vmatpush1.msra.mxu0 0.0
  %174 = vmatprep.subr.mxu0 0.0
  %175 = vmatpush1.msra.mxu0 0.0
  %176 = vmatprep.subr.mxu0 0.0
  %177 = vmatpush1.msra.mxu0 0.0
  %178 = vmatprep.subr.mxu0 0.0
  %179 = vmatpush1.msra.mxu0 0.0
  %180 = vmatprep.subr.mxu0 0.0
  %181 = vmatpush1.msra.mxu0 0.0
  %182 = vmatprep.subr.mxu0 0.0
  %183 = vmatpush1.msra.mxu0 0.0
  %184 = vmatprep.subr.mxu0 0.0
  %185 = vmatpush1.msra.mxu0 0.0
  %186 = vmatprep.subr.mxu0 0.0
  %187 = vmatpush1.msra.mxu0 0.0
  %188 = vmatprep.subr.mxu0 0.0
  %189 = vmatpush1.msra.mxu0 0.0
  %190 = vmatprep.subr.mxu0 0.0
  %191 = vmatpush1.msra.mxu0 0.0
  %192 = vmatprep.subr.mxu0 0.0
  %193 = vmatpush1.msra.mxu0 0.0
  %194 = vmatprep.subr.mxu0 0.0
  %195 = vmatpush1.msra.mxu0 0.0
  %196 = vmatprep.subr.mxu0 0.0
  %197 = vmatpush1.msra.mxu0 0.0
  %198 = vmatprep.subr.mxu0 0.0
  %199 = vmatpush1.msra.mxu0 0.0
  %200 = vmatprep.subr.mxu0 0.0
  %201 = vmatpush1.msra.mxu0 0.0
  %202 = vmatprep.subr.mxu0 0.0
  %203 = vmatpush1.msra.mxu0 0.0
  %204 = vmatprep.mubr.f32.mxu0 0.0
  %205 = vmatmul.mubr.f32.gmra.mrb[0].mxu0 %v116
  %v206 = vpop.f32.mrb[0].mxu0
  %v207 = vadd.f32 %v138, %v206
  %v208 = vpop.f32.mrb[0].mxu0
  %209 = vdwg.mxu0
  %210 = vst.msk [vmem:[%s5] sm:$0xff] %vm32, %v207
  // Predicated region
  $region22: #{stformer_forward.23} parent=0 // pred_check
    _
  $region23: #{stformer_forward.23} parent=0 // pred_check_branch
    %212 = sbr.rel (0) target = $region25
  $region24: #{stformer_forward.23} parent=0 // pred_region
    _
  $region25: #{stformer_forward.23} parent=0 // pred_fallthru
    _
  // Predicated region
  $region26: #{stformer_forward.23} parent=0 // pred_check
    _
  $region27: #{stformer_forward.23} parent=0 // pred_check_branch
    %214 = sbr.rel (0) target = $region29
  $region28: #{stformer_forward.23} parent=0 // pred_region
    _
  $region29: #{stformer_forward.23} parent=0 // pred_fallthru
    _

// kernel: stformer_forward.27
$region0: #{stformer_forward.27}
  #allocation0 [shape = 'u32[]', space=smem, size = 0x4, offset = 0x4, fixed_abs, tag = 'smem constant byte address 0x4 - core index']
  #allocation1 [shape = 'u32[144,128]{1,0:T(1,128)}', space=vmem, size = 0x12000, scoped, tag = 'internal scratch']
  %s0 = inlined_call_operand.vmem [shape: f32[16,32], index: 0, kind: input, shape index: {}]
  %s1 = inlined_call_operand.vmem [shape: f32[32,864], index: 1, kind: input, shape index: {}]
  %s2 = inlined_call_operand.vmem [shape: f32[1,864], index: 2, kind: input, shape index: {}]
  %s3 = inlined_call_operand.vmem [shape: f32[16,864], index: 3, kind: output, shape index: {}]
  %s4 = sld [smem:[#allocation0]]
  $region45: #{stformer_forward.27} parent=0
    _
  %s6 = ssub.s32 1, %s4
  %s7 = scalar_select 0, %s6, %s4
  loop: start=0, step=1, limit=4
  $region2: #{stformer_forward.27} parent=0 // loop_pre_header
    _
  $region3: #{stformer_forward.27} parent=0 // loop_header
    %s9 = sphi 0, %s13
    %p10 = scmp.ge.s32.totalorder %s9, 4
    %s19 = sphi 0, %s21
    %s22 = sphi 0, %s19
    %s23 = sphi 0, %s22
    %s39 = sphi 0, %s23
    %s43 = sphi 0, %s43
    %s45 = sphi 0, %s43
    %s46 = sphi 0, %s45
    %s60 = sphi 0, %s46
    %s64 = sphi 0, %s64
    %s66 = sphi 0, %s64
    %s67 = sphi 0, %s66
    %s81 = sphi 0, %s67
    %s87 = sphi 0, %s89
    %s90 = sphi 0, %s87
    %s91 = sphi 0, %s90
    %s107 = sphi 0, %s91
  $region4: #{stformer_forward.27} parent=0 // loop_header_branch
    %12 = sbr.rel (%p10) target = $region8
  $region5: #{stformer_forward.27} parent=0 // loop_body
    %s14 = ssub.s32 %s9, 1
    %s15 = ssub.s32 %s9, 2
    %s16 = sadd.s32 %s9, 1
    %s17 = ssub.s32 %s9, %s16
    %p18 = scmp.eq.s32.totalorder %s17, 0
    %s20 = sadd.s32 %s19, 1
    %s21 = scalar_select %p18, %s19, %s20
    %p24 = pneg %p18
    %p25 = scmp.eq.s32.totalorder %s9, 1
    %p26 = por %p24, %p25
    %p27 = scmp.ne.s32.totalorder %s19, %s22
    %p28 = scmp.eq.s32.totalorder %s9, 0
    %p29 = por %p27, %p28
    %p30 = scmp.ne.s32.totalorder %s19, %s22
    %p31 = scmp.eq.s32.totalorder %s14, 1
    %p32 = por %p30, %p31
    %p33 = scmp.ne.s32.totalorder %s22, %s23
    %p34 = scmp.eq.s32.totalorder %s14, 0
    %p35 = por %p33, %p34
    %p36 = scmp.ne.s32.totalorder %s22, %s23
    %p37 = scmp.eq.s32.totalorder %s15, 1
    %p38 = por %p36, %p37
    %p40 = scmp.ne.s32.totalorder %s23, %s39
    %p41 = scmp.eq.s32.totalorder %s15, 0
    %p42 = por %p40, %p41
    %s44 = sadd.s32 %s43, 1
    %p47 = scmp.eq.s32.totalorder %s9, 1
    %p48 = scmp.ne.s32.totalorder %s43, %s45
    %p49 = scmp.eq.s32.totalorder %s9, 0
    %p50 = por %p48, %p49
    %p51 = scmp.ne.s32.totalorder %s43, %s45
    %p52 = scmp.eq.s32.totalorder %s14, 1
    %p53 = por %p51, %p52
    %p54 = scmp.ne.s32.totalorder %s45, %s46
    %p55 = scmp.eq.s32.totalorder %s14, 0
    %p56 = por %p54, %p55
    %p57 = scmp.ne.s32.totalorder %s45, %s46
    %p58 = scmp.eq.s32.totalorder %s15, 1
    %p59 = por %p57, %p58
    %p61 = scmp.ne.s32.totalorder %s46, %s60
    %p62 = scmp.eq.s32.totalorder %s15, 0
    %p63 = por %p61, %p62
    %s65 = sadd.s32 %s64, 1
    %p68 = scmp.eq.s32.totalorder %s9, 1
    %p69 = scmp.ne.s32.totalorder %s64, %s66
    %p70 = scmp.eq.s32.totalorder %s9, 0
    %p71 = por %p69, %p70
    %p72 = scmp.ne.s32.totalorder %s64, %s66
    %p73 = scmp.eq.s32.totalorder %s14, 1
    %p74 = por %p72, %p73
    %p75 = scmp.ne.s32.totalorder %s66, %s67
    %p76 = scmp.eq.s32.totalorder %s14, 0
    %p77 = por %p75, %p76
    %p78 = scmp.ne.s32.totalorder %s66, %s67
    %p79 = scmp.eq.s32.totalorder %s15, 1
    %p80 = por %p78, %p79
    %p82 = scmp.ne.s32.totalorder %s67, %s81
    %p83 = scmp.eq.s32.totalorder %s15, 0
    %p84 = por %p82, %p83
    %s85 = ssub.s32 %s9, %s16
    %p86 = scmp.eq.s32.totalorder %s85, 0
    %s88 = sadd.s32 %s87, 1
    %s89 = scalar_select %p86, %s87, %s88
    %p92 = pneg %p86
    %p93 = scmp.eq.s32.totalorder %s9, 1
    %p94 = por %p92, %p93
    %p95 = scmp.ne.s32.totalorder %s87, %s90
    %p96 = scmp.eq.s32.totalorder %s9, 0
    %p97 = por %p95, %p96
    %p98 = scmp.ne.s32.totalorder %s87, %s90
    %p99 = scmp.eq.s32.totalorder %s14, 1
    %p100 = por %p98, %p99
    %p101 = scmp.ne.s32.totalorder %s90, %s91
    %p102 = scmp.eq.s32.totalorder %s14, 0
    %p103 = por %p101, %p102
    %p104 = scmp.ne.s32.totalorder %s90, %s91
    %p105 = scmp.eq.s32.totalorder %s15, 1
    %p106 = por %p104, %p105
    %p108 = scmp.ne.s32.totalorder %s91, %s107
    %p109 = scmp.eq.s32.totalorder %s15, 0
    %p110 = por %p108, %p109
    %p111 = scmp.le.s32.totalorder 1, %s9
    %p112 = scmp.lt.s32.totalorder %s9, 3
    %p113 = pnand %p111, %p112
    %p114 = pneg %p113
    // Predicated region
    $region9: #{stformer_forward.27} parent=5 // pred_check
      _
    $region10: #{stformer_forward.27} parent=5 // pred_check_branch
      %116 = sbr.rel (%p113) target = $region12
    $region11: #{stformer_forward.27} parent=5 // pred_region
      %s117 = ssub.s32 %s9, 1
      // Predicated region
      $region13: #{stformer_forward.27} parent=11 // pred_check
        %p118 = pneg %p56
      $region14: #{stformer_forward.27} parent=11 // pred_check_branch
        %120 = sbr.rel (%p118) target = $region16
      $region15: #{stformer_forward.27} parent=11 // pred_region
        _
      $region16: #{stformer_forward.27} parent=11 // pred_fallthru
        _
      // Predicated region
      $region17: #{stformer_forward.27} parent=11 // pred_check
        %p121 = pneg %p77
      $region18: #{stformer_forward.27} parent=11 // pred_check_branch
        %123 = sbr.rel (%p121) target = $region20
      $region19: #{stformer_forward.27} parent=11 // pred_region
        _
      $region20: #{stformer_forward.27} parent=11 // pred_fallthru
        _
    $region12: #{stformer_forward.27} parent=5 // pred_fallthru
      _
    %p124 = scmp.lt.s32.totalorder %s9, 2
    // Predicated region
    $region21: #{stformer_forward.27} parent=5 // pred_check
      %p125 = pneg %p124
    $region22: #{stformer_forward.27} parent=5 // pred_check_branch
      %127 = sbr.rel (%p125) target = $region24
    $region23: #{stformer_forward.27} parent=5 // pred_region
      // Predicated region
      $region25: #{stformer_forward.27} parent=23 // pred_check
        %p128 = pneg %p29
      $region26: #{stformer_forward.27} parent=23 // pred_check_branch
        %130 = sbr.rel (%p128) target = $region28
      $region27: #{stformer_forward.27} parent=23 // pred_region
        %p131 = scmp.lt.s32.totalorder %s9, 1
        %s132 = scalar_select %p131, %s9, 1
        %s133 = smul.addr %s132, 8
        %s134 = scalar_lea.vmem %s0, %s133
      $region28: #{stformer_forward.27} parent=23 // pred_fallthru
        _
    $region24: #{stformer_forward.27} parent=5 // pred_fallthru
      _
    %p135 = scmp.le.s32.totalorder 1, %s9
    %p136 = scmp.lt.s32.totalorder %s9, 3
    %p137 = pnand %p135, %p136
    %p138 = pneg %p137
    // Predicated region
    $region29: #{stformer_forward.27} parent=5 // pred_check
      _
    $region30: #{stformer_forward.27} parent=5 // pred_check_branch
      %140 = sbr.rel (%p137) target = $region32
    $region31: #{stformer_forward.27} parent=5 // pred_region
      %s141 = ssub.s32 %s9, 1
      %p142 = scmp.lt.s32.totalorder %s14, 1
      %s143 = scalar_select %p142, %s14, 1
      %s144 = smul.addr %s143, 8
      %s145 = scalar_lea.vmem %s0, %s144
      %p146 = pneg %p35
      %p147 = pneg %p32
      %p148 = pneg %p56
      %p149 = pneg %p53
      %p150 = pneg %p77
      %p151 = pneg %p74
      %p152 = pneg %p103
      %p153 = pneg %p100
      %p154 = scmp.lt.s32.totalorder %s14, 1
      %s155 = scalar_select %p154, %s14, 1
      %s156 = smul.addr %s155, 7
      %s157 = smul.addr %s156, 8
      %s158 = scalar_lea.vmem %s3, %s157
      %p159 = scmp.lt.s32.totalorder %s14, 1
      %s160 = scalar_select %p159, %s14, 1
      %s161 = smul.addr %s160, 8
      %s162 = scalar_lea.vmem %s0, %s161
      %p163 = scmp.lt.s32.totalorder %s14, 1
      %s164 = scalar_select %p163, %s14, 1
      %s165 = smul.addr %s164, 7
      %s166 = smul.addr %s165, 8
      %s167 = scalar_lea.vmem %s3, %s166
      %v168 = vld [vmem:[%s162] sm:$0xff]
      %v169 = vmax.f32 %v168, 0.0
      %v170 = vand.u32 2147483647, %v168
      %v171 = vsub.f32 0.0, %v170
      %v172 = vmul.f32 %v171, 1.442695
      %v173 = vpow.pop %v172
      %v174 = vadd.f32 %v173, 1.0
      %v175 = vlog2.pop %v174
      %v176 = vmul.f32 %v175, 0.6931472
      %v177 = vadd.f32 %v169, %v176
      %v178 = vtanh.pop %v177
      %v179 = vmul.f32 %v168, %v178
      %v180 = vld [vmem:[%s1] sm:$0xff]
      %v181 = vld [vmem:[%s1 + $0x8] sm:$0xff]
      %v182 = vld [vmem:[%s1 + $0x10] sm:$0xff]
      %v183 = vld [vmem:[%s1 + $0x18] sm:$0xff]
      %v184 = vld [vmem:[%s1 + $0x20] sm:$0xff]
      %v185 = vld [vmem:[%s1 + $0x28] sm:$0xff]
      %v186 = vld [vmem:[%s1 + $0x30] sm:$0xff]
      %v187 = vld [vmem:[%s1 + $0x38] sm:$0xff]
      %v188 = vld [vmem:[%s1 + $0x40] sm:$0xff]
      %v189 = vld [vmem:[%s1 + $0x48] sm:$0xff]
      %v190 = vld [vmem:[%s1 + $0x50] sm:$0xff]
      %v191 = vld [vmem:[%s1 + $0x58] sm:$0xff]
      %v192 = vld [vmem:[%s1 + $0x60] sm:$0xff]
      %v193 = vld [vmem:[%s1 + $0x68] sm:$0xff]
      %v194 = vld [vmem:[%s1 + $0x70] sm:$0xff]
      %v195 = vld [vmem:[%s1 + $0x78] sm:$0xff]
      %v196 = vld [vmem:[%s1 + $0x80] sm:$0xff]
      %v197 = vld [vmem:[%s1 + $0x88] sm:$0xff]
      %v198 = vld [vmem:[%s1 + $0x90] sm:$0xff]
      %v199 = vld [vmem:[%s1 + $0x98] sm:$0xff]
      %v200 = vld [vmem:[%s1 + $0xa0] sm:$0xff]
      %v201 = vld [vmem:[%s1 + $0xa8] sm:$0xff]
      %v202 = vld [vmem:[%s1 + $0xb0] sm:$0xff]
      %v203 = vld [vmem:[%s1 + $0xb8] sm:$0xff]
      %v204 = vld [vmem:[%s1 + $0xc0] sm:$0xff]
      %v205 = vld [vmem:[%s1 + $0xc8] sm:$0xff]
      %v206 = vld [vmem:[%s1 + $0xd0] sm:$0xff]
      %v207 = vld [vmem:[%s1 + $0xd8] sm:$0xff]
      %v208 = vld [vmem:[%s2] sm:$0x7f]
      %v210 = vlaneseq
      %v211 = vshrl.u32 %v210, 7
      %v212 = vsub.s32 0, %v211
      %v213 = vrot.slane %v208, %v212
      %v214 = vlaneseq
      %v215 = vshrl.u32 %v214, 7
      %v216 = vsub.s32 1, %v215
      %v217 = vrot.slane %v208, %v216
      %v218 = vlaneseq
      %v219 = vshrl.u32 %v218, 7
      %v220 = vsub.s32 2, %v219
      %v221 = vrot.slane %v208, %v220
      %v222 = vlaneseq
      %v223 = vshrl.u32 %v222, 7
      %v224 = vsub.s32 3, %v223
      %v225 = vrot.slane %v208, %v224
      %v226 = vlaneseq
      %v227 = vshrl.u32 %v226, 7
      %v228 = vsub.s32 4, %v227
      %v229 = vrot.slane %v208, %v228
      %v230 = vlaneseq
      %v231 = vshrl.u32 %v230, 7
      %v232 = vsub.s32 5, %v231
      %v233 = vrot.slane %v208, %v232
      %v234 = vlaneseq
      %v235 = vshrl.u32 %v234, 7
      %v236 = vsub.s32 6, %v235
      %v237 = vrot.slane %v208, %v236
      %vm245 = vcmask 261120
      %v247 = vsel %vm245, %v179, 0
      %249 = vmatprep.subr.mxu0 %v181
      %250 = vmatpush1.msra.mxu0 %v180
      %251 = vmatprep.subr.mxu0 %v188
      %252 = vmatpush1.msra.mxu0 %v187
      %253 = vmatprep.subr.mxu0 %v195
      %254 = vmatpush1.msra.mxu0 %v194
      %255 = vmatprep.subr.mxu0 %v202
      %256 = vmatpush1.msra.mxu0 %v201
      %257 = vmatprep.subr.mxu0 0.0
      %258 = vmatpush1.msra.mxu0 0.0
      %259 = vmatprep.subr.mxu0 0.0
      %260 = vmatpush1.msra.mxu0 0.0
      %261 = vmatprep.subr.mxu0 0.0
      %262 = vmatpush1.msra.mxu0 0.0
      %263 = vmatprep.subr.mxu0 0.0
      %264 = vmatpush1.msra.mxu0 0.0
      %265 = vmatprep.subr.mxu0 0.0
      %266 = vmatpush1.msra.mxu0 0.0
      %267 = vmatprep.subr.mxu0 0.0
      %268 = vmatpush1.msra.mxu0 0.0
      %269 = vmatprep.subr.mxu0 0.0
      %270 = vmatpush1.msra.mxu0 0.0
      %271 = vmatprep.subr.mxu0 0.0
      %272 = vmatpush1.msra.mxu0 0.0
      %273 = vmatprep.subr.mxu0 0.0
      %274 = vmatpush1.msra.mxu0 0.0
      %275 = vmatprep.subr.mxu0 0.0
      %276 = vmatpush1.msra.mxu0 0.0
      %277 = vmatprep.subr.mxu0 0.0
      %278 = vmatpush1.msra.mxu0 0.0
      %279 = vmatprep.subr.mxu0 0.0
      %280 = vmatpush1.msra.mxu0 0.0
      %281 = vmatprep.subr.mxu0 0.0
      %282 = vmatpush1.msra.mxu0 0.0
      %283 = vmatprep.subr.mxu0 0.0
      %284 = vmatpush1.msra.mxu0 0.0
      %285 = vmatprep.subr.mxu0 0.0
      %286 = vmatpush1.msra.mxu0 0.0
      %287 = vmatprep.subr.mxu0 0.0
      %288 = vmatpush1.msra.mxu0 0.0
      %289 = vmatprep.subr.mxu0 0.0
      %290 = vmatpush1.msra.mxu0 0.0
      %291 = vmatprep.subr.mxu0 0.0
      %292 = vmatpush1.msra.mxu0 0.0
      %293 = vmatprep.subr.mxu0 0.0
      %294 = vmatpush1.msra.mxu0 0.0
      %295 = vmatprep.subr.mxu0 0.0
      %296 = vmatpush1.msra.mxu0 0.0
      %297 = vmatprep.subr.mxu0 0.0
      %298 = vmatpush1.msra.mxu0 0.0
      %299 = vmatprep.subr.mxu0 0.0
      %300 = vmatpush1.msra.mxu0 0.0
      %301 = vmatprep.subr.mxu0 0.0
      %302 = vmatpush1.msra.mxu0 0.0
      %303 = vmatprep.subr.mxu0 0.0
      %304 = vmatpush1.msra.mxu0 0.0
      %305 = vmatprep.subr.mxu0 0.0
      %306 = vmatpush1.msra.mxu0 0.0
      %307 = vmatprep.subr.mxu0 0.0
      %308 = vmatpush1.msra.mxu0 0.0
      %309 = vmatprep.subr.mxu0 0.0
      %310 = vmatpush1.msra.mxu0 0.0
      %311 = vmatprep.subr.mxu0 0.0
      %312 = vmatpush1.msra.mxu0 0.0
      %313 = vmatprep.mubr.f32.mxu0 0.0
      %314 = vmatmul.mubr.f32.gmra.mrb[0].mxu0 %v247
      %v315 = vpop.f32.mrb[0].mxu0
      %v316 = vadd.f32 %v213, %v315
      %v317 = vpop.f32.mrb[0].mxu0
      %v318 = vadd.f32 %v217, %v317
      %319 = vdwg.mxu0
      %320 = vmatprep.subr.mxu0 %v183
      %321 = vmatpush1.msra.mxu0 %v182
      %322 = vmatprep.subr.mxu0 %v190
      %323 = vmatpush1.msra.mxu0 %v189
      %324 = vmatprep.subr.mxu0 %v197
      %325 = vmatpush1.msra.mxu0 %v196
      %326 = vmatprep.subr.mxu0 %v204
      %327 = vmatpush1.msra.mxu0 %v203
      %328 = vmatprep.subr.mxu0 0.0
      %329 = vmatpush1.msra.mxu0 0.0
      %330 = vmatprep.subr.mxu0 0.0
      %331 = vmatpush1.msra.mxu0 0.0
      %332 = vmatprep.subr.mxu0 0.0
      %333 = vmatpush1.msra.mxu0 0.0
      %334 = vmatprep.subr.mxu0 0.0
      %335 = vmatpush1.msra.mxu0 0.0
      %336 = vmatprep.subr.mxu0 0.0
      %337 = vmatpush1.msra.mxu0 0.0
      %338 = vmatprep.subr.mxu0 0.0
      %339 = vmatpush1.msra.mxu0 0.0
      %340 = vmatprep.subr.mxu0 0.0
      %341 = vmatpush1.msra.mxu0 0.0
      %342 = vmatprep.subr.mxu0 0.0
      %343 = vmatpush1.msra.mxu0 0.0
      %344 = vmatprep.subr.mxu0 0.0
      %345 = vmatpush1.msra.mxu0 0.0
      %346 = vmatprep.subr.mxu0 0.0
      %347 = vmatpush1.msra.mxu0 0.0
      %348 = vmatprep.subr.mxu0 0.0
      %349 = vmatpush1.msra.mxu0 0.0
      %350 = vmatprep.subr.mxu0 0.0
      %351 = vmatpush1.msra.mxu0 0.0
      %352 = vmatprep.subr.mxu0 0.0
      %353 = vmatpush1.msra.mxu0 0.0
      %354 = vmatprep.subr.mxu0 0.0
      %355 = vmatpush1.msra.mxu0 0.0
      %356 = vmatprep.subr.mxu0 0.0
      %357 = vmatpush1.msra.mxu0 0.0
      %358 = vmatprep.subr.mxu0 0.0
      %359 = vmatpush1.msra.mxu0 0.0
      %360 = vmatprep.subr.mxu0 0.0
      %361 = vmatpush1.msra.mxu0 0.0
      %362 = vmatprep.subr.mxu0 0.0
      %363 = vmatpush1.msra.mxu0 0.0
      %364 = vmatprep.subr.mxu0 0.0
      %365 = vmatpush1.msra.mxu0 0.0
      %366 = vmatprep.subr.mxu0 0.0
      %367 = vmatpush1.msra.mxu0 0.0
      %368 = vmatprep.subr.mxu0 0.0
      %369 = vmatpush1.msra.mxu0 0.0
      %370 = vmatprep.subr.mxu0 0.0
      %371 = vmatpush1.msra.mxu0 0.0
      %372 = vmatprep.subr.mxu0 0.0
      %373 = vmatpush1.msra.mxu0 0.0
      %374 = vmatprep.subr.mxu0 0.0
      %375 = vmatpush1.msra.mxu0 0.0
      %376 = vmatprep.subr.mxu0 0.0
      %377 = vmatpush1.msra.mxu0 0.0
      %378 = vmatprep.subr.mxu0 0.0
      %379 = vmatpush1.msra.mxu0 0.0
      %380 = vmatprep.subr.mxu0 0.0
      %381 = vmatpush1.msra.mxu0 0.0
      %382 = vmatprep.subr.mxu0 0.0
      %383 = vmatpush1.msra.mxu0 0.0
      %384 = vmatprep.mubr.f32.mxu0 0.0
      %385 = vmatmul.mubr.f32.gmra.mrb[0].mxu0 %v247
      %v386 = vpop.f32.mrb[0].mxu0
      %v387 = vadd.f32 %v221, %v386
      %v388 = vpop.f32.mrb[0].mxu0
      %v389 = vadd.f32 %v225, %v388
      %390 = vdwg.mxu0
      %391 = vmatprep.subr.mxu0 %v185
      %392 = vmatpush1.msra.mxu0 %v184
      %393 = vmatprep.subr.mxu0 %v192
      %394 = vmatpush1.msra.mxu0 %v191
      %395 = vmatprep.subr.mxu0 %v199
      %396 = vmatpush1.msra.mxu0 %v198
      %397 = vmatprep.subr.mxu0 %v206
      %398 = vmatpush1.msra.mxu0 %v205
      %399 = vmatprep.subr.mxu0 0.0
      %400 = vmatpush1.msra.mxu0 0.0
      %401 = vmatprep.subr.mxu0 0.0
      %402 = vmatpush1.msra.mxu0 0.0
      %403 = vmatprep.subr.mxu0 0.0
      %404 = vmatpush1.msra.mxu0 0.0
      %405 = vmatprep.subr.mxu0 0.0
      %406 = vmatpush1.msra.mxu0 0.0
      %407 = vmatprep.subr.mxu0 0.0
      %408 = vmatpush1.msra.mxu0 0.0
      %409 = vmatprep.subr.mxu0 0.0
      %410 = vmatpush1.msra.mxu0 0.0
      %411 = vmatprep.subr.mxu0 0.0
      %412 = vmatpush1.msra.mxu0 0.0
      %413 = vmatprep.subr.mxu0 0.0
      %414 = vmatpush1.msra.mxu0 0.0
      %415 = vmatprep.subr.mxu0 0.0
      %416 = vmatpush1.msra.mxu0 0.0
      %417 = vmatprep.subr.mxu0 0.0
      %418 = vmatpush1.msra.mxu0 0.0
      %419 = vmatprep.subr.mxu0 0.0
      %420 = vmatpush1.msra.mxu0 0.0
      %421 = vmatprep.subr.mxu0 0.0
      %422 = vmatpush1.msra.mxu0 0.0
      %423 = vmatprep.subr.mxu0 0.0
      %424 = vmatpush1.msra.mxu0 0.0
      %425 = vmatprep.subr.mxu0 0.0
      %426 = vmatpush1.msra.mxu0 0.0
      %427 = vmatprep.subr.mxu0 0.0
      %428 = vmatpush1.msra.mxu0 0.0
      %429 = vmatprep.subr.mxu0 0.0
      %430 = vmatpush1.msra.mxu0 0.0
      %431 = vmatprep.subr.mxu0 0.0
      %432 = vmatpush1.msra.mxu0 0.0
      %433 = vmatprep.subr.mxu0 0.0
      %434 = vmatpush1.msra.mxu0 0.0
      %435 = vmatprep.subr.mxu0 0.0
      %436 = vmatpush1.msra.mxu0 0.0
      %437 = vmatprep.subr.mxu0 0.0
      %438 = vmatpush1.msra.mxu0 0.0
      %439 = vmatprep.subr.mxu0 0.0
      %440 = vmatpush1.msra.mxu0 0.0
      %441 = vmatprep.subr.mxu0 0.0
      %442 = vmatpush1.msra.mxu0 0.0
      %443 = vmatprep.subr.mxu0 0.0
      %444 = vmatpush1.msra.mxu0 0.0
      %445 = vmatprep.subr.mxu0 0.0
      %446 = vmatpush1.msra.mxu0 0.0
      %447 = vmatprep.subr.mxu0 0.0
      %448 = vmatpush1.msra.mxu0 0.0
      %449 = vmatprep.subr.mxu0 0.0
      %450 = vmatpush1.msra.mxu0 0.0
      %451 = vmatprep.subr.mxu0 0.0
      %452 = vmatpush1.msra.mxu0 0.0
      %453 = vmatprep.subr.mxu0 0.0
      %454 = vmatpush1.msra.mxu0 0.0
      %455 = vmatprep.mubr.f32.mxu0 0.0
      %456 = vmatmul.mubr.f32.gmra.mrb[0].mxu0 %v247
      %v457 = vpop.f32.mrb[0].mxu0
      %v458 = vadd.f32 %v229, %v457
      %v459 = vpop.f32.mrb[0].mxu0
      %v460 = vadd.f32 %v233, %v459
      %461 = vdwg.mxu0
      %462 = vmatprep.subr.mxu0 0.0
      %463 = vmatpush1.msra.mxu0 %v186
      %464 = vmatprep.subr.mxu0 0.0
      %465 = vmatpush1.msra.mxu0 %v193
      %466 = vmatprep.subr.mxu0 0.0
      %467 = vmatpush1.msra.mxu0 %v200
      %468 = vmatprep.subr.mxu0 0.0
      %469 = vmatpush1.msra.mxu0 %v207
      %470 = vmatprep.subr.mxu0 0.0
      %471 = vmatpush1.msra.mxu0 0.0
      %472 = vmatprep.subr.mxu0 0.0
      %473 = vmatpush1.msra.mxu0 0.0
      %474 = vmatprep.subr.mxu0 0.0
      %475 = vmatpush1.msra.mxu0 0.0
      %476 = vmatprep.subr.mxu0 0.0
      %477 = vmatpush1.msra.mxu0 0.0
      %478 = vmatprep.subr.mxu0 0.0
      %479 = vmatpush1.msra.mxu0 0.0
      %480 = vmatprep.subr.mxu0 0.0
      %481 = vmatpush1.msra.mxu0 0.0
      %482 = vmatprep.subr.mxu0 0.0
      %483 = vmatpush1.msra.mxu0 0.0
      %484 = vmatprep.subr.mxu0 0.0
      %485 = vmatpush1.msra.mxu0 0.0
      %486 = vmatprep.subr.mxu0 0.0
      %487 = vmatpush1.msra.mxu0 0.0
      %488 = vmatprep.subr.mxu0 0.0
      %489 = vmatpush1.msra.mxu0 0.0
      %490 = vmatprep.subr.mxu0 0.0
      %491 = vmatpush1.msra.mxu0 0.0
      %492 = vmatprep.subr.mxu0 0.0
      %493 = vmatpush1.msra.mxu0 0.0
      %494 = vmatprep.subr.mxu0 0.0
      %495 = vmatpush1.msra.mxu0 0.0
      %496 = vmatprep.subr.mxu0 0.0
      %497 = vmatpush1.msra.mxu0 0.0
      %498 = vmatprep.subr.mxu0 0.0
      %499 = vmatpush1.msra.mxu0 0.0
      %500 = vmatprep.subr.mxu0 0.0
      %501 = vmatpush1.msra.mxu0 0.0
      %502 = vmatprep.subr.mxu0 0.0
      %503 = vmatpush1.msra.mxu0 0.0
      %504 = vmatprep.subr.mxu0 0.0
      %505 = vmatpush1.msra.mxu0 0.0
      %506 = vmatprep.subr.mxu0 0.0
      %507 = vmatpush1.msra.mxu0 0.0
      %508 = vmatprep.subr.mxu0 0.0
      %509 = vmatpush1.msra.mxu0 0.0
      %510 = vmatprep.subr.mxu0 0.0
      %511 = vmatpush1.msra.mxu0 0.0
      %512 = vmatprep.subr.mxu0 0.0
      %513 = vmatpush1.msra.mxu0 0.0
      %514 = vmatprep.subr.mxu0 0.0
      %515 = vmatpush1.msra.mxu0 0.0
      %516 = vmatprep.subr.mxu0 0.0
      %517 = vmatpush1.msra.mxu0 0.0
      %518 = vmatprep.subr.mxu0 0.0
      %519 = vmatpush1.msra.mxu0 0.0
      %520 = vmatprep.subr.mxu0 0.0
      %521 = vmatpush1.msra.mxu0 0.0
      %522 = vmatprep.subr.mxu0 0.0
      %523 = vmatpush1.msra.mxu0 0.0
      %524 = vmatprep.subr.mxu0 0.0
      %525 = vmatpush1.msra.mxu0 0.0
      %526 = vmatprep.mubr.f32.mxu0 0.0
      %527 = vmatmul.mubr.f32.gmra.mrb[0].mxu0 %v247
      %v528 = vpop.f32.mrb[0].mxu0
      %v529 = vadd.f32 %v237, %v528
      %v530 = vpop.f32.mrb[0].mxu0
      %531 = vdwg.mxu0
      %532 = vst [vmem:[%s167] sm:$0xff] %v316
      %533 = vst [vmem:[%s167 + $0x8] sm:$0xff] %v318
      %534 = vst [vmem:[%s167 + $0x10] sm:$0xff] %v387
      %535 = vst [vmem:[%s167 + $0x18] sm:$0xff] %v389
      %536 = vst [vmem:[%s167 + $0x20] sm:$0xff] %v458
      %537 = vst [vmem:[%s167 + $0x28] sm:$0xff] %v460
      %vm538 = vcmask 785408
      %539 = vst.msk [vmem:[%s167 + $0x30] sm:$0xff] %vm538, %v529
      %p540 = scmp.lt.s32.totalorder %s14, 1
      %s541 = scalar_select %p540, %s14, 1
      %s542 = smul.addr %s541, 7
      %s543 = smul.addr %s542, 8
      %s544 = scalar_lea.vmem %s3, %s543
      // Predicated region
      $region33: #{stformer_forward.27} parent=31 // pred_check
        %p545 = pneg %p100
      $region34: #{stformer_forward.27} parent=31 // pred_check_branch
        %547 = sbr.rel (%p545) target = $region36
      $region35: #{stformer_forward.27} parent=31 // pred_region
        _
      $region36: #{stformer_forward.27} parent=31 // pred_fallthru
        _
    $region32: #{stformer_forward.27} parent=5 // pred_fallthru
      _
    %p548 = scmp.le.s32.totalorder 2, %s9
    // Predicated region
    $region37: #{stformer_forward.27} parent=5 // pred_check
      %p549 = pneg %p548
    $region38: #{stformer_forward.27} parent=5 // pred_check_branch
      %551 = sbr.rel (%p549) target = $region40
    $region39: #{stformer_forward.27} parent=5 // pred_region
      %s552 = ssub.s32 %s9, 2
      // Predicated region
      $region41: #{stformer_forward.27} parent=39 // pred_check
        %p553 = pneg %p106
      $region42: #{stformer_forward.27} parent=39 // pred_check_branch
        %555 = sbr.rel (%p553) target = $region44
      $region43: #{stformer_forward.27} parent=39 // pred_region
        %p556 = scmp.lt.s32.totalorder %s15, 1
        %s557 = scalar_select %p556, %s15, 1
        %s558 = smul.addr %s557, 7
        %s559 = smul.addr %s558, 8
        %s560 = scalar_lea.vmem %s3, %s559
      $region44: #{stformer_forward.27} parent=39 // pred_fallthru
        _
    $region40: #{stformer_forward.27} parent=5 // pred_fallthru
      _
  $region6: #{stformer_forward.27} parent=0 // loop_footer
    %s13 = sadd.s32 1, %s9
  $region7: #{stformer_forward.27} parent=0 // loop_footer_branch
    %8 = sbr.rel target = $region3
  $region8: #{stformer_forward.27} parent=0 // loop_exit
    _

// kernel: stformer_forward.25
$region0: #{stformer_forward.25}
  #allocation0 [shape = 'u32[]', space=smem, size = 0x4, offset = 0x4, fixed_abs, tag = 'smem constant byte address 0x4 - core index']
  #allocation1 [shape = 'u32[144,128]{1,0:T(1,128)}', space=vmem, size = 0x12000, scoped, tag = 'internal scratch']
  %s0 = inlined_call_operand.vmem [shape: f32[96,6], index: 0, kind: input, shape index: {}]
  %s1 = inlined_call_operand.vmem [shape: f32[6,128], index: 1, kind: input, shape index: {}]
  %s2 = inlined_call_operand.vmem [shape: f32[1,128], index: 2, kind: input, shape index: {}]
  %s3 = inlined_call_operand.vmem [shape: f32[128,32], index: 3, kind: input, shape index: {}]
  %s4 = inlined_call_operand.vmem [shape: f32[1,32], index: 4, kind: input, shape index: {}]
  %s5 = inlined_call_operand.vmem [shape: f32[96,32], index: 5, kind: output, shape index: {}]
  %s6 = sld [smem:[#allocation0]]
  $region53: #{stformer_forward.25} parent=0
    _
  %s8 = ssub.s32 1, %s6
  %s9 = scalar_select 0, %s8, %s6
  loop: start=0, step=1, limit=4
  $region2: #{stformer_forward.25} parent=0 // loop_pre_header
    _
  $region3: #{stformer_forward.25} parent=0 // loop_header
    %s11 = sphi 0, %s15
    %p12 = scmp.ge.s32.totalorder %s11, 4
    %s21 = sphi 0, %s23
    %s24 = sphi 0, %s21
    %s25 = sphi 0, %s24
    %s41 = sphi 0, %s25
    %s45 = sphi 0, %s45
    %s47 = sphi 0, %s45
    %s48 = sphi 0, %s47
    %s62 = sphi 0, %s48
    %s66 = sphi 0, %s66
    %s68 = sphi 0, %s66
    %s69 = sphi 0, %s68
    %s83 = sphi 0, %s69
    %s87 = sphi 0, %s87
    %s89 = sphi 0, %s87
    %s90 = sphi 0, %s89
    %s104 = sphi 0, %s90
    %s108 = sphi 0, %s108
    %s110 = sphi 0, %s108
    %s111 = sphi 0, %s110
    %s125 = sphi 0, %s111
    %s131 = sphi 0, %s133
    %s134 = sphi 0, %s131
    %s135 = sphi 0, %s134
    %s151 = sphi 0, %s135
  $region4: #{stformer_forward.25} parent=0 // loop_header_branch
    %14 = sbr.rel (%p12) target = $region8
  $region5: #{stformer_forward.25} parent=0 // loop_body
    %s16 = ssub.s32 %s11, 1
    %s17 = ssub.s32 %s11, 2
    %s18 = sadd.s32 %s11, 1
    %s19 = ssub.s32 %s11, %s18
    %p20 = scmp.eq.s32.totalorder %s19, 0
    %s22 = sadd.s32 %s21, 1
    %s23 = scalar_select %p20, %s21, %s22
    %p26 = pneg %p20
    %p27 = scmp.eq.s32.totalorder %s11, 1
    %p28 = por %p26, %p27
    %p29 = scmp.ne.s32.totalorder %s21, %s24
    %p30 = scmp.eq.s32.totalorder %s11, 0
    %p31 = por %p29, %p30
    %p32 = scmp.ne.s32.totalorder %s21, %s24
    %p33 = scmp.eq.s32.totalorder %s16, 1
    %p34 = por %p32, %p33
    %p35 = scmp.ne.s32.totalorder %s24, %s25
    %p36 = scmp.eq.s32.totalorder %s16, 0
    %p37 = por %p35, %p36
    %p38 = scmp.ne.s32.totalorder %s24, %s25
    %p39 = scmp.eq.s32.totalorder %s17, 1
    %p40 = por %p38, %p39
    %p42 = scmp.ne.s32.totalorder %s25, %s41
    %p43 = scmp.eq.s32.totalorder %s17, 0
    %p44 = por %p42, %p43
    %s46 = sadd.s32 %s45, 1
    %p49 = scmp.eq.s32.totalorder %s11, 1
    %p50 = scmp.ne.s32.totalorder %s45, %s47
    %p51 = scmp.eq.s32.totalorder %s11, 0
    %p52 = por %p50, %p51
    %p53 = scmp.ne.s32.totalorder %s45, %s47
    %p54 = scmp.eq.s32.totalorder %s16, 1
    %p55 = por %p53, %p54
    %p56 = scmp.ne.s32.totalorder %s47, %s48
    %p57 = scmp.eq.s32.totalorder %s16, 0
    %p58 = por %p56, %p57
    %p59 = scmp.ne.s32.totalorder %s47, %s48
    %p60 = scmp.eq.s32.totalorder %s17, 1
    %p61 = por %p59, %p60
    %p63 = scmp.ne.s32.totalorder %s48, %s62
    %p64 = scmp.eq.s32.totalorder %s17, 0
    %p65 = por %p63, %p64
    %s67 = sadd.s32 %s66, 1
    %p70 = scmp.eq.s32.totalorder %s11, 1
    %p71 = scmp.ne.s32.totalorder %s66, %s68
    %p72 = scmp.eq.s32.totalorder %s11, 0
    %p73 = por %p71, %p72
    %p74 = scmp.ne.s32.totalorder %s66, %s68
    %p75 = scmp.eq.s32.totalorder %s16, 1
    %p76 = por %p74, %p75
    %p77 = scmp.ne.s32.totalorder %s68, %s69
    %p78 = scmp.eq.s32.totalorder %s16, 0
    %p79 = por %p77, %p78
    %p80 = scmp.ne.s32.totalorder %s68, %s69
    %p81 = scmp.eq.s32.totalorder %s17, 1
    %p82 = por %p80, %p81
    %p84 = scmp.ne.s32.totalorder %s69, %s83
    %p85 = scmp.eq.s32.totalorder %s17, 0
    %p86 = por %p84, %p85
    %s88 = sadd.s32 %s87, 1
    %p91 = scmp.eq.s32.totalorder %s11, 1
    %p92 = scmp.ne.s32.totalorder %s87, %s89
    %p93 = scmp.eq.s32.totalorder %s11, 0
    %p94 = por %p92, %p93
    %p95 = scmp.ne.s32.totalorder %s87, %s89
    %p96 = scmp.eq.s32.totalorder %s16, 1
    %p97 = por %p95, %p96
    %p98 = scmp.ne.s32.totalorder %s89, %s90
    %p99 = scmp.eq.s32.totalorder %s16, 0
    %p100 = por %p98, %p99
    %p101 = scmp.ne.s32.totalorder %s89, %s90
    %p102 = scmp.eq.s32.totalorder %s17, 1
    %p103 = por %p101, %p102
    %p105 = scmp.ne.s32.totalorder %s90, %s104
    %p106 = scmp.eq.s32.totalorder %s17, 0
    %p107 = por %p105, %p106
    %s109 = sadd.s32 %s108, 1
    %p112 = scmp.eq.s32.totalorder %s11, 1
    %p113 = scmp.ne.s32.totalorder %s108, %s110
    %p114 = scmp.eq.s32.totalorder %s11, 0
    %p115 = por %p113, %p114
    %p116 = scmp.ne.s32.totalorder %s108, %s110
    %p117 = scmp.eq.s32.totalorder %s16, 1
    %p118 = por %p116, %p117
    %p119 = scmp.ne.s32.totalorder %s110, %s111
    %p120 = scmp.eq.s32.totalorder %s16, 0
    %p121 = por %p119, %p120
    %p122 = scmp.ne.s32.totalorder %s110, %s111
    %p123 = scmp.eq.s32.totalorder %s17, 1
    %p124 = por %p122, %p123
    %p126 = scmp.ne.s32.totalorder %s111, %s125
    %p127 = scmp.eq.s32.totalorder %s17, 0
    %p128 = por %p126, %p127
    %s129 = ssub.s32 %s11, %s18
    %p130 = scmp.eq.s32.totalorder %s129, 0
    %s132 = sadd.s32 %s131, 1
    %s133 = scalar_select %p130, %s131, %s132
    %p136 = pneg %p130
    %p137 = scmp.eq.s32.totalorder %s11, 1
    %p138 = por %p136, %p137
    %p139 = scmp.ne.s32.totalorder %s131, %s134
    %p140 = scmp.eq.s32.totalorder %s11, 0
    %p141 = por %p139, %p140
    %p142 = scmp.ne.s32.totalorder %s131, %s134
    %p143 = scmp.eq.s32.totalorder %s16, 1
    %p144 = por %p142, %p143
    %p145 = scmp.ne.s32.totalorder %s134, %s135
    %p146 = scmp.eq.s32.totalorder %s16, 0
    %p147 = por %p145, %p146
    %p148 = scmp.ne.s32.totalorder %s134, %s135
    %p149 = scmp.eq.s32.totalorder %s17, 1
    %p150 = por %p148, %p149
    %p152 = scmp.ne.s32.totalorder %s135, %s151
    %p153 = scmp.eq.s32.totalorder %s17, 0
    %p154 = por %p152, %p153
    %p155 = scmp.le.s32.totalorder 1, %s11
    %p156 = scmp.lt.s32.totalorder %s11, 3
    %p157 = pnand %p155, %p156
    %p158 = pneg %p157
    // Predicated region
    $region9: #{stformer_forward.25} parent=5 // pred_check
      _
    $region10: #{stformer_forward.25} parent=5 // pred_check_branch
      %160 = sbr.rel (%p157) target = $region12
    $region11: #{stformer_forward.25} parent=5 // pred_region
      %s161 = ssub.s32 %s11, 1
      // Predicated region
      $region13: #{stformer_forward.25} parent=11 // pred_check
        %p162 = pneg %p58
      $region14: #{stformer_forward.25} parent=11 // pred_check_branch
        %164 = sbr.rel (%p162) target = $region16
      $region15: #{stformer_forward.25} parent=11 // pred_region
        _
      $region16: #{stformer_forward.25} parent=11 // pred_fallthru
        _
      // Predicated region
      $region17: #{stformer_forward.25} parent=11 // pred_check
        %p165 = pneg %p79
      $region18: #{stformer_forward.25} parent=11 // pred_check_branch
        %167 = sbr.rel (%p165) target = $region20
      $region19: #{stformer_forward.25} parent=11 // pred_region
        _
      $region20: #{stformer_forward.25} parent=11 // pred_fallthru
        _
      // Predicated region
      $region21: #{stformer_forward.25} parent=11 // pred_check
        %p168 = pneg %p100
      $region22: #{stformer_forward.25} parent=11 // pred_check_branch
        %170 = sbr.rel (%p168) target = $region24
      $region23: #{stformer_forward.25} parent=11 // pred_region
        _
      $region24: #{stformer_forward.25} parent=11 // pred_fallthru
        _
      // Predicated region
      $region25: #{stformer_forward.25} parent=11 // pred_check
        %p171 = pneg %p121
      $region26: #{stformer_forward.25} parent=11 // pred_check_branch
        %173 = sbr.rel (%p171) target = $region28
      $region27: #{stformer_forward.25} parent=11 // pred_region
        _
      $region28: #{stformer_forward.25} parent=11 // pred_fallthru
        _
    $region12: #{stformer_forward.25} parent=5 // pred_fallthru
      _
    %p174 = scmp.lt.s32.totalorder %s11, 2
    // Predicated region
    $region29: #{stformer_forward.25} parent=5 // pred_check
      %p175 = pneg %p174
    $region30: #{stformer_forward.25} parent=5 // pred_check_branch
      %177 = sbr.rel (%p175) target = $region32
    $region31: #{stformer_forward.25} parent=5 // pred_region
      // Predicated region
      $region33: #{stformer_forward.25} parent=31 // pred_check
        %p178 = pneg %p31
      $region34: #{stformer_forward.25} parent=31 // pred_check_branch
        %180 = sbr.rel (%p178) target = $region36
      $region35: #{stformer_forward.25} parent=31 // pred_region
        %s181 = smul.u32 6, %s11
        %p182 = scmp.lt.s32.totalorder %s181, 11
        %s183 = scalar_select %p182, %s181, 11
        %s184 = smul.addr %s183, 8
        %s185 = scalar_lea.vmem %s0, %s184
        %s186 = smul.u32 6, %s11
      $region36: #{stformer_forward.25} parent=31 // pred_fallthru
        _
    $region32: #{stformer_forward.25} parent=5 // pred_fallthru
      _
    %p187 = scmp.le.s32.totalorder 1, %s11
    %p188 = scmp.lt.s32.totalorder %s11, 3
    %p189 = pnand %p187, %p188
    %p190 = pneg %p189
    // Predicated region
    $region37: #{stformer_forward.25} parent=5 // pred_check
      _
    $region38: #{stformer_forward.25} parent=5 // pred_check_branch
      %192 = sbr.rel (%p189) target = $region40
    $region39: #{stformer_forward.25} parent=5 // pred_region
      %s193 = ssub.s32 %s11, 1
      %s194 = smul.u32 6, %s16
      %p195 = scmp.lt.s32.totalorder %s194, 11
      %s196 = scalar_select %p195, %s194, 11
      %s197 = smul.addr %s196, 8
      %s198 = scalar_lea.vmem %s0, %s197
      %p199 = pneg %p37
      %p200 = pneg %p34
      %p201 = pneg %p58
      %p202 = pneg %p55
      %p203 = pneg %p79
      %p204 = pneg %p76
      %p205 = pneg %p100
      %p206 = pneg %p97
      %p207 = pneg %p121
      %p208 = pneg %p118
      %p209 = pneg %p147
      %p210 = pneg %p144
      %s211 = smul.u32 6, %s16
      %p212 = scmp.lt.s32.totalorder %s211, 11
      %s213 = scalar_select %p212, %s211, 11
      %s214 = smul.addr %s213, 8
      %s215 = scalar_lea.vmem %s5, %s214
      %s216 = smul.u32 6, %s16
      %p217 = scmp.lt.s32.totalorder %s216, 11
      %s218 = scalar_select %p217, %s216, 11
      %s219 = smul.addr %s218, 8
      %s220 = scalar_lea.vmem %s0, %s219
      %s221 = smul.u32 6, %s16
      %s222 = smul.u32 6, %s16
      %p223 = scmp.lt.s32.totalorder %s222, 11
      %s224 = scalar_select %p223, %s222, 11
      %s225 = smul.addr %s224, 8
      %s226 = scalar_lea.vmem %s5, %s225
      %s227 = smul.u32 6, %s16
      %v228 = vld [vmem:[%s220] sm:$0xff]
      %v229 = vld [vmem:[%s220 + $0x8] sm:$0xff]
      %v230 = vld [vmem:[%s220 + $0x10] sm:$0xff]
      %v231 = vld [vmem:[%s220 + $0x18] sm:$0xff]
      %v232 = vld [vmem:[%s220 + $0x20] sm:$0xff]
      %v233 = vld [vmem:[%s220 + $0x28] sm:$0xff]
      %v234 = vld [vmem:[%s1] sm:$0x3f]
      %v235 = vld [vmem:[%s2] sm:$0x1]
      %v237 = vlaneseq
      %v238 = vshrl.u32 %v237, 7
      %v239 = vsub.s32 0, %v238
      %v240 = vrot.slane %v235, %v239
      %vm242 = vcmask 48128
      %v244 = vsel %vm242, %v228, 0
      %v247 = vsel %vm242, %v229, 0
      %v250 = vsel %vm242, %v230, 0
      %v253 = vsel %vm242, %v231, 0
      %v256 = vsel %vm242, %v232, 0
      %v259 = vsel %vm242, %v233, 0
      %vm261 = vcmask 1045504
      %v263 = vsel %vm261, %v234, 0
      %265 = vmatprep.subr.mxu0 0.0
      %266 = vmatpush1.msra.mxu0 %v263
      %267 = vmatprep.subr.mxu0 0.0
      %268 = vmatpush1.msra.mxu0 0.0
      %269 = vmatprep.subr.mxu0 0.0
      %270 = vmatpush1.msra.mxu0 0.0
      %271 = vmatprep.subr.mxu0 0.0
      %272 = vmatpush1.msra.mxu0 0.0
      %273 = vmatprep.subr.mxu0 0.0
      %274 = vmatpush1.msra.mxu0 0.0
      %275 = vmatprep.subr.mxu0 0.0
      %276 = vmatpush1.msra.mxu0 0.0
      %277 = vmatprep.subr.mxu0 0.0
      %278 = vmatpush1.msra.mxu0 0.0
      %279 = vmatprep.subr.mxu0 0.0
      %280 = vmatpush1.msra.mxu0 0.0
      %281 = vmatprep.subr.mxu0 0.0
      %282 = vmatpush1.msra.mxu0 0.0
      %283 = vmatprep.subr.mxu0 0.0
      %284 = vmatpush1.msra.mxu0 0.0
      %285 = vmatprep.subr.mxu0 0.0
      %286 = vmatpush1.msra.mxu0 0.0
      %287 = vmatprep.subr.mxu0 0.0
      %288 = vmatpush1.msra.mxu0 0.0
      %289 = vmatprep.subr.mxu0 0.0
      %290 = vmatpush1.msra.mxu0 0.0
      %291 = vmatprep.subr.mxu0 0.0
      %292 = vmatpush1.msra.mxu0 0.0
      %293 = vmatprep.subr.mxu0 0.0
      %294 = vmatpush1.msra.mxu0 0.0
      %295 = vmatprep.subr.mxu0 0.0
      %296 = vmatpush1.msra.mxu0 0.0
      %297 = vmatprep.subr.mxu0 0.0
      %298 = vmatpush1.msra.mxu0 0.0
      %299 = vmatprep.subr.mxu0 0.0
      %300 = vmatpush1.msra.mxu0 0.0
      %301 = vmatprep.subr.mxu0 0.0
      %302 = vmatpush1.msra.mxu0 0.0
      %303 = vmatprep.subr.mxu0 0.0
      %304 = vmatpush1.msra.mxu0 0.0
      %305 = vmatprep.subr.mxu0 0.0
      %306 = vmatpush1.msra.mxu0 0.0
      %307 = vmatprep.subr.mxu0 0.0
      %308 = vmatpush1.msra.mxu0 0.0
      %309 = vmatprep.subr.mxu0 0.0
      %310 = vmatpush1.msra.mxu0 0.0
      %311 = vmatprep.subr.mxu0 0.0
      %312 = vmatpush1.msra.mxu0 0.0
      %313 = vmatprep.subr.mxu0 0.0
      %314 = vmatpush1.msra.mxu0 0.0
      %315 = vmatprep.subr.mxu0 0.0
      %316 = vmatpush1.msra.mxu0 0.0
      %317 = vmatprep.subr.mxu0 0.0
      %318 = vmatpush1.msra.mxu0 0.0
      %319 = vmatprep.subr.mxu0 0.0
      %320 = vmatpush1.msra.mxu0 0.0
      %321 = vmatprep.subr.mxu0 0.0
      %322 = vmatpush1.msra.mxu0 0.0
      %323 = vmatprep.subr.mxu0 0.0
      %324 = vmatpush1.msra.mxu0 0.0
      %325 = vmatprep.subr.mxu0 0.0
      %326 = vmatpush1.msra.mxu0 0.0
      %327 = vmatprep.subr.mxu0 0.0
      %328 = vmatpush1.msra.mxu0 0.0
      %329 = vmatprep.mubr.f32.mxu0 0.0
      %330 = vmatmul.mubr.f32.gmra.mrb[0].mxu0 %v244
      %v331 = vpop.f32.mrb[0].mxu0
      %v332 = vadd.f32 %v240, %v331
      %v333 = vpop.f32.mrb[0].mxu0
      %334 = vmatprep.mubr.f32.mxu0 0.0
      %335 = vmatmul.mubr.f32.gmra.mrb[0].mxu0 %v247
      %v336 = vpop.f32.mrb[0].mxu0
      %v337 = vadd.f32 %v240, %v336
      %v338 = vpop.f32.mrb[0].mxu0
      %339 = vmatprep.mubr.f32.mxu0 0.0
      %340 = vmatmul.mubr.f32.gmra.mrb[0].mxu0 %v250
      %v341 = vpop.f32.mrb[0].mxu0
      %v342 = vadd.f32 %v240, %v341
      %v343 = vpop.f32.mrb[0].mxu0
      %344 = vmatprep.mubr.f32.mxu0 0.0
      %345 = vmatmul.mubr.f32.gmra.mrb[0].mxu0 %v253
      %v346 = vpop.f32.mrb[0].mxu0
      %v347 = vadd.f32 %v240, %v346
      %v348 = vpop.f32.mrb[0].mxu0
      %349 = vmatprep.mubr.f32.mxu0 0.0
      %350 = vmatmul.mubr.f32.gmra.mrb[0].mxu0 %v256
      %v351 = vpop.f32.mrb[0].mxu0
      %v352 = vadd.f32 %v240, %v351
      %v353 = vpop.f32.mrb[0].mxu0
      %354 = vmatprep.mubr.f32.mxu0 0.0
      %355 = vmatmul.mubr.f32.gmra.mrb[0].mxu0 %v259
      %v356 = vpop.f32.mrb[0].mxu0
      %v357 = vadd.f32 %v240, %v356
      %v358 = vpop.f32.mrb[0].mxu0
      %359 = vdwg.mxu0
      %v360 = vmax.f32 %v332, 0.0
      %v361 = vmax.f32 %v337, 0.0
      %v362 = vmax.f32 %v342, 0.0
      %v363 = vmax.f32 %v347, 0.0
      %v364 = vmax.f32 %v352, 0.0
      %v365 = vmax.f32 %v357, 0.0
      %v366 = vand.u32 2147483647, %v332
      %v367 = vand.u32 2147483647, %v337
      %v368 = vand.u32 2147483647, %v342
      %v369 = vand.u32 2147483647, %v347
      %v370 = vand.u32 2147483647, %v352
      %v371 = vand.u32 2147483647, %v357
      %v372 = vsub.f32 0.0, %v366
      %v373 = vsub.f32 0.0, %v367
      %v374 = vsub.f32 0.0, %v368
      %v375 = vsub.f32 0.0, %v369
      %v376 = vsub.f32 0.0, %v370
      %v377 = vsub.f32 0.0, %v371
      %v378 = vmul.f32 %v372, 1.442695
      %v379 = vpow.pop %v378
      %v380 = vmul.f32 %v373, 1.442695
      %v381 = vpow.pop %v380
      %v382 = vmul.f32 %v374, 1.442695
      %v383 = vpow.pop %v382
      %v384 = vmul.f32 %v375, 1.442695
      %v385 = vpow.pop %v384
      %v386 = vmul.f32 %v376, 1.442695
      %v387 = vpow.pop %v386
      %v388 = vmul.f32 %v377, 1.442695
      %v389 = vpow.pop %v388
      %v390 = vadd.f32 %v379, 1.0
      %v391 = vadd.f32 %v381, 1.0
      %v392 = vadd.f32 %v383, 1.0
      %v393 = vadd.f32 %v385, 1.0
      %v394 = vadd.f32 %v387, 1.0
      %v395 = vadd.f32 %v389, 1.0
      %v396 = vlog2.pop %v390
      %v397 = vmul.f32 %v396, 0.6931472
      %v398 = vlog2.pop %v391
      %v399 = vmul.f32 %v398, 0.6931472
      %v400 = vlog2.pop %v392
      %v401 = vmul.f32 %v400, 0.6931472
      %v402 = vlog2.pop %v393
      %v403 = vmul.f32 %v402, 0.6931472
      %v404 = vlog2.pop %v394
      %v405 = vmul.f32 %v404, 0.6931472
      %v406 = vlog2.pop %v395
      %v407 = vmul.f32 %v406, 0.6931472
      %v408 = vadd.f32 %v360, %v397
      %v409 = vadd.f32 %v361, %v399
      %v410 = vadd.f32 %v362, %v401
      %v411 = vadd.f32 %v363, %v403
      %v412 = vadd.f32 %v364, %v405
      %v413 = vadd.f32 %v365, %v407
      %v414 = vtanh.pop %v408
      %v415 = vtanh.pop %v409
      %v416 = vtanh.pop %v410
      %v417 = vtanh.pop %v411
      %v418 = vtanh.pop %v412
      %v419 = vtanh.pop %v413
      %v420 = vmul.f32 %v332, %v414
      %v421 = vmul.f32 %v337, %v415
      %v422 = vmul.f32 %v342, %v416
      %v423 = vmul.f32 %v347, %v417
      %v424 = vmul.f32 %v352, %v418
      %v425 = vmul.f32 %v357, %v419
      %v426 = vld [vmem:[%s3] sm:$0xff]
      %v427 = vld [vmem:[%s3 + $0x8] sm:$0xff]
      %v428 = vld [vmem:[%s3 + $0x10] sm:$0xff]
      %v429 = vld [vmem:[%s3 + $0x18] sm:$0xff]
      %v430 = vld [vmem:[%s3 + $0x20] sm:$0xff]
      %v431 = vld [vmem:[%s3 + $0x28] sm:$0xff]
      %v432 = vld [vmem:[%s3 + $0x30] sm:$0xff]
      %v433 = vld [vmem:[%s3 + $0x38] sm:$0xff]
      %v434 = vld [vmem:[%s3 + $0x40] sm:$0xff]
      %v435 = vld [vmem:[%s3 + $0x48] sm:$0xff]
      %v436 = vld [vmem:[%s3 + $0x50] sm:$0xff]
      %v437 = vld [vmem:[%s3 + $0x58] sm:$0xff]
      %v438 = vld [vmem:[%s3 + $0x60] sm:$0xff]
      %v439 = vld [vmem:[%s3 + $0x68] sm:$0xff]
      %v440 = vld [vmem:[%s3 + $0x70] sm:$0xff]
      %v441 = vld [vmem:[%s3 + $0x78] sm:$0xff]
      %v442 = vld [vmem:[%s4] sm:$0x1]
      %v444 = vlaneseq
      %v445 = vshrl.u32 %v444, 7
      %v446 = vsub.s32 0, %v445
      %v447 = vrot.slane %v442, %v446
      %449 = vmatprep.subr.mxu0 0.0
      %450 = vmatpush1.msra.mxu0 %v426
      %451 = vmatprep.subr.mxu0 0.0
      %452 = vmatpush1.msra.mxu0 %v427
      %453 = vmatprep.subr.mxu0 0.0
      %454 = vmatpush1.msra.mxu0 %v428
      %455 = vmatprep.subr.mxu0 0.0
      %456 = vmatpush1.msra.mxu0 %v429
      %457 = vmatprep.subr.mxu0 0.0
      %458 = vmatpush1.msra.mxu0 %v430
      %459 = vmatprep.subr.mxu0 0.0
      %460 = vmatpush1.msra.mxu0 %v431
      %461 = vmatprep.subr.mxu0 0.0
      %462 = vmatpush1.msra.mxu0 %v432
      %463 = vmatprep.subr.mxu0 0.0
      %464 = vmatpush1.msra.mxu0 %v433
      %465 = vmatprep.subr.mxu0 0.0
      %466 = vmatpush1.msra.mxu0 %v434
      %467 = vmatprep.subr.mxu0 0.0
      %468 = vmatpush1.msra.mxu0 %v435
      %469 = vmatprep.subr.mxu0 0.0
      %470 = vmatpush1.msra.mxu0 %v436
      %471 = vmatprep.subr.mxu0 0.0
      %472 = vmatpush1.msra.mxu0 %v437
      %473 = vmatprep.subr.mxu0 0.0
      %474 = vmatpush1.msra.mxu0 %v438
      %475 = vmatprep.subr.mxu0 0.0
      %476 = vmatpush1.msra.mxu0 %v439
      %477 = vmatprep.subr.mxu0 0.0
      %478 = vmatpush1.msra.mxu0 %v440
      %479 = vmatprep.subr.mxu0 0.0
      %480 = vmatpush1.msra.mxu0 %v441
      %481 = vmatprep.subr.mxu0 0.0
      %482 = vmatpush1.msra.mxu0 0.0
      %483 = vmatprep.subr.mxu0 0.0
      %484 = vmatpush1.msra.mxu0 0.0
      %485 = vmatprep.subr.mxu0 0.0
      %486 = vmatpush1.msra.mxu0 0.0
      %487 = vmatprep.subr.mxu0 0.0
      %488 = vmatpush1.msra.mxu0 0.0
      %489 = vmatprep.subr.mxu0 0.0
      %490 = vmatpush1.msra.mxu0 0.0
      %491 = vmatprep.subr.mxu0 0.0
      %492 = vmatpush1.msra.mxu0 0.0
      %493 = vmatprep.subr.mxu0 0.0
      %494 = vmatpush1.msra.mxu0 0.0
      %495 = vmatprep.subr.mxu0 0.0
      %496 = vmatpush1.msra.mxu0 0.0
      %497 = vmatprep.subr.mxu0 0.0
      %498 = vmatpush1.msra.mxu0 0.0
      %499 = vmatprep.subr.mxu0 0.0
      %500 = vmatpush1.msra.mxu0 0.0
      %501 = vmatprep.subr.mxu0 0.0
      %502 = vmatpush1.msra.mxu0 0.0
      %503 = vmatprep.subr.mxu0 0.0
      %504 = vmatpush1.msra.mxu0 0.0
      %505 = vmatprep.subr.mxu0 0.0
      %506 = vmatpush1.msra.mxu0 0.0
      %507 = vmatprep.subr.mxu0 0.0
      %508 = vmatpush1.msra.mxu0 0.0
      %509 = vmatprep.subr.mxu0 0.0
      %510 = vmatpush1.msra.mxu0 0.0
      %511 = vmatprep.subr.mxu0 0.0
      %512 = vmatpush1.msra.mxu0 0.0
      %513 = vmatprep.mubr.f32.mxu0 0.0
      %514 = vmatmul.mubr.f32.gmra.mrb[0].mxu0 %v420
      %v515 = vpop.f32.mrb[0].mxu0
      %v516 = vadd.f32 %v447, %v515
      %v517 = vpop.f32.mrb[0].mxu0
      %518 = vmatprep.mubr.f32.mxu0 0.0
      %519 = vmatmul.mubr.f32.gmra.mrb[0].mxu0 %v421
      %v520 = vpop.f32.mrb[0].mxu0
      %v521 = vadd.f32 %v447, %v520
      %v522 = vpop.f32.mrb[0].mxu0
      %523 = vmatprep.mubr.f32.mxu0 0.0
      %524 = vmatmul.mubr.f32.gmra.mrb[0].mxu0 %v422
      %v525 = vpop.f32.mrb[0].mxu0
      %v526 = vadd.f32 %v447, %v525
      %v527 = vpop.f32.mrb[0].mxu0
      %528 = vmatprep.mubr.f32.mxu0 0.0
      %529 = vmatmul.mubr.f32.gmra.mrb[0].mxu0 %v423
      %v530 = vpop.f32.mrb[0].mxu0
      %v531 = vadd.f32 %v447, %v530
      %v532 = vpop.f32.mrb[0].mxu0
      %533 = vmatprep.mubr.f32.mxu0 0.0
      %534 = vmatmul.mubr.f32.gmra.mrb[0].mxu0 %v424
      %v535 = vpop.f32.mrb[0].mxu0
      %v536 = vadd.f32 %v447, %v535
      %v537 = vpop.f32.mrb[0].mxu0
      %538 = vmatprep.mubr.f32.mxu0 0.0
      %539 = vmatmul.mubr.f32.gmra.mrb[0].mxu0 %v425
      %v540 = vpop.f32.mrb[0].mxu0
      %v541 = vadd.f32 %v447, %v540
      %v542 = vpop.f32.mrb[0].mxu0
      %543 = vdwg.mxu0
      %vm544 = vcmask 261120
      %545 = vst.msk [vmem:[%s226] sm:$0xff] %vm544, %v516
      %546 = vst.msk [vmem:[%s226 + $0x8] sm:$0xff] %vm544, %v521
      %547 = vst.msk [vmem:[%s226 + $0x10] sm:$0xff] %vm544, %v526
      %548 = vst.msk [vmem:[%s226 + $0x18] sm:$0xff] %vm544, %v531
      %549 = vst.msk [vmem:[%s226 + $0x20] sm:$0xff] %vm544, %v536
      %550 = vst.msk [vmem:[%s226 + $0x28] sm:$0xff] %vm544, %v541
      %s551 = smul.u32 6, %s16
      %p552 = scmp.lt.s32.totalorder %s551, 11
      %s553 = scalar_select %p552, %s551, 11
      %s554 = smul.addr %s553, 8
      %s555 = scalar_lea.vmem %s5, %s554
      // Predicated region
      $region41: #{stformer_forward.25} parent=39 // pred_check
        %p556 = pneg %p144
      $region42: #{stformer_forward.25} parent=39 // pred_check_branch
        %558 = sbr.rel (%p556) target = $region44
      $region43: #{stformer_forward.25} parent=39 // pred_region
        %s559 = smul.u32 6, %s16
      $region44: #{stformer_forward.25} parent=39 // pred_fallthru
        _
    $region40: #{stformer_forward.25} parent=5 // pred_fallthru
      _
    %p560 = scmp.le.s32.totalorder 2, %s11
    // Predicated region
    $region45: #{stformer_forward.25} parent=5 // pred_check
      %p561 = pneg %p560
    $region46: #{stformer_forward.25} parent=5 // pred_check_branch
      %563 = sbr.rel (%p561) target = $region48
    $region47: #{stformer_forward.25} parent=5 // pred_region
      %s564 = ssub.s32 %s11, 2
      // Predicated region
      $region49: #{stformer_forward.25} parent=47 // pred_check
        %p565 = pneg %p150
      $region50: #{stformer_forward.25} parent=47 // pred_check_branch
        %567 = sbr.rel (%p565) target = $region52
      $region51: #{stformer_forward.25} parent=47 // pred_region
        %s568 = smul.u32 6, %s17
        %p569 = scmp.lt.s32.totalorder %s568, 11
        %s570 = scalar_select %p569, %s568, 11
        %s571 = smul.addr %s570, 8
        %s572 = scalar_lea.vmem %s5, %s571
      $region52: #{stformer_forward.25} parent=47 // pred_fallthru
        _
    $region48: #{stformer_forward.25} parent=5 // pred_fallthru
      _
  $region6: #{stformer_forward.25} parent=0 // loop_footer
    %s15 = sadd.s32 1, %s11
  $region7: #{stformer_forward.25} parent=0 // loop_footer_branch
    %10 = sbr.rel target = $region3
  $region8: #{stformer_forward.25} parent=0 // loop_exit
    _

// kernel: stformer_forward.24
$region0: #{stformer_forward.24}
  #allocation0 [shape = 'u32[]', space=smem, size = 0x4, offset = 0x4, fixed_abs, tag = 'smem constant byte address 0x4 - core index']
  #allocation1 [shape = 'u32[144,128]{1,0:T(1,128)}', space=vmem, size = 0x12000, scoped, tag = 'internal scratch']
  %s0 = inlined_call_operand.vmem [shape: f32[64,6], index: 0, kind: input, shape index: {}]
  %s1 = inlined_call_operand.vmem [shape: f32[6,128], index: 1, kind: input, shape index: {}]
  %s2 = inlined_call_operand.vmem [shape: f32[1,128], index: 2, kind: input, shape index: {}]
  %s3 = inlined_call_operand.vmem [shape: f32[128,32], index: 3, kind: input, shape index: {}]
  %s4 = inlined_call_operand.vmem [shape: f32[1,32], index: 4, kind: input, shape index: {}]
  %s5 = inlined_call_operand.vmem [shape: f32[64,32], index: 5, kind: output, shape index: {}]
  %s6 = sld [smem:[#allocation0]]
  $region53: #{stformer_forward.24} parent=0
    _
  %s8 = ssub.s32 1, %s6
  %s9 = scalar_select 0, %s8, %s6
  loop: start=0, step=1, limit=4
  $region2: #{stformer_forward.24} parent=0 // loop_pre_header
    _
  $region3: #{stformer_forward.24} parent=0 // loop_header
    %s11 = sphi 0, %s15
    %p12 = scmp.ge.s32.totalorder %s11, 4
    %s21 = sphi 0, %s23
    %s24 = sphi 0, %s21
    %s25 = sphi 0, %s24
    %s41 = sphi 0, %s25
    %s45 = sphi 0, %s45
    %s47 = sphi 0, %s45
    %s48 = sphi 0, %s47
    %s62 = sphi 0, %s48
    %s66 = sphi 0, %s66
    %s68 = sphi 0, %s66
    %s69 = sphi 0, %s68
    %s83 = sphi 0, %s69
    %s87 = sphi 0, %s87
    %s89 = sphi 0, %s87
    %s90 = sphi 0, %s89
    %s104 = sphi 0, %s90
    %s108 = sphi 0, %s108
    %s110 = sphi 0, %s108
    %s111 = sphi 0, %s110
    %s125 = sphi 0, %s111
    %s131 = sphi 0, %s133
    %s134 = sphi 0, %s131
    %s135 = sphi 0, %s134
    %s151 = sphi 0, %s135
  $region4: #{stformer_forward.24} parent=0 // loop_header_branch
    %14 = sbr.rel (%p12) target = $region8
  $region5: #{stformer_forward.24} parent=0 // loop_body
    %s16 = ssub.s32 %s11, 1
    %s17 = ssub.s32 %s11, 2
    %s18 = sadd.s32 %s11, 1
    %s19 = ssub.s32 %s11, %s18
    %p20 = scmp.eq.s32.totalorder %s19, 0
    %s22 = sadd.s32 %s21, 1
    %s23 = scalar_select %p20, %s21, %s22
    %p26 = pneg %p20
    %p27 = scmp.eq.s32.totalorder %s11, 1
    %p28 = por %p26, %p27
    %p29 = scmp.ne.s32.totalorder %s21, %s24
    %p30 = scmp.eq.s32.totalorder %s11, 0
    %p31 = por %p29, %p30
    %p32 = scmp.ne.s32.totalorder %s21, %s24
    %p33 = scmp.eq.s32.totalorder %s16, 1
    %p34 = por %p32, %p33
    %p35 = scmp.ne.s32.totalorder %s24, %s25
    %p36 = scmp.eq.s32.totalorder %s16, 0
    %p37 = por %p35, %p36
    %p38 = scmp.ne.s32.totalorder %s24, %s25
    %p39 = scmp.eq.s32.totalorder %s17, 1
    %p40 = por %p38, %p39
    %p42 = scmp.ne.s32.totalorder %s25, %s41
    %p43 = scmp.eq.s32.totalorder %s17, 0
    %p44 = por %p42, %p43
    %s46 = sadd.s32 %s45, 1
    %p49 = scmp.eq.s32.totalorder %s11, 1
    %p50 = scmp.ne.s32.totalorder %s45, %s47
    %p51 = scmp.eq.s32.totalorder %s11, 0
    %p52 = por %p50, %p51
    %p53 = scmp.ne.s32.totalorder %s45, %s47
    %p54 = scmp.eq.s32.totalorder %s16, 1
    %p55 = por %p53, %p54
    %p56 = scmp.ne.s32.totalorder %s47, %s48
    %p57 = scmp.eq.s32.totalorder %s16, 0
    %p58 = por %p56, %p57
    %p59 = scmp.ne.s32.totalorder %s47, %s48
    %p60 = scmp.eq.s32.totalorder %s17, 1
    %p61 = por %p59, %p60
    %p63 = scmp.ne.s32.totalorder %s48, %s62
    %p64 = scmp.eq.s32.totalorder %s17, 0
    %p65 = por %p63, %p64
    %s67 = sadd.s32 %s66, 1
    %p70 = scmp.eq.s32.totalorder %s11, 1
    %p71 = scmp.ne.s32.totalorder %s66, %s68
    %p72 = scmp.eq.s32.totalorder %s11, 0
    %p73 = por %p71, %p72
    %p74 = scmp.ne.s32.totalorder %s66, %s68
    %p75 = scmp.eq.s32.totalorder %s16, 1
    %p76 = por %p74, %p75
    %p77 = scmp.ne.s32.totalorder %s68, %s69
    %p78 = scmp.eq.s32.totalorder %s16, 0
    %p79 = por %p77, %p78
    %p80 = scmp.ne.s32.totalorder %s68, %s69
    %p81 = scmp.eq.s32.totalorder %s17, 1
    %p82 = por %p80, %p81
    %p84 = scmp.ne.s32.totalorder %s69, %s83
    %p85 = scmp.eq.s32.totalorder %s17, 0
    %p86 = por %p84, %p85
    %s88 = sadd.s32 %s87, 1
    %p91 = scmp.eq.s32.totalorder %s11, 1
    %p92 = scmp.ne.s32.totalorder %s87, %s89
    %p93 = scmp.eq.s32.totalorder %s11, 0
    %p94 = por %p92, %p93
    %p95 = scmp.ne.s32.totalorder %s87, %s89
    %p96 = scmp.eq.s32.totalorder %s16, 1
    %p97 = por %p95, %p96
    %p98 = scmp.ne.s32.totalorder %s89, %s90
    %p99 = scmp.eq.s32.totalorder %s16, 0
    %p100 = por %p98, %p99
    %p101 = scmp.ne.s32.totalorder %s89, %s90
    %p102 = scmp.eq.s32.totalorder %s17, 1
    %p103 = por %p101, %p102
    %p105 = scmp.ne.s32.totalorder %s90, %s104
    %p106 = scmp.eq.s32.totalorder %s17, 0
    %p107 = por %p105, %p106
    %s109 = sadd.s32 %s108, 1
    %p112 = scmp.eq.s32.totalorder %s11, 1
    %p113 = scmp.ne.s32.totalorder %s108, %s110
    %p114 = scmp.eq.s32.totalorder %s11, 0
    %p115 = por %p113, %p114
    %p116 = scmp.ne.s32.totalorder %s108, %s110
    %p117 = scmp.eq.s32.totalorder %s16, 1
    %p118 = por %p116, %p117
    %p119 = scmp.ne.s32.totalorder %s110, %s111
    %p120 = scmp.eq.s32.totalorder %s16, 0
    %p121 = por %p119, %p120
    %p122 = scmp.ne.s32.totalorder %s110, %s111
    %p123 = scmp.eq.s32.totalorder %s17, 1
    %p124 = por %p122, %p123
    %p126 = scmp.ne.s32.totalorder %s111, %s125
    %p127 = scmp.eq.s32.totalorder %s17, 0
    %p128 = por %p126, %p127
    %s129 = ssub.s32 %s11, %s18
    %p130 = scmp.eq.s32.totalorder %s129, 0
    %s132 = sadd.s32 %s131, 1
    %s133 = scalar_select %p130, %s131, %s132
    %p136 = pneg %p130
    %p137 = scmp.eq.s32.totalorder %s11, 1
    %p138 = por %p136, %p137
    %p139 = scmp.ne.s32.totalorder %s131, %s134
    %p140 = scmp.eq.s32.totalorder %s11, 0
    %p141 = por %p139, %p140
    %p142 = scmp.ne.s32.totalorder %s131, %s134
    %p143 = scmp.eq.s32.totalorder %s16, 1
    %p144 = por %p142, %p143
    %p145 = scmp.ne.s32.totalorder %s134, %s135
    %p146 = scmp.eq.s32.totalorder %s16, 0
    %p147 = por %p145, %p146
    %p148 = scmp.ne.s32.totalorder %s134, %s135
    %p149 = scmp.eq.s32.totalorder %s17, 1
    %p150 = por %p148, %p149
    %p152 = scmp.ne.s32.totalorder %s135, %s151
    %p153 = scmp.eq.s32.totalorder %s17, 0
    %p154 = por %p152, %p153
    %p155 = scmp.le.s32.totalorder 1, %s11
    %p156 = scmp.lt.s32.totalorder %s11, 3
    %p157 = pnand %p155, %p156
    %p158 = pneg %p157
    // Predicated region
    $region9: #{stformer_forward.24} parent=5 // pred_check
      _
    $region10: #{stformer_forward.24} parent=5 // pred_check_branch
      %160 = sbr.rel (%p157) target = $region12
    $region11: #{stformer_forward.24} parent=5 // pred_region
      %s161 = ssub.s32 %s11, 1
      // Predicated region
      $region13: #{stformer_forward.24} parent=11 // pred_check
        %p162 = pneg %p58
      $region14: #{stformer_forward.24} parent=11 // pred_check_branch
        %164 = sbr.rel (%p162) target = $region16
      $region15: #{stformer_forward.24} parent=11 // pred_region
        _
      $region16: #{stformer_forward.24} parent=11 // pred_fallthru
        _
      // Predicated region
      $region17: #{stformer_forward.24} parent=11 // pred_check
        %p165 = pneg %p79
      $region18: #{stformer_forward.24} parent=11 // pred_check_branch
        %167 = sbr.rel (%p165) target = $region20
      $region19: #{stformer_forward.24} parent=11 // pred_region
        _
      $region20: #{stformer_forward.24} parent=11 // pred_fallthru
        _
      // Predicated region
      $region21: #{stformer_forward.24} parent=11 // pred_check
        %p168 = pneg %p100
      $region22: #{stformer_forward.24} parent=11 // pred_check_branch
        %170 = sbr.rel (%p168) target = $region24
      $region23: #{stformer_forward.24} parent=11 // pred_region
        _
      $region24: #{stformer_forward.24} parent=11 // pred_fallthru
        _
      // Predicated region
      $region25: #{stformer_forward.24} parent=11 // pred_check
        %p171 = pneg %p121
      $region26: #{stformer_forward.24} parent=11 // pred_check_branch
        %173 = sbr.rel (%p171) target = $region28
      $region27: #{stformer_forward.24} parent=11 // pred_region
        _
      $region28: #{stformer_forward.24} parent=11 // pred_fallthru
        _
    $region12: #{stformer_forward.24} parent=5 // pred_fallthru
      _
    %p174 = scmp.lt.s32.totalorder %s11, 2
    // Predicated region
    $region29: #{stformer_forward.24} parent=5 // pred_check
      %p175 = pneg %p174
    $region30: #{stformer_forward.24} parent=5 // pred_check_branch
      %177 = sbr.rel (%p175) target = $region32
    $region31: #{stformer_forward.24} parent=5 // pred_region
      // Predicated region
      $region33: #{stformer_forward.24} parent=31 // pred_check
        %p178 = pneg %p31
      $region34: #{stformer_forward.24} parent=31 // pred_check_branch
        %180 = sbr.rel (%p178) target = $region36
      $region35: #{stformer_forward.24} parent=31 // pred_region
        %s181 = smul.u32 4, %s11
        %p182 = scmp.lt.s32.totalorder %s181, 7
        %s183 = scalar_select %p182, %s181, 7
        %s184 = smul.addr %s183, 8
        %s185 = scalar_lea.vmem %s0, %s184
        %s186 = smul.u32 4, %s11
      $region36: #{stformer_forward.24} parent=31 // pred_fallthru
        _
    $region32: #{stformer_forward.24} parent=5 // pred_fallthru
      _
    %p187 = scmp.le.s32.totalorder 1, %s11
    %p188 = scmp.lt.s32.totalorder %s11, 3
    %p189 = pnand %p187, %p188
    %p190 = pneg %p189
    // Predicated region
    $region37: #{stformer_forward.24} parent=5 // pred_check
      _
    $region38: #{stformer_forward.24} parent=5 // pred_check_branch
      %192 = sbr.rel (%p189) target = $region40
    $region39: #{stformer_forward.24} parent=5 // pred_region
      %s193 = ssub.s32 %s11, 1
      %s194 = smul.u32 4, %s16
      %p195 = scmp.lt.s32.totalorder %s194, 7
      %s196 = scalar_select %p195, %s194, 7
      %s197 = smul.addr %s196, 8
      %s198 = scalar_lea.vmem %s0, %s197
      %p199 = pneg %p37
      %p200 = pneg %p34
      %p201 = pneg %p58
      %p202 = pneg %p55
      %p203 = pneg %p79
      %p204 = pneg %p76
      %p205 = pneg %p100
      %p206 = pneg %p97
      %p207 = pneg %p121
      %p208 = pneg %p118
      %p209 = pneg %p147
      %p210 = pneg %p144
      %s211 = smul.u32 4, %s16
      %p212 = scmp.lt.s32.totalorder %s211, 7
      %s213 = scalar_select %p212, %s211, 7
      %s214 = smul.addr %s213, 8
      %s215 = scalar_lea.vmem %s5, %s214
      %s216 = smul.u32 4, %s16
      %p217 = scmp.lt.s32.totalorder %s216, 7
      %s218 = scalar_select %p217, %s216, 7
      %s219 = smul.addr %s218, 8
      %s220 = scalar_lea.vmem %s0, %s219
      %s221 = smul.u32 4, %s16
      %s222 = smul.u32 4, %s16
      %p223 = scmp.lt.s32.totalorder %s222, 7
      %s224 = scalar_select %p223, %s222, 7
      %s225 = smul.addr %s224, 8
      %s226 = scalar_lea.vmem %s5, %s225
      %s227 = smul.u32 4, %s16
      %v228 = vld [vmem:[%s220] sm:$0xff]
      %v229 = vld [vmem:[%s220 + $0x8] sm:$0xff]
      %v230 = vld [vmem:[%s220 + $0x10] sm:$0xff]
      %v231 = vld [vmem:[%s220 + $0x18] sm:$0xff]
      %v232 = vld [vmem:[%s1] sm:$0x3f]
      %v233 = vld [vmem:[%s2] sm:$0x1]
      %v235 = vlaneseq
      %v236 = vshrl.u32 %v235, 7
      %v237 = vsub.s32 0, %v236
      %v238 = vrot.slane %v233, %v237
      %vm240 = vcmask 48128
      %v242 = vsel %vm240, %v228, 0
      %v245 = vsel %vm240, %v229, 0
      %v248 = vsel %vm240, %v230, 0
      %v251 = vsel %vm240, %v231, 0
      %vm253 = vcmask 1045504
      %v255 = vsel %vm253, %v232, 0
      %257 = vmatprep.subr.mxu0 0.0
      %258 = vmatpush1.msra.mxu0 %v255
      %259 = vmatprep.subr.mxu0 0.0
      %260 = vmatpush1.msra.mxu0 0.0
      %261 = vmatprep.subr.mxu0 0.0
      %262 = vmatpush1.msra.mxu0 0.0
      %263 = vmatprep.subr.mxu0 0.0
      %264 = vmatpush1.msra.mxu0 0.0
      %265 = vmatprep.subr.mxu0 0.0
      %266 = vmatpush1.msra.mxu0 0.0
      %267 = vmatprep.subr.mxu0 0.0
      %268 = vmatpush1.msra.mxu0 0.0
      %269 = vmatprep.subr.mxu0 0.0
      %270 = vmatpush1.msra.mxu0 0.0
      %271 = vmatprep.subr.mxu0 0.0
      %272 = vmatpush1.msra.mxu0 0.0
      %273 = vmatprep.subr.mxu0 0.0
      %274 = vmatpush1.msra.mxu0 0.0
      %275 = vmatprep.subr.mxu0 0.0
      %276 = vmatpush1.msra.mxu0 0.0
      %277 = vmatprep.subr.mxu0 0.0
      %278 = vmatpush1.msra.mxu0 0.0
      %279 = vmatprep.subr.mxu0 0.0
      %280 = vmatpush1.msra.mxu0 0.0
      %281 = vmatprep.subr.mxu0 0.0
      %282 = vmatpush1.msra.mxu0 0.0
      %283 = vmatprep.subr.mxu0 0.0
      %284 = vmatpush1.msra.mxu0 0.0
      %285 = vmatprep.subr.mxu0 0.0
      %286 = vmatpush1.msra.mxu0 0.0
      %287 = vmatprep.subr.mxu0 0.0
      %288 = vmatpush1.msra.mxu0 0.0
      %289 = vmatprep.subr.mxu0 0.0
      %290 = vmatpush1.msra.mxu0 0.0
      %291 = vmatprep.subr.mxu0 0.0
      %292 = vmatpush1.msra.mxu0 0.0
      %293 = vmatprep.subr.mxu0 0.0
      %294 = vmatpush1.msra.mxu0 0.0
      %295 = vmatprep.subr.mxu0 0.0
      %296 = vmatpush1.msra.mxu0 0.0
      %297 = vmatprep.subr.mxu0 0.0
      %298 = vmatpush1.msra.mxu0 0.0
      %299 = vmatprep.subr.mxu0 0.0
      %300 = vmatpush1.msra.mxu0 0.0
      %301 = vmatprep.subr.mxu0 0.0
      %302 = vmatpush1.msra.mxu0 0.0
      %303 = vmatprep.subr.mxu0 0.0
      %304 = vmatpush1.msra.mxu0 0.0
      %305 = vmatprep.subr.mxu0 0.0
      %306 = vmatpush1.msra.mxu0 0.0
      %307 = vmatprep.subr.mxu0 0.0
      %308 = vmatpush1.msra.mxu0 0.0
      %309 = vmatprep.subr.mxu0 0.0
      %310 = vmatpush1.msra.mxu0 0.0
      %311 = vmatprep.subr.mxu0 0.0
      %312 = vmatpush1.msra.mxu0 0.0
      %313 = vmatprep.subr.mxu0 0.0
      %314 = vmatpush1.msra.mxu0 0.0
      %315 = vmatprep.subr.mxu0 0.0
      %316 = vmatpush1.msra.mxu0 0.0
      %317 = vmatprep.subr.mxu0 0.0
      %318 = vmatpush1.msra.mxu0 0.0
      %319 = vmatprep.subr.mxu0 0.0
      %320 = vmatpush1.msra.mxu0 0.0
      %321 = vmatprep.mubr.f32.mxu0 0.0
      %322 = vmatmul.mubr.f32.gmra.mrb[0].mxu0 %v242
      %v323 = vpop.f32.mrb[0].mxu0
      %v324 = vadd.f32 %v238, %v323
      %v325 = vpop.f32.mrb[0].mxu0
      %326 = vmatprep.mubr.f32.mxu0 0.0
      %327 = vmatmul.mubr.f32.gmra.mrb[0].mxu0 %v245
      %v328 = vpop.f32.mrb[0].mxu0
      %v329 = vadd.f32 %v238, %v328
      %v330 = vpop.f32.mrb[0].mxu0
      %331 = vmatprep.mubr.f32.mxu0 0.0
      %332 = vmatmul.mubr.f32.gmra.mrb[0].mxu0 %v248
      %v333 = vpop.f32.mrb[0].mxu0
      %v334 = vadd.f32 %v238, %v333
      %v335 = vpop.f32.mrb[0].mxu0
      %336 = vmatprep.mubr.f32.mxu0 0.0
      %337 = vmatmul.mubr.f32.gmra.mrb[0].mxu0 %v251
      %v338 = vpop.f32.mrb[0].mxu0
      %v339 = vadd.f32 %v238, %v338
      %v340 = vpop.f32.mrb[0].mxu0
      %341 = vdwg.mxu0
      %v342 = vmax.f32 %v324, 0.0
      %v343 = vmax.f32 %v329, 0.0
      %v344 = vmax.f32 %v334, 0.0
      %v345 = vmax.f32 %v339, 0.0
      %v346 = vand.u32 2147483647, %v324
      %v347 = vand.u32 2147483647, %v329
      %v348 = vand.u32 2147483647, %v334
      %v349 = vand.u32 2147483647, %v339
      %v350 = vsub.f32 0.0, %v346
      %v351 = vsub.f32 0.0, %v347
      %v352 = vsub.f32 0.0, %v348
      %v353 = vsub.f32 0.0, %v349
      %v354 = vmul.f32 %v350, 1.442695
      %v355 = vpow.pop %v354
      %v356 = vmul.f32 %v351, 1.442695
      %v357 = vpow.pop %v356
      %v358 = vmul.f32 %v352, 1.442695
      %v359 = vpow.pop %v358
      %v360 = vmul.f32 %v353, 1.442695
      %v361 = vpow.pop %v360
      %v362 = vadd.f32 %v355, 1.0
      %v363 = vadd.f32 %v357, 1.0
      %v364 = vadd.f32 %v359, 1.0
      %v365 = vadd.f32 %v361, 1.0
      %v366 = vlog2.pop %v362
      %v367 = vmul.f32 %v366, 0.6931472
      %v368 = vlog2.pop %v363
      %v369 = vmul.f32 %v368, 0.6931472
      %v370 = vlog2.pop %v364
      %v371 = vmul.f32 %v370, 0.6931472
      %v372 = vlog2.pop %v365
      %v373 = vmul.f32 %v372, 0.6931472
      %v374 = vadd.f32 %v342, %v367
      %v375 = vadd.f32 %v343, %v369
      %v376 = vadd.f32 %v344, %v371
      %v377 = vadd.f32 %v345, %v373
      %v378 = vtanh.pop %v374
      %v379 = vtanh.pop %v375
      %v380 = vtanh.pop %v376
      %v381 = vtanh.pop %v377
      %v382 = vmul.f32 %v324, %v378
      %v383 = vmul.f32 %v329, %v379
      %v384 = vmul.f32 %v334, %v380
      %v385 = vmul.f32 %v339, %v381
      %v386 = vld [vmem:[%s3] sm:$0xff]
      %v387 = vld [vmem:[%s3 + $0x8] sm:$0xff]
      %v388 = vld [vmem:[%s3 + $0x10] sm:$0xff]
      %v389 = vld [vmem:[%s3 + $0x18] sm:$0xff]
      %v390 = vld [vmem:[%s3 + $0x20] sm:$0xff]
      %v391 = vld [vmem:[%s3 + $0x28] sm:$0xff]
      %v392 = vld [vmem:[%s3 + $0x30] sm:$0xff]
      %v393 = vld [vmem:[%s3 + $0x38] sm:$0xff]
      %v394 = vld [vmem:[%s3 + $0x40] sm:$0xff]
      %v395 = vld [vmem:[%s3 + $0x48] sm:$0xff]
      %v396 = vld [vmem:[%s3 + $0x50] sm:$0xff]
      %v397 = vld [vmem:[%s3 + $0x58] sm:$0xff]
      %v398 = vld [vmem:[%s3 + $0x60] sm:$0xff]
      %v399 = vld [vmem:[%s3 + $0x68] sm:$0xff]
      %v400 = vld [vmem:[%s3 + $0x70] sm:$0xff]
      %v401 = vld [vmem:[%s3 + $0x78] sm:$0xff]
      %v402 = vld [vmem:[%s4] sm:$0x1]
      %v404 = vlaneseq
      %v405 = vshrl.u32 %v404, 7
      %v406 = vsub.s32 0, %v405
      %v407 = vrot.slane %v402, %v406
      %409 = vmatprep.subr.mxu0 0.0
      %410 = vmatpush1.msra.mxu0 %v386
      %411 = vmatprep.subr.mxu0 0.0
      %412 = vmatpush1.msra.mxu0 %v387
      %413 = vmatprep.subr.mxu0 0.0
      %414 = vmatpush1.msra.mxu0 %v388
      %415 = vmatprep.subr.mxu0 0.0
      %416 = vmatpush1.msra.mxu0 %v389
      %417 = vmatprep.subr.mxu0 0.0
      %418 = vmatpush1.msra.mxu0 %v390
      %419 = vmatprep.subr.mxu0 0.0
      %420 = vmatpush1.msra.mxu0 %v391
      %421 = vmatprep.subr.mxu0 0.0
      %422 = vmatpush1.msra.mxu0 %v392
      %423 = vmatprep.subr.mxu0 0.0
      %424 = vmatpush1.msra.mxu0 %v393
      %425 = vmatprep.subr.mxu0 0.0
      %426 = vmatpush1.msra.mxu0 %v394
      %427 = vmatprep.subr.mxu0 0.0
      %428 = vmatpush1.msra.mxu0 %v395
      %429 = vmatprep.subr.mxu0 0.0
      %430 = vmatpush1.msra.mxu0 %v396
      %431 = vmatprep.subr.mxu0 0.0
      %432 = vmatpush1.msra.mxu0 %v397
      %433 = vmatprep.subr.mxu0 0.0
      %434 = vmatpush1.msra.mxu0 %v398
      %435 = vmatprep.subr.mxu0 0.0
      %436 = vmatpush1.msra.mxu0 %v399
      %437 = vmatprep.subr.mxu0 0.0
      %438 = vmatpush1.msra.mxu0 %v400
      %439 = vmatprep.subr.mxu0 0.0
      %440 = vmatpush1.msra.mxu0 %v401
      %441 = vmatprep.subr.mxu0 0.0
      %442 = vmatpush1.msra.mxu0 0.0
      %443 = vmatprep.subr.mxu0 0.0
      %444 = vmatpush1.msra.mxu0 0.0
      %445 = vmatprep.subr.mxu0 0.0
      %446 = vmatpush1.msra.mxu0 0.0
      %447 = vmatprep.subr.mxu0 0.0
      %448 = vmatpush1.msra.mxu0 0.0
      %449 = vmatprep.subr.mxu0 0.0
      %450 = vmatpush1.msra.mxu0 0.0
      %451 = vmatprep.subr.mxu0 0.0
      %452 = vmatpush1.msra.mxu0 0.0
      %453 = vmatprep.subr.mxu0 0.0
      %454 = vmatpush1.msra.mxu0 0.0
      %455 = vmatprep.subr.mxu0 0.0
      %456 = vmatpush1.msra.mxu0 0.0
      %457 = vmatprep.subr.mxu0 0.0
      %458 = vmatpush1.msra.mxu0 0.0
      %459 = vmatprep.subr.mxu0 0.0
      %460 = vmatpush1.msra.mxu0 0.0
      %461 = vmatprep.subr.mxu0 0.0
      %462 = vmatpush1.msra.mxu0 0.0
      %463 = vmatprep.subr.mxu0 0.0
      %464 = vmatpush1.msra.mxu0 0.0
      %465 = vmatprep.subr.mxu0 0.0
      %466 = vmatpush1.msra.mxu0 0.0
      %467 = vmatprep.subr.mxu0 0.0
      %468 = vmatpush1.msra.mxu0 0.0
      %469 = vmatprep.subr.mxu0 0.0
      %470 = vmatpush1.msra.mxu0 0.0
      %471 = vmatprep.subr.mxu0 0.0
      %472 = vmatpush1.msra.mxu0 0.0
      %473 = vmatprep.mubr.f32.mxu0 0.0
      %474 = vmatmul.mubr.f32.gmra.mrb[0].mxu0 %v382
      %v475 = vpop.f32.mrb[0].mxu0
      %v476 = vadd.f32 %v407, %v475
      %v477 = vpop.f32.mrb[0].mxu0
      %478 = vmatprep.mubr.f32.mxu0 0.0
      %479 = vmatmul.mubr.f32.gmra.mrb[0].mxu0 %v383
      %v480 = vpop.f32.mrb[0].mxu0
      %v481 = vadd.f32 %v407, %v480
      %v482 = vpop.f32.mrb[0].mxu0
      %483 = vmatprep.mubr.f32.mxu0 0.0
      %484 = vmatmul.mubr.f32.gmra.mrb[0].mxu0 %v384
      %v485 = vpop.f32.mrb[0].mxu0
      %v486 = vadd.f32 %v407, %v485
      %v487 = vpop.f32.mrb[0].mxu0
      %488 = vmatprep.mubr.f32.mxu0 0.0
      %489 = vmatmul.mubr.f32.gmra.mrb[0].mxu0 %v385
      %v490 = vpop.f32.mrb[0].mxu0
      %v491 = vadd.f32 %v407, %v490
      %v492 = vpop.f32.mrb[0].mxu0
      %493 = vdwg.mxu0
      %vm494 = vcmask 261120
      %495 = vst.msk [vmem:[%s226] sm:$0xff] %vm494, %v476
      %496 = vst.msk [vmem:[%s226 + $0x8] sm:$0xff] %vm494, %v481
      %497 = vst.msk [vmem:[%s226 + $0x10] sm:$0xff] %vm494, %v486
      %498 = vst.msk [vmem:[%s226 + $0x18] sm:$0xff] %vm494, %v491
      %s499 = smul.u32 4, %s16
      %p500 = scmp.lt.s32.totalorder %s499, 7
      %s501 = scalar_select %p500, %s499, 7
      %s502 = smul.addr %s501, 8
      %s503 = scalar_lea.vmem %s5, %s502
      // Predicated region
      $region41: #{stformer_forward.24} parent=39 // pred_check
        %p504 = pneg %p144
      $region42: #{stformer_forward.24} parent=39 // pred_check_branch
        %506 = sbr.rel (%p504) target = $region44
      $region43: #{stformer_forward.24} parent=39 // pred_region
        %s507 = smul.u32 4, %s16
      $region44: #{stformer_forward.24} parent=39 // pred_fallthru
        _
    $region40: #{stformer_forward.24} parent=5 // pred_fallthru
      _
    %p508 = scmp.le.s32.totalorder 2, %s11
    // Predicated region
    $region45: #{stformer_forward.24} parent=5 // pred_check
      %p509 = pneg %p508
    $region46: #{stformer_forward.24} parent=5 // pred_check_branch
      %511 = sbr.rel (%p509) target = $region48
    $region47: #{stformer_forward.24} parent=5 // pred_region
      %s512 = ssub.s32 %s11, 2
      // Predicated region
      $region49: #{stformer_forward.24} parent=47 // pred_check
        %p513 = pneg %p150
      $region50: #{stformer_forward.24} parent=47 // pred_check_branch
        %515 = sbr.rel (%p513) target = $region52
      $region51: #{stformer_forward.24} parent=47 // pred_region
        %s516 = smul.u32 4, %s17
        %p517 = scmp.lt.s32.totalorder %s516, 7
        %s518 = scalar_select %p517, %s516, 7
        %s519 = smul.addr %s518, 8
        %s520 = scalar_lea.vmem %s5, %s519
      $region52: #{stformer_forward.24} parent=47 // pred_fallthru
        _
    $region48: #{stformer_forward.24} parent=5 // pred_fallthru
      _
  $region6: #{stformer_forward.24} parent=0 // loop_footer
    %s15 = sadd.s32 1, %s11
  $region7: #{stformer_forward.24} parent=0 // loop_footer_branch
    %10 = sbr.rel target = $region3
  $region8: #{stformer_forward.24} parent=0 // loop_exit
    _

// kernel: stformer_forward.26
$region0: #{stformer_forward.26}
  #allocation0 [shape = 'u32[]', space=smem, size = 0x4, offset = 0x4, fixed_abs, tag = 'smem constant byte address 0x4 - core index']
  #allocation1 [shape = 'u32[144,128]{1,0:T(1,128)}', space=vmem, size = 0x12000, scoped, tag = 'internal scratch']
  %s0 = inlined_call_operand.vmem [shape: f32[2,48,32], index: 0, kind: input, shape index: {}]
  %s1 = inlined_call_operand.vmem [shape: f32[32,8], index: 1, kind: input, shape index: {}]
  %s2 = inlined_call_operand.vmem [shape: f32[8,32], index: 2, kind: input, shape index: {}]
  %s3 = inlined_call_operand.vmem [shape: f32[2,48,32], index: 3, kind: output, shape index: {}]
  %s4 = sld [smem:[#allocation0]]
  $region45: #{stformer_forward.26} parent=0
    _
  %s6 = ssub.s32 1, %s4
  %s7 = scalar_select 0, %s6, %s4
  loop: start=0, step=1, limit=4
  $region2: #{stformer_forward.26} parent=0 // loop_pre_header
    _
  $region3: #{stformer_forward.26} parent=0 // loop_header
    %s9 = sphi 0, %s13
    %p10 = scmp.ge.s32.totalorder %s9, 4
    %s19 = sphi 0, %s21
    %s22 = sphi 0, %s19
    %s23 = sphi 0, %s22
    %s39 = sphi 0, %s23
    %s43 = sphi 0, %s43
    %s45 = sphi 0, %s43
    %s46 = sphi 0, %s45
    %s60 = sphi 0, %s46
    %s64 = sphi 0, %s64
    %s66 = sphi 0, %s64
    %s67 = sphi 0, %s66
    %s81 = sphi 0, %s67
    %s87 = sphi 0, %s89
    %s90 = sphi 0, %s87
    %s91 = sphi 0, %s90
    %s107 = sphi 0, %s91
  $region4: #{stformer_forward.26} parent=0 // loop_header_branch
    %12 = sbr.rel (%p10) target = $region8
  $region5: #{stformer_forward.26} parent=0 // loop_body
    %s14 = ssub.s32 %s9, 1
    %s15 = ssub.s32 %s9, 2
    %s16 = sadd.s32 %s9, 1
    %s17 = ssub.s32 %s9, %s16
    %p18 = scmp.eq.s32.totalorder %s17, 0
    %s20 = sadd.s32 %s19, 1
    %s21 = scalar_select %p18, %s19, %s20
    %p24 = pneg %p18
    %p25 = scmp.eq.s32.totalorder %s9, 1
    %p26 = por %p24, %p25
    %p27 = scmp.ne.s32.totalorder %s19, %s22
    %p28 = scmp.eq.s32.totalorder %s9, 0
    %p29 = por %p27, %p28
    %p30 = scmp.ne.s32.totalorder %s19, %s22
    %p31 = scmp.eq.s32.totalorder %s14, 1
    %p32 = por %p30, %p31
    %p33 = scmp.ne.s32.totalorder %s22, %s23
    %p34 = scmp.eq.s32.totalorder %s14, 0
    %p35 = por %p33, %p34
    %p36 = scmp.ne.s32.totalorder %s22, %s23
    %p37 = scmp.eq.s32.totalorder %s15, 1
    %p38 = por %p36, %p37
    %p40 = scmp.ne.s32.totalorder %s23, %s39
    %p41 = scmp.eq.s32.totalorder %s15, 0
    %p42 = por %p40, %p41
    %s44 = sadd.s32 %s43, 1
    %p47 = scmp.eq.s32.totalorder %s9, 1
    %p48 = scmp.ne.s32.totalorder %s43, %s45
    %p49 = scmp.eq.s32.totalorder %s9, 0
    %p50 = por %p48, %p49
    %p51 = scmp.ne.s32.totalorder %s43, %s45
    %p52 = scmp.eq.s32.totalorder %s14, 1
    %p53 = por %p51, %p52
    %p54 = scmp.ne.s32.totalorder %s45, %s46
    %p55 = scmp.eq.s32.totalorder %s14, 0
    %p56 = por %p54, %p55
    %p57 = scmp.ne.s32.totalorder %s45, %s46
    %p58 = scmp.eq.s32.totalorder %s15, 1
    %p59 = por %p57, %p58
    %p61 = scmp.ne.s32.totalorder %s46, %s60
    %p62 = scmp.eq.s32.totalorder %s15, 0
    %p63 = por %p61, %p62
    %s65 = sadd.s32 %s64, 1
    %p68 = scmp.eq.s32.totalorder %s9, 1
    %p69 = scmp.ne.s32.totalorder %s64, %s66
    %p70 = scmp.eq.s32.totalorder %s9, 0
    %p71 = por %p69, %p70
    %p72 = scmp.ne.s32.totalorder %s64, %s66
    %p73 = scmp.eq.s32.totalorder %s14, 1
    %p74 = por %p72, %p73
    %p75 = scmp.ne.s32.totalorder %s66, %s67
    %p76 = scmp.eq.s32.totalorder %s14, 0
    %p77 = por %p75, %p76
    %p78 = scmp.ne.s32.totalorder %s66, %s67
    %p79 = scmp.eq.s32.totalorder %s15, 1
    %p80 = por %p78, %p79
    %p82 = scmp.ne.s32.totalorder %s67, %s81
    %p83 = scmp.eq.s32.totalorder %s15, 0
    %p84 = por %p82, %p83
    %s85 = ssub.s32 %s9, %s16
    %p86 = scmp.eq.s32.totalorder %s85, 0
    %s88 = sadd.s32 %s87, 1
    %s89 = scalar_select %p86, %s87, %s88
    %p92 = pneg %p86
    %p93 = scmp.eq.s32.totalorder %s9, 1
    %p94 = por %p92, %p93
    %p95 = scmp.ne.s32.totalorder %s87, %s90
    %p96 = scmp.eq.s32.totalorder %s9, 0
    %p97 = por %p95, %p96
    %p98 = scmp.ne.s32.totalorder %s87, %s90
    %p99 = scmp.eq.s32.totalorder %s14, 1
    %p100 = por %p98, %p99
    %p101 = scmp.ne.s32.totalorder %s90, %s91
    %p102 = scmp.eq.s32.totalorder %s14, 0
    %p103 = por %p101, %p102
    %p104 = scmp.ne.s32.totalorder %s90, %s91
    %p105 = scmp.eq.s32.totalorder %s15, 1
    %p106 = por %p104, %p105
    %p108 = scmp.ne.s32.totalorder %s91, %s107
    %p109 = scmp.eq.s32.totalorder %s15, 0
    %p110 = por %p108, %p109
    %p111 = scmp.le.s32.totalorder 1, %s9
    %p112 = scmp.lt.s32.totalorder %s9, 3
    %p113 = pnand %p111, %p112
    %p114 = pneg %p113
    // Predicated region
    $region9: #{stformer_forward.26} parent=5 // pred_check
      _
    $region10: #{stformer_forward.26} parent=5 // pred_check_branch
      %116 = sbr.rel (%p113) target = $region12
    $region11: #{stformer_forward.26} parent=5 // pred_region
      %s117 = ssub.s32 %s9, 1
      // Predicated region
      $region13: #{stformer_forward.26} parent=11 // pred_check
        %p118 = pneg %p56
      $region14: #{stformer_forward.26} parent=11 // pred_check_branch
        %120 = sbr.rel (%p118) target = $region16
      $region15: #{stformer_forward.26} parent=11 // pred_region
        _
      $region16: #{stformer_forward.26} parent=11 // pred_fallthru
        _
      // Predicated region
      $region17: #{stformer_forward.26} parent=11 // pred_check
        %p121 = pneg %p77
      $region18: #{stformer_forward.26} parent=11 // pred_check_branch
        %123 = sbr.rel (%p121) target = $region20
      $region19: #{stformer_forward.26} parent=11 // pred_region
        _
      $region20: #{stformer_forward.26} parent=11 // pred_fallthru
        _
    $region12: #{stformer_forward.26} parent=5 // pred_fallthru
      _
    %p124 = scmp.lt.s32.totalorder %s9, 2
    // Predicated region
    $region21: #{stformer_forward.26} parent=5 // pred_check
      %p125 = pneg %p124
    $region22: #{stformer_forward.26} parent=5 // pred_check_branch
      %127 = sbr.rel (%p125) target = $region24
    $region23: #{stformer_forward.26} parent=5 // pred_region
      // Predicated region
      $region25: #{stformer_forward.26} parent=23 // pred_check
        %p128 = pneg %p29
      $region26: #{stformer_forward.26} parent=23 // pred_check_branch
        %130 = sbr.rel (%p128) target = $region28
      $region27: #{stformer_forward.26} parent=23 // pred_region
        %p131 = scmp.lt.s32.totalorder %s9, 1
        %s132 = scalar_select %p131, %s9, 1
        %s133 = smul.addr %s132, 6
        %s134 = smul.addr %s133, 8
        %s135 = scalar_lea.vmem %s0, %s134
      $region28: #{stformer_forward.26} parent=23 // pred_fallthru
        _
    $region24: #{stformer_forward.26} parent=5 // pred_fallthru
      _
    %p136 = scmp.le.s32.totalorder 1, %s9
    %p137 = scmp.lt.s32.totalorder %s9, 3
    %p138 = pnand %p136, %p137
    %p139 = pneg %p138
    // Predicated region
    $region29: #{stformer_forward.26} parent=5 // pred_check
      _
    $region30: #{stformer_forward.26} parent=5 // pred_check_branch
      %141 = sbr.rel (%p138) target = $region32
    $region31: #{stformer_forward.26} parent=5 // pred_region
      %s142 = ssub.s32 %s9, 1
      %p143 = scmp.lt.s32.totalorder %s14, 1
      %s144 = scalar_select %p143, %s14, 1
      %s145 = smul.addr %s144, 6
      %s146 = smul.addr %s145, 8
      %s147 = scalar_lea.vmem %s0, %s146
      %p148 = pneg %p35
      %p149 = pneg %p32
      %p150 = pneg %p56
      %p151 = pneg %p53
      %p152 = pneg %p77
      %p153 = pneg %p74
      %p154 = pneg %p103
      %p155 = pneg %p100
      %p156 = scmp.lt.s32.totalorder %s14, 1
      %s157 = scalar_select %p156, %s14, 1
      %s158 = smul.addr %s157, 6
      %s159 = smul.addr %s158, 8
      %s160 = scalar_lea.vmem %s3, %s159
      %p161 = scmp.lt.s32.totalorder %s14, 1
      %s162 = scalar_select %p161, %s14, 1
      %s163 = smul.addr %s162, 6
      %s164 = smul.addr %s163, 8
      %s165 = scalar_lea.vmem %s0, %s164
      %p166 = scmp.lt.s32.totalorder %s14, 1
      %s167 = scalar_select %p166, %s14, 1
      %s168 = smul.addr %s167, 6
      %s169 = smul.addr %s168, 8
      %s170 = scalar_lea.vmem %s3, %s169
      %v171 = vld [vmem:[%s165] sm:$0xff]
      %v172 = vld [vmem:[%s165 + $0x8] sm:$0xff]
      %v173 = vld [vmem:[%s165 + $0x10] sm:$0xff]
      %v174 = vld [vmem:[%s165 + $0x18] sm:$0xff]
      %v175 = vld [vmem:[%s165 + $0x20] sm:$0xff]
      %v176 = vld [vmem:[%s165 + $0x28] sm:$0xff]
      %vm177 = vcmask 261120
      %v178 = vsel %vm177, %v171, 0.0
      %v179 = vsel %vm177, %v172, 0.0
      %v180 = vadd.f32 %v178, %v179
      %v181 = vsel %vm177, %v173, 0.0
      %v182 = vadd.f32 %v180, %v181
      %v183 = vsel %vm177, %v174, 0.0
      %v184 = vadd.f32 %v182, %v183
      %v185 = vsel %vm177, %v175, 0.0
      %v186 = vadd.f32 %v184, %v185
      %v187 = vsel %vm177, %v176, 0.0
      %v188 = vadd.f32 %v186, %v187
      %v189 = vrot.slane %v188, 4
      %v190 = vadd.f32 %v188, %v189
      %v191 = vrot.slane %v190, 2
      %v192 = vadd.f32 %v190, %v191
      %v193 = vrot.slane %v192, 1
      %v194 = vadd.f32 %v192, %v193
      %v195 = vld [vmem:[%s1] sm:$0xff]
      %v196 = vld [vmem:[%s1 + $0x8] sm:$0xff]
      %v197 = vld [vmem:[%s1 + $0x10] sm:$0xff]
      %v198 = vld [vmem:[%s1 + $0x18] sm:$0xff]
      %v200 = vsel %vm177, %v194, 0
      %202 = vmatprep.subr.mxu0 0.0
      %203 = vmatpush1.msra.mxu0 %v195
      %204 = vmatprep.subr.mxu0 0.0
      %205 = vmatpush1.msra.mxu0 %v196
      %206 = vmatprep.subr.mxu0 0.0
      %207 = vmatpush1.msra.mxu0 %v197
      %208 = vmatprep.subr.mxu0 0.0
      %209 = vmatpush1.msra.mxu0 %v198
      %210 = vmatprep.subr.mxu0 0.0
      %211 = vmatpush1.msra.mxu0 0.0
      %212 = vmatprep.subr.mxu0 0.0
      %213 = vmatpush1.msra.mxu0 0.0
      %214 = vmatprep.subr.mxu0 0.0
      %215 = vmatpush1.msra.mxu0 0.0
      %216 = vmatprep.subr.mxu0 0.0
      %217 = vmatpush1.msra.mxu0 0.0
      %218 = vmatprep.subr.mxu0 0.0
      %219 = vmatpush1.msra.mxu0 0.0
      %220 = vmatprep.subr.mxu0 0.0
      %221 = vmatpush1.msra.mxu0 0.0
      %222 = vmatprep.subr.mxu0 0.0
      %223 = vmatpush1.msra.mxu0 0.0
      %224 = vmatprep.subr.mxu0 0.0
      %225 = vmatpush1.msra.mxu0 0.0
      %226 = vmatprep.subr.mxu0 0.0
      %227 = vmatpush1.msra.mxu0 0.0
      %228 = vmatprep.subr.mxu0 0.0
      %229 = vmatpush1.msra.mxu0 0.0
      %230 = vmatprep.subr.mxu0 0.0
      %231 = vmatpush1.msra.mxu0 0.0
      %232 = vmatprep.subr.mxu0 0.0
      %233 = vmatpush1.msra.mxu0 0.0
      %234 = vmatprep.subr.mxu0 0.0
      %235 = vmatpush1.msra.mxu0 0.0
      %236 = vmatprep.subr.mxu0 0.0
      %237 = vmatpush1.msra.mxu0 0.0
      %238 = vmatprep.subr.mxu0 0.0
      %239 = vmatpush1.msra.mxu0 0.0
      %240 = vmatprep.subr.mxu0 0.0
      %241 = vmatpush1.msra.mxu0 0.0
      %242 = vmatprep.subr.mxu0 0.0
      %243 = vmatpush1.msra.mxu0 0.0
      %244 = vmatprep.subr.mxu0 0.0
      %245 = vmatpush1.msra.mxu0 0.0
      %246 = vmatprep.subr.mxu0 0.0
      %247 = vmatpush1.msra.mxu0 0.0
      %248 = vmatprep.subr.mxu0 0.0
      %249 = vmatpush1.msra.mxu0 0.0
      %250 = vmatprep.subr.mxu0 0.0
      %251 = vmatpush1.msra.mxu0 0.0
      %252 = vmatprep.subr.mxu0 0.0
      %253 = vmatpush1.msra.mxu0 0.0
      %254 = vmatprep.subr.mxu0 0.0
      %255 = vmatpush1.msra.mxu0 0.0
      %256 = vmatprep.subr.mxu0 0.0
      %257 = vmatpush1.msra.mxu0 0.0
      %258 = vmatprep.subr.mxu0 0.0
      %259 = vmatpush1.msra.mxu0 0.0
      %260 = vmatprep.subr.mxu0 0.0
      %261 = vmatpush1.msra.mxu0 0.0
      %262 = vmatprep.subr.mxu0 0.0
      %263 = vmatpush1.msra.mxu0 0.0
      %264 = vmatprep.subr.mxu0 0.0
      %265 = vmatpush1.msra.mxu0 0.0
      %266 = vmatprep.mubr.f32.mxu0 0.0
      %267 = vmatmul.mubr.f32.gmra.mrb[0].mxu0 %v200
      %v268 = vpop.f32.mrb[0].mxu0
      %v269 = vadd.f32 0.0, %v268
      %v270 = vpop.f32.mrb[0].mxu0
      %271 = vdwg.mxu0
      %v272 = vmul.f32 %v269, 0.0052083335
      %v273 = vld [vmem:[%s2] sm:$0xff]
      %vm274 = vcmask 64512
      %v276 = vsel %vm274, %v272, 0
      %278 = vmatprep.subr.mxu0 0.0
      %279 = vmatpush1.msra.mxu0 %v273
      %280 = vmatprep.subr.mxu0 0.0
      %281 = vmatpush1.msra.mxu0 0.0
      %282 = vmatprep.subr.mxu0 0.0
      %283 = vmatpush1.msra.mxu0 0.0
      %284 = vmatprep.subr.mxu0 0.0
      %285 = vmatpush1.msra.mxu0 0.0
      %286 = vmatprep.subr.mxu0 0.0
      %287 = vmatpush1.msra.mxu0 0.0
      %288 = vmatprep.subr.mxu0 0.0
      %289 = vmatpush1.msra.mxu0 0.0
      %290 = vmatprep.subr.mxu0 0.0
      %291 = vmatpush1.msra.mxu0 0.0
      %292 = vmatprep.subr.mxu0 0.0
      %293 = vmatpush1.msra.mxu0 0.0
      %294 = vmatprep.subr.mxu0 0.0
      %295 = vmatpush1.msra.mxu0 0.0
      %296 = vmatprep.subr.mxu0 0.0
      %297 = vmatpush1.msra.mxu0 0.0
      %298 = vmatprep.subr.mxu0 0.0
      %299 = vmatpush1.msra.mxu0 0.0
      %300 = vmatprep.subr.mxu0 0.0
      %301 = vmatpush1.msra.mxu0 0.0
      %302 = vmatprep.subr.mxu0 0.0
      %303 = vmatpush1.msra.mxu0 0.0
      %304 = vmatprep.subr.mxu0 0.0
      %305 = vmatpush1.msra.mxu0 0.0
      %306 = vmatprep.subr.mxu0 0.0
      %307 = vmatpush1.msra.mxu0 0.0
      %308 = vmatprep.subr.mxu0 0.0
      %309 = vmatpush1.msra.mxu0 0.0
      %310 = vmatprep.subr.mxu0 0.0
      %311 = vmatpush1.msra.mxu0 0.0
      %312 = vmatprep.subr.mxu0 0.0
      %313 = vmatpush1.msra.mxu0 0.0
      %314 = vmatprep.subr.mxu0 0.0
      %315 = vmatpush1.msra.mxu0 0.0
      %316 = vmatprep.subr.mxu0 0.0
      %317 = vmatpush1.msra.mxu0 0.0
      %318 = vmatprep.subr.mxu0 0.0
      %319 = vmatpush1.msra.mxu0 0.0
      %320 = vmatprep.subr.mxu0 0.0
      %321 = vmatpush1.msra.mxu0 0.0
      %322 = vmatprep.subr.mxu0 0.0
      %323 = vmatpush1.msra.mxu0 0.0
      %324 = vmatprep.subr.mxu0 0.0
      %325 = vmatpush1.msra.mxu0 0.0
      %326 = vmatprep.subr.mxu0 0.0
      %327 = vmatpush1.msra.mxu0 0.0
      %328 = vmatprep.subr.mxu0 0.0
      %329 = vmatpush1.msra.mxu0 0.0
      %330 = vmatprep.subr.mxu0 0.0
      %331 = vmatpush1.msra.mxu0 0.0
      %332 = vmatprep.subr.mxu0 0.0
      %333 = vmatpush1.msra.mxu0 0.0
      %334 = vmatprep.subr.mxu0 0.0
      %335 = vmatpush1.msra.mxu0 0.0
      %336 = vmatprep.subr.mxu0 0.0
      %337 = vmatpush1.msra.mxu0 0.0
      %338 = vmatprep.subr.mxu0 0.0
      %339 = vmatpush1.msra.mxu0 0.0
      %340 = vmatprep.subr.mxu0 0.0
      %341 = vmatpush1.msra.mxu0 0.0
      %342 = vmatprep.mubr.f32.mxu0 0.0
      %343 = vmatmul.mubr.f32.gmra.mrb[0].mxu0 %v276
      %v344 = vpop.f32.mrb[0].mxu0
      %v345 = vadd.f32 0.0, %v344
      %v346 = vpop.f32.mrb[0].mxu0
      %347 = vdwg.mxu0
      %v348 = vlaneseq
      %v349 = vshrl.u32 %v348, 7
      %v350 = vsub.s32 0, %v349
      %v351 = vrot.slane %v345, %v350
      %v352 = vsub.f32 %v171, %v351
      %v353 = vsub.f32 %v172, %v351
      %v354 = vsub.f32 %v173, %v351
      %v355 = vsub.f32 %v174, %v351
      %v356 = vsub.f32 %v175, %v351
      %v357 = vsub.f32 %v176, %v351
      %v358 = vmul.f32 %v352, %v352
      %v359 = vmul.f32 %v353, %v353
      %v360 = vmul.f32 %v354, %v354
      %v361 = vmul.f32 %v355, %v355
      %v362 = vmul.f32 %v356, %v356
      %v363 = vmul.f32 %v357, %v357
      %v364 = vsel %vm177, %v358, 0.0
      %v365 = vsel %vm177, %v359, 0.0
      %v366 = vadd.f32 %v364, %v365
      %v367 = vsel %vm177, %v360, 0.0
      %v368 = vadd.f32 %v366, %v367
      %v369 = vsel %vm177, %v361, 0.0
      %v370 = vadd.f32 %v368, %v369
      %v371 = vsel %vm177, %v362, 0.0
      %v372 = vadd.f32 %v370, %v371
      %v373 = vsel %vm177, %v363, 0.0
      %v374 = vadd.f32 %v372, %v373
      %v375 = vrot.slane %v374, 4
      %v376 = vadd.f32 %v374, %v375
      %v377 = vrot.slane %v376, 2
      %v378 = vadd.f32 %v376, %v377
      %v379 = vrot.slane %v378, 1
      %v380 = vadd.f32 %v378, %v379
      %v382 = vsel %vm177, %v380, 0
      %384 = vmatprep.subr.mxu0 0.0
      %385 = vmatpush1.msra.mxu0 %v195
      %386 = vmatprep.subr.mxu0 0.0
      %387 = vmatpush1.msra.mxu0 %v196
      %388 = vmatprep.subr.mxu0 0.0
      %389 = vmatpush1.msra.mxu0 %v197
      %390 = vmatprep.subr.mxu0 0.0
      %391 = vmatpush1.msra.mxu0 %v198
      %392 = vmatprep.subr.mxu0 0.0
      %393 = vmatpush1.msra.mxu0 0.0
      %394 = vmatprep.subr.mxu0 0.0
      %395 = vmatpush1.msra.mxu0 0.0
      %396 = vmatprep.subr.mxu0 0.0
      %397 = vmatpush1.msra.mxu0 0.0
      %398 = vmatprep.subr.mxu0 0.0
      %399 = vmatpush1.msra.mxu0 0.0
      %400 = vmatprep.subr.mxu0 0.0
      %401 = vmatpush1.msra.mxu0 0.0
      %402 = vmatprep.subr.mxu0 0.0
      %403 = vmatpush1.msra.mxu0 0.0
      %404 = vmatprep.subr.mxu0 0.0
      %405 = vmatpush1.msra.mxu0 0.0
      %406 = vmatprep.subr.mxu0 0.0
      %407 = vmatpush1.msra.mxu0 0.0
      %408 = vmatprep.subr.mxu0 0.0
      %409 = vmatpush1.msra.mxu0 0.0
      %410 = vmatprep.subr.mxu0 0.0
      %411 = vmatpush1.msra.mxu0 0.0
      %412 = vmatprep.subr.mxu0 0.0
      %413 = vmatpush1.msra.mxu0 0.0
      %414 = vmatprep.subr.mxu0 0.0
      %415 = vmatpush1.msra.mxu0 0.0
      %416 = vmatprep.subr.mxu0 0.0
      %417 = vmatpush1.msra.mxu0 0.0
      %418 = vmatprep.subr.mxu0 0.0
      %419 = vmatpush1.msra.mxu0 0.0
      %420 = vmatprep.subr.mxu0 0.0
      %421 = vmatpush1.msra.mxu0 0.0
      %422 = vmatprep.subr.mxu0 0.0
      %423 = vmatpush1.msra.mxu0 0.0
      %424 = vmatprep.subr.mxu0 0.0
      %425 = vmatpush1.msra.mxu0 0.0
      %426 = vmatprep.subr.mxu0 0.0
      %427 = vmatpush1.msra.mxu0 0.0
      %428 = vmatprep.subr.mxu0 0.0
      %429 = vmatpush1.msra.mxu0 0.0
      %430 = vmatprep.subr.mxu0 0.0
      %431 = vmatpush1.msra.mxu0 0.0
      %432 = vmatprep.subr.mxu0 0.0
      %433 = vmatpush1.msra.mxu0 0.0
      %434 = vmatprep.subr.mxu0 0.0
      %435 = vmatpush1.msra.mxu0 0.0
      %436 = vmatprep.subr.mxu0 0.0
      %437 = vmatpush1.msra.mxu0 0.0
      %438 = vmatprep.subr.mxu0 0.0
      %439 = vmatpush1.msra.mxu0 0.0
      %440 = vmatprep.subr.mxu0 0.0
      %441 = vmatpush1.msra.mxu0 0.0
      %442 = vmatprep.subr.mxu0 0.0
      %443 = vmatpush1.msra.mxu0 0.0
      %444 = vmatprep.subr.mxu0 0.0
      %445 = vmatpush1.msra.mxu0 0.0
      %446 = vmatprep.subr.mxu0 0.0
      %447 = vmatpush1.msra.mxu0 0.0
      %448 = vmatprep.mubr.f32.mxu0 0.0
      %449 = vmatmul.mubr.f32.gmra.mrb[0].mxu0 %v382
      %v450 = vpop.f32.mrb[0].mxu0
      %v451 = vadd.f32 0.0, %v450
      %v452 = vpop.f32.mrb[0].mxu0
      %453 = vdwg.mxu0
      %v454 = vmul.f32 %v451, 0.0052083335
      %v456 = vsel %vm274, %v454, 0
      %458 = vmatprep.subr.mxu0 0.0
      %459 = vmatpush1.msra.mxu0 %v273
      %460 = vmatprep.subr.mxu0 0.0
      %461 = vmatpush1.msra.mxu0 0.0
      %462 = vmatprep.subr.mxu0 0.0
      %463 = vmatpush1.msra.mxu0 0.0
      %464 = vmatprep.subr.mxu0 0.0
      %465 = vmatpush1.msra.mxu0 0.0
      %466 = vmatprep.subr.mxu0 0.0
      %467 = vmatpush1.msra.mxu0 0.0
      %468 = vmatprep.subr.mxu0 0.0
      %469 = vmatpush1.msra.mxu0 0.0
      %470 = vmatprep.subr.mxu0 0.0
      %471 = vmatpush1.msra.mxu0 0.0
      %472 = vmatprep.subr.mxu0 0.0
      %473 = vmatpush1.msra.mxu0 0.0
      %474 = vmatprep.subr.mxu0 0.0
      %475 = vmatpush1.msra.mxu0 0.0
      %476 = vmatprep.subr.mxu0 0.0
      %477 = vmatpush1.msra.mxu0 0.0
      %478 = vmatprep.subr.mxu0 0.0
      %479 = vmatpush1.msra.mxu0 0.0
      %480 = vmatprep.subr.mxu0 0.0
      %481 = vmatpush1.msra.mxu0 0.0
      %482 = vmatprep.subr.mxu0 0.0
      %483 = vmatpush1.msra.mxu0 0.0
      %484 = vmatprep.subr.mxu0 0.0
      %485 = vmatpush1.msra.mxu0 0.0
      %486 = vmatprep.subr.mxu0 0.0
      %487 = vmatpush1.msra.mxu0 0.0
      %488 = vmatprep.subr.mxu0 0.0
      %489 = vmatpush1.msra.mxu0 0.0
      %490 = vmatprep.subr.mxu0 0.0
      %491 = vmatpush1.msra.mxu0 0.0
      %492 = vmatprep.subr.mxu0 0.0
      %493 = vmatpush1.msra.mxu0 0.0
      %494 = vmatprep.subr.mxu0 0.0
      %495 = vmatpush1.msra.mxu0 0.0
      %496 = vmatprep.subr.mxu0 0.0
      %497 = vmatpush1.msra.mxu0 0.0
      %498 = vmatprep.subr.mxu0 0.0
      %499 = vmatpush1.msra.mxu0 0.0
      %500 = vmatprep.subr.mxu0 0.0
      %501 = vmatpush1.msra.mxu0 0.0
      %502 = vmatprep.subr.mxu0 0.0
      %503 = vmatpush1.msra.mxu0 0.0
      %504 = vmatprep.subr.mxu0 0.0
      %505 = vmatpush1.msra.mxu0 0.0
      %506 = vmatprep.subr.mxu0 0.0
      %507 = vmatpush1.msra.mxu0 0.0
      %508 = vmatprep.subr.mxu0 0.0
      %509 = vmatpush1.msra.mxu0 0.0
      %510 = vmatprep.subr.mxu0 0.0
      %511 = vmatpush1.msra.mxu0 0.0
      %512 = vmatprep.subr.mxu0 0.0
      %513 = vmatpush1.msra.mxu0 0.0
      %514 = vmatprep.subr.mxu0 0.0
      %515 = vmatpush1.msra.mxu0 0.0
      %516 = vmatprep.subr.mxu0 0.0
      %517 = vmatpush1.msra.mxu0 0.0
      %518 = vmatprep.subr.mxu0 0.0
      %519 = vmatpush1.msra.mxu0 0.0
      %520 = vmatprep.subr.mxu0 0.0
      %521 = vmatpush1.msra.mxu0 0.0
      %522 = vmatprep.mubr.f32.mxu0 0.0
      %523 = vmatmul.mubr.f32.gmra.mrb[0].mxu0 %v456
      %v524 = vpop.f32.mrb[0].mxu0
      %v525 = vadd.f32 1e-05, %v524
      %v526 = vpop.f32.mrb[0].mxu0
      %527 = vdwg.mxu0
      %v528 = vrsqrt.pop %v525
      %v529 = vlaneseq
      %v530 = vshrl.u32 %v529, 7
      %v531 = vsub.s32 0, %v530
      %v532 = vrot.slane %v528, %v531
      %v533 = vmul.f32 %v352, %v532
      %v534 = vmul.f32 %v353, %v532
      %v535 = vmul.f32 %v354, %v532
      %v536 = vmul.f32 %v355, %v532
      %v537 = vmul.f32 %v356, %v532
      %v538 = vmul.f32 %v357, %v532
      %539 = vst.msk [vmem:[%s170] sm:$0xff] %vm177, %v533
      %540 = vst.msk [vmem:[%s170 + $0x8] sm:$0xff] %vm177, %v534
      %541 = vst.msk [vmem:[%s170 + $0x10] sm:$0xff] %vm177, %v535
      %542 = vst.msk [vmem:[%s170 + $0x18] sm:$0xff] %vm177, %v536
      %543 = vst.msk [vmem:[%s170 + $0x20] sm:$0xff] %vm177, %v537
      %544 = vst.msk [vmem:[%s170 + $0x28] sm:$0xff] %vm177, %v538
      %p545 = scmp.lt.s32.totalorder %s14, 1
      %s546 = scalar_select %p545, %s14, 1
      %s547 = smul.addr %s546, 6
      %s548 = smul.addr %s547, 8
      %s549 = scalar_lea.vmem %s3, %s548
      // Predicated region
      $region33: #{stformer_forward.26} parent=31 // pred_check
        %p550 = pneg %p100
      $region34: #{stformer_forward.26} parent=31 // pred_check_branch
        %552 = sbr.rel (%p550) target = $region36
      $region35: #{stformer_forward.26} parent=31 // pred_region
        _
      $region36: #{stformer_forward.26} parent=31 // pred_fallthru
        _
    $region32: #{stformer_forward.26} parent=5 // pred_fallthru
      _
    %p553 = scmp.le.s32.totalorder 2, %s9
    // Predicated region
    $region37: #{stformer_forward.26} parent=5 // pred_check
      %p554 = pneg %p553
    $region38: #{stformer_forward.26} parent=5 // pred_check_branch
      %556 = sbr.rel (%p554) target = $region40
    $region39: #{stformer_forward.26} parent=5 // pred_region
      %s557 = ssub.s32 %s9, 2
      // Predicated region
      $region41: #{stformer_forward.26} parent=39 // pred_check
        %p558 = pneg %p106
      $region42: #{stformer_forward.26} parent=39 // pred_check_branch
        %560 = sbr.rel (%p558) target = $region44
      $region43: #{stformer_forward.26} parent=39 // pred_region
        %p561 = scmp.lt.s32.totalorder %s15, 1
        %s562 = scalar_select %p561, %s15, 1
        %s563 = smul.addr %s562, 6
        %s564 = smul.addr %s563, 8
        %s565 = scalar_lea.vmem %s3, %s564
      $region44: #{stformer_forward.26} parent=39 // pred_fallthru
        _
    $region40: #{stformer_forward.26} parent=5 // pred_fallthru
      _
  $region6: #{stformer_forward.26} parent=0 // loop_footer
    %s13 = sadd.s32 1, %s9
  $region7: #{stformer_forward.26} parent=0 // loop_footer_branch
    %8 = sbr.rel target = $region3
  $region8: #{stformer_forward.26} parent=0 // loop_exit
    _

// kernel: stformer_forward.28
$region0: #{stformer_forward.28}
  #allocation0 [shape = 'u32[]', space=smem, size = 0x4, offset = 0x4, fixed_abs, tag = 'smem constant byte address 0x4 - core index']
  #allocation1 [shape = 'u32[144,128]{1,0:T(1,128)}', space=vmem, size = 0x12000, scoped, tag = 'internal scratch']
  %s0 = inlined_call_operand.vmem [shape: f32[2,32,32], index: 0, kind: input, shape index: {}]
  %s1 = inlined_call_operand.vmem [shape: f32[32,8], index: 1, kind: input, shape index: {}]
  %s2 = inlined_call_operand.vmem [shape: f32[8,32], index: 2, kind: input, shape index: {}]
  %s3 = inlined_call_operand.vmem [shape: f32[2,32,32], index: 3, kind: output, shape index: {}]
  %s4 = sld [smem:[#allocation0]]
  $region45: #{stformer_forward.28} parent=0
    _
  %s6 = ssub.s32 1, %s4
  %s7 = scalar_select 0, %s6, %s4
  loop: start=0, step=1, limit=4
  $region2: #{stformer_forward.28} parent=0 // loop_pre_header
    _
  $region3: #{stformer_forward.28} parent=0 // loop_header
    %s9 = sphi 0, %s13
    %p10 = scmp.ge.s32.totalorder %s9, 4
    %s19 = sphi 0, %s21
    %s22 = sphi 0, %s19
    %s23 = sphi 0, %s22
    %s39 = sphi 0, %s23
    %s43 = sphi 0, %s43
    %s45 = sphi 0, %s43
    %s46 = sphi 0, %s45
    %s60 = sphi 0, %s46
    %s64 = sphi 0, %s64
    %s66 = sphi 0, %s64
    %s67 = sphi 0, %s66
    %s81 = sphi 0, %s67
    %s87 = sphi 0, %s89
    %s90 = sphi 0, %s87
    %s91 = sphi 0, %s90
    %s107 = sphi 0, %s91
  $region4: #{stformer_forward.28} parent=0 // loop_header_branch
    %12 = sbr.rel (%p10) target = $region8
  $region5: #{stformer_forward.28} parent=0 // loop_body
    %s14 = ssub.s32 %s9, 1
    %s15 = ssub.s32 %s9, 2
    %s16 = sadd.s32 %s9, 1
    %s17 = ssub.s32 %s9, %s16
    %p18 = scmp.eq.s32.totalorder %s17, 0
    %s20 = sadd.s32 %s19, 1
    %s21 = scalar_select %p18, %s19, %s20
    %p24 = pneg %p18
    %p25 = scmp.eq.s32.totalorder %s9, 1
    %p26 = por %p24, %p25
    %p27 = scmp.ne.s32.totalorder %s19, %s22
    %p28 = scmp.eq.s32.totalorder %s9, 0
    %p29 = por %p27, %p28
    %p30 = scmp.ne.s32.totalorder %s19, %s22
    %p31 = scmp.eq.s32.totalorder %s14, 1
    %p32 = por %p30, %p31
    %p33 = scmp.ne.s32.totalorder %s22, %s23
    %p34 = scmp.eq.s32.totalorder %s14, 0
    %p35 = por %p33, %p34
    %p36 = scmp.ne.s32.totalorder %s22, %s23
    %p37 = scmp.eq.s32.totalorder %s15, 1
    %p38 = por %p36, %p37
    %p40 = scmp.ne.s32.totalorder %s23, %s39
    %p41 = scmp.eq.s32.totalorder %s15, 0
    %p42 = por %p40, %p41
    %s44 = sadd.s32 %s43, 1
    %p47 = scmp.eq.s32.totalorder %s9, 1
    %p48 = scmp.ne.s32.totalorder %s43, %s45
    %p49 = scmp.eq.s32.totalorder %s9, 0
    %p50 = por %p48, %p49
    %p51 = scmp.ne.s32.totalorder %s43, %s45
    %p52 = scmp.eq.s32.totalorder %s14, 1
    %p53 = por %p51, %p52
    %p54 = scmp.ne.s32.totalorder %s45, %s46
    %p55 = scmp.eq.s32.totalorder %s14, 0
    %p56 = por %p54, %p55
    %p57 = scmp.ne.s32.totalorder %s45, %s46
    %p58 = scmp.eq.s32.totalorder %s15, 1
    %p59 = por %p57, %p58
    %p61 = scmp.ne.s32.totalorder %s46, %s60
    %p62 = scmp.eq.s32.totalorder %s15, 0
    %p63 = por %p61, %p62
    %s65 = sadd.s32 %s64, 1
    %p68 = scmp.eq.s32.totalorder %s9, 1
    %p69 = scmp.ne.s32.totalorder %s64, %s66
    %p70 = scmp.eq.s32.totalorder %s9, 0
    %p71 = por %p69, %p70
    %p72 = scmp.ne.s32.totalorder %s64, %s66
    %p73 = scmp.eq.s32.totalorder %s14, 1
    %p74 = por %p72, %p73
    %p75 = scmp.ne.s32.totalorder %s66, %s67
    %p76 = scmp.eq.s32.totalorder %s14, 0
    %p77 = por %p75, %p76
    %p78 = scmp.ne.s32.totalorder %s66, %s67
    %p79 = scmp.eq.s32.totalorder %s15, 1
    %p80 = por %p78, %p79
    %p82 = scmp.ne.s32.totalorder %s67, %s81
    %p83 = scmp.eq.s32.totalorder %s15, 0
    %p84 = por %p82, %p83
    %s85 = ssub.s32 %s9, %s16
    %p86 = scmp.eq.s32.totalorder %s85, 0
    %s88 = sadd.s32 %s87, 1
    %s89 = scalar_select %p86, %s87, %s88
    %p92 = pneg %p86
    %p93 = scmp.eq.s32.totalorder %s9, 1
    %p94 = por %p92, %p93
    %p95 = scmp.ne.s32.totalorder %s87, %s90
    %p96 = scmp.eq.s32.totalorder %s9, 0
    %p97 = por %p95, %p96
    %p98 = scmp.ne.s32.totalorder %s87, %s90
    %p99 = scmp.eq.s32.totalorder %s14, 1
    %p100 = por %p98, %p99
    %p101 = scmp.ne.s32.totalorder %s90, %s91
    %p102 = scmp.eq.s32.totalorder %s14, 0
    %p103 = por %p101, %p102
    %p104 = scmp.ne.s32.totalorder %s90, %s91
    %p105 = scmp.eq.s32.totalorder %s15, 1
    %p106 = por %p104, %p105
    %p108 = scmp.ne.s32.totalorder %s91, %s107
    %p109 = scmp.eq.s32.totalorder %s15, 0
    %p110 = por %p108, %p109
    %p111 = scmp.le.s32.totalorder 1, %s9
    %p112 = scmp.lt.s32.totalorder %s9, 3
    %p113 = pnand %p111, %p112
    %p114 = pneg %p113
    // Predicated region
    $region9: #{stformer_forward.28} parent=5 // pred_check
      _
    $region10: #{stformer_forward.28} parent=5 // pred_check_branch
      %116 = sbr.rel (%p113) target = $region12
    $region11: #{stformer_forward.28} parent=5 // pred_region
      %s117 = ssub.s32 %s9, 1
      // Predicated region
      $region13: #{stformer_forward.28} parent=11 // pred_check
        %p118 = pneg %p56
      $region14: #{stformer_forward.28} parent=11 // pred_check_branch
        %120 = sbr.rel (%p118) target = $region16
      $region15: #{stformer_forward.28} parent=11 // pred_region
        _
      $region16: #{stformer_forward.28} parent=11 // pred_fallthru
        _
      // Predicated region
      $region17: #{stformer_forward.28} parent=11 // pred_check
        %p121 = pneg %p77
      $region18: #{stformer_forward.28} parent=11 // pred_check_branch
        %123 = sbr.rel (%p121) target = $region20
      $region19: #{stformer_forward.28} parent=11 // pred_region
        _
      $region20: #{stformer_forward.28} parent=11 // pred_fallthru
        _
    $region12: #{stformer_forward.28} parent=5 // pred_fallthru
      _
    %p124 = scmp.lt.s32.totalorder %s9, 2
    // Predicated region
    $region21: #{stformer_forward.28} parent=5 // pred_check
      %p125 = pneg %p124
    $region22: #{stformer_forward.28} parent=5 // pred_check_branch
      %127 = sbr.rel (%p125) target = $region24
    $region23: #{stformer_forward.28} parent=5 // pred_region
      // Predicated region
      $region25: #{stformer_forward.28} parent=23 // pred_check
        %p128 = pneg %p29
      $region26: #{stformer_forward.28} parent=23 // pred_check_branch
        %130 = sbr.rel (%p128) target = $region28
      $region27: #{stformer_forward.28} parent=23 // pred_region
        %p131 = scmp.lt.s32.totalorder %s9, 1
        %s132 = scalar_select %p131, %s9, 1
        %s133 = smul.addr %s132, 4
        %s134 = smul.addr %s133, 8
        %s135 = scalar_lea.vmem %s0, %s134
      $region28: #{stformer_forward.28} parent=23 // pred_fallthru
        _
    $region24: #{stformer_forward.28} parent=5 // pred_fallthru
      _
    %p136 = scmp.le.s32.totalorder 1, %s9
    %p137 = scmp.lt.s32.totalorder %s9, 3
    %p138 = pnand %p136, %p137
    %p139 = pneg %p138
    // Predicated region
    $region29: #{stformer_forward.28} parent=5 // pred_check
      _
    $region30: #{stformer_forward.28} parent=5 // pred_check_branch
      %141 = sbr.rel (%p138) target = $region32
    $region31: #{stformer_forward.28} parent=5 // pred_region
      %s142 = ssub.s32 %s9, 1
      %p143 = scmp.lt.s32.totalorder %s14, 1
      %s144 = scalar_select %p143, %s14, 1
      %s145 = smul.addr %s144, 4
      %s146 = smul.addr %s145, 8
      %s147 = scalar_lea.vmem %s0, %s146
      %p148 = pneg %p35
      %p149 = pneg %p32
      %p150 = pneg %p56
      %p151 = pneg %p53
      %p152 = pneg %p77
      %p153 = pneg %p74
      %p154 = pneg %p103
      %p155 = pneg %p100
      %p156 = scmp.lt.s32.totalorder %s14, 1
      %s157 = scalar_select %p156, %s14, 1
      %s158 = smul.addr %s157, 4
      %s159 = smul.addr %s158, 8
      %s160 = scalar_lea.vmem %s3, %s159
      %p161 = scmp.lt.s32.totalorder %s14, 1
      %s162 = scalar_select %p161, %s14, 1
      %s163 = smul.addr %s162, 4
      %s164 = smul.addr %s163, 8
      %s165 = scalar_lea.vmem %s0, %s164
      %p166 = scmp.lt.s32.totalorder %s14, 1
      %s167 = scalar_select %p166, %s14, 1
      %s168 = smul.addr %s167, 4
      %s169 = smul.addr %s168, 8
      %s170 = scalar_lea.vmem %s3, %s169
      %v171 = vld [vmem:[%s165] sm:$0xff]
      %v172 = vld [vmem:[%s165 + $0x8] sm:$0xff]
      %v173 = vld [vmem:[%s165 + $0x10] sm:$0xff]
      %v174 = vld [vmem:[%s165 + $0x18] sm:$0xff]
      %vm175 = vcmask 261120
      %v176 = vsel %vm175, %v171, 0.0
      %v177 = vsel %vm175, %v172, 0.0
      %v178 = vadd.f32 %v176, %v177
      %v179 = vsel %vm175, %v173, 0.0
      %v180 = vadd.f32 %v178, %v179
      %v181 = vsel %vm175, %v174, 0.0
      %v182 = vadd.f32 %v180, %v181
      %v183 = vrot.slane %v182, 4
      %v184 = vadd.f32 %v182, %v183
      %v185 = vrot.slane %v184, 2
      %v186 = vadd.f32 %v184, %v185
      %v187 = vrot.slane %v186, 1
      %v188 = vadd.f32 %v186, %v187
      %v189 = vld [vmem:[%s1] sm:$0xff]
      %v190 = vld [vmem:[%s1 + $0x8] sm:$0xff]
      %v191 = vld [vmem:[%s1 + $0x10] sm:$0xff]
      %v192 = vld [vmem:[%s1 + $0x18] sm:$0xff]
      %v194 = vsel %vm175, %v188, 0
      %196 = vmatprep.subr.mxu0 0.0
      %197 = vmatpush1.msra.mxu0 %v189
      %198 = vmatprep.subr.mxu0 0.0
      %199 = vmatpush1.msra.mxu0 %v190
      %200 = vmatprep.subr.mxu0 0.0
      %201 = vmatpush1.msra.mxu0 %v191
      %202 = vmatprep.subr.mxu0 0.0
      %203 = vmatpush1.msra.mxu0 %v192
      %204 = vmatprep.subr.mxu0 0.0
      %205 = vmatpush1.msra.mxu0 0.0
      %206 = vmatprep.subr.mxu0 0.0
      %207 = vmatpush1.msra.mxu0 0.0
      %208 = vmatprep.subr.mxu0 0.0
      %209 = vmatpush1.msra.mxu0 0.0
      %210 = vmatprep.subr.mxu0 0.0
      %211 = vmatpush1.msra.mxu0 0.0
      %212 = vmatprep.subr.mxu0 0.0
      %213 = vmatpush1.msra.mxu0 0.0
      %214 = vmatprep.subr.mxu0 0.0
      %215 = vmatpush1.msra.mxu0 0.0
      %216 = vmatprep.subr.mxu0 0.0
      %217 = vmatpush1.msra.mxu0 0.0
      %218 = vmatprep.subr.mxu0 0.0
      %219 = vmatpush1.msra.mxu0 0.0
      %220 = vmatprep.subr.mxu0 0.0
      %221 = vmatpush1.msra.mxu0 0.0
      %222 = vmatprep.subr.mxu0 0.0
      %223 = vmatpush1.msra.mxu0 0.0
      %224 = vmatprep.subr.mxu0 0.0
      %225 = vmatpush1.msra.mxu0 0.0
      %226 = vmatprep.subr.mxu0 0.0
      %227 = vmatpush1.msra.mxu0 0.0
      %228 = vmatprep.subr.mxu0 0.0
      %229 = vmatpush1.msra.mxu0 0.0
      %230 = vmatprep.subr.mxu0 0.0
      %231 = vmatpush1.msra.mxu0 0.0
      %232 = vmatprep.subr.mxu0 0.0
      %233 = vmatpush1.msra.mxu0 0.0
      %234 = vmatprep.subr.mxu0 0.0
      %235 = vmatpush1.msra.mxu0 0.0
      %236 = vmatprep.subr.mxu0 0.0
      %237 = vmatpush1.msra.mxu0 0.0
      %238 = vmatprep.subr.mxu0 0.0
      %239 = vmatpush1.msra.mxu0 0.0
      %240 = vmatprep.subr.mxu0 0.0
      %241 = vmatpush1.msra.mxu0 0.0
      %242 = vmatprep.subr.mxu0 0.0
      %243 = vmatpush1.msra.mxu0 0.0
      %244 = vmatprep.subr.mxu0 0.0
      %245 = vmatpush1.msra.mxu0 0.0
      %246 = vmatprep.subr.mxu0 0.0
      %247 = vmatpush1.msra.mxu0 0.0
      %248 = vmatprep.subr.mxu0 0.0
      %249 = vmatpush1.msra.mxu0 0.0
      %250 = vmatprep.subr.mxu0 0.0
      %251 = vmatpush1.msra.mxu0 0.0
      %252 = vmatprep.subr.mxu0 0.0
      %253 = vmatpush1.msra.mxu0 0.0
      %254 = vmatprep.subr.mxu0 0.0
      %255 = vmatpush1.msra.mxu0 0.0
      %256 = vmatprep.subr.mxu0 0.0
      %257 = vmatpush1.msra.mxu0 0.0
      %258 = vmatprep.subr.mxu0 0.0
      %259 = vmatpush1.msra.mxu0 0.0
      %260 = vmatprep.mubr.f32.mxu0 0.0
      %261 = vmatmul.mubr.f32.gmra.mrb[0].mxu0 %v194
      %v262 = vpop.f32.mrb[0].mxu0
      %v263 = vadd.f32 0.0, %v262
      %v264 = vpop.f32.mrb[0].mxu0
      %265 = vdwg.mxu0
      %v266 = vmul.f32 %v263, 0.0078125
      %v267 = vld [vmem:[%s2] sm:$0xff]
      %vm268 = vcmask 64512
      %v270 = vsel %vm268, %v266, 0
      %272 = vmatprep.subr.mxu0 0.0
      %273 = vmatpush1.msra.mxu0 %v267
      %274 = vmatprep.subr.mxu0 0.0
      %275 = vmatpush1.msra.mxu0 0.0
      %276 = vmatprep.subr.mxu0 0.0
      %277 = vmatpush1.msra.mxu0 0.0
      %278 = vmatprep.subr.mxu0 0.0
      %279 = vmatpush1.msra.mxu0 0.0
      %280 = vmatprep.subr.mxu0 0.0
      %281 = vmatpush1.msra.mxu0 0.0
      %282 = vmatprep.subr.mxu0 0.0
      %283 = vmatpush1.msra.mxu0 0.0
      %284 = vmatprep.subr.mxu0 0.0
      %285 = vmatpush1.msra.mxu0 0.0
      %286 = vmatprep.subr.mxu0 0.0
      %287 = vmatpush1.msra.mxu0 0.0
      %288 = vmatprep.subr.mxu0 0.0
      %289 = vmatpush1.msra.mxu0 0.0
      %290 = vmatprep.subr.mxu0 0.0
      %291 = vmatpush1.msra.mxu0 0.0
      %292 = vmatprep.subr.mxu0 0.0
      %293 = vmatpush1.msra.mxu0 0.0
      %294 = vmatprep.subr.mxu0 0.0
      %295 = vmatpush1.msra.mxu0 0.0
      %296 = vmatprep.subr.mxu0 0.0
      %297 = vmatpush1.msra.mxu0 0.0
      %298 = vmatprep.subr.mxu0 0.0
      %299 = vmatpush1.msra.mxu0 0.0
      %300 = vmatprep.subr.mxu0 0.0
      %301 = vmatpush1.msra.mxu0 0.0
      %302 = vmatprep.subr.mxu0 0.0
      %303 = vmatpush1.msra.mxu0 0.0
      %304 = vmatprep.subr.mxu0 0.0
      %305 = vmatpush1.msra.mxu0 0.0
      %306 = vmatprep.subr.mxu0 0.0
      %307 = vmatpush1.msra.mxu0 0.0
      %308 = vmatprep.subr.mxu0 0.0
      %309 = vmatpush1.msra.mxu0 0.0
      %310 = vmatprep.subr.mxu0 0.0
      %311 = vmatpush1.msra.mxu0 0.0
      %312 = vmatprep.subr.mxu0 0.0
      %313 = vmatpush1.msra.mxu0 0.0
      %314 = vmatprep.subr.mxu0 0.0
      %315 = vmatpush1.msra.mxu0 0.0
      %316 = vmatprep.subr.mxu0 0.0
      %317 = vmatpush1.msra.mxu0 0.0
      %318 = vmatprep.subr.mxu0 0.0
      %319 = vmatpush1.msra.mxu0 0.0
      %320 = vmatprep.subr.mxu0 0.0
      %321 = vmatpush1.msra.mxu0 0.0
      %322 = vmatprep.subr.mxu0 0.0
      %323 = vmatpush1.msra.mxu0 0.0
      %324 = vmatprep.subr.mxu0 0.0
      %325 = vmatpush1.msra.mxu0 0.0
      %326 = vmatprep.subr.mxu0 0.0
      %327 = vmatpush1.msra.mxu0 0.0
      %328 = vmatprep.subr.mxu0 0.0
      %329 = vmatpush1.msra.mxu0 0.0
      %330 = vmatprep.subr.mxu0 0.0
      %331 = vmatpush1.msra.mxu0 0.0
      %332 = vmatprep.subr.mxu0 0.0
      %333 = vmatpush1.msra.mxu0 0.0
      %334 = vmatprep.subr.mxu0 0.0
      %335 = vmatpush1.msra.mxu0 0.0
      %336 = vmatprep.mubr.f32.mxu0 0.0
      %337 = vmatmul.mubr.f32.gmra.mrb[0].mxu0 %v270
      %v338 = vpop.f32.mrb[0].mxu0
      %v339 = vadd.f32 0.0, %v338
      %v340 = vpop.f32.mrb[0].mxu0
      %341 = vdwg.mxu0
      %v342 = vlaneseq
      %v343 = vshrl.u32 %v342, 7
      %v344 = vsub.s32 0, %v343
      %v345 = vrot.slane %v339, %v344
      %v346 = vsub.f32 %v171, %v345
      %v347 = vsub.f32 %v172, %v345
      %v348 = vsub.f32 %v173, %v345
      %v349 = vsub.f32 %v174, %v345
      %v350 = vmul.f32 %v346, %v346
      %v351 = vmul.f32 %v347, %v347
      %v352 = vmul.f32 %v348, %v348
      %v353 = vmul.f32 %v349, %v349
      %v354 = vsel %vm175, %v350, 0.0
      %v355 = vsel %vm175, %v351, 0.0
      %v356 = vadd.f32 %v354, %v355
      %v357 = vsel %vm175, %v352, 0.0
      %v358 = vadd.f32 %v356, %v357
      %v359 = vsel %vm175, %v353, 0.0
      %v360 = vadd.f32 %v358, %v359
      %v361 = vrot.slane %v360, 4
      %v362 = vadd.f32 %v360, %v361
      %v363 = vrot.slane %v362, 2
      %v364 = vadd.f32 %v362, %v363
      %v365 = vrot.slane %v364, 1
      %v366 = vadd.f32 %v364, %v365
      %v368 = vsel %vm175, %v366, 0
      %370 = vmatprep.subr.mxu0 0.0
      %371 = vmatpush1.msra.mxu0 %v189
      %372 = vmatprep.subr.mxu0 0.0
      %373 = vmatpush1.msra.mxu0 %v190
      %374 = vmatprep.subr.mxu0 0.0
      %375 = vmatpush1.msra.mxu0 %v191
      %376 = vmatprep.subr.mxu0 0.0
      %377 = vmatpush1.msra.mxu0 %v192
      %378 = vmatprep.subr.mxu0 0.0
      %379 = vmatpush1.msra.mxu0 0.0
      %380 = vmatprep.subr.mxu0 0.0
      %381 = vmatpush1.msra.mxu0 0.0
      %382 = vmatprep.subr.mxu0 0.0
      %383 = vmatpush1.msra.mxu0 0.0
      %384 = vmatprep.subr.mxu0 0.0
      %385 = vmatpush1.msra.mxu0 0.0
      %386 = vmatprep.subr.mxu0 0.0
      %387 = vmatpush1.msra.mxu0 0.0
      %388 = vmatprep.subr.mxu0 0.0
      %389 = vmatpush1.msra.mxu0 0.0
      %390 = vmatprep.subr.mxu0 0.0
      %391 = vmatpush1.msra.mxu0 0.0
      %392 = vmatprep.subr.mxu0 0.0
      %393 = vmatpush1.msra.mxu0 0.0
      %394 = vmatprep.subr.mxu0 0.0
      %395 = vmatpush1.msra.mxu0 0.0
      %396 = vmatprep.subr.mxu0 0.0
      %397 = vmatpush1.msra.mxu0 0.0
      %398 = vmatprep.subr.mxu0 0.0
      %399 = vmatpush1.msra.mxu0 0.0
      %400 = vmatprep.subr.mxu0 0.0
      %401 = vmatpush1.msra.mxu0 0.0
      %402 = vmatprep.subr.mxu0 0.0
      %403 = vmatpush1.msra.mxu0 0.0
      %404 = vmatprep.subr.mxu0 0.0
      %405 = vmatpush1.msra.mxu0 0.0
      %406 = vmatprep.subr.mxu0 0.0
      %407 = vmatpush1.msra.mxu0 0.0
      %408 = vmatprep.subr.mxu0 0.0
      %409 = vmatpush1.msra.mxu0 0.0
      %410 = vmatprep.subr.mxu0 0.0
      %411 = vmatpush1.msra.mxu0 0.0
      %412 = vmatprep.subr.mxu0 0.0
      %413 = vmatpush1.msra.mxu0 0.0
      %414 = vmatprep.subr.mxu0 0.0
      %415 = vmatpush1.msra.mxu0 0.0
      %416 = vmatprep.subr.mxu0 0.0
      %417 = vmatpush1.msra.mxu0 0.0
      %418 = vmatprep.subr.mxu0 0.0
      %419 = vmatpush1.msra.mxu0 0.0
      %420 = vmatprep.subr.mxu0 0.0
      %421 = vmatpush1.msra.mxu0 0.0
      %422 = vmatprep.subr.mxu0 0.0
      %423 = vmatpush1.msra.mxu0 0.0
      %424 = vmatprep.subr.mxu0 0.0
      %425 = vmatpush1.msra.mxu0 0.0
      %426 = vmatprep.subr.mxu0 0.0
      %427 = vmatpush1.msra.mxu0 0.0
      %428 = vmatprep.subr.mxu0 0.0
      %429 = vmatpush1.msra.mxu0 0.0
      %430 = vmatprep.subr.mxu0 0.0
      %431 = vmatpush1.msra.mxu0 0.0
      %432 = vmatprep.subr.mxu0 0.0
      %433 = vmatpush1.msra.mxu0 0.0
      %434 = vmatprep.mubr.f32.mxu0 0.0
      %435 = vmatmul.mubr.f32.gmra.mrb[0].mxu0 %v368
      %v436 = vpop.f32.mrb[0].mxu0
      %v437 = vadd.f32 0.0, %v436
      %v438 = vpop.f32.mrb[0].mxu0
      %439 = vdwg.mxu0
      %v440 = vmul.f32 %v437, 0.0078125
      %v442 = vsel %vm268, %v440, 0
      %444 = vmatprep.subr.mxu0 0.0
      %445 = vmatpush1.msra.mxu0 %v267
      %446 = vmatprep.subr.mxu0 0.0
      %447 = vmatpush1.msra.mxu0 0.0
      %448 = vmatprep.subr.mxu0 0.0
      %449 = vmatpush1.msra.mxu0 0.0
      %450 = vmatprep.subr.mxu0 0.0
      %451 = vmatpush1.msra.mxu0 0.0
      %452 = vmatprep.subr.mxu0 0.0
      %453 = vmatpush1.msra.mxu0 0.0
      %454 = vmatprep.subr.mxu0 0.0
      %455 = vmatpush1.msra.mxu0 0.0
      %456 = vmatprep.subr.mxu0 0.0
      %457 = vmatpush1.msra.mxu0 0.0
      %458 = vmatprep.subr.mxu0 0.0
      %459 = vmatpush1.msra.mxu0 0.0
      %460 = vmatprep.subr.mxu0 0.0
      %461 = vmatpush1.msra.mxu0 0.0
      %462 = vmatprep.subr.mxu0 0.0
      %463 = vmatpush1.msra.mxu0 0.0
      %464 = vmatprep.subr.mxu0 0.0
      %465 = vmatpush1.msra.mxu0 0.0
      %466 = vmatprep.subr.mxu0 0.0
      %467 = vmatpush1.msra.mxu0 0.0
      %468 = vmatprep.subr.mxu0 0.0
      %469 = vmatpush1.msra.mxu0 0.0
      %470 = vmatprep.subr.mxu0 0.0
      %471 = vmatpush1.msra.mxu0 0.0
      %472 = vmatprep.subr.mxu0 0.0
      %473 = vmatpush1.msra.mxu0 0.0
      %474 = vmatprep.subr.mxu0 0.0
      %475 = vmatpush1.msra.mxu0 0.0
      %476 = vmatprep.subr.mxu0 0.0
      %477 = vmatpush1.msra.mxu0 0.0
      %478 = vmatprep.subr.mxu0 0.0
      %479 = vmatpush1.msra.mxu0 0.0
      %480 = vmatprep.subr.mxu0 0.0
      %481 = vmatpush1.msra.mxu0 0.0
      %482 = vmatprep.subr.mxu0 0.0
      %483 = vmatpush1.msra.mxu0 0.0
      %484 = vmatprep.subr.mxu0 0.0
      %485 = vmatpush1.msra.mxu0 0.0
      %486 = vmatprep.subr.mxu0 0.0
      %487 = vmatpush1.msra.mxu0 0.0
      %488 = vmatprep.subr.mxu0 0.0
      %489 = vmatpush1.msra.mxu0 0.0
      %490 = vmatprep.subr.mxu0 0.0
      %491 = vmatpush1.msra.mxu0 0.0
      %492 = vmatprep.subr.mxu0 0.0
      %493 = vmatpush1.msra.mxu0 0.0
      %494 = vmatprep.subr.mxu0 0.0
      %495 = vmatpush1.msra.mxu0 0.0
      %496 = vmatprep.subr.mxu0 0.0
      %497 = vmatpush1.msra.mxu0 0.0
      %498 = vmatprep.subr.mxu0 0.0
      %499 = vmatpush1.msra.mxu0 0.0
      %500 = vmatprep.subr.mxu0 0.0
      %501 = vmatpush1.msra.mxu0 0.0
      %502 = vmatprep.subr.mxu0 0.0
      %503 = vmatpush1.msra.mxu0 0.0
      %504 = vmatprep.subr.mxu0 0.0
      %505 = vmatpush1.msra.mxu0 0.0
      %506 = vmatprep.subr.mxu0 0.0
      %507 = vmatpush1.msra.mxu0 0.0
      %508 = vmatprep.mubr.f32.mxu0 0.0
      %509 = vmatmul.mubr.f32.gmra.mrb[0].mxu0 %v442
      %v510 = vpop.f32.mrb[0].mxu0
      %v511 = vadd.f32 1e-05, %v510
      %v512 = vpop.f32.mrb[0].mxu0
      %513 = vdwg.mxu0
      %v514 = vrsqrt.pop %v511
      %v515 = vlaneseq
      %v516 = vshrl.u32 %v515, 7
      %v517 = vsub.s32 0, %v516
      %v518 = vrot.slane %v514, %v517
      %v519 = vmul.f32 %v346, %v518
      %v520 = vmul.f32 %v347, %v518
      %v521 = vmul.f32 %v348, %v518
      %v522 = vmul.f32 %v349, %v518
      %523 = vst.msk [vmem:[%s170] sm:$0xff] %vm175, %v519
      %524 = vst.msk [vmem:[%s170 + $0x8] sm:$0xff] %vm175, %v520
      %525 = vst.msk [vmem:[%s170 + $0x10] sm:$0xff] %vm175, %v521
      %526 = vst.msk [vmem:[%s170 + $0x18] sm:$0xff] %vm175, %v522
      %p527 = scmp.lt.s32.totalorder %s14, 1
      %s528 = scalar_select %p527, %s14, 1
      %s529 = smul.addr %s528, 4
      %s530 = smul.addr %s529, 8
      %s531 = scalar_lea.vmem %s3, %s530
      // Predicated region
      $region33: #{stformer_forward.28} parent=31 // pred_check
        %p532 = pneg %p100
      $region34: #{stformer_forward.28} parent=31 // pred_check_branch
        %534 = sbr.rel (%p532) target = $region36
      $region35: #{stformer_forward.28} parent=31 // pred_region
        _
      $region36: #{stformer_forward.28} parent=31 // pred_fallthru
        _
    $region32: #{stformer_forward.28} parent=5 // pred_fallthru
      _
    %p535 = scmp.le.s32.totalorder 2, %s9
    // Predicated region
    $region37: #{stformer_forward.28} parent=5 // pred_check
      %p536 = pneg %p535
    $region38: #{stformer_forward.28} parent=5 // pred_check_branch
      %538 = sbr.rel (%p536) target = $region40
    $region39: #{stformer_forward.28} parent=5 // pred_region
      %s539 = ssub.s32 %s9, 2
      // Predicated region
      $region41: #{stformer_forward.28} parent=39 // pred_check
        %p540 = pneg %p106
      $region42: #{stformer_forward.28} parent=39 // pred_check_branch
        %542 = sbr.rel (%p540) target = $region44
      $region43: #{stformer_forward.28} parent=39 // pred_region
        %p543 = scmp.lt.s32.totalorder %s15, 1
        %s544 = scalar_select %p543, %s15, 1
        %s545 = smul.addr %s544, 4
        %s546 = smul.addr %s545, 8
        %s547 = scalar_lea.vmem %s3, %s546
      $region44: #{stformer_forward.28} parent=39 // pred_fallthru
        _
    $region40: #{stformer_forward.28} parent=5 // pred_fallthru
      _
  $region6: #{stformer_forward.28} parent=0 // loop_footer
    %s13 = sadd.s32 1, %s9
  $region7: #{stformer_forward.28} parent=0 // loop_footer_branch
    %8 = sbr.rel target = $region3
  $region8: #{stformer_forward.28} parent=0 // loop_exit
    _

// kernel: stformer_forward.29
$region0: #{stformer_forward.29}
  #allocation0 [shape = 'u32[]', space=smem, size = 0x4, offset = 0x4, fixed_abs, tag = 'smem constant byte address 0x4 - core index']
  #allocation1 [shape = 'u32[144,128]{1,0:T(1,128)}', space=vmem, size = 0x12000, scoped, tag = 'internal scratch']
  %s0 = inlined_call_operand.vmem [shape: f32[64,32], index: 0, kind: input, shape index: {}]
  %s1 = inlined_call_operand.vmem [shape: f32[64,96], index: 1, kind: input, shape index: {}]
  %s2 = inlined_call_operand.vmem [shape: f32[96,32], index: 2, kind: input, shape index: {}]
  %s3 = inlined_call_operand.vmem [shape: f32[96,192], index: 3, kind: input, shape index: {}]
  %s4 = inlined_call_operand.vmem [shape: f32[32,96], index: 4, kind: input, shape index: {}]
  %s5 = inlined_call_operand.vmem [shape: f32[1,96], index: 5, kind: input, shape index: {}]
  %s6 = inlined_call_operand.vmem [shape: f32[32,192], index: 6, kind: input, shape index: {}]
  %s7 = inlined_call_operand.vmem [shape: f32[1,192], index: 7, kind: input, shape index: {}]
  %s8 = inlined_call_operand.vmem [shape: f32[96,32], index: 8, kind: input, shape index: {}]
  %s9 = inlined_call_operand.vmem [shape: f32[1,32], index: 9, kind: input, shape index: {}]
  %s10 = inlined_call_operand.vmem [shape: f32[64,32], index: 10, kind: output, shape index: {}]
  %s11 = sld [smem:[#allocation0]]
  $region73: #{stformer_forward.29} parent=0
    _
  %s13 = ssub.s32 1, %s11
  %s14 = scalar_select 0, %s13, %s11
  loop: start=0, step=1, limit=4
  $region2: #{stformer_forward.29} parent=0 // loop_pre_header
    _
  $region3: #{stformer_forward.29} parent=0 // loop_header
    %s16 = sphi 0, %s20
    %p17 = scmp.ge.s32.totalorder %s16, 4
    %s26 = sphi 0, %s28
    %s29 = sphi 0, %s26
    %s30 = sphi 0, %s29
    %s46 = sphi 0, %s30
    %s52 = sphi 0, %s54
    %s55 = sphi 0, %s52
    %s56 = sphi 0, %s55
    %s72 = sphi 0, %s56
    %s78 = sphi 0, %s80
    %s81 = sphi 0, %s78
    %s82 = sphi 0, %s81
    %s98 = sphi 0, %s82
    %s104 = sphi 0, %s106
    %s107 = sphi 0, %s104
    %s108 = sphi 0, %s107
    %s124 = sphi 0, %s108
    %s128 = sphi 0, %s128
    %s130 = sphi 0, %s128
    %s131 = sphi 0, %s130
    %s145 = sphi 0, %s131
    %s149 = sphi 0, %s149
    %s151 = sphi 0, %s149
    %s152 = sphi 0, %s151
    %s166 = sphi 0, %s152
    %s170 = sphi 0, %s170
    %s172 = sphi 0, %s170
    %s173 = sphi 0, %s172
    %s187 = sphi 0, %s173
    %s191 = sphi 0, %s191
    %s193 = sphi 0, %s191
    %s194 = sphi 0, %s193
    %s208 = sphi 0, %s194
    %s212 = sphi 0, %s212
    %s214 = sphi 0, %s212
    %s215 = sphi 0, %s214
    %s229 = sphi 0, %s215
    %s233 = sphi 0, %s233
    %s235 = sphi 0, %s233
    %s236 = sphi 0, %s235
    %s250 = sphi 0, %s236
    %s256 = sphi 0, %s258
    %s259 = sphi 0, %s256
    %s260 = sphi 0, %s259
    %s276 = sphi 0, %s260
  $region4: #{stformer_forward.29} parent=0 // loop_header_branch
    %19 = sbr.rel (%p17) target = $region8
  $region5: #{stformer_forward.29} parent=0 // loop_body
    %s21 = ssub.s32 %s16, 1
    %s22 = ssub.s32 %s16, 2
    %s23 = sadd.s32 %s16, 1
    %s24 = ssub.s32 %s16, %s23
    %p25 = scmp.eq.s32.totalorder %s24, 0
    %s27 = sadd.s32 %s26, 1
    %s28 = scalar_select %p25, %s26, %s27
    %p31 = pneg %p25
    %p32 = scmp.eq.s32.totalorder %s16, 1
    %p33 = por %p31, %p32
    %p34 = scmp.ne.s32.totalorder %s26, %s29
    %p35 = scmp.eq.s32.totalorder %s16, 0
    %p36 = por %p34, %p35
    %p37 = scmp.ne.s32.totalorder %s26, %s29
    %p38 = scmp.eq.s32.totalorder %s21, 1
    %p39 = por %p37, %p38
    %p40 = scmp.ne.s32.totalorder %s29, %s30
    %p41 = scmp.eq.s32.totalorder %s21, 0
    %p42 = por %p40, %p41
    %p43 = scmp.ne.s32.totalorder %s29, %s30
    %p44 = scmp.eq.s32.totalorder %s22, 1
    %p45 = por %p43, %p44
    %p47 = scmp.ne.s32.totalorder %s30, %s46
    %p48 = scmp.eq.s32.totalorder %s22, 0
    %p49 = por %p47, %p48
    %s50 = ssub.s32 %s16, %s23
    %p51 = scmp.eq.s32.totalorder %s50, 0
    %s53 = sadd.s32 %s52, 1
    %s54 = scalar_select %p51, %s52, %s53
    %p57 = pneg %p51
    %p58 = scmp.eq.s32.totalorder %s16, 1
    %p59 = por %p57, %p58
    %p60 = scmp.ne.s32.totalorder %s52, %s55
    %p61 = scmp.eq.s32.totalorder %s16, 0
    %p62 = por %p60, %p61
    %p63 = scmp.ne.s32.totalorder %s52, %s55
    %p64 = scmp.eq.s32.totalorder %s21, 1
    %p65 = por %p63, %p64
    %p66 = scmp.ne.s32.totalorder %s55, %s56
    %p67 = scmp.eq.s32.totalorder %s21, 0
    %p68 = por %p66, %p67
    %p69 = scmp.ne.s32.totalorder %s55, %s56
    %p70 = scmp.eq.s32.totalorder %s22, 1
    %p71 = por %p69, %p70
    %p73 = scmp.ne.s32.totalorder %s56, %s72
    %p74 = scmp.eq.s32.totalorder %s22, 0
    %p75 = por %p73, %p74
    %s76 = ssub.s32 %s16, %s23
    %p77 = scmp.eq.s32.totalorder %s76, 0
    %s79 = sadd.s32 %s78, 1
    %s80 = scalar_select %p77, %s78, %s79
    %p83 = pneg %p77
    %p84 = scmp.eq.s32.totalorder %s16, 1
    %p85 = por %p83, %p84
    %p86 = scmp.ne.s32.totalorder %s78, %s81
    %p87 = scmp.eq.s32.totalorder %s16, 0
    %p88 = por %p86, %p87
    %p89 = scmp.ne.s32.totalorder %s78, %s81
    %p90 = scmp.eq.s32.totalorder %s21, 1
    %p91 = por %p89, %p90
    %p92 = scmp.ne.s32.totalorder %s81, %s82
    %p93 = scmp.eq.s32.totalorder %s21, 0
    %p94 = por %p92, %p93
    %p95 = scmp.ne.s32.totalorder %s81, %s82
    %p96 = scmp.eq.s32.totalorder %s22, 1
    %p97 = por %p95, %p96
    %p99 = scmp.ne.s32.totalorder %s82, %s98
    %p100 = scmp.eq.s32.totalorder %s22, 0
    %p101 = por %p99, %p100
    %s102 = ssub.s32 %s16, %s23
    %p103 = scmp.eq.s32.totalorder %s102, 0
    %s105 = sadd.s32 %s104, 1
    %s106 = scalar_select %p103, %s104, %s105
    %p109 = pneg %p103
    %p110 = scmp.eq.s32.totalorder %s16, 1
    %p111 = por %p109, %p110
    %p112 = scmp.ne.s32.totalorder %s104, %s107
    %p113 = scmp.eq.s32.totalorder %s16, 0
    %p114 = por %p112, %p113
    %p115 = scmp.ne.s32.totalorder %s104, %s107
    %p116 = scmp.eq.s32.totalorder %s21, 1
    %p117 = por %p115, %p116
    %p118 = scmp.ne.s32.totalorder %s107, %s108
    %p119 = scmp.eq.s32.totalorder %s21, 0
    %p120 = por %p118, %p119
    %p121 = scmp.ne.s32.totalorder %s107, %s108
    %p122 = scmp.eq.s32.totalorder %s22, 1
    %p123 = por %p121, %p122
    %p125 = scmp.ne.s32.totalorder %s108, %s124
    %p126 = scmp.eq.s32.totalorder %s22, 0
    %p127 = por %p125, %p126
    %s129 = sadd.s32 %s128, 1
    %p132 = scmp.eq.s32.totalorder %s16, 1
    %p133 = scmp.ne.s32.totalorder %s128, %s130
    %p134 = scmp.eq.s32.totalorder %s16, 0
    %p135 = por %p133, %p134
    %p136 = scmp.ne.s32.totalorder %s128, %s130
    %p137 = scmp.eq.s32.totalorder %s21, 1
    %p138 = por %p136, %p137
    %p139 = scmp.ne.s32.totalorder %s130, %s131
    %p140 = scmp.eq.s32.totalorder %s21, 0
    %p141 = por %p139, %p140
    %p142 = scmp.ne.s32.totalorder %s130, %s131
    %p143 = scmp.eq.s32.totalorder %s22, 1
    %p144 = por %p142, %p143
    %p146 = scmp.ne.s32.totalorder %s131, %s145
    %p147 = scmp.eq.s32.totalorder %s22, 0
    %p148 = por %p146, %p147
    %s150 = sadd.s32 %s149, 1
    %p153 = scmp.eq.s32.totalorder %s16, 1
    %p154 = scmp.ne.s32.totalorder %s149, %s151
    %p155 = scmp.eq.s32.totalorder %s16, 0
    %p156 = por %p154, %p155
    %p157 = scmp.ne.s32.totalorder %s149, %s151
    %p158 = scmp.eq.s32.totalorder %s21, 1
    %p159 = por %p157, %p158
    %p160 = scmp.ne.s32.totalorder %s151, %s152
    %p161 = scmp.eq.s32.totalorder %s21, 0
    %p162 = por %p160, %p161
    %p163 = scmp.ne.s32.totalorder %s151, %s152
    %p164 = scmp.eq.s32.totalorder %s22, 1
    %p165 = por %p163, %p164
    %p167 = scmp.ne.s32.totalorder %s152, %s166
    %p168 = scmp.eq.s32.totalorder %s22, 0
    %p169 = por %p167, %p168
    %s171 = sadd.s32 %s170, 1
    %p174 = scmp.eq.s32.totalorder %s16, 1
    %p175 = scmp.ne.s32.totalorder %s170, %s172
    %p176 = scmp.eq.s32.totalorder %s16, 0
    %p177 = por %p175, %p176
    %p178 = scmp.ne.s32.totalorder %s170, %s172
    %p179 = scmp.eq.s32.totalorder %s21, 1
    %p180 = por %p178, %p179
    %p181 = scmp.ne.s32.totalorder %s172, %s173
    %p182 = scmp.eq.s32.totalorder %s21, 0
    %p183 = por %p181, %p182
    %p184 = scmp.ne.s32.totalorder %s172, %s173
    %p185 = scmp.eq.s32.totalorder %s22, 1
    %p186 = por %p184, %p185
    %p188 = scmp.ne.s32.totalorder %s173, %s187
    %p189 = scmp.eq.s32.totalorder %s22, 0
    %p190 = por %p188, %p189
    %s192 = sadd.s32 %s191, 1
    %p195 = scmp.eq.s32.totalorder %s16, 1
    %p196 = scmp.ne.s32.totalorder %s191, %s193
    %p197 = scmp.eq.s32.totalorder %s16, 0
    %p198 = por %p196, %p197
    %p199 = scmp.ne.s32.totalorder %s191, %s193
    %p200 = scmp.eq.s32.totalorder %s21, 1
    %p201 = por %p199, %p200
    %p202 = scmp.ne.s32.totalorder %s193, %s194
    %p203 = scmp.eq.s32.totalorder %s21, 0
    %p204 = por %p202, %p203
    %p205 = scmp.ne.s32.totalorder %s193, %s194
    %p206 = scmp.eq.s32.totalorder %s22, 1
    %p207 = por %p205, %p206
    %p209 = scmp.ne.s32.totalorder %s194, %s208
    %p210 = scmp.eq.s32.totalorder %s22, 0
    %p211 = por %p209, %p210
    %s213 = sadd.s32 %s212, 1
    %p216 = scmp.eq.s32.totalorder %s16, 1
    %p217 = scmp.ne.s32.totalorder %s212, %s214
    %p218 = scmp.eq.s32.totalorder %s16, 0
    %p219 = por %p217, %p218
    %p220 = scmp.ne.s32.totalorder %s212, %s214
    %p221 = scmp.eq.s32.totalorder %s21, 1
    %p222 = por %p220, %p221
    %p223 = scmp.ne.s32.totalorder %s214, %s215
    %p224 = scmp.eq.s32.totalorder %s21, 0
    %p225 = por %p223, %p224
    %p226 = scmp.ne.s32.totalorder %s214, %s215
    %p227 = scmp.eq.s32.totalorder %s22, 1
    %p228 = por %p226, %p227
    %p230 = scmp.ne.s32.totalorder %s215, %s229
    %p231 = scmp.eq.s32.totalorder %s22, 0
    %p232 = por %p230, %p231
    %s234 = sadd.s32 %s233, 1
    %p237 = scmp.eq.s32.totalorder %s16, 1
    %p238 = scmp.ne.s32.totalorder %s233, %s235
    %p239 = scmp.eq.s32.totalorder %s16, 0
    %p240 = por %p238, %p239
    %p241 = scmp.ne.s32.totalorder %s233, %s235
    %p242 = scmp.eq.s32.totalorder %s21, 1
    %p243 = por %p241, %p242
    %p244 = scmp.ne.s32.totalorder %s235, %s236
    %p245 = scmp.eq.s32.totalorder %s21, 0
    %p246 = por %p244, %p245
    %p247 = scmp.ne.s32.totalorder %s235, %s236
    %p248 = scmp.eq.s32.totalorder %s22, 1
    %p249 = por %p247, %p248
    %p251 = scmp.ne.s32.totalorder %s236, %s250
    %p252 = scmp.eq.s32.totalorder %s22, 0
    %p253 = por %p251, %p252
    %s254 = ssub.s32 %s16, %s23
    %p255 = scmp.eq.s32.totalorder %s254, 0
    %s257 = sadd.s32 %s256, 1
    %s258 = scalar_select %p255, %s256, %s257
    %p261 = pneg %p255
    %p262 = scmp.eq.s32.totalorder %s16, 1
    %p263 = por %p261, %p262
    %p264 = scmp.ne.s32.totalorder %s256, %s259
    %p265 = scmp.eq.s32.totalorder %s16, 0
    %p266 = por %p264, %p265
    %p267 = scmp.ne.s32.totalorder %s256, %s259
    %p268 = scmp.eq.s32.totalorder %s21, 1
    %p269 = por %p267, %p268
    %p270 = scmp.ne.s32.totalorder %s259, %s260
    %p271 = scmp.eq.s32.totalorder %s21, 0
    %p272 = por %p270, %p271
    %p273 = scmp.ne.s32.totalorder %s259, %s260
    %p274 = scmp.eq.s32.totalorder %s22, 1
    %p275 = por %p273, %p274
    %p277 = scmp.ne.s32.totalorder %s260, %s276
    %p278 = scmp.eq.s32.totalorder %s22, 0
    %p279 = por %p277, %p278
    %p280 = scmp.le.s32.totalorder 1, %s16
    %p281 = scmp.lt.s32.totalorder %s16, 3
    %p282 = pnand %p280, %p281
    %p283 = pneg %p282
    // Predicated region
    $region9: #{stformer_forward.29} parent=5 // pred_check
      _
    $region10: #{stformer_forward.29} parent=5 // pred_check_branch
      %285 = sbr.rel (%p282) target = $region12
    $region11: #{stformer_forward.29} parent=5 // pred_region
      %s286 = ssub.s32 %s16, 1
      // Predicated region
      $region13: #{stformer_forward.29} parent=11 // pred_check
        %p287 = pneg %p141
      $region14: #{stformer_forward.29} parent=11 // pred_check_branch
        %289 = sbr.rel (%p287) target = $region16
      $region15: #{stformer_forward.29} parent=11 // pred_region
        _
      $region16: #{stformer_forward.29} parent=11 // pred_fallthru
        _
      // Predicated region
      $region17: #{stformer_forward.29} parent=11 // pred_check
        %p290 = pneg %p162
      $region18: #{stformer_forward.29} parent=11 // pred_check_branch
        %292 = sbr.rel (%p290) target = $region20
      $region19: #{stformer_forward.29} parent=11 // pred_region
        _
      $region20: #{stformer_forward.29} parent=11 // pred_fallthru
        _
      // Predicated region
      $region21: #{stformer_forward.29} parent=11 // pred_check
        %p293 = pneg %p183
      $region22: #{stformer_forward.29} parent=11 // pred_check_branch
        %295 = sbr.rel (%p293) target = $region24
      $region23: #{stformer_forward.29} parent=11 // pred_region
        _
      $region24: #{stformer_forward.29} parent=11 // pred_fallthru
        _
      // Predicated region
      $region25: #{stformer_forward.29} parent=11 // pred_check
        %p296 = pneg %p204
      $region26: #{stformer_forward.29} parent=11 // pred_check_branch
        %298 = sbr.rel (%p296) target = $region28
      $region27: #{stformer_forward.29} parent=11 // pred_region
        _
      $region28: #{stformer_forward.29} parent=11 // pred_fallthru
        _
      // Predicated region
      $region29: #{stformer_forward.29} parent=11 // pred_check
        %p299 = pneg %p225
      $region30: #{stformer_forward.29} parent=11 // pred_check_branch
        %301 = sbr.rel (%p299) target = $region32
      $region31: #{stformer_forward.29} parent=11 // pred_region
        _
      $region32: #{stformer_forward.29} parent=11 // pred_fallthru
        _
      // Predicated region
      $region33: #{stformer_forward.29} parent=11 // pred_check
        %p302 = pneg %p246
      $region34: #{stformer_forward.29} parent=11 // pred_check_branch
        %304 = sbr.rel (%p302) target = $region36
      $region35: #{stformer_forward.29} parent=11 // pred_region
        _
      $region36: #{stformer_forward.29} parent=11 // pred_fallthru
        _
    $region12: #{stformer_forward.29} parent=5 // pred_fallthru
      _
    %p305 = scmp.lt.s32.totalorder %s16, 2
    // Predicated region
    $region37: #{stformer_forward.29} parent=5 // pred_check
      %p306 = pneg %p305
    $region38: #{stformer_forward.29} parent=5 // pred_check_branch
      %308 = sbr.rel (%p306) target = $region40
    $region39: #{stformer_forward.29} parent=5 // pred_region
      // Predicated region
      $region41: #{stformer_forward.29} parent=39 // pred_check
        %p309 = pneg %p36
      $region42: #{stformer_forward.29} parent=39 // pred_check_branch
        %311 = sbr.rel (%p309) target = $region44
      $region43: #{stformer_forward.29} parent=39 // pred_region
        %s312 = smul.u32 4, %s16
        %p313 = scmp.lt.s32.totalorder %s312, 7
        %s314 = scalar_select %p313, %s312, 7
        %s315 = smul.addr %s314, 8
        %s316 = scalar_lea.vmem %s0, %s315
        %s317 = smul.u32 4, %s16
      $region44: #{stformer_forward.29} parent=39 // pred_fallthru
        _
      // Predicated region
      $region45: #{stformer_forward.29} parent=39 // pred_check
        %p318 = pneg %p62
      $region46: #{stformer_forward.29} parent=39 // pred_check_branch
        %320 = sbr.rel (%p318) target = $region48
      $region47: #{stformer_forward.29} parent=39 // pred_region
        %s321 = smul.u32 4, %s16
        %p322 = scmp.lt.s32.totalorder %s321, 7
        %s323 = scalar_select %p322, %s321, 7
        %s324 = smul.addr %s323, 8
        %s325 = scalar_lea.vmem %s1, %s324
        %s326 = smul.u32 4, %s16
      $region48: #{stformer_forward.29} parent=39 // pred_fallthru
        _
      // Predicated region
      $region49: #{stformer_forward.29} parent=39 // pred_check
        %p327 = pneg %p88
      $region50: #{stformer_forward.29} parent=39 // pred_check_branch
        %329 = sbr.rel (%p327) target = $region52
      $region51: #{stformer_forward.29} parent=39 // pred_region
        %s330 = smul.u32 6, %s16
        %p331 = scmp.lt.s32.totalorder %s330, 11
        %s332 = scalar_select %p331, %s330, 11
        %s333 = smul.addr %s332, 8
        %s334 = scalar_lea.vmem %s2, %s333
        %s335 = smul.u32 6, %s16
      $region52: #{stformer_forward.29} parent=39 // pred_fallthru
        _
      // Predicated region
      $region53: #{stformer_forward.29} parent=39 // pred_check
        %p336 = pneg %p114
      $region54: #{stformer_forward.29} parent=39 // pred_check_branch
        %338 = sbr.rel (%p336) target = $region56
      $region55: #{stformer_forward.29} parent=39 // pred_region
        %s339 = smul.u32 6, %s16
        %p340 = scmp.lt.s32.totalorder %s339, 11
        %s341 = scalar_select %p340, %s339, 11
        %s342 = smul.addr %s341, 2
        %s343 = smul.addr %s342, 8
        %s344 = scalar_lea.vmem %s3, %s343
        %s345 = smul.u32 6, %s16
      $region56: #{stformer_forward.29} parent=39 // pred_fallthru
        _
    $region40: #{stformer_forward.29} parent=5 // pred_fallthru
      _
    %p346 = scmp.le.s32.totalorder 1, %s16
    %p347 = scmp.lt.s32.totalorder %s16, 3
    %p348 = pnand %p346, %p347
    %p349 = pneg %p348
    // Predicated region
    $region57: #{stformer_forward.29} parent=5 // pred_check
      _
    $region58: #{stformer_forward.29} parent=5 // pred_check_branch
      %351 = sbr.rel (%p348) target = $region60
    $region59: #{stformer_forward.29} parent=5 // pred_region
      %s352 = ssub.s32 %s16, 1
      %s353 = smul.u32 4, %s21
      %p354 = scmp.lt.s32.totalorder %s353, 7
      %s355 = scalar_select %p354, %s353, 7
      %s356 = smul.addr %s355, 8
      %s357 = scalar_lea.vmem %s0, %s356
      %p358 = pneg %p42
      %p359 = pneg %p39
      %s360 = smul.u32 4, %s21
      %p361 = scmp.lt.s32.totalorder %s360, 7
      %s362 = scalar_select %p361, %s360, 7
      %s363 = smul.addr %s362, 8
      %s364 = scalar_lea.vmem %s1, %s363
      %p365 = pneg %p68
      %p366 = pneg %p65
      %s367 = smul.u32 6, %s21
      %p368 = scmp.lt.s32.totalorder %s367, 11
      %s369 = scalar_select %p368, %s367, 11
      %s370 = smul.addr %s369, 8
      %s371 = scalar_lea.vmem %s2, %s370
      %p372 = pneg %p94
      %p373 = pneg %p91
      %s374 = smul.u32 6, %s21
      %p375 = scmp.lt.s32.totalorder %s374, 11
      %s376 = scalar_select %p375, %s374, 11
      %s377 = smul.addr %s376, 2
      %s378 = smul.addr %s377, 8
      %s379 = scalar_lea.vmem %s3, %s378
      %p380 = pneg %p120
      %p381 = pneg %p117
      %p382 = pneg %p141
      %p383 = pneg %p138
      %p384 = pneg %p162
      %p385 = pneg %p159
      %p386 = pneg %p183
      %p387 = pneg %p180
      %p388 = pneg %p204
      %p389 = pneg %p201
      %p390 = pneg %p225
      %p391 = pneg %p222
      %p392 = pneg %p246
      %p393 = pneg %p243
      %p394 = pneg %p272
      %p395 = pneg %p269
      %s396 = smul.u32 4, %s21
      %p397 = scmp.lt.s32.totalorder %s396, 7
      %s398 = scalar_select %p397, %s396, 7
      %s399 = smul.addr %s398, 8
      %s400 = scalar_lea.vmem %s10, %s399
      %s401 = smul.u32 4, %s21
      %p402 = scmp.lt.s32.totalorder %s401, 7
      %s403 = scalar_select %p402, %s401, 7
      %s404 = smul.addr %s403, 8
      %s405 = scalar_lea.vmem %s0, %s404
      %s406 = smul.u32 4, %s21
      %s407 = smul.u32 4, %s21
      %p408 = scmp.lt.s32.totalorder %s407, 7
      %s409 = scalar_select %p408, %s407, 7
      %s410 = smul.addr %s409, 8
      %s411 = scalar_lea.vmem %s1, %s410
      %s412 = smul.u32 4, %s21
      %s413 = smul.u32 6, %s21
      %p414 = scmp.lt.s32.totalorder %s413, 11
      %s415 = scalar_select %p414, %s413, 11
      %s416 = smul.addr %s415, 8
      %s417 = scalar_lea.vmem %s2, %s416
      %s418 = smul.u32 6, %s21
      %s419 = smul.u32 6, %s21
      %p420 = scmp.lt.s32.totalorder %s419, 11
      %s421 = scalar_select %p420, %s419, 11
      %s422 = smul.addr %s421, 2
      %s423 = smul.addr %s422, 8
      %s424 = scalar_lea.vmem %s3, %s423
      %s425 = smul.u32 6, %s21
      %s426 = smul.u32 4, %s21
      %p427 = scmp.lt.s32.totalorder %s426, 7
      %s428 = scalar_select %p427, %s426, 7
      %s429 = smul.addr %s428, 8
      %s430 = scalar_lea.vmem %s10, %s429
      %s431 = smul.u32 4, %s21
      %v432 = vld [vmem:[%s405] sm:$0xff]
      %v433 = vld [vmem:[%s405 + $0x8] sm:$0xff]
      %v434 = vld [vmem:[%s405 + $0x10] sm:$0xff]
      %v435 = vld [vmem:[%s405 + $0x18] sm:$0xff]
      %v436 = vld [vmem:[%s4] sm:$0xff]
      %v437 = vld [vmem:[%s4 + $0x8] sm:$0xff]
      %v438 = vld [vmem:[%s4 + $0x10] sm:$0xff]
      %v439 = vld [vmem:[%s4 + $0x18] sm:$0xff]
      %v440 = vld [vmem:[%s5] sm:$0x1]
      %v442 = vlaneseq
      %v443 = vshrl.u32 %v442, 7
      %v444 = vsub.s32 0, %v443
      %v445 = vrot.slane %v440, %v444
      %vm447 = vcmask 261120
      %v449 = vsel %vm447, %v432, 0
      %v452 = vsel %vm447, %v433, 0
      %v455 = vsel %vm447, %v434, 0
      %v458 = vsel %vm447, %v435, 0
      %460 = vmatprep.subr.mxu0 0.0
      %461 = vmatpush1.msra.mxu0 %v436
      %462 = vmatprep.subr.mxu0 0.0
      %463 = vmatpush1.msra.mxu0 %v437
      %464 = vmatprep.subr.mxu0 0.0
      %465 = vmatpush1.msra.mxu0 %v438
      %466 = vmatprep.subr.mxu0 0.0
      %467 = vmatpush1.msra.mxu0 %v439
      %468 = vmatprep.subr.mxu0 0.0
      %469 = vmatpush1.msra.mxu0 0.0
      %470 = vmatprep.subr.mxu0 0.0
      %471 = vmatpush1.msra.mxu0 0.0
      %472 = vmatprep.subr.mxu0 0.0
      %473 = vmatpush1.msra.mxu0 0.0
      %474 = vmatprep.subr.mxu0 0.0
      %475 = vmatpush1.msra.mxu0 0.0
      %476 = vmatprep.subr.mxu0 0.0
      %477 = vmatpush1.msra.mxu0 0.0
      %478 = vmatprep.subr.mxu0 0.0
      %479 = vmatpush1.msra.mxu0 0.0
      %480 = vmatprep.subr.mxu0 0.0
      %481 = vmatpush1.msra.mxu0 0.0
      %482 = vmatprep.subr.mxu0 0.0
      %483 = vmatpush1.msra.mxu0 0.0
      %484 = vmatprep.subr.mxu0 0.0
      %485 = vmatpush1.msra.mxu0 0.0
      %486 = vmatprep.subr.mxu0 0.0
      %487 = vmatpush1.msra.mxu0 0.0
      %488 = vmatprep.subr.mxu0 0.0
      %489 = vmatpush1.msra.mxu0 0.0
      %490 = vmatprep.subr.mxu0 0.0
      %491 = vmatpush1.msra.mxu0 0.0
      %492 = vmatprep.subr.mxu0 0.0
      %493 = vmatpush1.msra.mxu0 0.0
      %494 = vmatprep.subr.mxu0 0.0
      %495 = vmatpush1.msra.mxu0 0.0
      %496 = vmatprep.subr.mxu0 0.0
      %497 = vmatpush1.msra.mxu0 0.0
      %498 = vmatprep.subr.mxu0 0.0
      %499 = vmatpush1.msra.mxu0 0.0
      %500 = vmatprep.subr.mxu0 0.0
      %501 = vmatpush1.msra.mxu0 0.0
      %502 = vmatprep.subr.mxu0 0.0
      %503 = vmatpush1.msra.mxu0 0.0
      %504 = vmatprep.subr.mxu0 0.0
      %505 = vmatpush1.msra.mxu0 0.0
      %506 = vmatprep.subr.mxu0 0.0
      %507 = vmatpush1.msra.mxu0 0.0
      %508 = vmatprep.subr.mxu0 0.0
      %509 = vmatpush1.msra.mxu0 0.0
      %510 = vmatprep.subr.mxu0 0.0
      %511 = vmatpush1.msra.mxu0 0.0
      %512 = vmatprep.subr.mxu0 0.0
      %513 = vmatpush1.msra.mxu0 0.0
      %514 = vmatprep.subr.mxu0 0.0
      %515 = vmatpush1.msra.mxu0 0.0
      %516 = vmatprep.subr.mxu0 0.0
      %517 = vmatpush1.msra.mxu0 0.0
      %518 = vmatprep.subr.mxu0 0.0
      %519 = vmatpush1.msra.mxu0 0.0
      %520 = vmatprep.subr.mxu0 0.0
      %521 = vmatpush1.msra.mxu0 0.0
      %522 = vmatprep.subr.mxu0 0.0
      %523 = vmatpush1.msra.mxu0 0.0
      %524 = vmatprep.mubr.f32.mxu0 0.0
      %525 = vmatmul.mubr.f32.gmra.mrb[0].mxu0 %v449
      %v526 = vpop.f32.mrb[0].mxu0
      %v527 = vadd.f32 %v445, %v526
      %v528 = vpop.f32.mrb[0].mxu0
      %529 = vmatprep.mubr.f32.mxu0 0.0
      %530 = vmatmul.mubr.f32.gmra.mrb[0].mxu0 %v452
      %v531 = vpop.f32.mrb[0].mxu0
      %v532 = vadd.f32 %v445, %v531
      %v533 = vpop.f32.mrb[0].mxu0
      %534 = vmatprep.mubr.f32.mxu0 0.0
      %535 = vmatmul.mubr.f32.gmra.mrb[0].mxu0 %v455
      %v536 = vpop.f32.mrb[0].mxu0
      %v537 = vadd.f32 %v445, %v536
      %v538 = vpop.f32.mrb[0].mxu0
      %539 = vmatprep.mubr.f32.mxu0 0.0
      %540 = vmatmul.mubr.f32.gmra.mrb[0].mxu0 %v458
      %v541 = vpop.f32.mrb[0].mxu0
      %v542 = vadd.f32 %v445, %v541
      %v543 = vpop.f32.mrb[0].mxu0
      %544 = vdwg.mxu0
      %v545 = vld [vmem:[%s411] sm:$0xff]
      %v546 = vld [vmem:[%s411 + $0x8] sm:$0xff]
      %v547 = vld [vmem:[%s411 + $0x10] sm:$0xff]
      %v548 = vld [vmem:[%s411 + $0x18] sm:$0xff]
      %v549 = vadd.f32 %v527, %v545
      %v550 = vadd.f32 %v532, %v546
      %v551 = vadd.f32 %v537, %v547
      %v552 = vadd.f32 %v542, %v548
      %v553 = vld [vmem:[%s417] sm:$0xff]
      %v554 = vld [vmem:[%s417 + $0x8] sm:$0xff]
      %v555 = vld [vmem:[%s417 + $0x10] sm:$0xff]
      %v556 = vld [vmem:[%s417 + $0x18] sm:$0xff]
      %v557 = vld [vmem:[%s417 + $0x20] sm:$0xff]
      %v558 = vld [vmem:[%s417 + $0x28] sm:$0xff]
      %v559 = vld [vmem:[%s6] sm:$0xff]
      %v560 = vld [vmem:[%s6 + $0x8] sm:$0xff]
      %v561 = vld [vmem:[%s6 + $0x10] sm:$0xff]
      %v562 = vld [vmem:[%s6 + $0x18] sm:$0xff]
      %v563 = vld [vmem:[%s6 + $0x20] sm:$0xff]
      %v564 = vld [vmem:[%s6 + $0x28] sm:$0xff]
      %v565 = vld [vmem:[%s6 + $0x30] sm:$0xff]
      %v566 = vld [vmem:[%s6 + $0x38] sm:$0xff]
      %v567 = vld [vmem:[%s7] sm:$0x3]
      %v569 = vlaneseq
      %v570 = vshrl.u32 %v569, 7
      %v571 = vsub.s32 0, %v570
      %v572 = vrot.slane %v567, %v571
      %v573 = vlaneseq
      %v574 = vshrl.u32 %v573, 7
      %v575 = vsub.s32 1, %v574
      %v576 = vrot.slane %v567, %v575
      %v580 = vsel %vm447, %v553, 0
      %v583 = vsel %vm447, %v554, 0
      %v586 = vsel %vm447, %v555, 0
      %v589 = vsel %vm447, %v556, 0
      %v592 = vsel %vm447, %v557, 0
      %v595 = vsel %vm447, %v558, 0
      %597 = vmatprep.subr.mxu0 %v560
      %598 = vmatpush1.msra.mxu0 %v559
      %599 = vmatprep.subr.mxu0 %v562
      %600 = vmatpush1.msra.mxu0 %v561
      %601 = vmatprep.subr.mxu0 %v564
      %602 = vmatpush1.msra.mxu0 %v563
      %603 = vmatprep.subr.mxu0 %v566
      %604 = vmatpush1.msra.mxu0 %v565
      %605 = vmatprep.subr.mxu0 0.0
      %606 = vmatpush1.msra.mxu0 0.0
      %607 = vmatprep.subr.mxu0 0.0
      %608 = vmatpush1.msra.mxu0 0.0
      %609 = vmatprep.subr.mxu0 0.0
      %610 = vmatpush1.msra.mxu0 0.0
      %611 = vmatprep.subr.mxu0 0.0
      %612 = vmatpush1.msra.mxu0 0.0
      %613 = vmatprep.subr.mxu0 0.0
      %614 = vmatpush1.msra.mxu0 0.0
      %615 = vmatprep.subr.mxu0 0.0
      %616 = vmatpush1.msra.mxu0 0.0
      %617 = vmatprep.subr.mxu0 0.0
      %618 = vmatpush1.msra.mxu0 0.0
      %619 = vmatprep.subr.mxu0 0.0
      %620 = vmatpush1.msra.mxu0 0.0
      %621 = vmatprep.subr.mxu0 0.0
      %622 = vmatpush1.msra.mxu0 0.0
      %623 = vmatprep.subr.mxu0 0.0
      %624 = vmatpush1.msra.mxu0 0.0
      %625 = vmatprep.subr.mxu0 0.0
      %626 = vmatpush1.msra.mxu0 0.0
      %627 = vmatprep.subr.mxu0 0.0
      %628 = vmatpush1.msra.mxu0 0.0
      %629 = vmatprep.subr.mxu0 0.0
      %630 = vmatpush1.msra.mxu0 0.0
      %631 = vmatprep.subr.mxu0 0.0
      %632 = vmatpush1.msra.mxu0 0.0
      %633 = vmatprep.subr.mxu0 0.0
      %634 = vmatpush1.msra.mxu0 0.0
      %635 = vmatprep.subr.mxu0 0.0
      %636 = vmatpush1.msra.mxu0 0.0
      %637 = vmatprep.subr.mxu0 0.0
      %638 = vmatpush1.msra.mxu0 0.0
      %639 = vmatprep.subr.mxu0 0.0
      %640 = vmatpush1.msra.mxu0 0.0
      %641 = vmatprep.subr.mxu0 0.0
      %642 = vmatpush1.msra.mxu0 0.0
      %643 = vmatprep.subr.mxu0 0.0
      %644 = vmatpush1.msra.mxu0 0.0
      %645 = vmatprep.subr.mxu0 0.0
      %646 = vmatpush1.msra.mxu0 0.0
      %647 = vmatprep.subr.mxu0 0.0
      %648 = vmatpush1.msra.mxu0 0.0
      %649 = vmatprep.subr.mxu0 0.0
      %650 = vmatpush1.msra.mxu0 0.0
      %651 = vmatprep.subr.mxu0 0.0
      %652 = vmatpush1.msra.mxu0 0.0
      %653 = vmatprep.subr.mxu0 0.0
      %654 = vmatpush1.msra.mxu0 0.0
      %655 = vmatprep.subr.mxu0 0.0
      %656 = vmatpush1.msra.mxu0 0.0
      %657 = vmatprep.subr.mxu0 0.0
      %658 = vmatpush1.msra.mxu0 0.0
      %659 = vmatprep.subr.mxu0 0.0
      %660 = vmatpush1.msra.mxu0 0.0
      %661 = vmatprep.mubr.f32.mxu0 0.0
      %662 = vmatmul.mubr.f32.gmra.mrb[0].mxu0 %v580
      %v663 = vpop.f32.mrb[0].mxu0
      %v664 = vadd.f32 %v572, %v663
      %v665 = vpop.f32.mrb[0].mxu0
      %v666 = vadd.f32 %v576, %v665
      %667 = vmatprep.mubr.f32.mxu0 0.0
      %668 = vmatmul.mubr.f32.gmra.mrb[0].mxu0 %v583
      %v669 = vpop.f32.mrb[0].mxu0
      %v670 = vadd.f32 %v572, %v669
      %v671 = vpop.f32.mrb[0].mxu0
      %v672 = vadd.f32 %v576, %v671
      %673 = vmatprep.mubr.f32.mxu0 0.0
      %674 = vmatmul.mubr.f32.gmra.mrb[0].mxu0 %v586
      %v675 = vpop.f32.mrb[0].mxu0
      %v676 = vadd.f32 %v572, %v675
      %v677 = vpop.f32.mrb[0].mxu0
      %v678 = vadd.f32 %v576, %v677
      %679 = vmatprep.mubr.f32.mxu0 0.0
      %680 = vmatmul.mubr.f32.gmra.mrb[0].mxu0 %v589
      %v681 = vpop.f32.mrb[0].mxu0
      %v682 = vadd.f32 %v572, %v681
      %v683 = vpop.f32.mrb[0].mxu0
      %v684 = vadd.f32 %v576, %v683
      %685 = vmatprep.mubr.f32.mxu0 0.0
      %686 = vmatmul.mubr.f32.gmra.mrb[0].mxu0 %v592
      %v687 = vpop.f32.mrb[0].mxu0
      %v688 = vadd.f32 %v572, %v687
      %v689 = vpop.f32.mrb[0].mxu0
      %v690 = vadd.f32 %v576, %v689
      %691 = vmatprep.mubr.f32.mxu0 0.0
      %692 = vmatmul.mubr.f32.gmra.mrb[0].mxu0 %v595
      %v693 = vpop.f32.mrb[0].mxu0
      %v694 = vadd.f32 %v572, %v693
      %v695 = vpop.f32.mrb[0].mxu0
      %v696 = vadd.f32 %v576, %v695
      %697 = vdwg.mxu0
      %v698 = vld [vmem:[%s424] sm:$0xff]
      %v699 = vld [vmem:[%s424 + $0x8] sm:$0xff]
      %v700 = vld [vmem:[%s424 + $0x10] sm:$0xff]
      %v701 = vld [vmem:[%s424 + $0x18] sm:$0xff]
      %v702 = vld [vmem:[%s424 + $0x20] sm:$0xff]
      %v703 = vld [vmem:[%s424 + $0x28] sm:$0xff]
      %v704 = vld [vmem:[%s424 + $0x30] sm:$0xff]
      %v705 = vld [vmem:[%s424 + $0x38] sm:$0xff]
      %v706 = vld [vmem:[%s424 + $0x40] sm:$0xff]
      %v707 = vld [vmem:[%s424 + $0x48] sm:$0xff]
      %v708 = vld [vmem:[%s424 + $0x50] sm:$0xff]
      %v709 = vld [vmem:[%s424 + $0x58] sm:$0xff]
      %v710 = vadd.f32 %v664, %v698
      %v711 = vadd.f32 %v666, %v699
      %v712 = vadd.f32 %v670, %v700
      %v713 = vadd.f32 %v672, %v701
      %v714 = vadd.f32 %v676, %v702
      %v715 = vadd.f32 %v678, %v703
      %v716 = vadd.f32 %v682, %v704
      %v717 = vadd.f32 %v684, %v705
      %v718 = vadd.f32 %v688, %v706
      %v719 = vadd.f32 %v690, %v707
      %v720 = vadd.f32 %v694, %v708
      %v721 = vadd.f32 %v696, %v709
      %v722 = vlaneseq
      %v723 = vshrl.u32 %v722, 7
      %v724 = vadd.s32 %v723, 8
      %v725 = vadd.s32 %v723, 16
      %v726 = vadd.s32 %v723, 24
      %v727 = vcvt.s32.f32 %v723
      %v728 = vcvt.s32.f32 %v724
      %v729 = vcvt.s32.f32 %v725
      %v730 = vcvt.s32.f32 %v726
      %v731 = vlaneseq
      %v732 = vand.u32 %v731, 127
      %v733 = vcvt.s32.f32 %v732
      %v734 = vadd.f32 %v727, 0.5
      %v735 = vadd.f32 %v728, 0.5
      %v736 = vadd.f32 %v729, 0.5
      %v737 = vadd.f32 %v730, 0.5
      %v738 = vmul.f32 %v734, 0.125
      %v739 = vmul.f32 %v735, 0.125
      %v740 = vmul.f32 %v736, 0.125
      %v741 = vmul.f32 %v737, 0.125
      %v742 = vfloor.f32 %v738
      %v743 = vfloor.f32 %v739
      %v744 = vfloor.f32 %v740
      %v745 = vfloor.f32 %v741
      %v746 = vadd.f32 %v733, 0.5
      %v747 = vmul.f32 %v746, 0.083333336
      %v748 = vfloor.f32 %v747
      %vm749 = vcmp.eq.f32.partialorder %v742, %v748
      %vm750 = vcmp.eq.f32.partialorder %v743, %v748
      %vm751 = vcmp.eq.f32.partialorder %v744, %v748
      %vm752 = vcmp.eq.f32.partialorder %v745, %v748
      %v754 = vsel %vm447, %v549, 0
      %v757 = vsel %vm447, %v550, 0
      %v760 = vsel %vm447, %v551, 0
      %v763 = vsel %vm447, %v552, 0
      %v766 = vsel %vm447, %v710, 0
      %v769 = vsel %vm447, %v712, 0
      %v772 = vsel %vm447, %v714, 0
      %v775 = vsel %vm447, %v716, 0
      %v778 = vsel %vm447, %v718, 0
      %v781 = vsel %vm447, %v720, 0
      %783 = vmatprep.subr.mxu0 0.0
      %784 = vmatpush1.xpose.msra.mxu0 %v766
      %785 = vmatprep.subr.mxu0 0.0
      %786 = vmatpush1.xpose.msra.mxu0 %v769
      %787 = vmatprep.subr.mxu0 0.0
      %788 = vmatpush1.xpose.msra.mxu0 %v772
      %789 = vmatprep.subr.mxu0 0.0
      %790 = vmatpush1.xpose.msra.mxu0 %v775
      %791 = vmatprep.subr.mxu0 0.0
      %792 = vmatpush1.xpose.msra.mxu0 %v778
      %793 = vmatprep.subr.mxu0 0.0
      %794 = vmatpush1.xpose.msra.mxu0 %v781
      %795 = vmatprep.subr.mxu0 0.0
      %796 = vmatpush1.xpose.msra.mxu0 0.0
      %797 = vmatprep.subr.mxu0 0.0
      %798 = vmatpush1.xpose.msra.mxu0 0.0
      %799 = vmatprep.subr.mxu0 0.0
      %800 = vmatpush1.xpose.msra.mxu0 0.0
      %801 = vmatprep.subr.mxu0 0.0
      %802 = vmatpush1.xpose.msra.mxu0 0.0
      %803 = vmatprep.subr.mxu0 0.0
      %804 = vmatpush1.xpose.msra.mxu0 0.0
      %805 = vmatprep.subr.mxu0 0.0
      %806 = vmatpush1.xpose.msra.mxu0 0.0
      %807 = vmatprep.subr.mxu0 0.0
      %808 = vmatpush1.xpose.msra.mxu0 0.0
      %809 = vmatprep.subr.mxu0 0.0
      %810 = vmatpush1.xpose.msra.mxu0 0.0
      %811 = vmatprep.subr.mxu0 0.0
      %812 = vmatpush1.xpose.msra.mxu0 0.0
      %813 = vmatprep.subr.mxu0 0.0
      %814 = vmatpush1.xpose.msra.mxu0 0.0
      %815 = vmatprep.subr.mxu0 0.0
      %816 = vmatpush1.xpose.msra.mxu0 0.0
      %817 = vmatprep.subr.mxu0 0.0
      %818 = vmatpush1.xpose.msra.mxu0 0.0
      %819 = vmatprep.subr.mxu0 0.0
      %820 = vmatpush1.xpose.msra.mxu0 0.0
      %821 = vmatprep.subr.mxu0 0.0
      %822 = vmatpush1.xpose.msra.mxu0 0.0
      %823 = vmatprep.subr.mxu0 0.0
      %824 = vmatpush1.xpose.msra.mxu0 0.0
      %825 = vmatprep.subr.mxu0 0.0
      %826 = vmatpush1.xpose.msra.mxu0 0.0
      %827 = vmatprep.subr.mxu0 0.0
      %828 = vmatpush1.xpose.msra.mxu0 0.0
      %829 = vmatprep.subr.mxu0 0.0
      %830 = vmatpush1.xpose.msra.mxu0 0.0
      %831 = vmatprep.subr.mxu0 0.0
      %832 = vmatpush1.xpose.msra.mxu0 0.0
      %833 = vmatprep.subr.mxu0 0.0
      %834 = vmatpush1.xpose.msra.mxu0 0.0
      %835 = vmatprep.subr.mxu0 0.0
      %836 = vmatpush1.xpose.msra.mxu0 0.0
      %837 = vmatprep.subr.mxu0 0.0
      %838 = vmatpush1.xpose.msra.mxu0 0.0
      %839 = vmatprep.subr.mxu0 0.0
      %840 = vmatpush1.xpose.msra.mxu0 0.0
      %841 = vmatprep.subr.mxu0 0.0
      %842 = vmatpush1.xpose.msra.mxu0 0.0
      %843 = vmatprep.subr.mxu0 0.0
      %844 = vmatpush1.xpose.msra.mxu0 0.0
      %845 = vmatprep.subr.mxu0 0.0
      %846 = vmatpush1.xpose.msra.mxu0 0.0
      %847 = vmatprep.mubr.f32.mxu0 0.0
      %848 = vmatmul.mubr.f32.gmra.mrb[0].mxu0 %v754
      %v849 = vpop.f32.mrb[0].mxu0
      %v850 = vadd.f32 0.0, %v849
      %v851 = vpop.f32.mrb[0].mxu0
      %852 = vmatprep.mubr.f32.mxu0 0.0
      %853 = vmatmul.mubr.f32.gmra.mrb[0].mxu0 %v757
      %v854 = vpop.f32.mrb[0].mxu0
      %v855 = vadd.f32 0.0, %v854
      %v856 = vpop.f32.mrb[0].mxu0
      %857 = vmatprep.mubr.f32.mxu0 0.0
      %858 = vmatmul.mubr.f32.gmra.mrb[0].mxu0 %v760
      %v859 = vpop.f32.mrb[0].mxu0
      %v860 = vadd.f32 0.0, %v859
      %v861 = vpop.f32.mrb[0].mxu0
      %862 = vmatprep.mubr.f32.mxu0 0.0
      %863 = vmatmul.mubr.f32.gmra.mrb[0].mxu0 %v763
      %v864 = vpop.f32.mrb[0].mxu0
      %v865 = vadd.f32 0.0, %v864
      %v866 = vpop.f32.mrb[0].mxu0
      %867 = vdwg.mxu0
      %v868 = vsel %vm749, %v850, -1e+30
      %v869 = vsel %vm750, %v855, -1e+30
      %v870 = vsel %vm751, %v860, -1e+30
      %v871 = vsel %vm752, %v865, -1e+30
      %vm872 = vcmask 392192
      %v873 = vsel %vm872, %v868, -inf
      %874 = vmax.xlane.f32.xlu0 %v873
      %v875 = vpop.xlane.xlu0 %874
      %v876 = vsel %vm872, %v869, -inf
      %877 = vmax.xlane.f32.xlu0 %v876
      %v878 = vpop.xlane.xlu0 %877
      %v879 = vsel %vm872, %v870, -inf
      %880 = vmax.xlane.f32.xlu0 %v879
      %v881 = vpop.xlane.xlu0 %880
      %v882 = vsel %vm872, %v871, -inf
      %883 = vmax.xlane.f32.xlu0 %v882
      %v884 = vpop.xlane.xlu0 %883
      %v885 = vsub.f32 %v868, %v875
      %v886 = vsub.f32 %v869, %v878
      %v887 = vsub.f32 %v870, %v881
      %v888 = vsub.f32 %v871, %v884
      %v889 = vmul.f32 %v885, 1.442695
      %v890 = vpow.pop %v889
      %v891 = vmul.f32 %v886, 1.442695
      %v892 = vpow.pop %v891
      %v893 = vmul.f32 %v887, 1.442695
      %v894 = vpow.pop %v893
      %v895 = vmul.f32 %v888, 1.442695
      %v896 = vpow.pop %v895
      %v897 = vsel %vm872, %v890, 0.0
      %898 = vadd.xlane.f32.xlu0 %v897
      %v899 = vpop.xlane.xlu0 %898
      %v900 = vsel %vm872, %v892, 0.0
      %901 = vadd.xlane.f32.xlu0 %v900
      %v902 = vpop.xlane.xlu0 %901
      %v903 = vsel %vm872, %v894, 0.0
      %904 = vadd.xlane.f32.xlu0 %v903
      %v905 = vpop.xlane.xlu0 %904
      %v906 = vsel %vm872, %v896, 0.0
      %907 = vadd.xlane.f32.xlu0 %v906
      %v908 = vpop.xlane.xlu0 %907
      %v909 = vrcp.pop %v899
      %v910 = vrcp.pop %v902
      %v911 = vrcp.pop %v905
      %v912 = vrcp.pop %v908
      %v913 = vmul.f32 %v890, %v909
      %v914 = vmul.f32 %v892, %v910
      %v915 = vmul.f32 %v894, %v911
      %v916 = vmul.f32 %v896, %v912
      %917 = vrot.lane.b32.xlu0 %v710, 32
      %v918 = vpop.permute.xlu0 %917
      %919 = vrot.lane.b32.xlu0 %v712, 32
      %v920 = vpop.permute.xlu0 %919
      %921 = vrot.lane.b32.xlu0 %v714, 32
      %v922 = vpop.permute.xlu0 %921
      %923 = vrot.lane.b32.xlu0 %v716, 32
      %v924 = vpop.permute.xlu0 %923
      %925 = vrot.lane.b32.xlu0 %v718, 32
      %v926 = vpop.permute.xlu0 %925
      %927 = vrot.lane.b32.xlu0 %v720, 32
      %v928 = vpop.permute.xlu0 %927
      %v936 = vsel %vm872, %v913, 0
      %v939 = vsel %vm872, %v914, 0
      %v942 = vsel %vm872, %v915, 0
      %v945 = vsel %vm872, %v916, 0
      %947 = vmatprep.subr.mxu0 0.0
      %948 = vmatpush1.msra.mxu0 %v918
      %949 = vmatprep.subr.mxu0 0.0
      %950 = vmatpush1.msra.mxu0 %v920
      %951 = vmatprep.subr.mxu0 0.0
      %952 = vmatpush1.msra.mxu0 %v922
      %953 = vmatprep.subr.mxu0 0.0
      %954 = vmatpush1.msra.mxu0 %v924
      %955 = vmatprep.subr.mxu0 0.0
      %956 = vmatpush1.msra.mxu0 %v926
      %957 = vmatprep.subr.mxu0 0.0
      %958 = vmatpush1.msra.mxu0 %v928
      %959 = vmatprep.subr.mxu0 0.0
      %960 = vmatpush1.msra.mxu0 0.0
      %961 = vmatprep.subr.mxu0 0.0
      %962 = vmatpush1.msra.mxu0 0.0
      %963 = vmatprep.subr.mxu0 0.0
      %964 = vmatpush1.msra.mxu0 0.0
      %965 = vmatprep.subr.mxu0 0.0
      %966 = vmatpush1.msra.mxu0 0.0
      %967 = vmatprep.subr.mxu0 0.0
      %968 = vmatpush1.msra.mxu0 0.0
      %969 = vmatprep.subr.mxu0 0.0
      %970 = vmatpush1.msra.mxu0 0.0
      %971 = vmatprep.subr.mxu0 0.0
      %972 = vmatpush1.msra.mxu0 0.0
      %973 = vmatprep.subr.mxu0 0.0
      %974 = vmatpush1.msra.mxu0 0.0
      %975 = vmatprep.subr.mxu0 0.0
      %976 = vmatpush1.msra.mxu0 0.0
      %977 = vmatprep.subr.mxu0 0.0
      %978 = vmatpush1.msra.mxu0 0.0
      %979 = vmatprep.subr.mxu0 0.0
      %980 = vmatpush1.msra.mxu0 0.0
      %981 = vmatprep.subr.mxu0 0.0
      %982 = vmatpush1.msra.mxu0 0.0
      %983 = vmatprep.subr.mxu0 0.0
      %984 = vmatpush1.msra.mxu0 0.0
      %985 = vmatprep.subr.mxu0 0.0
      %986 = vmatpush1.msra.mxu0 0.0
      %987 = vmatprep.subr.mxu0 0.0
      %988 = vmatpush1.msra.mxu0 0.0
      %989 = vmatprep.subr.mxu0 0.0
      %990 = vmatpush1.msra.mxu0 0.0
      %991 = vmatprep.subr.mxu0 0.0
      %992 = vmatpush1.msra.mxu0 0.0
      %993 = vmatprep.subr.mxu0 0.0
      %994 = vmatpush1.msra.mxu0 0.0
      %995 = vmatprep.subr.mxu0 0.0
      %996 = vmatpush1.msra.mxu0 0.0
      %997 = vmatprep.subr.mxu0 0.0
      %998 = vmatpush1.msra.mxu0 0.0
      %999 = vmatprep.subr.mxu0 0.0
      %1000 = vmatpush1.msra.mxu0 0.0
      %1001 = vmatprep.subr.mxu0 0.0
      %1002 = vmatpush1.msra.mxu0 0.0
      %1003 = vmatprep.subr.mxu0 0.0
      %1004 = vmatpush1.msra.mxu0 0.0
      %1005 = vmatprep.subr.mxu0 0.0
      %1006 = vmatpush1.msra.mxu0 0.0
      %1007 = vmatprep.subr.mxu0 0.0
      %1008 = vmatpush1.msra.mxu0 0.0
      %1009 = vmatprep.subr.mxu0 0.0
      %1010 = vmatpush1.msra.mxu0 0.0
      %1011 = vmatprep.mubr.f32.mxu0 0.0
      %1012 = vmatmul.mubr.f32.gmra.mrb[0].mxu0 %v936
      %v1013 = vpop.f32.mrb[0].mxu0
      %v1014 = vadd.f32 0.0, %v1013
      %v1015 = vpop.f32.mrb[0].mxu0
      %1016 = vmatprep.mubr.f32.mxu0 0.0
      %1017 = vmatmul.mubr.f32.gmra.mrb[0].mxu0 %v939
      %v1018 = vpop.f32.mrb[0].mxu0
      %v1019 = vadd.f32 0.0, %v1018
      %v1020 = vpop.f32.mrb[0].mxu0
      %1021 = vmatprep.mubr.f32.mxu0 0.0
      %1022 = vmatmul.mubr.f32.gmra.mrb[0].mxu0 %v942
      %v1023 = vpop.f32.mrb[0].mxu0
      %v1024 = vadd.f32 0.0, %v1023
      %v1025 = vpop.f32.mrb[0].mxu0
      %1026 = vmatprep.mubr.f32.mxu0 0.0
      %1027 = vmatmul.mubr.f32.gmra.mrb[0].mxu0 %v945
      %v1028 = vpop.f32.mrb[0].mxu0
      %v1029 = vadd.f32 0.0, %v1028
      %v1030 = vpop.f32.mrb[0].mxu0
      %1031 = vdwg.mxu0
      %1032 = vrot.lane.b32.xlu0 %v549, 96
      %v1033 = vpop.permute.xlu0 %1032
      %1034 = vrot.lane.b32.xlu0 %v550, 96
      %v1035 = vpop.permute.xlu0 %1034
      %1036 = vrot.lane.b32.xlu0 %v551, 96
      %v1037 = vpop.permute.xlu0 %1036
      %1038 = vrot.lane.b32.xlu0 %v552, 96
      %v1039 = vpop.permute.xlu0 %1038
      %1040 = vrot.lane.b32.xlu0 %v710, 96
      %v1041 = vpop.permute.xlu0 %1040
      %1042 = vrot.lane.b32.xlu0 %v712, 96
      %v1043 = vpop.permute.xlu0 %1042
      %1044 = vrot.lane.b32.xlu0 %v714, 96
      %v1045 = vpop.permute.xlu0 %1044
      %1046 = vrot.lane.b32.xlu0 %v716, 96
      %v1047 = vpop.permute.xlu0 %1046
      %1048 = vrot.lane.b32.xlu0 %v718, 96
      %v1049 = vpop.permute.xlu0 %1048
      %1050 = vrot.lane.b32.xlu0 %v720, 96
      %v1051 = vpop.permute.xlu0 %1050
      %v1052 = vsel %vm447, %v1033, 0
      %v1054 = vsel %vm447, %v1035, 0
      %v1056 = vsel %vm447, %v1037, 0
      %v1058 = vsel %vm447, %v1039, 0
      %v1060 = vsel %vm447, %v1041, 0
      %v1062 = vsel %vm447, %v1043, 0
      %v1064 = vsel %vm447, %v1045, 0
      %v1066 = vsel %vm447, %v1047, 0
      %v1068 = vsel %vm447, %v1049, 0
      %v1070 = vsel %vm447, %v1051, 0
      %1072 = vmatprep.subr.mxu0 0.0
      %1073 = vmatpush1.xpose.msra.mxu0 %v1060
      %1074 = vmatprep.subr.mxu0 0.0
      %1075 = vmatpush1.xpose.msra.mxu0 %v1062
      %1076 = vmatprep.subr.mxu0 0.0
      %1077 = vmatpush1.xpose.msra.mxu0 %v1064
      %1078 = vmatprep.subr.mxu0 0.0
      %1079 = vmatpush1.xpose.msra.mxu0 %v1066
      %1080 = vmatprep.subr.mxu0 0.0
      %1081 = vmatpush1.xpose.msra.mxu0 %v1068
      %1082 = vmatprep.subr.mxu0 0.0
      %1083 = vmatpush1.xpose.msra.mxu0 %v1070
      %1084 = vmatprep.subr.mxu0 0.0
      %1085 = vmatpush1.xpose.msra.mxu0 0.0
      %1086 = vmatprep.subr.mxu0 0.0
      %1087 = vmatpush1.xpose.msra.mxu0 0.0
      %1088 = vmatprep.subr.mxu0 0.0
      %1089 = vmatpush1.xpose.msra.mxu0 0.0
      %1090 = vmatprep.subr.mxu0 0.0
      %1091 = vmatpush1.xpose.msra.mxu0 0.0
      %1092 = vmatprep.subr.mxu0 0.0
      %1093 = vmatpush1.xpose.msra.mxu0 0.0
      %1094 = vmatprep.subr.mxu0 0.0
      %1095 = vmatpush1.xpose.msra.mxu0 0.0
      %1096 = vmatprep.subr.mxu0 0.0
      %1097 = vmatpush1.xpose.msra.mxu0 0.0
      %1098 = vmatprep.subr.mxu0 0.0
      %1099 = vmatpush1.xpose.msra.mxu0 0.0
      %1100 = vmatprep.subr.mxu0 0.0
      %1101 = vmatpush1.xpose.msra.mxu0 0.0
      %1102 = vmatprep.subr.mxu0 0.0
      %1103 = vmatpush1.xpose.msra.mxu0 0.0
      %1104 = vmatprep.subr.mxu0 0.0
      %1105 = vmatpush1.xpose.msra.mxu0 0.0
      %1106 = vmatprep.subr.mxu0 0.0
      %1107 = vmatpush1.xpose.msra.mxu0 0.0
      %1108 = vmatprep.subr.mxu0 0.0
      %1109 = vmatpush1.xpose.msra.mxu0 0.0
      %1110 = vmatprep.subr.mxu0 0.0
      %1111 = vmatpush1.xpose.msra.mxu0 0.0
      %1112 = vmatprep.subr.mxu0 0.0
      %1113 = vmatpush1.xpose.msra.mxu0 0.0
      %1114 = vmatprep.subr.mxu0 0.0
      %1115 = vmatpush1.xpose.msra.mxu0 0.0
      %1116 = vmatprep.subr.mxu0 0.0
      %1117 = vmatpush1.xpose.msra.mxu0 0.0
      %1118 = vmatprep.subr.mxu0 0.0
      %1119 = vmatpush1.xpose.msra.mxu0 0.0
      %1120 = vmatprep.subr.mxu0 0.0
      %1121 = vmatpush1.xpose.msra.mxu0 0.0
      %1122 = vmatprep.subr.mxu0 0.0
      %1123 = vmatpush1.xpose.msra.mxu0 0.0
      %1124 = vmatprep.subr.mxu0 0.0
      %1125 = vmatpush1.xpose.msra.mxu0 0.0
      %1126 = vmatprep.subr.mxu0 0.0
      %1127 = vmatpush1.xpose.msra.mxu0 0.0
      %1128 = vmatprep.subr.mxu0 0.0
      %1129 = vmatpush1.xpose.msra.mxu0 0.0
      %1130 = vmatprep.subr.mxu0 0.0
      %1131 = vmatpush1.xpose.msra.mxu0 0.0
      %1132 = vmatprep.subr.mxu0 0.0
      %1133 = vmatpush1.xpose.msra.mxu0 0.0
      %1134 = vmatprep.subr.mxu0 0.0
      %1135 = vmatpush1.xpose.msra.mxu0 0.0
      %1136 = vmatprep.mubr.f32.mxu0 0.0
      %1137 = vmatmul.mubr.f32.gmra.mrb[0].mxu0 %v1052
      %v1138 = vpop.f32.mrb[0].mxu0
      %v1139 = vadd.f32 0.0, %v1138
      %v1140 = vpop.f32.mrb[0].mxu0
      %1141 = vmatprep.mubr.f32.mxu0 0.0
      %1142 = vmatmul.mubr.f32.gmra.mrb[0].mxu0 %v1054
      %v1143 = vpop.f32.mrb[0].mxu0
      %v1144 = vadd.f32 0.0, %v1143
      %v1145 = vpop.f32.mrb[0].mxu0
      %1146 = vmatprep.mubr.f32.mxu0 0.0
      %1147 = vmatmul.mubr.f32.gmra.mrb[0].mxu0 %v1056
      %v1148 = vpop.f32.mrb[0].mxu0
      %v1149 = vadd.f32 0.0, %v1148
      %v1150 = vpop.f32.mrb[0].mxu0
      %1151 = vmatprep.mubr.f32.mxu0 0.0
      %1152 = vmatmul.mubr.f32.gmra.mrb[0].mxu0 %v1058
      %v1153 = vpop.f32.mrb[0].mxu0
      %v1154 = vadd.f32 0.0, %v1153
      %v1155 = vpop.f32.mrb[0].mxu0
      %1156 = vdwg.mxu0
      %v1157 = vsel %vm749, %v1139, -1e+30
      %v1158 = vsel %vm750, %v1144, -1e+30
      %v1159 = vsel %vm751, %v1149, -1e+30
      %v1160 = vsel %vm752, %v1154, -1e+30
      %v1161 = vsel %vm872, %v1157, -inf
      %1162 = vmax.xlane.f32.xlu0 %v1161
      %v1163 = vpop.xlane.xlu0 %1162
      %v1164 = vsel %vm872, %v1158, -inf
      %1165 = vmax.xlane.f32.xlu0 %v1164
      %v1166 = vpop.xlane.xlu0 %1165
      %v1167 = vsel %vm872, %v1159, -inf
      %1168 = vmax.xlane.f32.xlu0 %v1167
      %v1169 = vpop.xlane.xlu0 %1168
      %v1170 = vsel %vm872, %v1160, -inf
      %1171 = vmax.xlane.f32.xlu0 %v1170
      %v1172 = vpop.xlane.xlu0 %1171
      %v1173 = vsub.f32 %v1157, %v1163
      %v1174 = vsub.f32 %v1158, %v1166
      %v1175 = vsub.f32 %v1159, %v1169
      %v1176 = vsub.f32 %v1160, %v1172
      %v1177 = vmul.f32 %v1173, 1.442695
      %v1178 = vpow.pop %v1177
      %v1179 = vmul.f32 %v1174, 1.442695
      %v1180 = vpow.pop %v1179
      %v1181 = vmul.f32 %v1175, 1.442695
      %v1182 = vpow.pop %v1181
      %v1183 = vmul.f32 %v1176, 1.442695
      %v1184 = vpow.pop %v1183
      %v1185 = vsel %vm872, %v1178, 0.0
      %1186 = vadd.xlane.f32.xlu0 %v1185
      %v1187 = vpop.xlane.xlu0 %1186
      %v1188 = vsel %vm872, %v1180, 0.0
      %1189 = vadd.xlane.f32.xlu0 %v1188
      %v1190 = vpop.xlane.xlu0 %1189
      %v1191 = vsel %vm872, %v1182, 0.0
      %1192 = vadd.xlane.f32.xlu0 %v1191
      %v1193 = vpop.xlane.xlu0 %1192
      %v1194 = vsel %vm872, %v1184, 0.0
      %1195 = vadd.xlane.f32.xlu0 %v1194
      %v1196 = vpop.xlane.xlu0 %1195
      %v1197 = vrcp.pop %v1187
      %v1198 = vrcp.pop %v1190
      %v1199 = vrcp.pop %v1193
      %v1200 = vrcp.pop %v1196
      %v1201 = vmul.f32 %v1178, %v1197
      %v1202 = vmul.f32 %v1180, %v1198
      %v1203 = vmul.f32 %v1182, %v1199
      %v1204 = vmul.f32 %v1184, %v1200
      %v1206 = vsel %vm872, %v1201, 0
      %v1209 = vsel %vm872, %v1202, 0
      %v1212 = vsel %vm872, %v1203, 0
      %v1215 = vsel %vm872, %v1204, 0
      %1217 = vmatprep.subr.mxu0 0.0
      %1218 = vmatpush1.msra.mxu0 %v711
      %1219 = vmatprep.subr.mxu0 0.0
      %1220 = vmatpush1.msra.mxu0 %v713
      %1221 = vmatprep.subr.mxu0 0.0
      %1222 = vmatpush1.msra.mxu0 %v715
      %1223 = vmatprep.subr.mxu0 0.0
      %1224 = vmatpush1.msra.mxu0 %v717
      %1225 = vmatprep.subr.mxu0 0.0
      %1226 = vmatpush1.msra.mxu0 %v719
      %1227 = vmatprep.subr.mxu0 0.0
      %1228 = vmatpush1.msra.mxu0 %v721
      %1229 = vmatprep.subr.mxu0 0.0
      %1230 = vmatpush1.msra.mxu0 0.0
      %1231 = vmatprep.subr.mxu0 0.0
      %1232 = vmatpush1.msra.mxu0 0.0
      %1233 = vmatprep.subr.mxu0 0.0
      %1234 = vmatpush1.msra.mxu0 0.0
      %1235 = vmatprep.subr.mxu0 0.0
      %1236 = vmatpush1.msra.mxu0 0.0
      %1237 = vmatprep.subr.mxu0 0.0
      %1238 = vmatpush1.msra.mxu0 0.0
      %1239 = vmatprep.subr.mxu0 0.0
      %1240 = vmatpush1.msra.mxu0 0.0
      %1241 = vmatprep.subr.mxu0 0.0
      %1242 = vmatpush1.msra.mxu0 0.0
      %1243 = vmatprep.subr.mxu0 0.0
      %1244 = vmatpush1.msra.mxu0 0.0
      %1245 = vmatprep.subr.mxu0 0.0
      %1246 = vmatpush1.msra.mxu0 0.0
      %1247 = vmatprep.subr.mxu0 0.0
      %1248 = vmatpush1.msra.mxu0 0.0
      %1249 = vmatprep.subr.mxu0 0.0
      %1250 = vmatpush1.msra.mxu0 0.0
      %1251 = vmatprep.subr.mxu0 0.0
      %1252 = vmatpush1.msra.mxu0 0.0
      %1253 = vmatprep.subr.mxu0 0.0
      %1254 = vmatpush1.msra.mxu0 0.0
      %1255 = vmatprep.subr.mxu0 0.0
      %1256 = vmatpush1.msra.mxu0 0.0
      %1257 = vmatprep.subr.mxu0 0.0
      %1258 = vmatpush1.msra.mxu0 0.0
      %1259 = vmatprep.subr.mxu0 0.0
      %1260 = vmatpush1.msra.mxu0 0.0
      %1261 = vmatprep.subr.mxu0 0.0
      %1262 = vmatpush1.msra.mxu0 0.0
      %1263 = vmatprep.subr.mxu0 0.0
      %1264 = vmatpush1.msra.mxu0 0.0
      %1265 = vmatprep.subr.mxu0 0.0
      %1266 = vmatpush1.msra.mxu0 0.0
      %1267 = vmatprep.subr.mxu0 0.0
      %1268 = vmatpush1.msra.mxu0 0.0
      %1269 = vmatprep.subr.mxu0 0.0
      %1270 = vmatpush1.msra.mxu0 0.0
      %1271 = vmatprep.subr.mxu0 0.0
      %1272 = vmatpush1.msra.mxu0 0.0
      %1273 = vmatprep.subr.mxu0 0.0
      %1274 = vmatpush1.msra.mxu0 0.0
      %1275 = vmatprep.subr.mxu0 0.0
      %1276 = vmatpush1.msra.mxu0 0.0
      %1277 = vmatprep.subr.mxu0 0.0
      %1278 = vmatpush1.msra.mxu0 0.0
      %1279 = vmatprep.subr.mxu0 0.0
      %1280 = vmatpush1.msra.mxu0 0.0
      %1281 = vmatprep.mubr.f32.mxu0 0.0
      %1282 = vmatmul.mubr.f32.gmra.mrb[0].mxu0 %v1206
      %v1283 = vpop.f32.mrb[0].mxu0
      %v1284 = vadd.f32 0.0, %v1283
      %v1285 = vpop.f32.mrb[0].mxu0
      %1286 = vmatprep.mubr.f32.mxu0 0.0
      %1287 = vmatmul.mubr.f32.gmra.mrb[0].mxu0 %v1209
      %v1288 = vpop.f32.mrb[0].mxu0
      %v1289 = vadd.f32 0.0, %v1288
      %v1290 = vpop.f32.mrb[0].mxu0
      %1291 = vmatprep.mubr.f32.mxu0 0.0
      %1292 = vmatmul.mubr.f32.gmra.mrb[0].mxu0 %v1212
      %v1293 = vpop.f32.mrb[0].mxu0
      %v1294 = vadd.f32 0.0, %v1293
      %v1295 = vpop.f32.mrb[0].mxu0
      %1296 = vmatprep.mubr.f32.mxu0 0.0
      %1297 = vmatmul.mubr.f32.gmra.mrb[0].mxu0 %v1215
      %v1298 = vpop.f32.mrb[0].mxu0
      %v1299 = vadd.f32 0.0, %v1298
      %v1300 = vpop.f32.mrb[0].mxu0
      %1301 = vdwg.mxu0
      %1302 = vrot.lane.b32.xlu0 %v549, 64
      %v1303 = vpop.permute.xlu0 %1302
      %1304 = vrot.lane.b32.xlu0 %v550, 64
      %v1305 = vpop.permute.xlu0 %1304
      %1306 = vrot.lane.b32.xlu0 %v551, 64
      %v1307 = vpop.permute.xlu0 %1306
      %1308 = vrot.lane.b32.xlu0 %v552, 64
      %v1309 = vpop.permute.xlu0 %1308
      %1310 = vrot.lane.b32.xlu0 %v710, 64
      %v1311 = vpop.permute.xlu0 %1310
      %1312 = vrot.lane.b32.xlu0 %v712, 64
      %v1313 = vpop.permute.xlu0 %1312
      %1314 = vrot.lane.b32.xlu0 %v714, 64
      %v1315 = vpop.permute.xlu0 %1314
      %1316 = vrot.lane.b32.xlu0 %v716, 64
      %v1317 = vpop.permute.xlu0 %1316
      %1318 = vrot.lane.b32.xlu0 %v718, 64
      %v1319 = vpop.permute.xlu0 %1318
      %1320 = vrot.lane.b32.xlu0 %v720, 64
      %v1321 = vpop.permute.xlu0 %1320
      %v1322 = vsel %vm447, %v1303, 0
      %v1324 = vsel %vm447, %v1305, 0
      %v1326 = vsel %vm447, %v1307, 0
      %v1328 = vsel %vm447, %v1309, 0
      %v1330 = vsel %vm447, %v1311, 0
      %v1332 = vsel %vm447, %v1313, 0
      %v1334 = vsel %vm447, %v1315, 0
      %v1336 = vsel %vm447, %v1317, 0
      %v1338 = vsel %vm447, %v1319, 0
      %v1340 = vsel %vm447, %v1321, 0
      %1342 = vmatprep.subr.mxu0 0.0
      %1343 = vmatpush1.xpose.msra.mxu0 %v1330
      %1344 = vmatprep.subr.mxu0 0.0
      %1345 = vmatpush1.xpose.msra.mxu0 %v1332
      %1346 = vmatprep.subr.mxu0 0.0
      %1347 = vmatpush1.xpose.msra.mxu0 %v1334
      %1348 = vmatprep.subr.mxu0 0.0
      %1349 = vmatpush1.xpose.msra.mxu0 %v1336
      %1350 = vmatprep.subr.mxu0 0.0
      %1351 = vmatpush1.xpose.msra.mxu0 %v1338
      %1352 = vmatprep.subr.mxu0 0.0
      %1353 = vmatpush1.xpose.msra.mxu0 %v1340
      %1354 = vmatprep.subr.mxu0 0.0
      %1355 = vmatpush1.xpose.msra.mxu0 0.0
      %1356 = vmatprep.subr.mxu0 0.0
      %1357 = vmatpush1.xpose.msra.mxu0 0.0
      %1358 = vmatprep.subr.mxu0 0.0
      %1359 = vmatpush1.xpose.msra.mxu0 0.0
      %1360 = vmatprep.subr.mxu0 0.0
      %1361 = vmatpush1.xpose.msra.mxu0 0.0
      %1362 = vmatprep.subr.mxu0 0.0
      %1363 = vmatpush1.xpose.msra.mxu0 0.0
      %1364 = vmatprep.subr.mxu0 0.0
      %1365 = vmatpush1.xpose.msra.mxu0 0.0
      %1366 = vmatprep.subr.mxu0 0.0
      %1367 = vmatpush1.xpose.msra.mxu0 0.0
      %1368 = vmatprep.subr.mxu0 0.0
      %1369 = vmatpush1.xpose.msra.mxu0 0.0
      %1370 = vmatprep.subr.mxu0 0.0
      %1371 = vmatpush1.xpose.msra.mxu0 0.0
      %1372 = vmatprep.subr.mxu0 0.0
      %1373 = vmatpush1.xpose.msra.mxu0 0.0
      %1374 = vmatprep.subr.mxu0 0.0
      %1375 = vmatpush1.xpose.msra.mxu0 0.0
      %1376 = vmatprep.subr.mxu0 0.0
      %1377 = vmatpush1.xpose.msra.mxu0 0.0
      %1378 = vmatprep.subr.mxu0 0.0
      %1379 = vmatpush1.xpose.msra.mxu0 0.0
      %1380 = vmatprep.subr.mxu0 0.0
      %1381 = vmatpush1.xpose.msra.mxu0 0.0
      %1382 = vmatprep.subr.mxu0 0.0
      %1383 = vmatpush1.xpose.msra.mxu0 0.0
      %1384 = vmatprep.subr.mxu0 0.0
      %1385 = vmatpush1.xpose.msra.mxu0 0.0
      %1386 = vmatprep.subr.mxu0 0.0
      %1387 = vmatpush1.xpose.msra.mxu0 0.0
      %1388 = vmatprep.subr.mxu0 0.0
      %1389 = vmatpush1.xpose.msra.mxu0 0.0
      %1390 = vmatprep.subr.mxu0 0.0
      %1391 = vmatpush1.xpose.msra.mxu0 0.0
      %1392 = vmatprep.subr.mxu0 0.0
      %1393 = vmatpush1.xpose.msra.mxu0 0.0
      %1394 = vmatprep.subr.mxu0 0.0
      %1395 = vmatpush1.xpose.msra.mxu0 0.0
      %1396 = vmatprep.subr.mxu0 0.0
      %1397 = vmatpush1.xpose.msra.mxu0 0.0
      %1398 = vmatprep.subr.mxu0 0.0
      %1399 = vmatpush1.xpose.msra.mxu0 0.0
      %1400 = vmatprep.subr.mxu0 0.0
      %1401 = vmatpush1.xpose.msra.mxu0 0.0
      %1402 = vmatprep.subr.mxu0 0.0
      %1403 = vmatpush1.xpose.msra.mxu0 0.0
      %1404 = vmatprep.subr.mxu0 0.0
      %1405 = vmatpush1.xpose.msra.mxu0 0.0
      %1406 = vmatprep.mubr.f32.mxu0 0.0
      %1407 = vmatmul.mubr.f32.gmra.mrb[0].mxu0 %v1322
      %v1408 = vpop.f32.mrb[0].mxu0
      %v1409 = vadd.f32 0.0, %v1408
      %v1410 = vpop.f32.mrb[0].mxu0
      %1411 = vmatprep.mubr.f32.mxu0 0.0
      %1412 = vmatmul.mubr.f32.gmra.mrb[0].mxu0 %v1324
      %v1413 = vpop.f32.mrb[0].mxu0
      %v1414 = vadd.f32 0.0, %v1413
      %v1415 = vpop.f32.mrb[0].mxu0
      %1416 = vmatprep.mubr.f32.mxu0 0.0
      %1417 = vmatmul.mubr.f32.gmra.mrb[0].mxu0 %v1326
      %v1418 = vpop.f32.mrb[0].mxu0
      %v1419 = vadd.f32 0.0, %v1418
      %v1420 = vpop.f32.mrb[0].mxu0
      %1421 = vmatprep.mubr.f32.mxu0 0.0
      %1422 = vmatmul.mubr.f32.gmra.mrb[0].mxu0 %v1328
      %v1423 = vpop.f32.mrb[0].mxu0
      %v1424 = vadd.f32 0.0, %v1423
      %v1425 = vpop.f32.mrb[0].mxu0
      %1426 = vdwg.mxu0
      %v1427 = vsel %vm749, %v1409, -1e+30
      %v1428 = vsel %vm750, %v1414, -1e+30
      %v1429 = vsel %vm751, %v1419, -1e+30
      %v1430 = vsel %vm752, %v1424, -1e+30
      %v1431 = vsel %vm872, %v1427, -inf
      %1432 = vmax.xlane.f32.xlu0 %v1431
      %v1433 = vpop.xlane.xlu0 %1432
      %v1434 = vsel %vm872, %v1428, -inf
      %1435 = vmax.xlane.f32.xlu0 %v1434
      %v1436 = vpop.xlane.xlu0 %1435
      %v1437 = vsel %vm872, %v1429, -inf
      %1438 = vmax.xlane.f32.xlu0 %v1437
      %v1439 = vpop.xlane.xlu0 %1438
      %v1440 = vsel %vm872, %v1430, -inf
      %1441 = vmax.xlane.f32.xlu0 %v1440
      %v1442 = vpop.xlane.xlu0 %1441
      %v1443 = vsub.f32 %v1427, %v1433
      %v1444 = vsub.f32 %v1428, %v1436
      %v1445 = vsub.f32 %v1429, %v1439
      %v1446 = vsub.f32 %v1430, %v1442
      %v1447 = vmul.f32 %v1443, 1.442695
      %v1448 = vpow.pop %v1447
      %v1449 = vmul.f32 %v1444, 1.442695
      %v1450 = vpow.pop %v1449
      %v1451 = vmul.f32 %v1445, 1.442695
      %v1452 = vpow.pop %v1451
      %v1453 = vmul.f32 %v1446, 1.442695
      %v1454 = vpow.pop %v1453
      %v1455 = vsel %vm872, %v1448, 0.0
      %1456 = vadd.xlane.f32.xlu0 %v1455
      %v1457 = vpop.xlane.xlu0 %1456
      %v1458 = vsel %vm872, %v1450, 0.0
      %1459 = vadd.xlane.f32.xlu0 %v1458
      %v1460 = vpop.xlane.xlu0 %1459
      %v1461 = vsel %vm872, %v1452, 0.0
      %1462 = vadd.xlane.f32.xlu0 %v1461
      %v1463 = vpop.xlane.xlu0 %1462
      %v1464 = vsel %vm872, %v1454, 0.0
      %1465 = vadd.xlane.f32.xlu0 %v1464
      %v1466 = vpop.xlane.xlu0 %1465
      %v1467 = vrcp.pop %v1457
      %v1468 = vrcp.pop %v1460
      %v1469 = vrcp.pop %v1463
      %v1470 = vrcp.pop %v1466
      %v1471 = vmul.f32 %v1448, %v1467
      %v1472 = vmul.f32 %v1450, %v1468
      %v1473 = vmul.f32 %v1452, %v1469
      %v1474 = vmul.f32 %v1454, %v1470
      %1481 = vrot.lane.b32.xlu0 %v711, 96
      %v1482 = vpop.permute.xlu0 %1481
      %1483 = vrot.lane.b32.xlu0 %v713, 96
      %v1484 = vpop.permute.xlu0 %1483
      %1485 = vrot.lane.b32.xlu0 %v715, 96
      %v1486 = vpop.permute.xlu0 %1485
      %1487 = vrot.lane.b32.xlu0 %v717, 96
      %v1488 = vpop.permute.xlu0 %1487
      %1489 = vrot.lane.b32.xlu0 %v719, 96
      %v1490 = vpop.permute.xlu0 %1489
      %1491 = vrot.lane.b32.xlu0 %v721, 96
      %v1492 = vpop.permute.xlu0 %1491
      %v1500 = vsel %vm872, %v1471, 0
      %v1503 = vsel %vm872, %v1472, 0
      %v1506 = vsel %vm872, %v1473, 0
      %v1509 = vsel %vm872, %v1474, 0
      %1511 = vmatprep.subr.mxu0 0.0
      %1512 = vmatpush1.msra.mxu0 %v1482
      %1513 = vmatprep.subr.mxu0 0.0
      %1514 = vmatpush1.msra.mxu0 %v1484
      %1515 = vmatprep.subr.mxu0 0.0
      %1516 = vmatpush1.msra.mxu0 %v1486
      %1517 = vmatprep.subr.mxu0 0.0
      %1518 = vmatpush1.msra.mxu0 %v1488
      %1519 = vmatprep.subr.mxu0 0.0
      %1520 = vmatpush1.msra.mxu0 %v1490
      %1521 = vmatprep.subr.mxu0 0.0
      %1522 = vmatpush1.msra.mxu0 %v1492
      %1523 = vmatprep.subr.mxu0 0.0
      %1524 = vmatpush1.msra.mxu0 0.0
      %1525 = vmatprep.subr.mxu0 0.0
      %1526 = vmatpush1.msra.mxu0 0.0
      %1527 = vmatprep.subr.mxu0 0.0
      %1528 = vmatpush1.msra.mxu0 0.0
      %1529 = vmatprep.subr.mxu0 0.0
      %1530 = vmatpush1.msra.mxu0 0.0
      %1531 = vmatprep.subr.mxu0 0.0
      %1532 = vmatpush1.msra.mxu0 0.0
      %1533 = vmatprep.subr.mxu0 0.0
      %1534 = vmatpush1.msra.mxu0 0.0
      %1535 = vmatprep.subr.mxu0 0.0
      %1536 = vmatpush1.msra.mxu0 0.0
      %1537 = vmatprep.subr.mxu0 0.0
      %1538 = vmatpush1.msra.mxu0 0.0
      %1539 = vmatprep.subr.mxu0 0.0
      %1540 = vmatpush1.msra.mxu0 0.0
      %1541 = vmatprep.subr.mxu0 0.0
      %1542 = vmatpush1.msra.mxu0 0.0
      %1543 = vmatprep.subr.mxu0 0.0
      %1544 = vmatpush1.msra.mxu0 0.0
      %1545 = vmatprep.subr.mxu0 0.0
      %1546 = vmatpush1.msra.mxu0 0.0
      %1547 = vmatprep.subr.mxu0 0.0
      %1548 = vmatpush1.msra.mxu0 0.0
      %1549 = vmatprep.subr.mxu0 0.0
      %1550 = vmatpush1.msra.mxu0 0.0
      %1551 = vmatprep.subr.mxu0 0.0
      %1552 = vmatpush1.msra.mxu0 0.0
      %1553 = vmatprep.subr.mxu0 0.0
      %1554 = vmatpush1.msra.mxu0 0.0
      %1555 = vmatprep.subr.mxu0 0.0
      %1556 = vmatpush1.msra.mxu0 0.0
      %1557 = vmatprep.subr.mxu0 0.0
      %1558 = vmatpush1.msra.mxu0 0.0
      %1559 = vmatprep.subr.mxu0 0.0
      %1560 = vmatpush1.msra.mxu0 0.0
      %1561 = vmatprep.subr.mxu0 0.0
      %1562 = vmatpush1.msra.mxu0 0.0
      %1563 = vmatprep.subr.mxu0 0.0
      %1564 = vmatpush1.msra.mxu0 0.0
      %1565 = vmatprep.subr.mxu0 0.0
      %1566 = vmatpush1.msra.mxu0 0.0
      %1567 = vmatprep.subr.mxu0 0.0
      %1568 = vmatpush1.msra.mxu0 0.0
      %1569 = vmatprep.subr.mxu0 0.0
      %1570 = vmatpush1.msra.mxu0 0.0
      %1571 = vmatprep.subr.mxu0 0.0
      %1572 = vmatpush1.msra.mxu0 0.0
      %1573 = vmatprep.subr.mxu0 0.0
      %1574 = vmatpush1.msra.mxu0 0.0
      %1575 = vmatprep.mubr.f32.mxu0 0.0
      %1576 = vmatmul.mubr.f32.gmra.mrb[0].mxu0 %v1500
      %v1577 = vpop.f32.mrb[0].mxu0
      %v1578 = vadd.f32 0.0, %v1577
      %v1579 = vpop.f32.mrb[0].mxu0
      %1580 = vmatprep.mubr.f32.mxu0 0.0
      %1581 = vmatmul.mubr.f32.gmra.mrb[0].mxu0 %v1503
      %v1582 = vpop.f32.mrb[0].mxu0
      %v1583 = vadd.f32 0.0, %v1582
      %v1584 = vpop.f32.mrb[0].mxu0
      %1585 = vmatprep.mubr.f32.mxu0 0.0
      %1586 = vmatmul.mubr.f32.gmra.mrb[0].mxu0 %v1506
      %v1587 = vpop.f32.mrb[0].mxu0
      %v1588 = vadd.f32 0.0, %v1587
      %v1589 = vpop.f32.mrb[0].mxu0
      %1590 = vmatprep.mubr.f32.mxu0 0.0
      %1591 = vmatmul.mubr.f32.gmra.mrb[0].mxu0 %v1509
      %v1592 = vpop.f32.mrb[0].mxu0
      %v1593 = vadd.f32 0.0, %v1592
      %v1594 = vpop.f32.mrb[0].mxu0
      %1595 = vdwg.mxu0
      %1600 = vrot.lane.b32.xlu0 %v1284, 32
      %v1601 = vpop.permute.xlu0 %1600
      %1602 = vrot.lane.b32.xlu0 %v1289, 32
      %v1603 = vpop.permute.xlu0 %1602
      %1604 = vrot.lane.b32.xlu0 %v1294, 32
      %v1605 = vpop.permute.xlu0 %1604
      %1606 = vrot.lane.b32.xlu0 %v1299, 32
      %v1607 = vpop.permute.xlu0 %1606
      %1616 = vrot.lane.b32.xlu0 %v1578, 64
      %v1617 = vpop.permute.xlu0 %1616
      %1618 = vrot.lane.b32.xlu0 %v1583, 64
      %v1619 = vpop.permute.xlu0 %1618
      %1620 = vrot.lane.b32.xlu0 %v1588, 64
      %v1621 = vpop.permute.xlu0 %1620
      %1622 = vrot.lane.b32.xlu0 %v1593, 64
      %v1623 = vpop.permute.xlu0 %1622
      %v1628 = vsel %vm447, %v1014, %v1601
      %v1629 = vsel %vm447, %v1019, %v1603
      %v1630 = vsel %vm447, %v1024, %v1605
      %v1631 = vsel %vm447, %v1029, %v1607
      %vm1632 = vcmask 523264
      %v1633 = vsel %vm1632, %v1628, %v1617
      %v1634 = vsel %vm1632, %v1629, %v1619
      %v1635 = vsel %vm1632, %v1630, %v1621
      %v1636 = vsel %vm1632, %v1631, %v1623
      %v1637 = vld [vmem:[%s8] sm:$0xff]
      %v1638 = vld [vmem:[%s8 + $0x8] sm:$0xff]
      %v1639 = vld [vmem:[%s8 + $0x10] sm:$0xff]
      %v1640 = vld [vmem:[%s8 + $0x18] sm:$0xff]
      %v1641 = vld [vmem:[%s8 + $0x20] sm:$0xff]
      %v1642 = vld [vmem:[%s8 + $0x28] sm:$0xff]
      %v1643 = vld [vmem:[%s8 + $0x30] sm:$0xff]
      %v1644 = vld [vmem:[%s8 + $0x38] sm:$0xff]
      %v1645 = vld [vmem:[%s8 + $0x40] sm:$0xff]
      %v1646 = vld [vmem:[%s8 + $0x48] sm:$0xff]
      %v1647 = vld [vmem:[%s8 + $0x50] sm:$0xff]
      %v1648 = vld [vmem:[%s8 + $0x58] sm:$0xff]
      %v1649 = vld [vmem:[%s9] sm:$0x1]
      %v1651 = vlaneseq
      %v1652 = vshrl.u32 %v1651, 7
      %v1653 = vsub.s32 0, %v1652
      %v1654 = vrot.slane %v1649, %v1653
      %vm1656 = vcmask 785408
      %v1658 = vsel %vm1656, %v1633, 0
      %v1661 = vsel %vm1656, %v1634, 0
      %v1664 = vsel %vm1656, %v1635, 0
      %v1667 = vsel %vm1656, %v1636, 0
      %1669 = vmatprep.subr.mxu0 0.0
      %1670 = vmatpush1.msra.mxu0 %v1637
      %1671 = vmatprep.subr.mxu0 0.0
      %1672 = vmatpush1.msra.mxu0 %v1638
      %1673 = vmatprep.subr.mxu0 0.0
      %1674 = vmatpush1.msra.mxu0 %v1639
      %1675 = vmatprep.subr.mxu0 0.0
      %1676 = vmatpush1.msra.mxu0 %v1640
      %1677 = vmatprep.subr.mxu0 0.0
      %1678 = vmatpush1.msra.mxu0 %v1641
      %1679 = vmatprep.subr.mxu0 0.0
      %1680 = vmatpush1.msra.mxu0 %v1642
      %1681 = vmatprep.subr.mxu0 0.0
      %1682 = vmatpush1.msra.mxu0 %v1643
      %1683 = vmatprep.subr.mxu0 0.0
      %1684 = vmatpush1.msra.mxu0 %v1644
      %1685 = vmatprep.subr.mxu0 0.0
      %1686 = vmatpush1.msra.mxu0 %v1645
      %1687 = vmatprep.subr.mxu0 0.0
      %1688 = vmatpush1.msra.mxu0 %v1646
      %1689 = vmatprep.subr.mxu0 0.0
      %1690 = vmatpush1.msra.mxu0 %v1647
      %1691 = vmatprep.subr.mxu0 0.0
      %1692 = vmatpush1.msra.mxu0 %v1648
      %1693 = vmatprep.subr.mxu0 0.0
      %1694 = vmatpush1.msra.mxu0 0.0
      %1695 = vmatprep.subr.mxu0 0.0
      %1696 = vmatpush1.msra.mxu0 0.0
      %1697 = vmatprep.subr.mxu0 0.0
      %1698 = vmatpush1.msra.mxu0 0.0
      %1699 = vmatprep.subr.mxu0 0.0
      %1700 = vmatpush1.msra.mxu0 0.0
      %1701 = vmatprep.subr.mxu0 0.0
      %1702 = vmatpush1.msra.mxu0 0.0
      %1703 = vmatprep.subr.mxu0 0.0
      %1704 = vmatpush1.msra.mxu0 0.0
      %1705 = vmatprep.subr.mxu0 0.0
      %1706 = vmatpush1.msra.mxu0 0.0
      %1707 = vmatprep.subr.mxu0 0.0
      %1708 = vmatpush1.msra.mxu0 0.0
      %1709 = vmatprep.subr.mxu0 0.0
      %1710 = vmatpush1.msra.mxu0 0.0
      %1711 = vmatprep.subr.mxu0 0.0
      %1712 = vmatpush1.msra.mxu0 0.0
      %1713 = vmatprep.subr.mxu0 0.0
      %1714 = vmatpush1.msra.mxu0 0.0
      %1715 = vmatprep.subr.mxu0 0.0
      %1716 = vmatpush1.msra.mxu0 0.0
      %1717 = vmatprep.subr.mxu0 0.0
      %1718 = vmatpush1.msra.mxu0 0.0
      %1719 = vmatprep.subr.mxu0 0.0
      %1720 = vmatpush1.msra.mxu0 0.0
      %1721 = vmatprep.subr.mxu0 0.0
      %1722 = vmatpush1.msra.mxu0 0.0
      %1723 = vmatprep.subr.mxu0 0.0
      %1724 = vmatpush1.msra.mxu0 0.0
      %1725 = vmatprep.subr.mxu0 0.0
      %1726 = vmatpush1.msra.mxu0 0.0
      %1727 = vmatprep.subr.mxu0 0.0
      %1728 = vmatpush1.msra.mxu0 0.0
      %1729 = vmatprep.subr.mxu0 0.0
      %1730 = vmatpush1.msra.mxu0 0.0
      %1731 = vmatprep.subr.mxu0 0.0
      %1732 = vmatpush1.msra.mxu0 0.0
      %1733 = vmatprep.mubr.f32.mxu0 0.0
      %1734 = vmatmul.mubr.f32.gmra.mrb[0].mxu0 %v1658
      %v1735 = vpop.f32.mrb[0].mxu0
      %v1736 = vadd.f32 %v1654, %v1735
      %v1737 = vpop.f32.mrb[0].mxu0
      %1738 = vmatprep.mubr.f32.mxu0 0.0
      %1739 = vmatmul.mubr.f32.gmra.mrb[0].mxu0 %v1661
      %v1740 = vpop.f32.mrb[0].mxu0
      %v1741 = vadd.f32 %v1654, %v1740
      %v1742 = vpop.f32.mrb[0].mxu0
      %1743 = vmatprep.mubr.f32.mxu0 0.0
      %1744 = vmatmul.mubr.f32.gmra.mrb[0].mxu0 %v1664
      %v1745 = vpop.f32.mrb[0].mxu0
      %v1746 = vadd.f32 %v1654, %v1745
      %v1747 = vpop.f32.mrb[0].mxu0
      %1748 = vmatprep.mubr.f32.mxu0 0.0
      %1749 = vmatmul.mubr.f32.gmra.mrb[0].mxu0 %v1667
      %v1750 = vpop.f32.mrb[0].mxu0
      %v1751 = vadd.f32 %v1654, %v1750
      %v1752 = vpop.f32.mrb[0].mxu0
      %1753 = vdwg.mxu0
      %1754 = vst.msk [vmem:[%s430] sm:$0xff] %vm447, %v1736
      %1755 = vst.msk [vmem:[%s430 + $0x8] sm:$0xff] %vm447, %v1741
      %1756 = vst.msk [vmem:[%s430 + $0x10] sm:$0xff] %vm447, %v1746
      %1757 = vst.msk [vmem:[%s430 + $0x18] sm:$0xff] %vm447, %v1751
      %s1758 = smul.u32 4, %s21
      %p1759 = scmp.lt.s32.totalorder %s1758, 7
      %s1760 = scalar_select %p1759, %s1758, 7
      %s1761 = smul.addr %s1760, 8
      %s1762 = scalar_lea.vmem %s10, %s1761
      // Predicated region
      $region61: #{stformer_forward.29} parent=59 // pred_check
        %p1763 = pneg %p269
      $region62: #{stformer_forward.29} parent=59 // pred_check_branch
        %1765 = sbr.rel (%p1763) target = $region64
      $region63: #{stformer_forward.29} parent=59 // pred_region
        %s1766 = smul.u32 4, %s21
      $region64: #{stformer_forward.29} parent=59 // pred_fallthru
        _
    $region60: #{stformer_forward.29} parent=5 // pred_fallthru
      _
    %p1767 = scmp.le.s32.totalorder 2, %s16
    // Predicated region
    $region65: #{stformer_forward.29} parent=5 // pred_check
      %p1768 = pneg %p1767
    $region66: #{stformer_forward.29} parent=5 // pred_check_branch
      %1770 = sbr.rel (%p1768) target = $region68
    $region67: #{stformer_forward.29} parent=5 // pred_region
      %s1771 = ssub.s32 %s16, 2
      // Predicated region
      $region69: #{stformer_forward.29} parent=67 // pred_check
        %p1772 = pneg %p275
      $region70: #{stformer_forward.29} parent=67 // pred_check_branch
        %1774 = sbr.rel (%p1772) target = $region72
      $region71: #{stformer_forward.29} parent=67 // pred_region
        %s1775 = smul.u32 4, %s22
        %p1776 = scmp.lt.s32.totalorder %s1775, 7
        %s1777 = scalar_select %p1776, %s1775, 7
        %s1778 = smul.addr %s1777, 8
        %s1779 = scalar_lea.vmem %s10, %s1778
      $region72: #{stformer_forward.29} parent=67 // pred_fallthru
        _
    $region68: #{stformer_forward.29} parent=5 // pred_fallthru
      _
  $region6: #{stformer_forward.29} parent=0 // loop_footer
    %s20 = sadd.s32 1, %s16
  $region7: #{stformer_forward.29} parent=0 // loop_footer_branch
    %15 = sbr.rel target = $region3
  $region8: #{stformer_forward.29} parent=0 // loop_exit
    _

// kernel: stformer_forward.34
$region0: #{stformer_forward.34}
  #allocation0 [shape = 'u32[]', space=smem, size = 0x4, offset = 0x4, fixed_abs, tag = 'smem constant byte address 0x4 - core index']
  #allocation1 [shape = 'u32[144,128]{1,0:T(1,128)}', space=vmem, size = 0x12000, scoped, tag = 'internal scratch']
  %s0 = inlined_call_operand.vmem [shape: f32[64,32], index: 0, kind: input, shape index: {}]
  %s1 = inlined_call_operand.vmem [shape: f32[1,32], index: 1, kind: input, shape index: {}]
  %s2 = inlined_call_operand.vmem [shape: f32[1,32], index: 2, kind: input, shape index: {}]
  %s3 = inlined_call_operand.vmem [shape: f32[32,128], index: 3, kind: input, shape index: {}]
  %s4 = inlined_call_operand.vmem [shape: f32[1,128], index: 4, kind: input, shape index: {}]
  %s5 = inlined_call_operand.vmem [shape: f32[128,32], index: 5, kind: input, shape index: {}]
  %s6 = inlined_call_operand.vmem [shape: f32[1,32], index: 6, kind: input, shape index: {}]
  %s7 = inlined_call_operand.vmem [shape: f32[64,32], index: 7, kind: output, shape index: {}]
  %s8 = sld [smem:[#allocation0]]
  $region61: #{stformer_forward.34} parent=0
    _
  %s10 = ssub.s32 1, %s8
  %s11 = scalar_select 0, %s10, %s8
  loop: start=0, step=1, limit=4
  $region2: #{stformer_forward.34} parent=0 // loop_pre_header
    _
  $region3: #{stformer_forward.34} parent=0 // loop_header
    %s13 = sphi 0, %s17
    %p14 = scmp.ge.s32.totalorder %s13, 4
    %s23 = sphi 0, %s25
    %s26 = sphi 0, %s23
    %s27 = sphi 0, %s26
    %s43 = sphi 0, %s27
    %s47 = sphi 0, %s47
    %s49 = sphi 0, %s47
    %s50 = sphi 0, %s49
    %s64 = sphi 0, %s50
    %s68 = sphi 0, %s68
    %s70 = sphi 0, %s68
    %s71 = sphi 0, %s70
    %s85 = sphi 0, %s71
    %s89 = sphi 0, %s89
    %s91 = sphi 0, %s89
    %s92 = sphi 0, %s91
    %s106 = sphi 0, %s92
    %s110 = sphi 0, %s110
    %s112 = sphi 0, %s110
    %s113 = sphi 0, %s112
    %s127 = sphi 0, %s113
    %s131 = sphi 0, %s131
    %s133 = sphi 0, %s131
    %s134 = sphi 0, %s133
    %s148 = sphi 0, %s134
    %s152 = sphi 0, %s152
    %s154 = sphi 0, %s152
    %s155 = sphi 0, %s154
    %s169 = sphi 0, %s155
    %s175 = sphi 0, %s177
    %s178 = sphi 0, %s175
    %s179 = sphi 0, %s178
    %s195 = sphi 0, %s179
  $region4: #{stformer_forward.34} parent=0 // loop_header_branch
    %16 = sbr.rel (%p14) target = $region8
  $region5: #{stformer_forward.34} parent=0 // loop_body
    %s18 = ssub.s32 %s13, 1
    %s19 = ssub.s32 %s13, 2
    %s20 = sadd.s32 %s13, 1
    %s21 = ssub.s32 %s13, %s20
    %p22 = scmp.eq.s32.totalorder %s21, 0
    %s24 = sadd.s32 %s23, 1
    %s25 = scalar_select %p22, %s23, %s24
    %p28 = pneg %p22
    %p29 = scmp.eq.s32.totalorder %s13, 1
    %p30 = por %p28, %p29
    %p31 = scmp.ne.s32.totalorder %s23, %s26
    %p32 = scmp.eq.s32.totalorder %s13, 0
    %p33 = por %p31, %p32
    %p34 = scmp.ne.s32.totalorder %s23, %s26
    %p35 = scmp.eq.s32.totalorder %s18, 1
    %p36 = por %p34, %p35
    %p37 = scmp.ne.s32.totalorder %s26, %s27
    %p38 = scmp.eq.s32.totalorder %s18, 0
    %p39 = por %p37, %p38
    %p40 = scmp.ne.s32.totalorder %s26, %s27
    %p41 = scmp.eq.s32.totalorder %s19, 1
    %p42 = por %p40, %p41
    %p44 = scmp.ne.s32.totalorder %s27, %s43
    %p45 = scmp.eq.s32.totalorder %s19, 0
    %p46 = por %p44, %p45
    %s48 = sadd.s32 %s47, 1
    %p51 = scmp.eq.s32.totalorder %s13, 1
    %p52 = scmp.ne.s32.totalorder %s47, %s49
    %p53 = scmp.eq.s32.totalorder %s13, 0
    %p54 = por %p52, %p53
    %p55 = scmp.ne.s32.totalorder %s47, %s49
    %p56 = scmp.eq.s32.totalorder %s18, 1
    %p57 = por %p55, %p56
    %p58 = scmp.ne.s32.totalorder %s49, %s50
    %p59 = scmp.eq.s32.totalorder %s18, 0
    %p60 = por %p58, %p59
    %p61 = scmp.ne.s32.totalorder %s49, %s50
    %p62 = scmp.eq.s32.totalorder %s19, 1
    %p63 = por %p61, %p62
    %p65 = scmp.ne.s32.totalorder %s50, %s64
    %p66 = scmp.eq.s32.totalorder %s19, 0
    %p67 = por %p65, %p66
    %s69 = sadd.s32 %s68, 1
    %p72 = scmp.eq.s32.totalorder %s13, 1
    %p73 = scmp.ne.s32.totalorder %s68, %s70
    %p74 = scmp.eq.s32.totalorder %s13, 0
    %p75 = por %p73, %p74
    %p76 = scmp.ne.s32.totalorder %s68, %s70
    %p77 = scmp.eq.s32.totalorder %s18, 1
    %p78 = por %p76, %p77
    %p79 = scmp.ne.s32.totalorder %s70, %s71
    %p80 = scmp.eq.s32.totalorder %s18, 0
    %p81 = por %p79, %p80
    %p82 = scmp.ne.s32.totalorder %s70, %s71
    %p83 = scmp.eq.s32.totalorder %s19, 1
    %p84 = por %p82, %p83
    %p86 = scmp.ne.s32.totalorder %s71, %s85
    %p87 = scmp.eq.s32.totalorder %s19, 0
    %p88 = por %p86, %p87
    %s90 = sadd.s32 %s89, 1
    %p93 = scmp.eq.s32.totalorder %s13, 1
    %p94 = scmp.ne.s32.totalorder %s89, %s91
    %p95 = scmp.eq.s32.totalorder %s13, 0
    %p96 = por %p94, %p95
    %p97 = scmp.ne.s32.totalorder %s89, %s91
    %p98 = scmp.eq.s32.totalorder %s18, 1
    %p99 = por %p97, %p98
    %p100 = scmp.ne.s32.totalorder %s91, %s92
    %p101 = scmp.eq.s32.totalorder %s18, 0
    %p102 = por %p100, %p101
    %p103 = scmp.ne.s32.totalorder %s91, %s92
    %p104 = scmp.eq.s32.totalorder %s19, 1
    %p105 = por %p103, %p104
    %p107 = scmp.ne.s32.totalorder %s92, %s106
    %p108 = scmp.eq.s32.totalorder %s19, 0
    %p109 = por %p107, %p108
    %s111 = sadd.s32 %s110, 1
    %p114 = scmp.eq.s32.totalorder %s13, 1
    %p115 = scmp.ne.s32.totalorder %s110, %s112
    %p116 = scmp.eq.s32.totalorder %s13, 0
    %p117 = por %p115, %p116
    %p118 = scmp.ne.s32.totalorder %s110, %s112
    %p119 = scmp.eq.s32.totalorder %s18, 1
    %p120 = por %p118, %p119
    %p121 = scmp.ne.s32.totalorder %s112, %s113
    %p122 = scmp.eq.s32.totalorder %s18, 0
    %p123 = por %p121, %p122
    %p124 = scmp.ne.s32.totalorder %s112, %s113
    %p125 = scmp.eq.s32.totalorder %s19, 1
    %p126 = por %p124, %p125
    %p128 = scmp.ne.s32.totalorder %s113, %s127
    %p129 = scmp.eq.s32.totalorder %s19, 0
    %p130 = por %p128, %p129
    %s132 = sadd.s32 %s131, 1
    %p135 = scmp.eq.s32.totalorder %s13, 1
    %p136 = scmp.ne.s32.totalorder %s131, %s133
    %p137 = scmp.eq.s32.totalorder %s13, 0
    %p138 = por %p136, %p137
    %p139 = scmp.ne.s32.totalorder %s131, %s133
    %p140 = scmp.eq.s32.totalorder %s18, 1
    %p141 = por %p139, %p140
    %p142 = scmp.ne.s32.totalorder %s133, %s134
    %p143 = scmp.eq.s32.totalorder %s18, 0
    %p144 = por %p142, %p143
    %p145 = scmp.ne.s32.totalorder %s133, %s134
    %p146 = scmp.eq.s32.totalorder %s19, 1
    %p147 = por %p145, %p146
    %p149 = scmp.ne.s32.totalorder %s134, %s148
    %p150 = scmp.eq.s32.totalorder %s19, 0
    %p151 = por %p149, %p150
    %s153 = sadd.s32 %s152, 1
    %p156 = scmp.eq.s32.totalorder %s13, 1
    %p157 = scmp.ne.s32.totalorder %s152, %s154
    %p158 = scmp.eq.s32.totalorder %s13, 0
    %p159 = por %p157, %p158
    %p160 = scmp.ne.s32.totalorder %s152, %s154
    %p161 = scmp.eq.s32.totalorder %s18, 1
    %p162 = por %p160, %p161
    %p163 = scmp.ne.s32.totalorder %s154, %s155
    %p164 = scmp.eq.s32.totalorder %s18, 0
    %p165 = por %p163, %p164
    %p166 = scmp.ne.s32.totalorder %s154, %s155
    %p167 = scmp.eq.s32.totalorder %s19, 1
    %p168 = por %p166, %p167
    %p170 = scmp.ne.s32.totalorder %s155, %s169
    %p171 = scmp.eq.s32.totalorder %s19, 0
    %p172 = por %p170, %p171
    %s173 = ssub.s32 %s13, %s20
    %p174 = scmp.eq.s32.totalorder %s173, 0
    %s176 = sadd.s32 %s175, 1
    %s177 = scalar_select %p174, %s175, %s176
    %p180 = pneg %p174
    %p181 = scmp.eq.s32.totalorder %s13, 1
    %p182 = por %p180, %p181
    %p183 = scmp.ne.s32.totalorder %s175, %s178
    %p184 = scmp.eq.s32.totalorder %s13, 0
    %p185 = por %p183, %p184
    %p186 = scmp.ne.s32.totalorder %s175, %s178
    %p187 = scmp.eq.s32.totalorder %s18, 1
    %p188 = por %p186, %p187
    %p189 = scmp.ne.s32.totalorder %s178, %s179
    %p190 = scmp.eq.s32.totalorder %s18, 0
    %p191 = por %p189, %p190
    %p192 = scmp.ne.s32.totalorder %s178, %s179
    %p193 = scmp.eq.s32.totalorder %s19, 1
    %p194 = por %p192, %p193
    %p196 = scmp.ne.s32.totalorder %s179, %s195
    %p197 = scmp.eq.s32.totalorder %s19, 0
    %p198 = por %p196, %p197
    %p199 = scmp.le.s32.totalorder 1, %s13
    %p200 = scmp.lt.s32.totalorder %s13, 3
    %p201 = pnand %p199, %p200
    %p202 = pneg %p201
    // Predicated region
    $region9: #{stformer_forward.34} parent=5 // pred_check
      _
    $region10: #{stformer_forward.34} parent=5 // pred_check_branch
      %204 = sbr.rel (%p201) target = $region12
    $region11: #{stformer_forward.34} parent=5 // pred_region
      %s205 = ssub.s32 %s13, 1
      // Predicated region
      $region13: #{stformer_forward.34} parent=11 // pred_check
        %p206 = pneg %p60
      $region14: #{stformer_forward.34} parent=11 // pred_check_branch
        %208 = sbr.rel (%p206) target = $region16
      $region15: #{stformer_forward.34} parent=11 // pred_region
        _
      $region16: #{stformer_forward.34} parent=11 // pred_fallthru
        _
      // Predicated region
      $region17: #{stformer_forward.34} parent=11 // pred_check
        %p209 = pneg %p81
      $region18: #{stformer_forward.34} parent=11 // pred_check_branch
        %211 = sbr.rel (%p209) target = $region20
      $region19: #{stformer_forward.34} parent=11 // pred_region
        _
      $region20: #{stformer_forward.34} parent=11 // pred_fallthru
        _
      // Predicated region
      $region21: #{stformer_forward.34} parent=11 // pred_check
        %p212 = pneg %p102
      $region22: #{stformer_forward.34} parent=11 // pred_check_branch
        %214 = sbr.rel (%p212) target = $region24
      $region23: #{stformer_forward.34} parent=11 // pred_region
        _
      $region24: #{stformer_forward.34} parent=11 // pred_fallthru
        _
      // Predicated region
      $region25: #{stformer_forward.34} parent=11 // pred_check
        %p215 = pneg %p123
      $region26: #{stformer_forward.34} parent=11 // pred_check_branch
        %217 = sbr.rel (%p215) target = $region28
      $region27: #{stformer_forward.34} parent=11 // pred_region
        _
      $region28: #{stformer_forward.34} parent=11 // pred_fallthru
        _
      // Predicated region
      $region29: #{stformer_forward.34} parent=11 // pred_check
        %p218 = pneg %p144
      $region30: #{stformer_forward.34} parent=11 // pred_check_branch
        %220 = sbr.rel (%p218) target = $region32
      $region31: #{stformer_forward.34} parent=11 // pred_region
        _
      $region32: #{stformer_forward.34} parent=11 // pred_fallthru
        _
      // Predicated region
      $region33: #{stformer_forward.34} parent=11 // pred_check
        %p221 = pneg %p165
      $region34: #{stformer_forward.34} parent=11 // pred_check_branch
        %223 = sbr.rel (%p221) target = $region36
      $region35: #{stformer_forward.34} parent=11 // pred_region
        _
      $region36: #{stformer_forward.34} parent=11 // pred_fallthru
        _
    $region12: #{stformer_forward.34} parent=5 // pred_fallthru
      _
    %p224 = scmp.lt.s32.totalorder %s13, 2
    // Predicated region
    $region37: #{stformer_forward.34} parent=5 // pred_check
      %p225 = pneg %p224
    $region38: #{stformer_forward.34} parent=5 // pred_check_branch
      %227 = sbr.rel (%p225) target = $region40
    $region39: #{stformer_forward.34} parent=5 // pred_region
      // Predicated region
      $region41: #{stformer_forward.34} parent=39 // pred_check
        %p228 = pneg %p33
      $region42: #{stformer_forward.34} parent=39 // pred_check_branch
        %230 = sbr.rel (%p228) target = $region44
      $region43: #{stformer_forward.34} parent=39 // pred_region
        %s231 = smul.u32 4, %s13
        %p232 = scmp.lt.s32.totalorder %s231, 7
        %s233 = scalar_select %p232, %s231, 7
        %s234 = smul.addr %s233, 8
        %s235 = scalar_lea.vmem %s0, %s234
        %s236 = smul.u32 4, %s13
      $region44: #{stformer_forward.34} parent=39 // pred_fallthru
        _
    $region40: #{stformer_forward.34} parent=5 // pred_fallthru
      _
    %p237 = scmp.le.s32.totalorder 1, %s13
    %p238 = scmp.lt.s32.totalorder %s13, 3
    %p239 = pnand %p237, %p238
    %p240 = pneg %p239
    // Predicated region
    $region45: #{stformer_forward.34} parent=5 // pred_check
      _
    $region46: #{stformer_forward.34} parent=5 // pred_check_branch
      %242 = sbr.rel (%p239) target = $region48
    $region47: #{stformer_forward.34} parent=5 // pred_region
      %s243 = ssub.s32 %s13, 1
      %s244 = smul.u32 4, %s18
      %p245 = scmp.lt.s32.totalorder %s244, 7
      %s246 = scalar_select %p245, %s244, 7
      %s247 = smul.addr %s246, 8
      %s248 = scalar_lea.vmem %s0, %s247
      %p249 = pneg %p39
      %p250 = pneg %p36
      %p251 = pneg %p60
      %p252 = pneg %p57
      %p253 = pneg %p81
      %p254 = pneg %p78
      %p255 = pneg %p102
      %p256 = pneg %p99
      %p257 = pneg %p123
      %p258 = pneg %p120
      %p259 = pneg %p144
      %p260 = pneg %p141
      %p261 = pneg %p165
      %p262 = pneg %p162
      %p263 = pneg %p191
      %p264 = pneg %p188
      %s265 = smul.u32 4, %s18
      %p266 = scmp.lt.s32.totalorder %s265, 7
      %s267 = scalar_select %p266, %s265, 7
      %s268 = smul.addr %s267, 8
      %s269 = scalar_lea.vmem %s7, %s268
      %s270 = smul.u32 4, %s18
      %p271 = scmp.lt.s32.totalorder %s270, 7
      %s272 = scalar_select %p271, %s270, 7
      %s273 = smul.addr %s272, 8
      %s274 = scalar_lea.vmem %s0, %s273
      %s275 = smul.u32 4, %s18
      %s276 = smul.u32 4, %s18
      %p277 = scmp.lt.s32.totalorder %s276, 7
      %s278 = scalar_select %p277, %s276, 7
      %s279 = smul.addr %s278, 8
      %s280 = scalar_lea.vmem %s7, %s279
      %s281 = smul.u32 4, %s18
      %v282 = vld [vmem:[%s274] sm:$0xff]
      %v283 = vld [vmem:[%s274 + $0x8] sm:$0xff]
      %v284 = vld [vmem:[%s274 + $0x10] sm:$0xff]
      %v285 = vld [vmem:[%s274 + $0x18] sm:$0xff]
      %v286 = vld [vmem:[%s1] sm:$0x1]
      %v288 = vlaneseq
      %v289 = vshrl.u32 %v288, 7
      %v290 = vsub.s32 0, %v289
      %v291 = vrot.slane %v286, %v290
      %v293 = vmul.f32 %v282, %v291
      %v294 = vmul.f32 %v283, %v291
      %v295 = vmul.f32 %v284, %v291
      %v296 = vmul.f32 %v285, %v291
      %v297 = vld [vmem:[%s2] sm:$0x1]
      %v299 = vlaneseq
      %v300 = vshrl.u32 %v299, 7
      %v301 = vsub.s32 0, %v300
      %v302 = vrot.slane %v297, %v301
      %v304 = vadd.f32 %v293, %v302
      %v305 = vadd.f32 %v294, %v302
      %v306 = vadd.f32 %v295, %v302
      %v307 = vadd.f32 %v296, %v302
      %v308 = vld [vmem:[%s3] sm:$0xff]
      %v309 = vld [vmem:[%s3 + $0x8] sm:$0xff]
      %v310 = vld [vmem:[%s3 + $0x10] sm:$0xff]
      %v311 = vld [vmem:[%s3 + $0x18] sm:$0xff]
      %v312 = vld [vmem:[%s4] sm:$0x1]
      %v314 = vlaneseq
      %v315 = vshrl.u32 %v314, 7
      %v316 = vsub.s32 0, %v315
      %v317 = vrot.slane %v312, %v316
      %vm319 = vcmask 261120
      %v321 = vsel %vm319, %v304, 0
      %v324 = vsel %vm319, %v305, 0
      %v327 = vsel %vm319, %v306, 0
      %v330 = vsel %vm319, %v307, 0
      %332 = vmatprep.subr.mxu0 0.0
      %333 = vmatpush1.msra.mxu0 %v308
      %334 = vmatprep.subr.mxu0 0.0
      %335 = vmatpush1.msra.mxu0 %v309
      %336 = vmatprep.subr.mxu0 0.0
      %337 = vmatpush1.msra.mxu0 %v310
      %338 = vmatprep.subr.mxu0 0.0
      %339 = vmatpush1.msra.mxu0 %v311
      %340 = vmatprep.subr.mxu0 0.0
      %341 = vmatpush1.msra.mxu0 0.0
      %342 = vmatprep.subr.mxu0 0.0
      %343 = vmatpush1.msra.mxu0 0.0
      %344 = vmatprep.subr.mxu0 0.0
      %345 = vmatpush1.msra.mxu0 0.0
      %346 = vmatprep.subr.mxu0 0.0
      %347 = vmatpush1.msra.mxu0 0.0
      %348 = vmatprep.subr.mxu0 0.0
      %349 = vmatpush1.msra.mxu0 0.0
      %350 = vmatprep.subr.mxu0 0.0
      %351 = vmatpush1.msra.mxu0 0.0
      %352 = vmatprep.subr.mxu0 0.0
      %353 = vmatpush1.msra.mxu0 0.0
      %354 = vmatprep.subr.mxu0 0.0
      %355 = vmatpush1.msra.mxu0 0.0
      %356 = vmatprep.subr.mxu0 0.0
      %357 = vmatpush1.msra.mxu0 0.0
      %358 = vmatprep.subr.mxu0 0.0
      %359 = vmatpush1.msra.mxu0 0.0
      %360 = vmatprep.subr.mxu0 0.0
      %361 = vmatpush1.msra.mxu0 0.0
      %362 = vmatprep.subr.mxu0 0.0
      %363 = vmatpush1.msra.mxu0 0.0
      %364 = vmatprep.subr.mxu0 0.0
      %365 = vmatpush1.msra.mxu0 0.0
      %366 = vmatprep.subr.mxu0 0.0
      %367 = vmatpush1.msra.mxu0 0.0
      %368 = vmatprep.subr.mxu0 0.0
      %369 = vmatpush1.msra.mxu0 0.0
      %370 = vmatprep.subr.mxu0 0.0
      %371 = vmatpush1.msra.mxu0 0.0
      %372 = vmatprep.subr.mxu0 0.0
      %373 = vmatpush1.msra.mxu0 0.0
      %374 = vmatprep.subr.mxu0 0.0
      %375 = vmatpush1.msra.mxu0 0.0
      %376 = vmatprep.subr.mxu0 0.0
      %377 = vmatpush1.msra.mxu0 0.0
      %378 = vmatprep.subr.mxu0 0.0
      %379 = vmatpush1.msra.mxu0 0.0
      %380 = vmatprep.subr.mxu0 0.0
      %381 = vmatpush1.msra.mxu0 0.0
      %382 = vmatprep.subr.mxu0 0.0
      %383 = vmatpush1.msra.mxu0 0.0
      %384 = vmatprep.subr.mxu0 0.0
      %385 = vmatpush1.msra.mxu0 0.0
      %386 = vmatprep.subr.mxu0 0.0
      %387 = vmatpush1.msra.mxu0 0.0
      %388 = vmatprep.subr.mxu0 0.0
      %389 = vmatpush1.msra.mxu0 0.0
      %390 = vmatprep.subr.mxu0 0.0
      %391 = vmatpush1.msra.mxu0 0.0
      %392 = vmatprep.subr.mxu0 0.0
      %393 = vmatpush1.msra.mxu0 0.0
      %394 = vmatprep.subr.mxu0 0.0
      %395 = vmatpush1.msra.mxu0 0.0
      %396 = vmatprep.mubr.f32.mxu0 0.0
      %397 = vmatmul.mubr.f32.gmra.mrb[0].mxu0 %v321
      %v398 = vpop.f32.mrb[0].mxu0
      %v399 = vadd.f32 %v317, %v398
      %v400 = vpop.f32.mrb[0].mxu0
      %401 = vmatprep.mubr.f32.mxu0 0.0
      %402 = vmatmul.mubr.f32.gmra.mrb[0].mxu0 %v324
      %v403 = vpop.f32.mrb[0].mxu0
      %v404 = vadd.f32 %v317, %v403
      %v405 = vpop.f32.mrb[0].mxu0
      %406 = vmatprep.mubr.f32.mxu0 0.0
      %407 = vmatmul.mubr.f32.gmra.mrb[0].mxu0 %v327
      %v408 = vpop.f32.mrb[0].mxu0
      %v409 = vadd.f32 %v317, %v408
      %v410 = vpop.f32.mrb[0].mxu0
      %411 = vmatprep.mubr.f32.mxu0 0.0
      %412 = vmatmul.mubr.f32.gmra.mrb[0].mxu0 %v330
      %v413 = vpop.f32.mrb[0].mxu0
      %v414 = vadd.f32 %v317, %v413
      %v415 = vpop.f32.mrb[0].mxu0
      %416 = vdwg.mxu0
      %v417 = vmax.f32 %v399, 0.0
      %v418 = vmax.f32 %v404, 0.0
      %v419 = vmax.f32 %v409, 0.0
      %v420 = vmax.f32 %v414, 0.0
      %v421 = vand.u32 2147483647, %v399
      %v422 = vand.u32 2147483647, %v404
      %v423 = vand.u32 2147483647, %v409
      %v424 = vand.u32 2147483647, %v414
      %v425 = vsub.f32 0.0, %v421
      %v426 = vsub.f32 0.0, %v422
      %v427 = vsub.f32 0.0, %v423
      %v428 = vsub.f32 0.0, %v424
      %v429 = vmul.f32 %v425, 1.442695
      %v430 = vpow.pop %v429
      %v431 = vmul.f32 %v426, 1.442695
      %v432 = vpow.pop %v431
      %v433 = vmul.f32 %v427, 1.442695
      %v434 = vpow.pop %v433
      %v435 = vmul.f32 %v428, 1.442695
      %v436 = vpow.pop %v435
      %v437 = vadd.f32 %v430, 1.0
      %v438 = vadd.f32 %v432, 1.0
      %v439 = vadd.f32 %v434, 1.0
      %v440 = vadd.f32 %v436, 1.0
      %v441 = vlog2.pop %v437
      %v442 = vmul.f32 %v441, 0.6931472
      %v443 = vlog2.pop %v438
      %v444 = vmul.f32 %v443, 0.6931472
      %v445 = vlog2.pop %v439
      %v446 = vmul.f32 %v445, 0.6931472
      %v447 = vlog2.pop %v440
      %v448 = vmul.f32 %v447, 0.6931472
      %v449 = vadd.f32 %v417, %v442
      %v450 = vadd.f32 %v418, %v444
      %v451 = vadd.f32 %v419, %v446
      %v452 = vadd.f32 %v420, %v448
      %v453 = vtanh.pop %v449
      %v454 = vtanh.pop %v450
      %v455 = vtanh.pop %v451
      %v456 = vtanh.pop %v452
      %v457 = vmul.f32 %v399, %v453
      %v458 = vmul.f32 %v404, %v454
      %v459 = vmul.f32 %v409, %v455
      %v460 = vmul.f32 %v414, %v456
      %v461 = vld [vmem:[%s5] sm:$0xff]
      %v462 = vld [vmem:[%s5 + $0x8] sm:$0xff]
      %v463 = vld [vmem:[%s5 + $0x10] sm:$0xff]
      %v464 = vld [vmem:[%s5 + $0x18] sm:$0xff]
      %v465 = vld [vmem:[%s5 + $0x20] sm:$0xff]
      %v466 = vld [vmem:[%s5 + $0x28] sm:$0xff]
      %v467 = vld [vmem:[%s5 + $0x30] sm:$0xff]
      %v468 = vld [vmem:[%s5 + $0x38] sm:$0xff]
      %v469 = vld [vmem:[%s5 + $0x40] sm:$0xff]
      %v470 = vld [vmem:[%s5 + $0x48] sm:$0xff]
      %v471 = vld [vmem:[%s5 + $0x50] sm:$0xff]
      %v472 = vld [vmem:[%s5 + $0x58] sm:$0xff]
      %v473 = vld [vmem:[%s5 + $0x60] sm:$0xff]
      %v474 = vld [vmem:[%s5 + $0x68] sm:$0xff]
      %v475 = vld [vmem:[%s5 + $0x70] sm:$0xff]
      %v476 = vld [vmem:[%s5 + $0x78] sm:$0xff]
      %v477 = vld [vmem:[%s6] sm:$0x1]
      %v479 = vlaneseq
      %v480 = vshrl.u32 %v479, 7
      %v481 = vsub.s32 0, %v480
      %v482 = vrot.slane %v477, %v481
      %484 = vmatprep.subr.mxu0 0.0
      %485 = vmatpush1.msra.mxu0 %v461
      %486 = vmatprep.subr.mxu0 0.0
      %487 = vmatpush1.msra.mxu0 %v462
      %488 = vmatprep.subr.mxu0 0.0
      %489 = vmatpush1.msra.mxu0 %v463
      %490 = vmatprep.subr.mxu0 0.0
      %491 = vmatpush1.msra.mxu0 %v464
      %492 = vmatprep.subr.mxu0 0.0
      %493 = vmatpush1.msra.mxu0 %v465
      %494 = vmatprep.subr.mxu0 0.0
      %495 = vmatpush1.msra.mxu0 %v466
      %496 = vmatprep.subr.mxu0 0.0
      %497 = vmatpush1.msra.mxu0 %v467
      %498 = vmatprep.subr.mxu0 0.0
      %499 = vmatpush1.msra.mxu0 %v468
      %500 = vmatprep.subr.mxu0 0.0
      %501 = vmatpush1.msra.mxu0 %v469
      %502 = vmatprep.subr.mxu0 0.0
      %503 = vmatpush1.msra.mxu0 %v470
      %504 = vmatprep.subr.mxu0 0.0
      %505 = vmatpush1.msra.mxu0 %v471
      %506 = vmatprep.subr.mxu0 0.0
      %507 = vmatpush1.msra.mxu0 %v472
      %508 = vmatprep.subr.mxu0 0.0
      %509 = vmatpush1.msra.mxu0 %v473
      %510 = vmatprep.subr.mxu0 0.0
      %511 = vmatpush1.msra.mxu0 %v474
      %512 = vmatprep.subr.mxu0 0.0
      %513 = vmatpush1.msra.mxu0 %v475
      %514 = vmatprep.subr.mxu0 0.0
      %515 = vmatpush1.msra.mxu0 %v476
      %516 = vmatprep.subr.mxu0 0.0
      %517 = vmatpush1.msra.mxu0 0.0
      %518 = vmatprep.subr.mxu0 0.0
      %519 = vmatpush1.msra.mxu0 0.0
      %520 = vmatprep.subr.mxu0 0.0
      %521 = vmatpush1.msra.mxu0 0.0
      %522 = vmatprep.subr.mxu0 0.0
      %523 = vmatpush1.msra.mxu0 0.0
      %524 = vmatprep.subr.mxu0 0.0
      %525 = vmatpush1.msra.mxu0 0.0
      %526 = vmatprep.subr.mxu0 0.0
      %527 = vmatpush1.msra.mxu0 0.0
      %528 = vmatprep.subr.mxu0 0.0
      %529 = vmatpush1.msra.mxu0 0.0
      %530 = vmatprep.subr.mxu0 0.0
      %531 = vmatpush1.msra.mxu0 0.0
      %532 = vmatprep.subr.mxu0 0.0
      %533 = vmatpush1.msra.mxu0 0.0
      %534 = vmatprep.subr.mxu0 0.0
      %535 = vmatpush1.msra.mxu0 0.0
      %536 = vmatprep.subr.mxu0 0.0
      %537 = vmatpush1.msra.mxu0 0.0
      %538 = vmatprep.subr.mxu0 0.0
      %539 = vmatpush1.msra.mxu0 0.0
      %540 = vmatprep.subr.mxu0 0.0
      %541 = vmatpush1.msra.mxu0 0.0
      %542 = vmatprep.subr.mxu0 0.0
      %543 = vmatpush1.msra.mxu0 0.0
      %544 = vmatprep.subr.mxu0 0.0
      %545 = vmatpush1.msra.mxu0 0.0
      %546 = vmatprep.subr.mxu0 0.0
      %547 = vmatpush1.msra.mxu0 0.0
      %548 = vmatprep.mubr.f32.mxu0 0.0
      %549 = vmatmul.mubr.f32.gmra.mrb[0].mxu0 %v457
      %v550 = vpop.f32.mrb[0].mxu0
      %v551 = vadd.f32 %v482, %v550
      %v552 = vpop.f32.mrb[0].mxu0
      %553 = vmatprep.mubr.f32.mxu0 0.0
      %554 = vmatmul.mubr.f32.gmra.mrb[0].mxu0 %v458
      %v555 = vpop.f32.mrb[0].mxu0
      %v556 = vadd.f32 %v482, %v555
      %v557 = vpop.f32.mrb[0].mxu0
      %558 = vmatprep.mubr.f32.mxu0 0.0
      %559 = vmatmul.mubr.f32.gmra.mrb[0].mxu0 %v459
      %v560 = vpop.f32.mrb[0].mxu0
      %v561 = vadd.f32 %v482, %v560
      %v562 = vpop.f32.mrb[0].mxu0
      %563 = vmatprep.mubr.f32.mxu0 0.0
      %564 = vmatmul.mubr.f32.gmra.mrb[0].mxu0 %v460
      %v565 = vpop.f32.mrb[0].mxu0
      %v566 = vadd.f32 %v482, %v565
      %v567 = vpop.f32.mrb[0].mxu0
      %568 = vdwg.mxu0
      %v569 = vadd.f32 %v551, %v304
      %v570 = vadd.f32 %v556, %v305
      %v571 = vadd.f32 %v561, %v306
      %v572 = vadd.f32 %v566, %v307
      %573 = vst.msk [vmem:[%s280] sm:$0xff] %vm319, %v569
      %574 = vst.msk [vmem:[%s280 + $0x8] sm:$0xff] %vm319, %v570
      %575 = vst.msk [vmem:[%s280 + $0x10] sm:$0xff] %vm319, %v571
      %576 = vst.msk [vmem:[%s280 + $0x18] sm:$0xff] %vm319, %v572
      %s577 = smul.u32 4, %s18
      %p578 = scmp.lt.s32.totalorder %s577, 7
      %s579 = scalar_select %p578, %s577, 7
      %s580 = smul.addr %s579, 8
      %s581 = scalar_lea.vmem %s7, %s580
      // Predicated region
      $region49: #{stformer_forward.34} parent=47 // pred_check
        %p582 = pneg %p188
      $region50: #{stformer_forward.34} parent=47 // pred_check_branch
        %584 = sbr.rel (%p582) target = $region52
      $region51: #{stformer_forward.34} parent=47 // pred_region
        %s585 = smul.u32 4, %s18
      $region52: #{stformer_forward.34} parent=47 // pred_fallthru
        _
    $region48: #{stformer_forward.34} parent=5 // pred_fallthru
      _
    %p586 = scmp.le.s32.totalorder 2, %s13
    // Predicated region
    $region53: #{stformer_forward.34} parent=5 // pred_check
      %p587 = pneg %p586
    $region54: #{stformer_forward.34} parent=5 // pred_check_branch
      %589 = sbr.rel (%p587) target = $region56
    $region55: #{stformer_forward.34} parent=5 // pred_region
      %s590 = ssub.s32 %s13, 2
      // Predicated region
      $region57: #{stformer_forward.34} parent=55 // pred_check
        %p591 = pneg %p194
      $region58: #{stformer_forward.34} parent=55 // pred_check_branch
        %593 = sbr.rel (%p591) target = $region60
      $region59: #{stformer_forward.34} parent=55 // pred_region
        %s594 = smul.u32 4, %s19
        %p595 = scmp.lt.s32.totalorder %s594, 7
        %s596 = scalar_select %p595, %s594, 7
        %s597 = smul.addr %s596, 8
        %s598 = scalar_lea.vmem %s7, %s597
      $region60: #{stformer_forward.34} parent=55 // pred_fallthru
        _
    $region56: #{stformer_forward.34} parent=5 // pred_fallthru
      _
  $region6: #{stformer_forward.34} parent=0 // loop_footer
    %s17 = sadd.s32 1, %s13
  $region7: #{stformer_forward.34} parent=0 // loop_footer_branch
    %12 = sbr.rel target = $region3
  $region8: #{stformer_forward.34} parent=0 // loop_exit
    _

// kernel: stformer_forward.31
$region0: #{stformer_forward.31}
  #allocation0 [shape = 'u32[]', space=smem, size = 0x4, offset = 0x4, fixed_abs, tag = 'smem constant byte address 0x4 - core index']
  #allocation1 [shape = 'u32[144,128]{1,0:T(1,128)}', space=vmem, size = 0x12000, scoped, tag = 'internal scratch']
  %s0 = inlined_call_operand.vmem [shape: f32[64,32], index: 0, kind: input, shape index: {}]
  %s1 = inlined_call_operand.vmem [shape: f32[64,288], index: 1, kind: input, shape index: {}]
  %s2 = inlined_call_operand.vmem [shape: f32[32,288], index: 2, kind: input, shape index: {}]
  %s3 = inlined_call_operand.vmem [shape: f32[1,288], index: 3, kind: input, shape index: {}]
  %s4 = inlined_call_operand.vmem [shape: f32[96,32], index: 4, kind: input, shape index: {}]
  %s5 = inlined_call_operand.vmem [shape: f32[1,32], index: 5, kind: input, shape index: {}]
  %s6 = inlined_call_operand.vmem [shape: f32[64,32], index: 6, kind: input, shape index: {}]
  %s7 = inlined_call_operand.vmem [shape: f32[64,32], index: 7, kind: output, shape index: {}]
  %s8 = sld [smem:[#allocation0]]
  $region61: #{stformer_forward.31} parent=0
    _
  %s10 = ssub.s32 1, %s8
  %s11 = scalar_select 0, %s10, %s8
  loop: start=0, step=1, limit=4
  $region2: #{stformer_forward.31} parent=0 // loop_pre_header
    _
  $region3: #{stformer_forward.31} parent=0 // loop_header
    %s13 = sphi 0, %s17
    %p14 = scmp.ge.s32.totalorder %s13, 4
    %s23 = sphi 0, %s25
    %s26 = sphi 0, %s23
    %s27 = sphi 0, %s26
    %s43 = sphi 0, %s27
    %s49 = sphi 0, %s51
    %s52 = sphi 0, %s49
    %s53 = sphi 0, %s52
    %s69 = sphi 0, %s53
    %s73 = sphi 0, %s73
    %s75 = sphi 0, %s73
    %s76 = sphi 0, %s75
    %s90 = sphi 0, %s76
    %s94 = sphi 0, %s94
    %s96 = sphi 0, %s94
    %s97 = sphi 0, %s96
    %s111 = sphi 0, %s97
    %s115 = sphi 0, %s115
    %s117 = sphi 0, %s115
    %s118 = sphi 0, %s117
    %s132 = sphi 0, %s118
    %s136 = sphi 0, %s136
    %s138 = sphi 0, %s136
    %s139 = sphi 0, %s138
    %s153 = sphi 0, %s139
    %s159 = sphi 0, %s161
    %s162 = sphi 0, %s159
    %s163 = sphi 0, %s162
    %s179 = sphi 0, %s163
    %s185 = sphi 0, %s187
    %s188 = sphi 0, %s185
    %s189 = sphi 0, %s188
    %s205 = sphi 0, %s189
  $region4: #{stformer_forward.31} parent=0 // loop_header_branch
    %16 = sbr.rel (%p14) target = $region8
  $region5: #{stformer_forward.31} parent=0 // loop_body
    %s18 = ssub.s32 %s13, 1
    %s19 = ssub.s32 %s13, 2
    %s20 = sadd.s32 %s13, 1
    %s21 = ssub.s32 %s13, %s20
    %p22 = scmp.eq.s32.totalorder %s21, 0
    %s24 = sadd.s32 %s23, 1
    %s25 = scalar_select %p22, %s23, %s24
    %p28 = pneg %p22
    %p29 = scmp.eq.s32.totalorder %s13, 1
    %p30 = por %p28, %p29
    %p31 = scmp.ne.s32.totalorder %s23, %s26
    %p32 = scmp.eq.s32.totalorder %s13, 0
    %p33 = por %p31, %p32
    %p34 = scmp.ne.s32.totalorder %s23, %s26
    %p35 = scmp.eq.s32.totalorder %s18, 1
    %p36 = por %p34, %p35
    %p37 = scmp.ne.s32.totalorder %s26, %s27
    %p38 = scmp.eq.s32.totalorder %s18, 0
    %p39 = por %p37, %p38
    %p40 = scmp.ne.s32.totalorder %s26, %s27
    %p41 = scmp.eq.s32.totalorder %s19, 1
    %p42 = por %p40, %p41
    %p44 = scmp.ne.s32.totalorder %s27, %s43
    %p45 = scmp.eq.s32.totalorder %s19, 0
    %p46 = por %p44, %p45
    %s47 = ssub.s32 %s13, %s20
    %p48 = scmp.eq.s32.totalorder %s47, 0
    %s50 = sadd.s32 %s49, 1
    %s51 = scalar_select %p48, %s49, %s50
    %p54 = pneg %p48
    %p55 = scmp.eq.s32.totalorder %s13, 1
    %p56 = por %p54, %p55
    %p57 = scmp.ne.s32.totalorder %s49, %s52
    %p58 = scmp.eq.s32.totalorder %s13, 0
    %p59 = por %p57, %p58
    %p60 = scmp.ne.s32.totalorder %s49, %s52
    %p61 = scmp.eq.s32.totalorder %s18, 1
    %p62 = por %p60, %p61
    %p63 = scmp.ne.s32.totalorder %s52, %s53
    %p64 = scmp.eq.s32.totalorder %s18, 0
    %p65 = por %p63, %p64
    %p66 = scmp.ne.s32.totalorder %s52, %s53
    %p67 = scmp.eq.s32.totalorder %s19, 1
    %p68 = por %p66, %p67
    %p70 = scmp.ne.s32.totalorder %s53, %s69
    %p71 = scmp.eq.s32.totalorder %s19, 0
    %p72 = por %p70, %p71
    %s74 = sadd.s32 %s73, 1
    %p77 = scmp.eq.s32.totalorder %s13, 1
    %p78 = scmp.ne.s32.totalorder %s73, %s75
    %p79 = scmp.eq.s32.totalorder %s13, 0
    %p80 = por %p78, %p79
    %p81 = scmp.ne.s32.totalorder %s73, %s75
    %p82 = scmp.eq.s32.totalorder %s18, 1
    %p83 = por %p81, %p82
    %p84 = scmp.ne.s32.totalorder %s75, %s76
    %p85 = scmp.eq.s32.totalorder %s18, 0
    %p86 = por %p84, %p85
    %p87 = scmp.ne.s32.totalorder %s75, %s76
    %p88 = scmp.eq.s32.totalorder %s19, 1
    %p89 = por %p87, %p88
    %p91 = scmp.ne.s32.totalorder %s76, %s90
    %p92 = scmp.eq.s32.totalorder %s19, 0
    %p93 = por %p91, %p92
    %s95 = sadd.s32 %s94, 1
    %p98 = scmp.eq.s32.totalorder %s13, 1
    %p99 = scmp.ne.s32.totalorder %s94, %s96
    %p100 = scmp.eq.s32.totalorder %s13, 0
    %p101 = por %p99, %p100
    %p102 = scmp.ne.s32.totalorder %s94, %s96
    %p103 = scmp.eq.s32.totalorder %s18, 1
    %p104 = por %p102, %p103
    %p105 = scmp.ne.s32.totalorder %s96, %s97
    %p106 = scmp.eq.s32.totalorder %s18, 0
    %p107 = por %p105, %p106
    %p108 = scmp.ne.s32.totalorder %s96, %s97
    %p109 = scmp.eq.s32.totalorder %s19, 1
    %p110 = por %p108, %p109
    %p112 = scmp.ne.s32.totalorder %s97, %s111
    %p113 = scmp.eq.s32.totalorder %s19, 0
    %p114 = por %p112, %p113
    %s116 = sadd.s32 %s115, 1
    %p119 = scmp.eq.s32.totalorder %s13, 1
    %p120 = scmp.ne.s32.totalorder %s115, %s117
    %p121 = scmp.eq.s32.totalorder %s13, 0
    %p122 = por %p120, %p121
    %p123 = scmp.ne.s32.totalorder %s115, %s117
    %p124 = scmp.eq.s32.totalorder %s18, 1
    %p125 = por %p123, %p124
    %p126 = scmp.ne.s32.totalorder %s117, %s118
    %p127 = scmp.eq.s32.totalorder %s18, 0
    %p128 = por %p126, %p127
    %p129 = scmp.ne.s32.totalorder %s117, %s118
    %p130 = scmp.eq.s32.totalorder %s19, 1
    %p131 = por %p129, %p130
    %p133 = scmp.ne.s32.totalorder %s118, %s132
    %p134 = scmp.eq.s32.totalorder %s19, 0
    %p135 = por %p133, %p134
    %s137 = sadd.s32 %s136, 1
    %p140 = scmp.eq.s32.totalorder %s13, 1
    %p141 = scmp.ne.s32.totalorder %s136, %s138
    %p142 = scmp.eq.s32.totalorder %s13, 0
    %p143 = por %p141, %p142
    %p144 = scmp.ne.s32.totalorder %s136, %s138
    %p145 = scmp.eq.s32.totalorder %s18, 1
    %p146 = por %p144, %p145
    %p147 = scmp.ne.s32.totalorder %s138, %s139
    %p148 = scmp.eq.s32.totalorder %s18, 0
    %p149 = por %p147, %p148
    %p150 = scmp.ne.s32.totalorder %s138, %s139
    %p151 = scmp.eq.s32.totalorder %s19, 1
    %p152 = por %p150, %p151
    %p154 = scmp.ne.s32.totalorder %s139, %s153
    %p155 = scmp.eq.s32.totalorder %s19, 0
    %p156 = por %p154, %p155
    %s157 = ssub.s32 %s13, %s20
    %p158 = scmp.eq.s32.totalorder %s157, 0
    %s160 = sadd.s32 %s159, 1
    %s161 = scalar_select %p158, %s159, %s160
    %p164 = pneg %p158
    %p165 = scmp.eq.s32.totalorder %s13, 1
    %p166 = por %p164, %p165
    %p167 = scmp.ne.s32.totalorder %s159, %s162
    %p168 = scmp.eq.s32.totalorder %s13, 0
    %p169 = por %p167, %p168
    %p170 = scmp.ne.s32.totalorder %s159, %s162
    %p171 = scmp.eq.s32.totalorder %s18, 1
    %p172 = por %p170, %p171
    %p173 = scmp.ne.s32.totalorder %s162, %s163
    %p174 = scmp.eq.s32.totalorder %s18, 0
    %p175 = por %p173, %p174
    %p176 = scmp.ne.s32.totalorder %s162, %s163
    %p177 = scmp.eq.s32.totalorder %s19, 1
    %p178 = por %p176, %p177
    %p180 = scmp.ne.s32.totalorder %s163, %s179
    %p181 = scmp.eq.s32.totalorder %s19, 0
    %p182 = por %p180, %p181
    %s183 = ssub.s32 %s13, %s20
    %p184 = scmp.eq.s32.totalorder %s183, 0
    %s186 = sadd.s32 %s185, 1
    %s187 = scalar_select %p184, %s185, %s186
    %p190 = pneg %p184
    %p191 = scmp.eq.s32.totalorder %s13, 1
    %p192 = por %p190, %p191
    %p193 = scmp.ne.s32.totalorder %s185, %s188
    %p194 = scmp.eq.s32.totalorder %s13, 0
    %p195 = por %p193, %p194
    %p196 = scmp.ne.s32.totalorder %s185, %s188
    %p197 = scmp.eq.s32.totalorder %s18, 1
    %p198 = por %p196, %p197
    %p199 = scmp.ne.s32.totalorder %s188, %s189
    %p200 = scmp.eq.s32.totalorder %s18, 0
    %p201 = por %p199, %p200
    %p202 = scmp.ne.s32.totalorder %s188, %s189
    %p203 = scmp.eq.s32.totalorder %s19, 1
    %p204 = por %p202, %p203
    %p206 = scmp.ne.s32.totalorder %s189, %s205
    %p207 = scmp.eq.s32.totalorder %s19, 0
    %p208 = por %p206, %p207
    %p209 = scmp.le.s32.totalorder 1, %s13
    %p210 = scmp.lt.s32.totalorder %s13, 3
    %p211 = pnand %p209, %p210
    %p212 = pneg %p211
    // Predicated region
    $region9: #{stformer_forward.31} parent=5 // pred_check
      _
    $region10: #{stformer_forward.31} parent=5 // pred_check_branch
      %214 = sbr.rel (%p211) target = $region12
    $region11: #{stformer_forward.31} parent=5 // pred_region
      %s215 = ssub.s32 %s13, 1
      // Predicated region
      $region13: #{stformer_forward.31} parent=11 // pred_check
        %p216 = pneg %p86
      $region14: #{stformer_forward.31} parent=11 // pred_check_branch
        %218 = sbr.rel (%p216) target = $region16
      $region15: #{stformer_forward.31} parent=11 // pred_region
        _
      $region16: #{stformer_forward.31} parent=11 // pred_fallthru
        _
      // Predicated region
      $region17: #{stformer_forward.31} parent=11 // pred_check
        %p219 = pneg %p107
      $region18: #{stformer_forward.31} parent=11 // pred_check_branch
        %221 = sbr.rel (%p219) target = $region20
      $region19: #{stformer_forward.31} parent=11 // pred_region
        _
      $region20: #{stformer_forward.31} parent=11 // pred_fallthru
        _
      // Predicated region
      $region21: #{stformer_forward.31} parent=11 // pred_check
        %p222 = pneg %p128
      $region22: #{stformer_forward.31} parent=11 // pred_check_branch
        %224 = sbr.rel (%p222) target = $region24
      $region23: #{stformer_forward.31} parent=11 // pred_region
        _
      $region24: #{stformer_forward.31} parent=11 // pred_fallthru
        _
      // Predicated region
      $region25: #{stformer_forward.31} parent=11 // pred_check
        %p225 = pneg %p149
      $region26: #{stformer_forward.31} parent=11 // pred_check_branch
        %227 = sbr.rel (%p225) target = $region28
      $region27: #{stformer_forward.31} parent=11 // pred_region
        _
      $region28: #{stformer_forward.31} parent=11 // pred_fallthru
        _
    $region12: #{stformer_forward.31} parent=5 // pred_fallthru
      _
    %p228 = scmp.lt.s32.totalorder %s13, 2
    // Predicated region
    $region29: #{stformer_forward.31} parent=5 // pred_check
      %p229 = pneg %p228
    $region30: #{stformer_forward.31} parent=5 // pred_check_branch
      %231 = sbr.rel (%p229) target = $region32
    $region31: #{stformer_forward.31} parent=5 // pred_region
      // Predicated region
      $region33: #{stformer_forward.31} parent=31 // pred_check
        %p232 = pneg %p33
      $region34: #{stformer_forward.31} parent=31 // pred_check_branch
        %234 = sbr.rel (%p232) target = $region36
      $region35: #{stformer_forward.31} parent=31 // pred_region
        %s235 = smul.u32 4, %s13
        %p236 = scmp.lt.s32.totalorder %s235, 7
        %s237 = scalar_select %p236, %s235, 7
        %s238 = smul.addr %s237, 8
        %s239 = scalar_lea.vmem %s0, %s238
        %s240 = smul.u32 4, %s13
      $region36: #{stformer_forward.31} parent=31 // pred_fallthru
        _
      // Predicated region
      $region37: #{stformer_forward.31} parent=31 // pred_check
        %p241 = pneg %p59
      $region38: #{stformer_forward.31} parent=31 // pred_check_branch
        %243 = sbr.rel (%p241) target = $region40
      $region39: #{stformer_forward.31} parent=31 // pred_region
        %s244 = smul.u32 4, %s13
        %p245 = scmp.lt.s32.totalorder %s244, 7
        %s246 = scalar_select %p245, %s244, 7
        %s247 = smul.addr %s246, 3
        %s248 = smul.addr %s247, 8
        %s249 = scalar_lea.vmem %s1, %s248
        %s250 = smul.u32 4, %s13
      $region40: #{stformer_forward.31} parent=31 // pred_fallthru
        _
      // Predicated region
      $region41: #{stformer_forward.31} parent=31 // pred_check
        %p251 = pneg %p169
      $region42: #{stformer_forward.31} parent=31 // pred_check_branch
        %253 = sbr.rel (%p251) target = $region44
      $region43: #{stformer_forward.31} parent=31 // pred_region
        %s254 = smul.u32 4, %s13
        %p255 = scmp.lt.s32.totalorder %s254, 7
        %s256 = scalar_select %p255, %s254, 7
        %s257 = smul.addr %s256, 8
        %s258 = scalar_lea.vmem %s6, %s257
        %s259 = smul.u32 4, %s13
      $region44: #{stformer_forward.31} parent=31 // pred_fallthru
        _
    $region32: #{stformer_forward.31} parent=5 // pred_fallthru
      _
    %p260 = scmp.le.s32.totalorder 1, %s13
    %p261 = scmp.lt.s32.totalorder %s13, 3
    %p262 = pnand %p260, %p261
    %p263 = pneg %p262
    // Predicated region
    $region45: #{stformer_forward.31} parent=5 // pred_check
      _
    $region46: #{stformer_forward.31} parent=5 // pred_check_branch
      %265 = sbr.rel (%p262) target = $region48
    $region47: #{stformer_forward.31} parent=5 // pred_region
      %s266 = ssub.s32 %s13, 1
      %s267 = smul.u32 4, %s18
      %p268 = scmp.lt.s32.totalorder %s267, 7
      %s269 = scalar_select %p268, %s267, 7
      %s270 = smul.addr %s269, 8
      %s271 = scalar_lea.vmem %s0, %s270
      %p272 = pneg %p39
      %p273 = pneg %p36
      %s274 = smul.u32 4, %s18
      %p275 = scmp.lt.s32.totalorder %s274, 7
      %s276 = scalar_select %p275, %s274, 7
      %s277 = smul.addr %s276, 3
      %s278 = smul.addr %s277, 8
      %s279 = scalar_lea.vmem %s1, %s278
      %p280 = pneg %p65
      %p281 = pneg %p62
      %p282 = pneg %p86
      %p283 = pneg %p83
      %p284 = pneg %p107
      %p285 = pneg %p104
      %p286 = pneg %p128
      %p287 = pneg %p125
      %p288 = pneg %p149
      %p289 = pneg %p146
      %s290 = smul.u32 4, %s18
      %p291 = scmp.lt.s32.totalorder %s290, 7
      %s292 = scalar_select %p291, %s290, 7
      %s293 = smul.addr %s292, 8
      %s294 = scalar_lea.vmem %s6, %s293
      %p295 = pneg %p175
      %p296 = pneg %p172
      %p297 = pneg %p201
      %p298 = pneg %p198
      %s299 = smul.u32 4, %s18
      %p300 = scmp.lt.s32.totalorder %s299, 7
      %s301 = scalar_select %p300, %s299, 7
      %s302 = smul.addr %s301, 8
      %s303 = scalar_lea.vmem %s7, %s302
      %s304 = smul.u32 4, %s18
      %p305 = scmp.lt.s32.totalorder %s304, 7
      %s306 = scalar_select %p305, %s304, 7
      %s307 = smul.addr %s306, 8
      %s308 = scalar_lea.vmem %s0, %s307
      %s309 = smul.u32 4, %s18
      %s310 = smul.u32 4, %s18
      %p311 = scmp.lt.s32.totalorder %s310, 7
      %s312 = scalar_select %p311, %s310, 7
      %s313 = smul.addr %s312, 3
      %s314 = smul.addr %s313, 8
      %s315 = scalar_lea.vmem %s1, %s314
      %s316 = smul.u32 4, %s18
      %s317 = smul.u32 4, %s18
      %p318 = scmp.lt.s32.totalorder %s317, 7
      %s319 = scalar_select %p318, %s317, 7
      %s320 = smul.addr %s319, 8
      %s321 = scalar_lea.vmem %s6, %s320
      %s322 = smul.u32 4, %s18
      %s323 = smul.u32 4, %s18
      %p324 = scmp.lt.s32.totalorder %s323, 7
      %s325 = scalar_select %p324, %s323, 7
      %s326 = smul.addr %s325, 8
      %s327 = scalar_lea.vmem %s7, %s326
      %s328 = smul.u32 4, %s18
      %v329 = vld [vmem:[%s308] sm:$0xff]
      %v330 = vld [vmem:[%s308 + $0x8] sm:$0xff]
      %v331 = vld [vmem:[%s308 + $0x10] sm:$0xff]
      %v332 = vld [vmem:[%s308 + $0x18] sm:$0xff]
      %v333 = vld [vmem:[%s2] sm:$0xff]
      %v334 = vld [vmem:[%s2 + $0x8] sm:$0xff]
      %v335 = vld [vmem:[%s2 + $0x10] sm:$0xff]
      %v336 = vld [vmem:[%s2 + $0x18] sm:$0xff]
      %v337 = vld [vmem:[%s2 + $0x20] sm:$0xff]
      %v338 = vld [vmem:[%s2 + $0x28] sm:$0xff]
      %v339 = vld [vmem:[%s2 + $0x30] sm:$0xff]
      %v340 = vld [vmem:[%s2 + $0x38] sm:$0xff]
      %v341 = vld [vmem:[%s2 + $0x40] sm:$0xff]
      %v342 = vld [vmem:[%s2 + $0x48] sm:$0xff]
      %v343 = vld [vmem:[%s2 + $0x50] sm:$0xff]
      %v344 = vld [vmem:[%s2 + $0x58] sm:$0xff]
      %v345 = vld [vmem:[%s3] sm:$0x7]
      %v347 = vlaneseq
      %v348 = vshrl.u32 %v347, 7
      %v349 = vsub.s32 0, %v348
      %v350 = vrot.slane %v345, %v349
      %v351 = vlaneseq
      %v352 = vshrl.u32 %v351, 7
      %v353 = vsub.s32 1, %v352
      %v354 = vrot.slane %v345, %v353
      %v355 = vlaneseq
      %v356 = vshrl.u32 %v355, 7
      %v357 = vsub.s32 2, %v356
      %v358 = vrot.slane %v345, %v357
      %vm362 = vcmask 261120
      %v364 = vsel %vm362, %v329, 0
      %v367 = vsel %vm362, %v330, 0
      %v370 = vsel %vm362, %v331, 0
      %v373 = vsel %vm362, %v332, 0
      %375 = vmatprep.subr.mxu0 %v334
      %376 = vmatpush1.msra.mxu0 %v333
      %377 = vmatprep.subr.mxu0 %v337
      %378 = vmatpush1.msra.mxu0 %v336
      %379 = vmatprep.subr.mxu0 %v340
      %380 = vmatpush1.msra.mxu0 %v339
      %381 = vmatprep.subr.mxu0 %v343
      %382 = vmatpush1.msra.mxu0 %v342
      %383 = vmatprep.subr.mxu0 0.0
      %384 = vmatpush1.msra.mxu0 0.0
      %385 = vmatprep.subr.mxu0 0.0
      %386 = vmatpush1.msra.mxu0 0.0
      %387 = vmatprep.subr.mxu0 0.0
      %388 = vmatpush1.msra.mxu0 0.0
      %389 = vmatprep.subr.mxu0 0.0
      %390 = vmatpush1.msra.mxu0 0.0
      %391 = vmatprep.subr.mxu0 0.0
      %392 = vmatpush1.msra.mxu0 0.0
      %393 = vmatprep.subr.mxu0 0.0
      %394 = vmatpush1.msra.mxu0 0.0
      %395 = vmatprep.subr.mxu0 0.0
      %396 = vmatpush1.msra.mxu0 0.0
      %397 = vmatprep.subr.mxu0 0.0
      %398 = vmatpush1.msra.mxu0 0.0
      %399 = vmatprep.subr.mxu0 0.0
      %400 = vmatpush1.msra.mxu0 0.0
      %401 = vmatprep.subr.mxu0 0.0
      %402 = vmatpush1.msra.mxu0 0.0
      %403 = vmatprep.subr.mxu0 0.0
      %404 = vmatpush1.msra.mxu0 0.0
      %405 = vmatprep.subr.mxu0 0.0
      %406 = vmatpush1.msra.mxu0 0.0
      %407 = vmatprep.subr.mxu0 0.0
      %408 = vmatpush1.msra.mxu0 0.0
      %409 = vmatprep.subr.mxu0 0.0
      %410 = vmatpush1.msra.mxu0 0.0
      %411 = vmatprep.subr.mxu0 0.0
      %412 = vmatpush1.msra.mxu0 0.0
      %413 = vmatprep.subr.mxu0 0.0
      %414 = vmatpush1.msra.mxu0 0.0
      %415 = vmatprep.subr.mxu0 0.0
      %416 = vmatpush1.msra.mxu0 0.0
      %417 = vmatprep.subr.mxu0 0.0
      %418 = vmatpush1.msra.mxu0 0.0
      %419 = vmatprep.subr.mxu0 0.0
      %420 = vmatpush1.msra.mxu0 0.0
      %421 = vmatprep.subr.mxu0 0.0
      %422 = vmatpush1.msra.mxu0 0.0
      %423 = vmatprep.subr.mxu0 0.0
      %424 = vmatpush1.msra.mxu0 0.0
      %425 = vmatprep.subr.mxu0 0.0
      %426 = vmatpush1.msra.mxu0 0.0
      %427 = vmatprep.subr.mxu0 0.0
      %428 = vmatpush1.msra.mxu0 0.0
      %429 = vmatprep.subr.mxu0 0.0
      %430 = vmatpush1.msra.mxu0 0.0
      %431 = vmatprep.subr.mxu0 0.0
      %432 = vmatpush1.msra.mxu0 0.0
      %433 = vmatprep.subr.mxu0 0.0
      %434 = vmatpush1.msra.mxu0 0.0
      %435 = vmatprep.subr.mxu0 0.0
      %436 = vmatpush1.msra.mxu0 0.0
      %437 = vmatprep.subr.mxu0 0.0
      %438 = vmatpush1.msra.mxu0 0.0
      %439 = vmatprep.mubr.f32.mxu0 0.0
      %440 = vmatmul.mubr.f32.gmra.mrb[0].mxu0 %v364
      %v441 = vpop.f32.mrb[0].mxu0
      %v442 = vadd.f32 %v350, %v441
      %v443 = vpop.f32.mrb[0].mxu0
      %v444 = vadd.f32 %v354, %v443
      %445 = vmatprep.mubr.f32.mxu0 0.0
      %446 = vmatmul.mubr.f32.gmra.mrb[0].mxu0 %v367
      %v447 = vpop.f32.mrb[0].mxu0
      %v448 = vadd.f32 %v350, %v447
      %v449 = vpop.f32.mrb[0].mxu0
      %v450 = vadd.f32 %v354, %v449
      %451 = vmatprep.mubr.f32.mxu0 0.0
      %452 = vmatmul.mubr.f32.gmra.mrb[0].mxu0 %v370
      %v453 = vpop.f32.mrb[0].mxu0
      %v454 = vadd.f32 %v350, %v453
      %v455 = vpop.f32.mrb[0].mxu0
      %v456 = vadd.f32 %v354, %v455
      %457 = vmatprep.mubr.f32.mxu0 0.0
      %458 = vmatmul.mubr.f32.gmra.mrb[0].mxu0 %v373
      %v459 = vpop.f32.mrb[0].mxu0
      %v460 = vadd.f32 %v350, %v459
      %v461 = vpop.f32.mrb[0].mxu0
      %v462 = vadd.f32 %v354, %v461
      %463 = vdwg.mxu0
      %464 = vmatprep.subr.mxu0 0.0
      %465 = vmatpush1.msra.mxu0 %v335
      %466 = vmatprep.subr.mxu0 0.0
      %467 = vmatpush1.msra.mxu0 %v338
      %468 = vmatprep.subr.mxu0 0.0
      %469 = vmatpush1.msra.mxu0 %v341
      %470 = vmatprep.subr.mxu0 0.0
      %471 = vmatpush1.msra.mxu0 %v344
      %472 = vmatprep.subr.mxu0 0.0
      %473 = vmatpush1.msra.mxu0 0.0
      %474 = vmatprep.subr.mxu0 0.0
      %475 = vmatpush1.msra.mxu0 0.0
      %476 = vmatprep.subr.mxu0 0.0
      %477 = vmatpush1.msra.mxu0 0.0
      %478 = vmatprep.subr.mxu0 0.0
      %479 = vmatpush1.msra.mxu0 0.0
      %480 = vmatprep.subr.mxu0 0.0
      %481 = vmatpush1.msra.mxu0 0.0
      %482 = vmatprep.subr.mxu0 0.0
      %483 = vmatpush1.msra.mxu0 0.0
      %484 = vmatprep.subr.mxu0 0.0
      %485 = vmatpush1.msra.mxu0 0.0
      %486 = vmatprep.subr.mxu0 0.0
      %487 = vmatpush1.msra.mxu0 0.0
      %488 = vmatprep.subr.mxu0 0.0
      %489 = vmatpush1.msra.mxu0 0.0
      %490 = vmatprep.subr.mxu0 0.0
      %491 = vmatpush1.msra.mxu0 0.0
      %492 = vmatprep.subr.mxu0 0.0
      %493 = vmatpush1.msra.mxu0 0.0
      %494 = vmatprep.subr.mxu0 0.0
      %495 = vmatpush1.msra.mxu0 0.0
      %496 = vmatprep.subr.mxu0 0.0
      %497 = vmatpush1.msra.mxu0 0.0
      %498 = vmatprep.subr.mxu0 0.0
      %499 = vmatpush1.msra.mxu0 0.0
      %500 = vmatprep.subr.mxu0 0.0
      %501 = vmatpush1.msra.mxu0 0.0
      %502 = vmatprep.subr.mxu0 0.0
      %503 = vmatpush1.msra.mxu0 0.0
      %504 = vmatprep.subr.mxu0 0.0
      %505 = vmatpush1.msra.mxu0 0.0
      %506 = vmatprep.subr.mxu0 0.0
      %507 = vmatpush1.msra.mxu0 0.0
      %508 = vmatprep.subr.mxu0 0.0
      %509 = vmatpush1.msra.mxu0 0.0
      %510 = vmatprep.subr.mxu0 0.0
      %511 = vmatpush1.msra.mxu0 0.0
      %512 = vmatprep.subr.mxu0 0.0
      %513 = vmatpush1.msra.mxu0 0.0
      %514 = vmatprep.subr.mxu0 0.0
      %515 = vmatpush1.msra.mxu0 0.0
      %516 = vmatprep.subr.mxu0 0.0
      %517 = vmatpush1.msra.mxu0 0.0
      %518 = vmatprep.subr.mxu0 0.0
      %519 = vmatpush1.msra.mxu0 0.0
      %520 = vmatprep.subr.mxu0 0.0
      %521 = vmatpush1.msra.mxu0 0.0
      %522 = vmatprep.subr.mxu0 0.0
      %523 = vmatpush1.msra.mxu0 0.0
      %524 = vmatprep.subr.mxu0 0.0
      %525 = vmatpush1.msra.mxu0 0.0
      %526 = vmatprep.subr.mxu0 0.0
      %527 = vmatpush1.msra.mxu0 0.0
      %528 = vmatprep.mubr.f32.mxu0 0.0
      %529 = vmatmul.mubr.f32.gmra.mrb[0].mxu0 %v364
      %v530 = vpop.f32.mrb[0].mxu0
      %v531 = vadd.f32 %v358, %v530
      %v532 = vpop.f32.mrb[0].mxu0
      %533 = vmatprep.mubr.f32.mxu0 0.0
      %534 = vmatmul.mubr.f32.gmra.mrb[0].mxu0 %v367
      %v535 = vpop.f32.mrb[0].mxu0
      %v536 = vadd.f32 %v358, %v535
      %v537 = vpop.f32.mrb[0].mxu0
      %538 = vmatprep.mubr.f32.mxu0 0.0
      %539 = vmatmul.mubr.f32.gmra.mrb[0].mxu0 %v370
      %v540 = vpop.f32.mrb[0].mxu0
      %v541 = vadd.f32 %v358, %v540
      %v542 = vpop.f32.mrb[0].mxu0
      %543 = vmatprep.mubr.f32.mxu0 0.0
      %544 = vmatmul.mubr.f32.gmra.mrb[0].mxu0 %v373
      %v545 = vpop.f32.mrb[0].mxu0
      %v546 = vadd.f32 %v358, %v545
      %v547 = vpop.f32.mrb[0].mxu0
      %548 = vdwg.mxu0
      %v549 = vld [vmem:[%s315] sm:$0xff]
      %v550 = vld [vmem:[%s315 + $0x8] sm:$0xff]
      %v551 = vld [vmem:[%s315 + $0x10] sm:$0xff]
      %v552 = vld [vmem:[%s315 + $0x18] sm:$0xff]
      %v553 = vld [vmem:[%s315 + $0x20] sm:$0xff]
      %v554 = vld [vmem:[%s315 + $0x28] sm:$0xff]
      %v555 = vld [vmem:[%s315 + $0x30] sm:$0xff]
      %v556 = vld [vmem:[%s315 + $0x38] sm:$0xff]
      %v557 = vld [vmem:[%s315 + $0x40] sm:$0xff]
      %v558 = vld [vmem:[%s315 + $0x48] sm:$0xff]
      %v559 = vld [vmem:[%s315 + $0x50] sm:$0xff]
      %v560 = vld [vmem:[%s315 + $0x58] sm:$0xff]
      %v561 = vadd.f32 %v442, %v549
      %v562 = vadd.f32 %v444, %v550
      %v563 = vadd.f32 %v531, %v551
      %v564 = vadd.f32 %v448, %v552
      %v565 = vadd.f32 %v450, %v553
      %v566 = vadd.f32 %v536, %v554
      %v567 = vadd.f32 %v454, %v555
      %v568 = vadd.f32 %v456, %v556
      %v569 = vadd.f32 %v541, %v557
      %v570 = vadd.f32 %v460, %v558
      %v571 = vadd.f32 %v462, %v559
      %v572 = vadd.f32 %v546, %v560
      %v573 = vlaneseq
      %v574 = vshrl.u32 %v573, 7
      %v575 = vadd.s32 %v574, 8
      %v576 = vadd.s32 %v574, 16
      %v577 = vadd.s32 %v574, 24
      %v578 = vcvt.s32.f32 %v574
      %v579 = vcvt.s32.f32 %v575
      %v580 = vcvt.s32.f32 %v576
      %v581 = vcvt.s32.f32 %v577
      %v582 = vlaneseq
      %v583 = vand.u32 %v582, 127
      %v584 = vcvt.s32.f32 %v583
      %v585 = vadd.f32 %v578, 0.5
      %v586 = vadd.f32 %v579, 0.5
      %v587 = vadd.f32 %v580, 0.5
      %v588 = vadd.f32 %v581, 0.5
      %v589 = vmul.f32 %v585, 0.25
      %v590 = vmul.f32 %v586, 0.25
      %v591 = vmul.f32 %v587, 0.25
      %v592 = vmul.f32 %v588, 0.25
      %v593 = vfloor.f32 %v589
      %v594 = vfloor.f32 %v590
      %v595 = vfloor.f32 %v591
      %v596 = vfloor.f32 %v592
      %v597 = vadd.f32 %v584, 0.5
      %v598 = vmul.f32 %v597, 0.25
      %v599 = vfloor.f32 %v598
      %vm600 = vcmp.eq.f32.partialorder %v593, %v599
      %vm601 = vcmp.eq.f32.partialorder %v594, %v599
      %vm602 = vcmp.eq.f32.partialorder %v595, %v599
      %vm603 = vcmp.eq.f32.partialorder %v596, %v599
      %608 = vrot.lane.b32.xlu0 %v561, 32
      %v609 = vpop.permute.xlu0 %608
      %610 = vrot.lane.b32.xlu0 %v564, 32
      %v611 = vpop.permute.xlu0 %610
      %612 = vrot.lane.b32.xlu0 %v567, 32
      %v613 = vpop.permute.xlu0 %612
      %614 = vrot.lane.b32.xlu0 %v570, 32
      %v615 = vpop.permute.xlu0 %614
      %v616 = vsel %vm362, %v561, 0
      %v618 = vsel %vm362, %v564, 0
      %v620 = vsel %vm362, %v567, 0
      %v622 = vsel %vm362, %v570, 0
      %v624 = vsel %vm362, %v609, 0
      %v626 = vsel %vm362, %v611, 0
      %v628 = vsel %vm362, %v613, 0
      %v630 = vsel %vm362, %v615, 0
      %632 = vmatprep.subr.mxu0 0.0
      %633 = vmatpush1.xpose.msra.mxu0 %v624
      %634 = vmatprep.subr.mxu0 0.0
      %635 = vmatpush1.xpose.msra.mxu0 %v626
      %636 = vmatprep.subr.mxu0 0.0
      %637 = vmatpush1.xpose.msra.mxu0 %v628
      %638 = vmatprep.subr.mxu0 0.0
      %639 = vmatpush1.xpose.msra.mxu0 %v630
      %640 = vmatprep.subr.mxu0 0.0
      %641 = vmatpush1.xpose.msra.mxu0 0.0
      %642 = vmatprep.subr.mxu0 0.0
      %643 = vmatpush1.xpose.msra.mxu0 0.0
      %644 = vmatprep.subr.mxu0 0.0
      %645 = vmatpush1.xpose.msra.mxu0 0.0
      %646 = vmatprep.subr.mxu0 0.0
      %647 = vmatpush1.xpose.msra.mxu0 0.0
      %648 = vmatprep.subr.mxu0 0.0
      %649 = vmatpush1.xpose.msra.mxu0 0.0
      %650 = vmatprep.subr.mxu0 0.0
      %651 = vmatpush1.xpose.msra.mxu0 0.0
      %652 = vmatprep.subr.mxu0 0.0
      %653 = vmatpush1.xpose.msra.mxu0 0.0
      %654 = vmatprep.subr.mxu0 0.0
      %655 = vmatpush1.xpose.msra.mxu0 0.0
      %656 = vmatprep.subr.mxu0 0.0
      %657 = vmatpush1.xpose.msra.mxu0 0.0
      %658 = vmatprep.subr.mxu0 0.0
      %659 = vmatpush1.xpose.msra.mxu0 0.0
      %660 = vmatprep.subr.mxu0 0.0
      %661 = vmatpush1.xpose.msra.mxu0 0.0
      %662 = vmatprep.subr.mxu0 0.0
      %663 = vmatpush1.xpose.msra.mxu0 0.0
      %664 = vmatprep.subr.mxu0 0.0
      %665 = vmatpush1.xpose.msra.mxu0 0.0
      %666 = vmatprep.subr.mxu0 0.0
      %667 = vmatpush1.xpose.msra.mxu0 0.0
      %668 = vmatprep.subr.mxu0 0.0
      %669 = vmatpush1.xpose.msra.mxu0 0.0
      %670 = vmatprep.subr.mxu0 0.0
      %671 = vmatpush1.xpose.msra.mxu0 0.0
      %672 = vmatprep.subr.mxu0 0.0
      %673 = vmatpush1.xpose.msra.mxu0 0.0
      %674 = vmatprep.subr.mxu0 0.0
      %675 = vmatpush1.xpose.msra.mxu0 0.0
      %676 = vmatprep.subr.mxu0 0.0
      %677 = vmatpush1.xpose.msra.mxu0 0.0
      %678 = vmatprep.subr.mxu0 0.0
      %679 = vmatpush1.xpose.msra.mxu0 0.0
      %680 = vmatprep.subr.mxu0 0.0
      %681 = vmatpush1.xpose.msra.mxu0 0.0
      %682 = vmatprep.subr.mxu0 0.0
      %683 = vmatpush1.xpose.msra.mxu0 0.0
      %684 = vmatprep.subr.mxu0 0.0
      %685 = vmatpush1.xpose.msra.mxu0 0.0
      %686 = vmatprep.subr.mxu0 0.0
      %687 = vmatpush1.xpose.msra.mxu0 0.0
      %688 = vmatprep.subr.mxu0 0.0
      %689 = vmatpush1.xpose.msra.mxu0 0.0
      %690 = vmatprep.subr.mxu0 0.0
      %691 = vmatpush1.xpose.msra.mxu0 0.0
      %692 = vmatprep.subr.mxu0 0.0
      %693 = vmatpush1.xpose.msra.mxu0 0.0
      %694 = vmatprep.subr.mxu0 0.0
      %695 = vmatpush1.xpose.msra.mxu0 0.0
      %696 = vmatprep.mubr.f32.mxu0 0.0
      %697 = vmatmul.mubr.f32.gmra.mrb[0].mxu0 %v616
      %v698 = vpop.f32.mrb[0].mxu0
      %v699 = vadd.f32 0.0, %v698
      %v700 = vpop.f32.mrb[0].mxu0
      %701 = vmatprep.mubr.f32.mxu0 0.0
      %702 = vmatmul.mubr.f32.gmra.mrb[0].mxu0 %v618
      %v703 = vpop.f32.mrb[0].mxu0
      %v704 = vadd.f32 0.0, %v703
      %v705 = vpop.f32.mrb[0].mxu0
      %706 = vmatprep.mubr.f32.mxu0 0.0
      %707 = vmatmul.mubr.f32.gmra.mrb[0].mxu0 %v620
      %v708 = vpop.f32.mrb[0].mxu0
      %v709 = vadd.f32 0.0, %v708
      %v710 = vpop.f32.mrb[0].mxu0
      %711 = vmatprep.mubr.f32.mxu0 0.0
      %712 = vmatmul.mubr.f32.gmra.mrb[0].mxu0 %v622
      %v713 = vpop.f32.mrb[0].mxu0
      %v714 = vadd.f32 0.0, %v713
      %v715 = vpop.f32.mrb[0].mxu0
      %716 = vdwg.mxu0
      %v717 = vsel %vm600, %v699, -1e+30
      %v718 = vsel %vm601, %v704, -1e+30
      %v719 = vsel %vm602, %v709, -1e+30
      %v720 = vsel %vm603, %v714, -1e+30
      %v721 = vsel %vm362, %v717, -inf
      %722 = vmax.xlane.f32.xlu0 %v721
      %v723 = vpop.xlane.xlu0 %722
      %v724 = vsel %vm362, %v718, -inf
      %725 = vmax.xlane.f32.xlu0 %v724
      %v726 = vpop.xlane.xlu0 %725
      %v727 = vsel %vm362, %v719, -inf
      %728 = vmax.xlane.f32.xlu0 %v727
      %v729 = vpop.xlane.xlu0 %728
      %v730 = vsel %vm362, %v720, -inf
      %731 = vmax.xlane.f32.xlu0 %v730
      %v732 = vpop.xlane.xlu0 %731
      %v733 = vsub.f32 %v717, %v723
      %v734 = vsub.f32 %v718, %v726
      %v735 = vsub.f32 %v719, %v729
      %v736 = vsub.f32 %v720, %v732
      %v737 = vmul.f32 %v733, 1.442695
      %v738 = vpow.pop %v737
      %v739 = vmul.f32 %v734, 1.442695
      %v740 = vpow.pop %v739
      %v741 = vmul.f32 %v735, 1.442695
      %v742 = vpow.pop %v741
      %v743 = vmul.f32 %v736, 1.442695
      %v744 = vpow.pop %v743
      %v745 = vsel %vm362, %v738, 0.0
      %746 = vadd.xlane.f32.xlu0 %v745
      %v747 = vpop.xlane.xlu0 %746
      %v748 = vsel %vm362, %v740, 0.0
      %749 = vadd.xlane.f32.xlu0 %v748
      %v750 = vpop.xlane.xlu0 %749
      %v751 = vsel %vm362, %v742, 0.0
      %752 = vadd.xlane.f32.xlu0 %v751
      %v753 = vpop.xlane.xlu0 %752
      %v754 = vsel %vm362, %v744, 0.0
      %755 = vadd.xlane.f32.xlu0 %v754
      %v756 = vpop.xlane.xlu0 %755
      %v757 = vrcp.pop %v747
      %v758 = vrcp.pop %v750
      %v759 = vrcp.pop %v753
      %v760 = vrcp.pop %v756
      %v761 = vmul.f32 %v738, %v757
      %v762 = vmul.f32 %v740, %v758
      %v763 = vmul.f32 %v742, %v759
      %v764 = vmul.f32 %v744, %v760
      %769 = vrot.lane.b32.xlu0 %v562, 64
      %v770 = vpop.permute.xlu0 %769
      %771 = vrot.lane.b32.xlu0 %v565, 64
      %v772 = vpop.permute.xlu0 %771
      %773 = vrot.lane.b32.xlu0 %v568, 64
      %v774 = vpop.permute.xlu0 %773
      %775 = vrot.lane.b32.xlu0 %v571, 64
      %v776 = vpop.permute.xlu0 %775
      %v782 = vsel %vm362, %v761, 0
      %v785 = vsel %vm362, %v762, 0
      %v788 = vsel %vm362, %v763, 0
      %v791 = vsel %vm362, %v764, 0
      %793 = vmatprep.subr.mxu0 0.0
      %794 = vmatpush1.msra.mxu0 %v770
      %795 = vmatprep.subr.mxu0 0.0
      %796 = vmatpush1.msra.mxu0 %v772
      %797 = vmatprep.subr.mxu0 0.0
      %798 = vmatpush1.msra.mxu0 %v774
      %799 = vmatprep.subr.mxu0 0.0
      %800 = vmatpush1.msra.mxu0 %v776
      %801 = vmatprep.subr.mxu0 0.0
      %802 = vmatpush1.msra.mxu0 0.0
      %803 = vmatprep.subr.mxu0 0.0
      %804 = vmatpush1.msra.mxu0 0.0
      %805 = vmatprep.subr.mxu0 0.0
      %806 = vmatpush1.msra.mxu0 0.0
      %807 = vmatprep.subr.mxu0 0.0
      %808 = vmatpush1.msra.mxu0 0.0
      %809 = vmatprep.subr.mxu0 0.0
      %810 = vmatpush1.msra.mxu0 0.0
      %811 = vmatprep.subr.mxu0 0.0
      %812 = vmatpush1.msra.mxu0 0.0
      %813 = vmatprep.subr.mxu0 0.0
      %814 = vmatpush1.msra.mxu0 0.0
      %815 = vmatprep.subr.mxu0 0.0
      %816 = vmatpush1.msra.mxu0 0.0
      %817 = vmatprep.subr.mxu0 0.0
      %818 = vmatpush1.msra.mxu0 0.0
      %819 = vmatprep.subr.mxu0 0.0
      %820 = vmatpush1.msra.mxu0 0.0
      %821 = vmatprep.subr.mxu0 0.0
      %822 = vmatpush1.msra.mxu0 0.0
      %823 = vmatprep.subr.mxu0 0.0
      %824 = vmatpush1.msra.mxu0 0.0
      %825 = vmatprep.subr.mxu0 0.0
      %826 = vmatpush1.msra.mxu0 0.0
      %827 = vmatprep.subr.mxu0 0.0
      %828 = vmatpush1.msra.mxu0 0.0
      %829 = vmatprep.subr.mxu0 0.0
      %830 = vmatpush1.msra.mxu0 0.0
      %831 = vmatprep.subr.mxu0 0.0
      %832 = vmatpush1.msra.mxu0 0.0
      %833 = vmatprep.subr.mxu0 0.0
      %834 = vmatpush1.msra.mxu0 0.0
      %835 = vmatprep.subr.mxu0 0.0
      %836 = vmatpush1.msra.mxu0 0.0
      %837 = vmatprep.subr.mxu0 0.0
      %838 = vmatpush1.msra.mxu0 0.0
      %839 = vmatprep.subr.mxu0 0.0
      %840 = vmatpush1.msra.mxu0 0.0
      %841 = vmatprep.subr.mxu0 0.0
      %842 = vmatpush1.msra.mxu0 0.0
      %843 = vmatprep.subr.mxu0 0.0
      %844 = vmatpush1.msra.mxu0 0.0
      %845 = vmatprep.subr.mxu0 0.0
      %846 = vmatpush1.msra.mxu0 0.0
      %847 = vmatprep.subr.mxu0 0.0
      %848 = vmatpush1.msra.mxu0 0.0
      %849 = vmatprep.subr.mxu0 0.0
      %850 = vmatpush1.msra.mxu0 0.0
      %851 = vmatprep.subr.mxu0 0.0
      %852 = vmatpush1.msra.mxu0 0.0
      %853 = vmatprep.subr.mxu0 0.0
      %854 = vmatpush1.msra.mxu0 0.0
      %855 = vmatprep.subr.mxu0 0.0
      %856 = vmatpush1.msra.mxu0 0.0
      %857 = vmatprep.mubr.f32.mxu0 0.0
      %858 = vmatmul.mubr.f32.gmra.mrb[0].mxu0 %v782
      %v859 = vpop.f32.mrb[0].mxu0
      %v860 = vadd.f32 0.0, %v859
      %v861 = vpop.f32.mrb[0].mxu0
      %862 = vmatprep.mubr.f32.mxu0 0.0
      %863 = vmatmul.mubr.f32.gmra.mrb[0].mxu0 %v785
      %v864 = vpop.f32.mrb[0].mxu0
      %v865 = vadd.f32 0.0, %v864
      %v866 = vpop.f32.mrb[0].mxu0
      %867 = vmatprep.mubr.f32.mxu0 0.0
      %868 = vmatmul.mubr.f32.gmra.mrb[0].mxu0 %v788
      %v869 = vpop.f32.mrb[0].mxu0
      %v870 = vadd.f32 0.0, %v869
      %v871 = vpop.f32.mrb[0].mxu0
      %872 = vmatprep.mubr.f32.mxu0 0.0
      %873 = vmatmul.mubr.f32.gmra.mrb[0].mxu0 %v791
      %v874 = vpop.f32.mrb[0].mxu0
      %v875 = vadd.f32 0.0, %v874
      %v876 = vpop.f32.mrb[0].mxu0
      %877 = vdwg.mxu0
      %878 = vrot.lane.b32.xlu0 %v561, 96
      %v879 = vpop.permute.xlu0 %878
      %880 = vrot.lane.b32.xlu0 %v564, 96
      %v881 = vpop.permute.xlu0 %880
      %882 = vrot.lane.b32.xlu0 %v567, 96
      %v883 = vpop.permute.xlu0 %882
      %884 = vrot.lane.b32.xlu0 %v570, 96
      %v885 = vpop.permute.xlu0 %884
      %v886 = vsel %vm362, %v879, 0
      %v888 = vsel %vm362, %v881, 0
      %v890 = vsel %vm362, %v883, 0
      %v892 = vsel %vm362, %v885, 0
      %v894 = vsel %vm362, %v562, 0
      %v896 = vsel %vm362, %v565, 0
      %v898 = vsel %vm362, %v568, 0
      %v900 = vsel %vm362, %v571, 0
      %902 = vmatprep.subr.mxu0 0.0
      %903 = vmatpush1.xpose.msra.mxu0 %v894
      %904 = vmatprep.subr.mxu0 0.0
      %905 = vmatpush1.xpose.msra.mxu0 %v896
      %906 = vmatprep.subr.mxu0 0.0
      %907 = vmatpush1.xpose.msra.mxu0 %v898
      %908 = vmatprep.subr.mxu0 0.0
      %909 = vmatpush1.xpose.msra.mxu0 %v900
      %910 = vmatprep.subr.mxu0 0.0
      %911 = vmatpush1.xpose.msra.mxu0 0.0
      %912 = vmatprep.subr.mxu0 0.0
      %913 = vmatpush1.xpose.msra.mxu0 0.0
      %914 = vmatprep.subr.mxu0 0.0
      %915 = vmatpush1.xpose.msra.mxu0 0.0
      %916 = vmatprep.subr.mxu0 0.0
      %917 = vmatpush1.xpose.msra.mxu0 0.0
      %918 = vmatprep.subr.mxu0 0.0
      %919 = vmatpush1.xpose.msra.mxu0 0.0
      %920 = vmatprep.subr.mxu0 0.0
      %921 = vmatpush1.xpose.msra.mxu0 0.0
      %922 = vmatprep.subr.mxu0 0.0
      %923 = vmatpush1.xpose.msra.mxu0 0.0
      %924 = vmatprep.subr.mxu0 0.0
      %925 = vmatpush1.xpose.msra.mxu0 0.0
      %926 = vmatprep.subr.mxu0 0.0
      %927 = vmatpush1.xpose.msra.mxu0 0.0
      %928 = vmatprep.subr.mxu0 0.0
      %929 = vmatpush1.xpose.msra.mxu0 0.0
      %930 = vmatprep.subr.mxu0 0.0
      %931 = vmatpush1.xpose.msra.mxu0 0.0
      %932 = vmatprep.subr.mxu0 0.0
      %933 = vmatpush1.xpose.msra.mxu0 0.0
      %934 = vmatprep.subr.mxu0 0.0
      %935 = vmatpush1.xpose.msra.mxu0 0.0
      %936 = vmatprep.subr.mxu0 0.0
      %937 = vmatpush1.xpose.msra.mxu0 0.0
      %938 = vmatprep.subr.mxu0 0.0
      %939 = vmatpush1.xpose.msra.mxu0 0.0
      %940 = vmatprep.subr.mxu0 0.0
      %941 = vmatpush1.xpose.msra.mxu0 0.0
      %942 = vmatprep.subr.mxu0 0.0
      %943 = vmatpush1.xpose.msra.mxu0 0.0
      %944 = vmatprep.subr.mxu0 0.0
      %945 = vmatpush1.xpose.msra.mxu0 0.0
      %946 = vmatprep.subr.mxu0 0.0
      %947 = vmatpush1.xpose.msra.mxu0 0.0
      %948 = vmatprep.subr.mxu0 0.0
      %949 = vmatpush1.xpose.msra.mxu0 0.0
      %950 = vmatprep.subr.mxu0 0.0
      %951 = vmatpush1.xpose.msra.mxu0 0.0
      %952 = vmatprep.subr.mxu0 0.0
      %953 = vmatpush1.xpose.msra.mxu0 0.0
      %954 = vmatprep.subr.mxu0 0.0
      %955 = vmatpush1.xpose.msra.mxu0 0.0
      %956 = vmatprep.subr.mxu0 0.0
      %957 = vmatpush1.xpose.msra.mxu0 0.0
      %958 = vmatprep.subr.mxu0 0.0
      %959 = vmatpush1.xpose.msra.mxu0 0.0
      %960 = vmatprep.subr.mxu0 0.0
      %961 = vmatpush1.xpose.msra.mxu0 0.0
      %962 = vmatprep.subr.mxu0 0.0
      %963 = vmatpush1.xpose.msra.mxu0 0.0
      %964 = vmatprep.subr.mxu0 0.0
      %965 = vmatpush1.xpose.msra.mxu0 0.0
      %966 = vmatprep.mubr.f32.mxu0 0.0
      %967 = vmatmul.mubr.f32.gmra.mrb[0].mxu0 %v886
      %v968 = vpop.f32.mrb[0].mxu0
      %v969 = vadd.f32 0.0, %v968
      %v970 = vpop.f32.mrb[0].mxu0
      %971 = vmatprep.mubr.f32.mxu0 0.0
      %972 = vmatmul.mubr.f32.gmra.mrb[0].mxu0 %v888
      %v973 = vpop.f32.mrb[0].mxu0
      %v974 = vadd.f32 0.0, %v973
      %v975 = vpop.f32.mrb[0].mxu0
      %976 = vmatprep.mubr.f32.mxu0 0.0
      %977 = vmatmul.mubr.f32.gmra.mrb[0].mxu0 %v890
      %v978 = vpop.f32.mrb[0].mxu0
      %v979 = vadd.f32 0.0, %v978
      %v980 = vpop.f32.mrb[0].mxu0
      %981 = vmatprep.mubr.f32.mxu0 0.0
      %982 = vmatmul.mubr.f32.gmra.mrb[0].mxu0 %v892
      %v983 = vpop.f32.mrb[0].mxu0
      %v984 = vadd.f32 0.0, %v983
      %v985 = vpop.f32.mrb[0].mxu0
      %986 = vdwg.mxu0
      %v987 = vsel %vm600, %v969, -1e+30
      %v988 = vsel %vm601, %v974, -1e+30
      %v989 = vsel %vm602, %v979, -1e+30
      %v990 = vsel %vm603, %v984, -1e+30
      %v991 = vsel %vm362, %v987, -inf
      %992 = vmax.xlane.f32.xlu0 %v991
      %v993 = vpop.xlane.xlu0 %992
      %v994 = vsel %vm362, %v988, -inf
      %995 = vmax.xlane.f32.xlu0 %v994
      %v996 = vpop.xlane.xlu0 %995
      %v997 = vsel %vm362, %v989, -inf
      %998 = vmax.xlane.f32.xlu0 %v997
      %v999 = vpop.xlane.xlu0 %998
      %v1000 = vsel %vm362, %v990, -inf
      %1001 = vmax.xlane.f32.xlu0 %v1000
      %v1002 = vpop.xlane.xlu0 %1001
      %v1003 = vsub.f32 %v987, %v993
      %v1004 = vsub.f32 %v988, %v996
      %v1005 = vsub.f32 %v989, %v999
      %v1006 = vsub.f32 %v990, %v1002
      %v1007 = vmul.f32 %v1003, 1.442695
      %v1008 = vpow.pop %v1007
      %v1009 = vmul.f32 %v1004, 1.442695
      %v1010 = vpow.pop %v1009
      %v1011 = vmul.f32 %v1005, 1.442695
      %v1012 = vpow.pop %v1011
      %v1013 = vmul.f32 %v1006, 1.442695
      %v1014 = vpow.pop %v1013
      %v1015 = vsel %vm362, %v1008, 0.0
      %1016 = vadd.xlane.f32.xlu0 %v1015
      %v1017 = vpop.xlane.xlu0 %1016
      %v1018 = vsel %vm362, %v1010, 0.0
      %1019 = vadd.xlane.f32.xlu0 %v1018
      %v1020 = vpop.xlane.xlu0 %1019
      %v1021 = vsel %vm362, %v1012, 0.0
      %1022 = vadd.xlane.f32.xlu0 %v1021
      %v1023 = vpop.xlane.xlu0 %1022
      %v1024 = vsel %vm362, %v1014, 0.0
      %1025 = vadd.xlane.f32.xlu0 %v1024
      %v1026 = vpop.xlane.xlu0 %1025
      %v1027 = vrcp.pop %v1017
      %v1028 = vrcp.pop %v1020
      %v1029 = vrcp.pop %v1023
      %v1030 = vrcp.pop %v1026
      %v1031 = vmul.f32 %v1008, %v1027
      %v1032 = vmul.f32 %v1010, %v1028
      %v1033 = vmul.f32 %v1012, %v1029
      %v1034 = vmul.f32 %v1014, %v1030
      %1035 = vrot.lane.b32.xlu0 %v562, 32
      %v1036 = vpop.permute.xlu0 %1035
      %1037 = vrot.lane.b32.xlu0 %v565, 32
      %v1038 = vpop.permute.xlu0 %1037
      %1039 = vrot.lane.b32.xlu0 %v568, 32
      %v1040 = vpop.permute.xlu0 %1039
      %1041 = vrot.lane.b32.xlu0 %v571, 32
      %v1042 = vpop.permute.xlu0 %1041
      %v1048 = vsel %vm362, %v1031, 0
      %v1051 = vsel %vm362, %v1032, 0
      %v1054 = vsel %vm362, %v1033, 0
      %v1057 = vsel %vm362, %v1034, 0
      %1059 = vmatprep.subr.mxu0 0.0
      %1060 = vmatpush1.msra.mxu0 %v1036
      %1061 = vmatprep.subr.mxu0 0.0
      %1062 = vmatpush1.msra.mxu0 %v1038
      %1063 = vmatprep.subr.mxu0 0.0
      %1064 = vmatpush1.msra.mxu0 %v1040
      %1065 = vmatprep.subr.mxu0 0.0
      %1066 = vmatpush1.msra.mxu0 %v1042
      %1067 = vmatprep.subr.mxu0 0.0
      %1068 = vmatpush1.msra.mxu0 0.0
      %1069 = vmatprep.subr.mxu0 0.0
      %1070 = vmatpush1.msra.mxu0 0.0
      %1071 = vmatprep.subr.mxu0 0.0
      %1072 = vmatpush1.msra.mxu0 0.0
      %1073 = vmatprep.subr.mxu0 0.0
      %1074 = vmatpush1.msra.mxu0 0.0
      %1075 = vmatprep.subr.mxu0 0.0
      %1076 = vmatpush1.msra.mxu0 0.0
      %1077 = vmatprep.subr.mxu0 0.0
      %1078 = vmatpush1.msra.mxu0 0.0
      %1079 = vmatprep.subr.mxu0 0.0
      %1080 = vmatpush1.msra.mxu0 0.0
      %1081 = vmatprep.subr.mxu0 0.0
      %1082 = vmatpush1.msra.mxu0 0.0
      %1083 = vmatprep.subr.mxu0 0.0
      %1084 = vmatpush1.msra.mxu0 0.0
      %1085 = vmatprep.subr.mxu0 0.0
      %1086 = vmatpush1.msra.mxu0 0.0
      %1087 = vmatprep.subr.mxu0 0.0
      %1088 = vmatpush1.msra.mxu0 0.0
      %1089 = vmatprep.subr.mxu0 0.0
      %1090 = vmatpush1.msra.mxu0 0.0
      %1091 = vmatprep.subr.mxu0 0.0
      %1092 = vmatpush1.msra.mxu0 0.0
      %1093 = vmatprep.subr.mxu0 0.0
      %1094 = vmatpush1.msra.mxu0 0.0
      %1095 = vmatprep.subr.mxu0 0.0
      %1096 = vmatpush1.msra.mxu0 0.0
      %1097 = vmatprep.subr.mxu0 0.0
      %1098 = vmatpush1.msra.mxu0 0.0
      %1099 = vmatprep.subr.mxu0 0.0
      %1100 = vmatpush1.msra.mxu0 0.0
      %1101 = vmatprep.subr.mxu0 0.0
      %1102 = vmatpush1.msra.mxu0 0.0
      %1103 = vmatprep.subr.mxu0 0.0
      %1104 = vmatpush1.msra.mxu0 0.0
      %1105 = vmatprep.subr.mxu0 0.0
      %1106 = vmatpush1.msra.mxu0 0.0
      %1107 = vmatprep.subr.mxu0 0.0
      %1108 = vmatpush1.msra.mxu0 0.0
      %1109 = vmatprep.subr.mxu0 0.0
      %1110 = vmatpush1.msra.mxu0 0.0
      %1111 = vmatprep.subr.mxu0 0.0
      %1112 = vmatpush1.msra.mxu0 0.0
      %1113 = vmatprep.subr.mxu0 0.0
      %1114 = vmatpush1.msra.mxu0 0.0
      %1115 = vmatprep.subr.mxu0 0.0
      %1116 = vmatpush1.msra.mxu0 0.0
      %1117 = vmatprep.subr.mxu0 0.0
      %1118 = vmatpush1.msra.mxu0 0.0
      %1119 = vmatprep.subr.mxu0 0.0
      %1120 = vmatpush1.msra.mxu0 0.0
      %1121 = vmatprep.subr.mxu0 0.0
      %1122 = vmatpush1.msra.mxu0 0.0
      %1123 = vmatprep.mubr.f32.mxu0 0.0
      %1124 = vmatmul.mubr.f32.gmra.mrb[0].mxu0 %v1048
      %v1125 = vpop.f32.mrb[0].mxu0
      %v1126 = vadd.f32 0.0, %v1125
      %v1127 = vpop.f32.mrb[0].mxu0
      %1128 = vmatprep.mubr.f32.mxu0 0.0
      %1129 = vmatmul.mubr.f32.gmra.mrb[0].mxu0 %v1051
      %v1130 = vpop.f32.mrb[0].mxu0
      %v1131 = vadd.f32 0.0, %v1130
      %v1132 = vpop.f32.mrb[0].mxu0
      %1133 = vmatprep.mubr.f32.mxu0 0.0
      %1134 = vmatmul.mubr.f32.gmra.mrb[0].mxu0 %v1054
      %v1135 = vpop.f32.mrb[0].mxu0
      %v1136 = vadd.f32 0.0, %v1135
      %v1137 = vpop.f32.mrb[0].mxu0
      %1138 = vmatprep.mubr.f32.mxu0 0.0
      %1139 = vmatmul.mubr.f32.gmra.mrb[0].mxu0 %v1057
      %v1140 = vpop.f32.mrb[0].mxu0
      %v1141 = vadd.f32 0.0, %v1140
      %v1142 = vpop.f32.mrb[0].mxu0
      %1143 = vdwg.mxu0
      %1144 = vrot.lane.b32.xlu0 %v561, 64
      %v1145 = vpop.permute.xlu0 %1144
      %1146 = vrot.lane.b32.xlu0 %v564, 64
      %v1147 = vpop.permute.xlu0 %1146
      %1148 = vrot.lane.b32.xlu0 %v567, 64
      %v1149 = vpop.permute.xlu0 %1148
      %1150 = vrot.lane.b32.xlu0 %v570, 64
      %v1151 = vpop.permute.xlu0 %1150
      %1152 = vrot.lane.b32.xlu0 %v562, 96
      %v1153 = vpop.permute.xlu0 %1152
      %1154 = vrot.lane.b32.xlu0 %v565, 96
      %v1155 = vpop.permute.xlu0 %1154
      %1156 = vrot.lane.b32.xlu0 %v568, 96
      %v1157 = vpop.permute.xlu0 %1156
      %1158 = vrot.lane.b32.xlu0 %v571, 96
      %v1159 = vpop.permute.xlu0 %1158
      %v1160 = vsel %vm362, %v1145, 0
      %v1162 = vsel %vm362, %v1147, 0
      %v1164 = vsel %vm362, %v1149, 0
      %v1166 = vsel %vm362, %v1151, 0
      %v1168 = vsel %vm362, %v1153, 0
      %v1170 = vsel %vm362, %v1155, 0
      %v1172 = vsel %vm362, %v1157, 0
      %v1174 = vsel %vm362, %v1159, 0
      %1176 = vmatprep.subr.mxu0 0.0
      %1177 = vmatpush1.xpose.msra.mxu0 %v1168
      %1178 = vmatprep.subr.mxu0 0.0
      %1179 = vmatpush1.xpose.msra.mxu0 %v1170
      %1180 = vmatprep.subr.mxu0 0.0
      %1181 = vmatpush1.xpose.msra.mxu0 %v1172
      %1182 = vmatprep.subr.mxu0 0.0
      %1183 = vmatpush1.xpose.msra.mxu0 %v1174
      %1184 = vmatprep.subr.mxu0 0.0
      %1185 = vmatpush1.xpose.msra.mxu0 0.0
      %1186 = vmatprep.subr.mxu0 0.0
      %1187 = vmatpush1.xpose.msra.mxu0 0.0
      %1188 = vmatprep.subr.mxu0 0.0
      %1189 = vmatpush1.xpose.msra.mxu0 0.0
      %1190 = vmatprep.subr.mxu0 0.0
      %1191 = vmatpush1.xpose.msra.mxu0 0.0
      %1192 = vmatprep.subr.mxu0 0.0
      %1193 = vmatpush1.xpose.msra.mxu0 0.0
      %1194 = vmatprep.subr.mxu0 0.0
      %1195 = vmatpush1.xpose.msra.mxu0 0.0
      %1196 = vmatprep.subr.mxu0 0.0
      %1197 = vmatpush1.xpose.msra.mxu0 0.0
      %1198 = vmatprep.subr.mxu0 0.0
      %1199 = vmatpush1.xpose.msra.mxu0 0.0
      %1200 = vmatprep.subr.mxu0 0.0
      %1201 = vmatpush1.xpose.msra.mxu0 0.0
      %1202 = vmatprep.subr.mxu0 0.0
      %1203 = vmatpush1.xpose.msra.mxu0 0.0
      %1204 = vmatprep.subr.mxu0 0.0
      %1205 = vmatpush1.xpose.msra.mxu0 0.0
      %1206 = vmatprep.subr.mxu0 0.0
      %1207 = vmatpush1.xpose.msra.mxu0 0.0
      %1208 = vmatprep.subr.mxu0 0.0
      %1209 = vmatpush1.xpose.msra.mxu0 0.0
      %1210 = vmatprep.subr.mxu0 0.0
      %1211 = vmatpush1.xpose.msra.mxu0 0.0
      %1212 = vmatprep.subr.mxu0 0.0
      %1213 = vmatpush1.xpose.msra.mxu0 0.0
      %1214 = vmatprep.subr.mxu0 0.0
      %1215 = vmatpush1.xpose.msra.mxu0 0.0
      %1216 = vmatprep.subr.mxu0 0.0
      %1217 = vmatpush1.xpose.msra.mxu0 0.0
      %1218 = vmatprep.subr.mxu0 0.0
      %1219 = vmatpush1.xpose.msra.mxu0 0.0
      %1220 = vmatprep.subr.mxu0 0.0
      %1221 = vmatpush1.xpose.msra.mxu0 0.0
      %1222 = vmatprep.subr.mxu0 0.0
      %1223 = vmatpush1.xpose.msra.mxu0 0.0
      %1224 = vmatprep.subr.mxu0 0.0
      %1225 = vmatpush1.xpose.msra.mxu0 0.0
      %1226 = vmatprep.subr.mxu0 0.0
      %1227 = vmatpush1.xpose.msra.mxu0 0.0
      %1228 = vmatprep.subr.mxu0 0.0
      %1229 = vmatpush1.xpose.msra.mxu0 0.0
      %1230 = vmatprep.subr.mxu0 0.0
      %1231 = vmatpush1.xpose.msra.mxu0 0.0
      %1232 = vmatprep.subr.mxu0 0.0
      %1233 = vmatpush1.xpose.msra.mxu0 0.0
      %1234 = vmatprep.subr.mxu0 0.0
      %1235 = vmatpush1.xpose.msra.mxu0 0.0
      %1236 = vmatprep.subr.mxu0 0.0
      %1237 = vmatpush1.xpose.msra.mxu0 0.0
      %1238 = vmatprep.subr.mxu0 0.0
      %1239 = vmatpush1.xpose.msra.mxu0 0.0
      %1240 = vmatprep.mubr.f32.mxu0 0.0
      %1241 = vmatmul.mubr.f32.gmra.mrb[0].mxu0 %v1160
      %v1242 = vpop.f32.mrb[0].mxu0
      %v1243 = vadd.f32 0.0, %v1242
      %v1244 = vpop.f32.mrb[0].mxu0
      %1245 = vmatprep.mubr.f32.mxu0 0.0
      %1246 = vmatmul.mubr.f32.gmra.mrb[0].mxu0 %v1162
      %v1247 = vpop.f32.mrb[0].mxu0
      %v1248 = vadd.f32 0.0, %v1247
      %v1249 = vpop.f32.mrb[0].mxu0
      %1250 = vmatprep.mubr.f32.mxu0 0.0
      %1251 = vmatmul.mubr.f32.gmra.mrb[0].mxu0 %v1164
      %v1252 = vpop.f32.mrb[0].mxu0
      %v1253 = vadd.f32 0.0, %v1252
      %v1254 = vpop.f32.mrb[0].mxu0
      %1255 = vmatprep.mubr.f32.mxu0 0.0
      %1256 = vmatmul.mubr.f32.gmra.mrb[0].mxu0 %v1166
      %v1257 = vpop.f32.mrb[0].mxu0
      %v1258 = vadd.f32 0.0, %v1257
      %v1259 = vpop.f32.mrb[0].mxu0
      %1260 = vdwg.mxu0
      %v1261 = vsel %vm600, %v1243, -1e+30
      %v1262 = vsel %vm601, %v1248, -1e+30
      %v1263 = vsel %vm602, %v1253, -1e+30
      %v1264 = vsel %vm603, %v1258, -1e+30
      %v1265 = vsel %vm362, %v1261, -inf
      %1266 = vmax.xlane.f32.xlu0 %v1265
      %v1267 = vpop.xlane.xlu0 %1266
      %v1268 = vsel %vm362, %v1262, -inf
      %1269 = vmax.xlane.f32.xlu0 %v1268
      %v1270 = vpop.xlane.xlu0 %1269
      %v1271 = vsel %vm362, %v1263, -inf
      %1272 = vmax.xlane.f32.xlu0 %v1271
      %v1273 = vpop.xlane.xlu0 %1272
      %v1274 = vsel %vm362, %v1264, -inf
      %1275 = vmax.xlane.f32.xlu0 %v1274
      %v1276 = vpop.xlane.xlu0 %1275
      %v1277 = vsub.f32 %v1261, %v1267
      %v1278 = vsub.f32 %v1262, %v1270
      %v1279 = vsub.f32 %v1263, %v1273
      %v1280 = vsub.f32 %v1264, %v1276
      %v1281 = vmul.f32 %v1277, 1.442695
      %v1282 = vpow.pop %v1281
      %v1283 = vmul.f32 %v1278, 1.442695
      %v1284 = vpow.pop %v1283
      %v1285 = vmul.f32 %v1279, 1.442695
      %v1286 = vpow.pop %v1285
      %v1287 = vmul.f32 %v1280, 1.442695
      %v1288 = vpow.pop %v1287
      %v1289 = vsel %vm362, %v1282, 0.0
      %1290 = vadd.xlane.f32.xlu0 %v1289
      %v1291 = vpop.xlane.xlu0 %1290
      %v1292 = vsel %vm362, %v1284, 0.0
      %1293 = vadd.xlane.f32.xlu0 %v1292
      %v1294 = vpop.xlane.xlu0 %1293
      %v1295 = vsel %vm362, %v1286, 0.0
      %1296 = vadd.xlane.f32.xlu0 %v1295
      %v1297 = vpop.xlane.xlu0 %1296
      %v1298 = vsel %vm362, %v1288, 0.0
      %1299 = vadd.xlane.f32.xlu0 %v1298
      %v1300 = vpop.xlane.xlu0 %1299
      %v1301 = vrcp.pop %v1291
      %v1302 = vrcp.pop %v1294
      %v1303 = vrcp.pop %v1297
      %v1304 = vrcp.pop %v1300
      %v1305 = vmul.f32 %v1282, %v1301
      %v1306 = vmul.f32 %v1284, %v1302
      %v1307 = vmul.f32 %v1286, %v1303
      %v1308 = vmul.f32 %v1288, %v1304
      %v1310 = vsel %vm362, %v1305, 0
      %v1313 = vsel %vm362, %v1306, 0
      %v1316 = vsel %vm362, %v1307, 0
      %v1319 = vsel %vm362, %v1308, 0
      %1321 = vmatprep.subr.mxu0 0.0
      %1322 = vmatpush1.msra.mxu0 %v563
      %1323 = vmatprep.subr.mxu0 0.0
      %1324 = vmatpush1.msra.mxu0 %v566
      %1325 = vmatprep.subr.mxu0 0.0
      %1326 = vmatpush1.msra.mxu0 %v569
      %1327 = vmatprep.subr.mxu0 0.0
      %1328 = vmatpush1.msra.mxu0 %v572
      %1329 = vmatprep.subr.mxu0 0.0
      %1330 = vmatpush1.msra.mxu0 0.0
      %1331 = vmatprep.subr.mxu0 0.0
      %1332 = vmatpush1.msra.mxu0 0.0
      %1333 = vmatprep.subr.mxu0 0.0
      %1334 = vmatpush1.msra.mxu0 0.0
      %1335 = vmatprep.subr.mxu0 0.0
      %1336 = vmatpush1.msra.mxu0 0.0
      %1337 = vmatprep.subr.mxu0 0.0
      %1338 = vmatpush1.msra.mxu0 0.0
      %1339 = vmatprep.subr.mxu0 0.0
      %1340 = vmatpush1.msra.mxu0 0.0
      %1341 = vmatprep.subr.mxu0 0.0
      %1342 = vmatpush1.msra.mxu0 0.0
      %1343 = vmatprep.subr.mxu0 0.0
      %1344 = vmatpush1.msra.mxu0 0.0
      %1345 = vmatprep.subr.mxu0 0.0
      %1346 = vmatpush1.msra.mxu0 0.0
      %1347 = vmatprep.subr.mxu0 0.0
      %1348 = vmatpush1.msra.mxu0 0.0
      %1349 = vmatprep.subr.mxu0 0.0
      %1350 = vmatpush1.msra.mxu0 0.0
      %1351 = vmatprep.subr.mxu0 0.0
      %1352 = vmatpush1.msra.mxu0 0.0
      %1353 = vmatprep.subr.mxu0 0.0
      %1354 = vmatpush1.msra.mxu0 0.0
      %1355 = vmatprep.subr.mxu0 0.0
      %1356 = vmatpush1.msra.mxu0 0.0
      %1357 = vmatprep.subr.mxu0 0.0
      %1358 = vmatpush1.msra.mxu0 0.0
      %1359 = vmatprep.subr.mxu0 0.0
      %1360 = vmatpush1.msra.mxu0 0.0
      %1361 = vmatprep.subr.mxu0 0.0
      %1362 = vmatpush1.msra.mxu0 0.0
      %1363 = vmatprep.subr.mxu0 0.0
      %1364 = vmatpush1.msra.mxu0 0.0
      %1365 = vmatprep.subr.mxu0 0.0
      %1366 = vmatpush1.msra.mxu0 0.0
      %1367 = vmatprep.subr.mxu0 0.0
      %1368 = vmatpush1.msra.mxu0 0.0
      %1369 = vmatprep.subr.mxu0 0.0
      %1370 = vmatpush1.msra.mxu0 0.0
      %1371 = vmatprep.subr.mxu0 0.0
      %1372 = vmatpush1.msra.mxu0 0.0
      %1373 = vmatprep.subr.mxu0 0.0
      %1374 = vmatpush1.msra.mxu0 0.0
      %1375 = vmatprep.subr.mxu0 0.0
      %1376 = vmatpush1.msra.mxu0 0.0
      %1377 = vmatprep.subr.mxu0 0.0
      %1378 = vmatpush1.msra.mxu0 0.0
      %1379 = vmatprep.subr.mxu0 0.0
      %1380 = vmatpush1.msra.mxu0 0.0
      %1381 = vmatprep.subr.mxu0 0.0
      %1382 = vmatpush1.msra.mxu0 0.0
      %1383 = vmatprep.subr.mxu0 0.0
      %1384 = vmatpush1.msra.mxu0 0.0
      %1385 = vmatprep.mubr.f32.mxu0 0.0
      %1386 = vmatmul.mubr.f32.gmra.mrb[0].mxu0 %v1310
      %v1387 = vpop.f32.mrb[0].mxu0
      %v1388 = vadd.f32 0.0, %v1387
      %v1389 = vpop.f32.mrb[0].mxu0
      %1390 = vmatprep.mubr.f32.mxu0 0.0
      %1391 = vmatmul.mubr.f32.gmra.mrb[0].mxu0 %v1313
      %v1392 = vpop.f32.mrb[0].mxu0
      %v1393 = vadd.f32 0.0, %v1392
      %v1394 = vpop.f32.mrb[0].mxu0
      %1395 = vmatprep.mubr.f32.mxu0 0.0
      %1396 = vmatmul.mubr.f32.gmra.mrb[0].mxu0 %v1316
      %v1397 = vpop.f32.mrb[0].mxu0
      %v1398 = vadd.f32 0.0, %v1397
      %v1399 = vpop.f32.mrb[0].mxu0
      %1400 = vmatprep.mubr.f32.mxu0 0.0
      %1401 = vmatmul.mubr.f32.gmra.mrb[0].mxu0 %v1319
      %v1402 = vpop.f32.mrb[0].mxu0
      %v1403 = vadd.f32 0.0, %v1402
      %v1404 = vpop.f32.mrb[0].mxu0
      %1405 = vdwg.mxu0
      %1410 = vrot.lane.b32.xlu0 %v1126, 32
      %v1411 = vpop.permute.xlu0 %1410
      %1412 = vrot.lane.b32.xlu0 %v1131, 32
      %v1413 = vpop.permute.xlu0 %1412
      %1414 = vrot.lane.b32.xlu0 %v1136, 32
      %v1415 = vpop.permute.xlu0 %1414
      %1416 = vrot.lane.b32.xlu0 %v1141, 32
      %v1417 = vpop.permute.xlu0 %1416
      %1426 = vrot.lane.b32.xlu0 %v1388, 64
      %v1427 = vpop.permute.xlu0 %1426
      %1428 = vrot.lane.b32.xlu0 %v1393, 64
      %v1429 = vpop.permute.xlu0 %1428
      %1430 = vrot.lane.b32.xlu0 %v1398, 64
      %v1431 = vpop.permute.xlu0 %1430
      %1432 = vrot.lane.b32.xlu0 %v1403, 64
      %v1433 = vpop.permute.xlu0 %1432
      %v1438 = vsel %vm362, %v860, %v1411
      %v1439 = vsel %vm362, %v865, %v1413
      %v1440 = vsel %vm362, %v870, %v1415
      %v1441 = vsel %vm362, %v875, %v1417
      %vm1442 = vcmask 523264
      %v1443 = vsel %vm1442, %v1438, %v1427
      %v1444 = vsel %vm1442, %v1439, %v1429
      %v1445 = vsel %vm1442, %v1440, %v1431
      %v1446 = vsel %vm1442, %v1441, %v1433
      %v1447 = vld [vmem:[%s4] sm:$0xff]
      %v1448 = vld [vmem:[%s4 + $0x8] sm:$0xff]
      %v1449 = vld [vmem:[%s4 + $0x10] sm:$0xff]
      %v1450 = vld [vmem:[%s4 + $0x18] sm:$0xff]
      %v1451 = vld [vmem:[%s4 + $0x20] sm:$0xff]
      %v1452 = vld [vmem:[%s4 + $0x28] sm:$0xff]
      %v1453 = vld [vmem:[%s4 + $0x30] sm:$0xff]
      %v1454 = vld [vmem:[%s4 + $0x38] sm:$0xff]
      %v1455 = vld [vmem:[%s4 + $0x40] sm:$0xff]
      %v1456 = vld [vmem:[%s4 + $0x48] sm:$0xff]
      %v1457 = vld [vmem:[%s4 + $0x50] sm:$0xff]
      %v1458 = vld [vmem:[%s4 + $0x58] sm:$0xff]
      %v1459 = vld [vmem:[%s5] sm:$0x1]
      %v1461 = vlaneseq
      %v1462 = vshrl.u32 %v1461, 7
      %v1463 = vsub.s32 0, %v1462
      %v1464 = vrot.slane %v1459, %v1463
      %vm1466 = vcmask 785408
      %v1468 = vsel %vm1466, %v1443, 0
      %v1471 = vsel %vm1466, %v1444, 0
      %v1474 = vsel %vm1466, %v1445, 0
      %v1477 = vsel %vm1466, %v1446, 0
      %1479 = vmatprep.subr.mxu0 0.0
      %1480 = vmatpush1.msra.mxu0 %v1447
      %1481 = vmatprep.subr.mxu0 0.0
      %1482 = vmatpush1.msra.mxu0 %v1448
      %1483 = vmatprep.subr.mxu0 0.0
      %1484 = vmatpush1.msra.mxu0 %v1449
      %1485 = vmatprep.subr.mxu0 0.0
      %1486 = vmatpush1.msra.mxu0 %v1450
      %1487 = vmatprep.subr.mxu0 0.0
      %1488 = vmatpush1.msra.mxu0 %v1451
      %1489 = vmatprep.subr.mxu0 0.0
      %1490 = vmatpush1.msra.mxu0 %v1452
      %1491 = vmatprep.subr.mxu0 0.0
      %1492 = vmatpush1.msra.mxu0 %v1453
      %1493 = vmatprep.subr.mxu0 0.0
      %1494 = vmatpush1.msra.mxu0 %v1454
      %1495 = vmatprep.subr.mxu0 0.0
      %1496 = vmatpush1.msra.mxu0 %v1455
      %1497 = vmatprep.subr.mxu0 0.0
      %1498 = vmatpush1.msra.mxu0 %v1456
      %1499 = vmatprep.subr.mxu0 0.0
      %1500 = vmatpush1.msra.mxu0 %v1457
      %1501 = vmatprep.subr.mxu0 0.0
      %1502 = vmatpush1.msra.mxu0 %v1458
      %1503 = vmatprep.subr.mxu0 0.0
      %1504 = vmatpush1.msra.mxu0 0.0
      %1505 = vmatprep.subr.mxu0 0.0
      %1506 = vmatpush1.msra.mxu0 0.0
      %1507 = vmatprep.subr.mxu0 0.0
      %1508 = vmatpush1.msra.mxu0 0.0
      %1509 = vmatprep.subr.mxu0 0.0
      %1510 = vmatpush1.msra.mxu0 0.0
      %1511 = vmatprep.subr.mxu0 0.0
      %1512 = vmatpush1.msra.mxu0 0.0
      %1513 = vmatprep.subr.mxu0 0.0
      %1514 = vmatpush1.msra.mxu0 0.0
      %1515 = vmatprep.subr.mxu0 0.0
      %1516 = vmatpush1.msra.mxu0 0.0
      %1517 = vmatprep.subr.mxu0 0.0
      %1518 = vmatpush1.msra.mxu0 0.0
      %1519 = vmatprep.subr.mxu0 0.0
      %1520 = vmatpush1.msra.mxu0 0.0
      %1521 = vmatprep.subr.mxu0 0.0
      %1522 = vmatpush1.msra.mxu0 0.0
      %1523 = vmatprep.subr.mxu0 0.0
      %1524 = vmatpush1.msra.mxu0 0.0
      %1525 = vmatprep.subr.mxu0 0.0
      %1526 = vmatpush1.msra.mxu0 0.0
      %1527 = vmatprep.subr.mxu0 0.0
      %1528 = vmatpush1.msra.mxu0 0.0
      %1529 = vmatprep.subr.mxu0 0.0
      %1530 = vmatpush1.msra.mxu0 0.0
      %1531 = vmatprep.subr.mxu0 0.0
      %1532 = vmatpush1.msra.mxu0 0.0
      %1533 = vmatprep.subr.mxu0 0.0
      %1534 = vmatpush1.msra.mxu0 0.0
      %1535 = vmatprep.subr.mxu0 0.0
      %1536 = vmatpush1.msra.mxu0 0.0
      %1537 = vmatprep.subr.mxu0 0.0
      %1538 = vmatpush1.msra.mxu0 0.0
      %1539 = vmatprep.subr.mxu0 0.0
      %1540 = vmatpush1.msra.mxu0 0.0
      %1541 = vmatprep.subr.mxu0 0.0
      %1542 = vmatpush1.msra.mxu0 0.0
      %1543 = vmatprep.mubr.f32.mxu0 0.0
      %1544 = vmatmul.mubr.f32.gmra.mrb[0].mxu0 %v1468
      %v1545 = vpop.f32.mrb[0].mxu0
      %v1546 = vadd.f32 %v1464, %v1545
      %v1547 = vpop.f32.mrb[0].mxu0
      %1548 = vmatprep.mubr.f32.mxu0 0.0
      %1549 = vmatmul.mubr.f32.gmra.mrb[0].mxu0 %v1471
      %v1550 = vpop.f32.mrb[0].mxu0
      %v1551 = vadd.f32 %v1464, %v1550
      %v1552 = vpop.f32.mrb[0].mxu0
      %1553 = vmatprep.mubr.f32.mxu0 0.0
      %1554 = vmatmul.mubr.f32.gmra.mrb[0].mxu0 %v1474
      %v1555 = vpop.f32.mrb[0].mxu0
      %v1556 = vadd.f32 %v1464, %v1555
      %v1557 = vpop.f32.mrb[0].mxu0
      %1558 = vmatprep.mubr.f32.mxu0 0.0
      %1559 = vmatmul.mubr.f32.gmra.mrb[0].mxu0 %v1477
      %v1560 = vpop.f32.mrb[0].mxu0
      %v1561 = vadd.f32 %v1464, %v1560
      %v1562 = vpop.f32.mrb[0].mxu0
      %1563 = vdwg.mxu0
      %v1564 = vld [vmem:[%s321] sm:$0xff]
      %v1565 = vld [vmem:[%s321 + $0x8] sm:$0xff]
      %v1566 = vld [vmem:[%s321 + $0x10] sm:$0xff]
      %v1567 = vld [vmem:[%s321 + $0x18] sm:$0xff]
      %v1568 = vadd.f32 %v1546, %v1564
      %v1569 = vadd.f32 %v1551, %v1565
      %v1570 = vadd.f32 %v1556, %v1566
      %v1571 = vadd.f32 %v1561, %v1567
      %1572 = vst.msk [vmem:[%s327] sm:$0xff] %vm362, %v1568
      %1573 = vst.msk [vmem:[%s327 + $0x8] sm:$0xff] %vm362, %v1569
      %1574 = vst.msk [vmem:[%s327 + $0x10] sm:$0xff] %vm362, %v1570
      %1575 = vst.msk [vmem:[%s327 + $0x18] sm:$0xff] %vm362, %v1571
      %s1576 = smul.u32 4, %s18
      %p1577 = scmp.lt.s32.totalorder %s1576, 7
      %s1578 = scalar_select %p1577, %s1576, 7
      %s1579 = smul.addr %s1578, 8
      %s1580 = scalar_lea.vmem %s7, %s1579
      // Predicated region
      $region49: #{stformer_forward.31} parent=47 // pred_check
        %p1581 = pneg %p198
      $region50: #{stformer_forward.31} parent=47 // pred_check_branch
        %1583 = sbr.rel (%p1581) target = $region52
      $region51: #{stformer_forward.31} parent=47 // pred_region
        %s1584 = smul.u32 4, %s18
      $region52: #{stformer_forward.31} parent=47 // pred_fallthru
        _
    $region48: #{stformer_forward.31} parent=5 // pred_fallthru
      _
    %p1585 = scmp.le.s32.totalorder 2, %s13
    // Predicated region
    $region53: #{stformer_forward.31} parent=5 // pred_check
      %p1586 = pneg %p1585
    $region54: #{stformer_forward.31} parent=5 // pred_check_branch
      %1588 = sbr.rel (%p1586) target = $region56
    $region55: #{stformer_forward.31} parent=5 // pred_region
      %s1589 = ssub.s32 %s13, 2
      // Predicated region
      $region57: #{stformer_forward.31} parent=55 // pred_check
        %p1590 = pneg %p204
      $region58: #{stformer_forward.31} parent=55 // pred_check_branch
        %1592 = sbr.rel (%p1590) target = $region60
      $region59: #{stformer_forward.31} parent=55 // pred_region
        %s1593 = smul.u32 4, %s19
        %p1594 = scmp.lt.s32.totalorder %s1593, 7
        %s1595 = scalar_select %p1594, %s1593, 7
        %s1596 = smul.addr %s1595, 8
        %s1597 = scalar_lea.vmem %s7, %s1596
      $region60: #{stformer_forward.31} parent=55 // pred_fallthru
        _
    $region56: #{stformer_forward.31} parent=5 // pred_fallthru
      _
  $region6: #{stformer_forward.31} parent=0 // loop_footer
    %s17 = sadd.s32 1, %s13
  $region7: #{stformer_forward.31} parent=0 // loop_footer_branch
    %12 = sbr.rel target = $region3
  $region8: #{stformer_forward.31} parent=0 // loop_exit
    _

// kernel: stformer_forward.32
$region0: #{stformer_forward.32}
  #allocation0 [shape = 'u32[]', space=smem, size = 0x4, offset = 0x4, fixed_abs, tag = 'smem constant byte address 0x4 - core index']
  #allocation1 [shape = 'u32[144,128]{1,0:T(1,128)}', space=vmem, size = 0x12000, scoped, tag = 'internal scratch']
  %s0 = inlined_call_operand.vmem [shape: f32[64,32], index: 0, kind: input, shape index: {}]
  %s1 = inlined_call_operand.vmem [shape: f32[64,288], index: 1, kind: input, shape index: {}]
  %s2 = inlined_call_operand.vmem [shape: f32[32,288], index: 2, kind: input, shape index: {}]
  %s3 = inlined_call_operand.vmem [shape: f32[1,288], index: 3, kind: input, shape index: {}]
  %s4 = inlined_call_operand.vmem [shape: f32[96,32], index: 4, kind: input, shape index: {}]
  %s5 = inlined_call_operand.vmem [shape: f32[1,32], index: 5, kind: input, shape index: {}]
  %s6 = inlined_call_operand.vmem [shape: f32[64,32], index: 6, kind: output, shape index: {}]
  %s7 = sld [smem:[#allocation0]]
  $region57: #{stformer_forward.32} parent=0
    _
  %s9 = ssub.s32 1, %s7
  %s10 = scalar_select 0, %s9, %s7
  loop: start=0, step=1, limit=4
  $region2: #{stformer_forward.32} parent=0 // loop_pre_header
    _
  $region3: #{stformer_forward.32} parent=0 // loop_header
    %s12 = sphi 0, %s16
    %p13 = scmp.ge.s32.totalorder %s12, 4
    %s22 = sphi 0, %s24
    %s25 = sphi 0, %s22
    %s26 = sphi 0, %s25
    %s42 = sphi 0, %s26
    %s48 = sphi 0, %s50
    %s51 = sphi 0, %s48
    %s52 = sphi 0, %s51
    %s68 = sphi 0, %s52
    %s72 = sphi 0, %s72
    %s74 = sphi 0, %s72
    %s75 = sphi 0, %s74
    %s89 = sphi 0, %s75
    %s93 = sphi 0, %s93
    %s95 = sphi 0, %s93
    %s96 = sphi 0, %s95
    %s110 = sphi 0, %s96
    %s114 = sphi 0, %s114
    %s116 = sphi 0, %s114
    %s117 = sphi 0, %s116
    %s131 = sphi 0, %s117
    %s135 = sphi 0, %s135
    %s137 = sphi 0, %s135
    %s138 = sphi 0, %s137
    %s152 = sphi 0, %s138
    %s158 = sphi 0, %s160
    %s161 = sphi 0, %s158
    %s162 = sphi 0, %s161
    %s178 = sphi 0, %s162
  $region4: #{stformer_forward.32} parent=0 // loop_header_branch
    %15 = sbr.rel (%p13) target = $region8
  $region5: #{stformer_forward.32} parent=0 // loop_body
    %s17 = ssub.s32 %s12, 1
    %s18 = ssub.s32 %s12, 2
    %s19 = sadd.s32 %s12, 1
    %s20 = ssub.s32 %s12, %s19
    %p21 = scmp.eq.s32.totalorder %s20, 0
    %s23 = sadd.s32 %s22, 1
    %s24 = scalar_select %p21, %s22, %s23
    %p27 = pneg %p21
    %p28 = scmp.eq.s32.totalorder %s12, 1
    %p29 = por %p27, %p28
    %p30 = scmp.ne.s32.totalorder %s22, %s25
    %p31 = scmp.eq.s32.totalorder %s12, 0
    %p32 = por %p30, %p31
    %p33 = scmp.ne.s32.totalorder %s22, %s25
    %p34 = scmp.eq.s32.totalorder %s17, 1
    %p35 = por %p33, %p34
    %p36 = scmp.ne.s32.totalorder %s25, %s26
    %p37 = scmp.eq.s32.totalorder %s17, 0
    %p38 = por %p36, %p37
    %p39 = scmp.ne.s32.totalorder %s25, %s26
    %p40 = scmp.eq.s32.totalorder %s18, 1
    %p41 = por %p39, %p40
    %p43 = scmp.ne.s32.totalorder %s26, %s42
    %p44 = scmp.eq.s32.totalorder %s18, 0
    %p45 = por %p43, %p44
    %s46 = ssub.s32 %s12, %s19
    %p47 = scmp.eq.s32.totalorder %s46, 0
    %s49 = sadd.s32 %s48, 1
    %s50 = scalar_select %p47, %s48, %s49
    %p53 = pneg %p47
    %p54 = scmp.eq.s32.totalorder %s12, 1
    %p55 = por %p53, %p54
    %p56 = scmp.ne.s32.totalorder %s48, %s51
    %p57 = scmp.eq.s32.totalorder %s12, 0
    %p58 = por %p56, %p57
    %p59 = scmp.ne.s32.totalorder %s48, %s51
    %p60 = scmp.eq.s32.totalorder %s17, 1
    %p61 = por %p59, %p60
    %p62 = scmp.ne.s32.totalorder %s51, %s52
    %p63 = scmp.eq.s32.totalorder %s17, 0
    %p64 = por %p62, %p63
    %p65 = scmp.ne.s32.totalorder %s51, %s52
    %p66 = scmp.eq.s32.totalorder %s18, 1
    %p67 = por %p65, %p66
    %p69 = scmp.ne.s32.totalorder %s52, %s68
    %p70 = scmp.eq.s32.totalorder %s18, 0
    %p71 = por %p69, %p70
    %s73 = sadd.s32 %s72, 1
    %p76 = scmp.eq.s32.totalorder %s12, 1
    %p77 = scmp.ne.s32.totalorder %s72, %s74
    %p78 = scmp.eq.s32.totalorder %s12, 0
    %p79 = por %p77, %p78
    %p80 = scmp.ne.s32.totalorder %s72, %s74
    %p81 = scmp.eq.s32.totalorder %s17, 1
    %p82 = por %p80, %p81
    %p83 = scmp.ne.s32.totalorder %s74, %s75
    %p84 = scmp.eq.s32.totalorder %s17, 0
    %p85 = por %p83, %p84
    %p86 = scmp.ne.s32.totalorder %s74, %s75
    %p87 = scmp.eq.s32.totalorder %s18, 1
    %p88 = por %p86, %p87
    %p90 = scmp.ne.s32.totalorder %s75, %s89
    %p91 = scmp.eq.s32.totalorder %s18, 0
    %p92 = por %p90, %p91
    %s94 = sadd.s32 %s93, 1
    %p97 = scmp.eq.s32.totalorder %s12, 1
    %p98 = scmp.ne.s32.totalorder %s93, %s95
    %p99 = scmp.eq.s32.totalorder %s12, 0
    %p100 = por %p98, %p99
    %p101 = scmp.ne.s32.totalorder %s93, %s95
    %p102 = scmp.eq.s32.totalorder %s17, 1
    %p103 = por %p101, %p102
    %p104 = scmp.ne.s32.totalorder %s95, %s96
    %p105 = scmp.eq.s32.totalorder %s17, 0
    %p106 = por %p104, %p105
    %p107 = scmp.ne.s32.totalorder %s95, %s96
    %p108 = scmp.eq.s32.totalorder %s18, 1
    %p109 = por %p107, %p108
    %p111 = scmp.ne.s32.totalorder %s96, %s110
    %p112 = scmp.eq.s32.totalorder %s18, 0
    %p113 = por %p111, %p112
    %s115 = sadd.s32 %s114, 1
    %p118 = scmp.eq.s32.totalorder %s12, 1
    %p119 = scmp.ne.s32.totalorder %s114, %s116
    %p120 = scmp.eq.s32.totalorder %s12, 0
    %p121 = por %p119, %p120
    %p122 = scmp.ne.s32.totalorder %s114, %s116
    %p123 = scmp.eq.s32.totalorder %s17, 1
    %p124 = por %p122, %p123
    %p125 = scmp.ne.s32.totalorder %s116, %s117
    %p126 = scmp.eq.s32.totalorder %s17, 0
    %p127 = por %p125, %p126
    %p128 = scmp.ne.s32.totalorder %s116, %s117
    %p129 = scmp.eq.s32.totalorder %s18, 1
    %p130 = por %p128, %p129
    %p132 = scmp.ne.s32.totalorder %s117, %s131
    %p133 = scmp.eq.s32.totalorder %s18, 0
    %p134 = por %p132, %p133
    %s136 = sadd.s32 %s135, 1
    %p139 = scmp.eq.s32.totalorder %s12, 1
    %p140 = scmp.ne.s32.totalorder %s135, %s137
    %p141 = scmp.eq.s32.totalorder %s12, 0
    %p142 = por %p140, %p141
    %p143 = scmp.ne.s32.totalorder %s135, %s137
    %p144 = scmp.eq.s32.totalorder %s17, 1
    %p145 = por %p143, %p144
    %p146 = scmp.ne.s32.totalorder %s137, %s138
    %p147 = scmp.eq.s32.totalorder %s17, 0
    %p148 = por %p146, %p147
    %p149 = scmp.ne.s32.totalorder %s137, %s138
    %p150 = scmp.eq.s32.totalorder %s18, 1
    %p151 = por %p149, %p150
    %p153 = scmp.ne.s32.totalorder %s138, %s152
    %p154 = scmp.eq.s32.totalorder %s18, 0
    %p155 = por %p153, %p154
    %s156 = ssub.s32 %s12, %s19
    %p157 = scmp.eq.s32.totalorder %s156, 0
    %s159 = sadd.s32 %s158, 1
    %s160 = scalar_select %p157, %s158, %s159
    %p163 = pneg %p157
    %p164 = scmp.eq.s32.totalorder %s12, 1
    %p165 = por %p163, %p164
    %p166 = scmp.ne.s32.totalorder %s158, %s161
    %p167 = scmp.eq.s32.totalorder %s12, 0
    %p168 = por %p166, %p167
    %p169 = scmp.ne.s32.totalorder %s158, %s161
    %p170 = scmp.eq.s32.totalorder %s17, 1
    %p171 = por %p169, %p170
    %p172 = scmp.ne.s32.totalorder %s161, %s162
    %p173 = scmp.eq.s32.totalorder %s17, 0
    %p174 = por %p172, %p173
    %p175 = scmp.ne.s32.totalorder %s161, %s162
    %p176 = scmp.eq.s32.totalorder %s18, 1
    %p177 = por %p175, %p176
    %p179 = scmp.ne.s32.totalorder %s162, %s178
    %p180 = scmp.eq.s32.totalorder %s18, 0
    %p181 = por %p179, %p180
    %p182 = scmp.le.s32.totalorder 1, %s12
    %p183 = scmp.lt.s32.totalorder %s12, 3
    %p184 = pnand %p182, %p183
    %p185 = pneg %p184
    // Predicated region
    $region9: #{stformer_forward.32} parent=5 // pred_check
      _
    $region10: #{stformer_forward.32} parent=5 // pred_check_branch
      %187 = sbr.rel (%p184) target = $region12
    $region11: #{stformer_forward.32} parent=5 // pred_region
      %s188 = ssub.s32 %s12, 1
      // Predicated region
      $region13: #{stformer_forward.32} parent=11 // pred_check
        %p189 = pneg %p85
      $region14: #{stformer_forward.32} parent=11 // pred_check_branch
        %191 = sbr.rel (%p189) target = $region16
      $region15: #{stformer_forward.32} parent=11 // pred_region
        _
      $region16: #{stformer_forward.32} parent=11 // pred_fallthru
        _
      // Predicated region
      $region17: #{stformer_forward.32} parent=11 // pred_check
        %p192 = pneg %p106
      $region18: #{stformer_forward.32} parent=11 // pred_check_branch
        %194 = sbr.rel (%p192) target = $region20
      $region19: #{stformer_forward.32} parent=11 // pred_region
        _
      $region20: #{stformer_forward.32} parent=11 // pred_fallthru
        _
      // Predicated region
      $region21: #{stformer_forward.32} parent=11 // pred_check
        %p195 = pneg %p127
      $region22: #{stformer_forward.32} parent=11 // pred_check_branch
        %197 = sbr.rel (%p195) target = $region24
      $region23: #{stformer_forward.32} parent=11 // pred_region
        _
      $region24: #{stformer_forward.32} parent=11 // pred_fallthru
        _
      // Predicated region
      $region25: #{stformer_forward.32} parent=11 // pred_check
        %p198 = pneg %p148
      $region26: #{stformer_forward.32} parent=11 // pred_check_branch
        %200 = sbr.rel (%p198) target = $region28
      $region27: #{stformer_forward.32} parent=11 // pred_region
        _
      $region28: #{stformer_forward.32} parent=11 // pred_fallthru
        _
    $region12: #{stformer_forward.32} parent=5 // pred_fallthru
      _
    %p201 = scmp.lt.s32.totalorder %s12, 2
    // Predicated region
    $region29: #{stformer_forward.32} parent=5 // pred_check
      %p202 = pneg %p201
    $region30: #{stformer_forward.32} parent=5 // pred_check_branch
      %204 = sbr.rel (%p202) target = $region32
    $region31: #{stformer_forward.32} parent=5 // pred_region
      // Predicated region
      $region33: #{stformer_forward.32} parent=31 // pred_check
        %p205 = pneg %p32
      $region34: #{stformer_forward.32} parent=31 // pred_check_branch
        %207 = sbr.rel (%p205) target = $region36
      $region35: #{stformer_forward.32} parent=31 // pred_region
        %s208 = smul.u32 4, %s12
        %p209 = scmp.lt.s32.totalorder %s208, 7
        %s210 = scalar_select %p209, %s208, 7
        %s211 = smul.addr %s210, 8
        %s212 = scalar_lea.vmem %s0, %s211
        %s213 = smul.u32 4, %s12
      $region36: #{stformer_forward.32} parent=31 // pred_fallthru
        _
      // Predicated region
      $region37: #{stformer_forward.32} parent=31 // pred_check
        %p214 = pneg %p58
      $region38: #{stformer_forward.32} parent=31 // pred_check_branch
        %216 = sbr.rel (%p214) target = $region40
      $region39: #{stformer_forward.32} parent=31 // pred_region
        %s217 = smul.u32 4, %s12
        %p218 = scmp.lt.s32.totalorder %s217, 7
        %s219 = scalar_select %p218, %s217, 7
        %s220 = smul.addr %s219, 3
        %s221 = smul.addr %s220, 8
        %s222 = scalar_lea.vmem %s1, %s221
        %s223 = smul.u32 4, %s12
      $region40: #{stformer_forward.32} parent=31 // pred_fallthru
        _
    $region32: #{stformer_forward.32} parent=5 // pred_fallthru
      _
    %p224 = scmp.le.s32.totalorder 1, %s12
    %p225 = scmp.lt.s32.totalorder %s12, 3
    %p226 = pnand %p224, %p225
    %p227 = pneg %p226
    // Predicated region
    $region41: #{stformer_forward.32} parent=5 // pred_check
      _
    $region42: #{stformer_forward.32} parent=5 // pred_check_branch
      %229 = sbr.rel (%p226) target = $region44
    $region43: #{stformer_forward.32} parent=5 // pred_region
      %s230 = ssub.s32 %s12, 1
      %s231 = smul.u32 4, %s17
      %p232 = scmp.lt.s32.totalorder %s231, 7
      %s233 = scalar_select %p232, %s231, 7
      %s234 = smul.addr %s233, 8
      %s235 = scalar_lea.vmem %s0, %s234
      %p236 = pneg %p38
      %p237 = pneg %p35
      %s238 = smul.u32 4, %s17
      %p239 = scmp.lt.s32.totalorder %s238, 7
      %s240 = scalar_select %p239, %s238, 7
      %s241 = smul.addr %s240, 3
      %s242 = smul.addr %s241, 8
      %s243 = scalar_lea.vmem %s1, %s242
      %p244 = pneg %p64
      %p245 = pneg %p61
      %p246 = pneg %p85
      %p247 = pneg %p82
      %p248 = pneg %p106
      %p249 = pneg %p103
      %p250 = pneg %p127
      %p251 = pneg %p124
      %p252 = pneg %p148
      %p253 = pneg %p145
      %p254 = pneg %p174
      %p255 = pneg %p171
      %s256 = smul.u32 4, %s17
      %p257 = scmp.lt.s32.totalorder %s256, 7
      %s258 = scalar_select %p257, %s256, 7
      %s259 = smul.addr %s258, 8
      %s260 = scalar_lea.vmem %s6, %s259
      %s261 = smul.u32 4, %s17
      %p262 = scmp.lt.s32.totalorder %s261, 7
      %s263 = scalar_select %p262, %s261, 7
      %s264 = smul.addr %s263, 8
      %s265 = scalar_lea.vmem %s0, %s264
      %s266 = smul.u32 4, %s17
      %s267 = smul.u32 4, %s17
      %p268 = scmp.lt.s32.totalorder %s267, 7
      %s269 = scalar_select %p268, %s267, 7
      %s270 = smul.addr %s269, 3
      %s271 = smul.addr %s270, 8
      %s272 = scalar_lea.vmem %s1, %s271
      %s273 = smul.u32 4, %s17
      %s274 = smul.u32 4, %s17
      %p275 = scmp.lt.s32.totalorder %s274, 7
      %s276 = scalar_select %p275, %s274, 7
      %s277 = smul.addr %s276, 8
      %s278 = scalar_lea.vmem %s6, %s277
      %s279 = smul.u32 4, %s17
      %v280 = vld [vmem:[%s265] sm:$0xff]
      %v281 = vld [vmem:[%s265 + $0x8] sm:$0xff]
      %v282 = vld [vmem:[%s265 + $0x10] sm:$0xff]
      %v283 = vld [vmem:[%s265 + $0x18] sm:$0xff]
      %v284 = vld [vmem:[%s2] sm:$0xff]
      %v285 = vld [vmem:[%s2 + $0x8] sm:$0xff]
      %v286 = vld [vmem:[%s2 + $0x10] sm:$0xff]
      %v287 = vld [vmem:[%s2 + $0x18] sm:$0xff]
      %v288 = vld [vmem:[%s2 + $0x20] sm:$0xff]
      %v289 = vld [vmem:[%s2 + $0x28] sm:$0xff]
      %v290 = vld [vmem:[%s2 + $0x30] sm:$0xff]
      %v291 = vld [vmem:[%s2 + $0x38] sm:$0xff]
      %v292 = vld [vmem:[%s2 + $0x40] sm:$0xff]
      %v293 = vld [vmem:[%s2 + $0x48] sm:$0xff]
      %v294 = vld [vmem:[%s2 + $0x50] sm:$0xff]
      %v295 = vld [vmem:[%s2 + $0x58] sm:$0xff]
      %v296 = vld [vmem:[%s3] sm:$0x7]
      %v298 = vlaneseq
      %v299 = vshrl.u32 %v298, 7
      %v300 = vsub.s32 0, %v299
      %v301 = vrot.slane %v296, %v300
      %v302 = vlaneseq
      %v303 = vshrl.u32 %v302, 7
      %v304 = vsub.s32 1, %v303
      %v305 = vrot.slane %v296, %v304
      %v306 = vlaneseq
      %v307 = vshrl.u32 %v306, 7
      %v308 = vsub.s32 2, %v307
      %v309 = vrot.slane %v296, %v308
      %vm313 = vcmask 261120
      %v315 = vsel %vm313, %v280, 0
      %v318 = vsel %vm313, %v281, 0
      %v321 = vsel %vm313, %v282, 0
      %v324 = vsel %vm313, %v283, 0
      %326 = vmatprep.subr.mxu0 %v285
      %327 = vmatpush1.msra.mxu0 %v284
      %328 = vmatprep.subr.mxu0 %v288
      %329 = vmatpush1.msra.mxu0 %v287
      %330 = vmatprep.subr.mxu0 %v291
      %331 = vmatpush1.msra.mxu0 %v290
      %332 = vmatprep.subr.mxu0 %v294
      %333 = vmatpush1.msra.mxu0 %v293
      %334 = vmatprep.subr.mxu0 0.0
      %335 = vmatpush1.msra.mxu0 0.0
      %336 = vmatprep.subr.mxu0 0.0
      %337 = vmatpush1.msra.mxu0 0.0
      %338 = vmatprep.subr.mxu0 0.0
      %339 = vmatpush1.msra.mxu0 0.0
      %340 = vmatprep.subr.mxu0 0.0
      %341 = vmatpush1.msra.mxu0 0.0
      %342 = vmatprep.subr.mxu0 0.0
      %343 = vmatpush1.msra.mxu0 0.0
      %344 = vmatprep.subr.mxu0 0.0
      %345 = vmatpush1.msra.mxu0 0.0
      %346 = vmatprep.subr.mxu0 0.0
      %347 = vmatpush1.msra.mxu0 0.0
      %348 = vmatprep.subr.mxu0 0.0
      %349 = vmatpush1.msra.mxu0 0.0
      %350 = vmatprep.subr.mxu0 0.0
      %351 = vmatpush1.msra.mxu0 0.0
      %352 = vmatprep.subr.mxu0 0.0
      %353 = vmatpush1.msra.mxu0 0.0
      %354 = vmatprep.subr.mxu0 0.0
      %355 = vmatpush1.msra.mxu0 0.0
      %356 = vmatprep.subr.mxu0 0.0
      %357 = vmatpush1.msra.mxu0 0.0
      %358 = vmatprep.subr.mxu0 0.0
      %359 = vmatpush1.msra.mxu0 0.0
      %360 = vmatprep.subr.mxu0 0.0
      %361 = vmatpush1.msra.mxu0 0.0
      %362 = vmatprep.subr.mxu0 0.0
      %363 = vmatpush1.msra.mxu0 0.0
      %364 = vmatprep.subr.mxu0 0.0
      %365 = vmatpush1.msra.mxu0 0.0
      %366 = vmatprep.subr.mxu0 0.0
      %367 = vmatpush1.msra.mxu0 0.0
      %368 = vmatprep.subr.mxu0 0.0
      %369 = vmatpush1.msra.mxu0 0.0
      %370 = vmatprep.subr.mxu0 0.0
      %371 = vmatpush1.msra.mxu0 0.0
      %372 = vmatprep.subr.mxu0 0.0
      %373 = vmatpush1.msra.mxu0 0.0
      %374 = vmatprep.subr.mxu0 0.0
      %375 = vmatpush1.msra.mxu0 0.0
      %376 = vmatprep.subr.mxu0 0.0
      %377 = vmatpush1.msra.mxu0 0.0
      %378 = vmatprep.subr.mxu0 0.0
      %379 = vmatpush1.msra.mxu0 0.0
      %380 = vmatprep.subr.mxu0 0.0
      %381 = vmatpush1.msra.mxu0 0.0
      %382 = vmatprep.subr.mxu0 0.0
      %383 = vmatpush1.msra.mxu0 0.0
      %384 = vmatprep.subr.mxu0 0.0
      %385 = vmatpush1.msra.mxu0 0.0
      %386 = vmatprep.subr.mxu0 0.0
      %387 = vmatpush1.msra.mxu0 0.0
      %388 = vmatprep.subr.mxu0 0.0
      %389 = vmatpush1.msra.mxu0 0.0
      %390 = vmatprep.mubr.f32.mxu0 0.0
      %391 = vmatmul.mubr.f32.gmra.mrb[0].mxu0 %v315
      %v392 = vpop.f32.mrb[0].mxu0
      %v393 = vadd.f32 %v301, %v392
      %v394 = vpop.f32.mrb[0].mxu0
      %v395 = vadd.f32 %v305, %v394
      %396 = vmatprep.mubr.f32.mxu0 0.0
      %397 = vmatmul.mubr.f32.gmra.mrb[0].mxu0 %v318
      %v398 = vpop.f32.mrb[0].mxu0
      %v399 = vadd.f32 %v301, %v398
      %v400 = vpop.f32.mrb[0].mxu0
      %v401 = vadd.f32 %v305, %v400
      %402 = vmatprep.mubr.f32.mxu0 0.0
      %403 = vmatmul.mubr.f32.gmra.mrb[0].mxu0 %v321
      %v404 = vpop.f32.mrb[0].mxu0
      %v405 = vadd.f32 %v301, %v404
      %v406 = vpop.f32.mrb[0].mxu0
      %v407 = vadd.f32 %v305, %v406
      %408 = vmatprep.mubr.f32.mxu0 0.0
      %409 = vmatmul.mubr.f32.gmra.mrb[0].mxu0 %v324
      %v410 = vpop.f32.mrb[0].mxu0
      %v411 = vadd.f32 %v301, %v410
      %v412 = vpop.f32.mrb[0].mxu0
      %v413 = vadd.f32 %v305, %v412
      %414 = vdwg.mxu0
      %415 = vmatprep.subr.mxu0 0.0
      %416 = vmatpush1.msra.mxu0 %v286
      %417 = vmatprep.subr.mxu0 0.0
      %418 = vmatpush1.msra.mxu0 %v289
      %419 = vmatprep.subr.mxu0 0.0
      %420 = vmatpush1.msra.mxu0 %v292
      %421 = vmatprep.subr.mxu0 0.0
      %422 = vmatpush1.msra.mxu0 %v295
      %423 = vmatprep.subr.mxu0 0.0
      %424 = vmatpush1.msra.mxu0 0.0
      %425 = vmatprep.subr.mxu0 0.0
      %426 = vmatpush1.msra.mxu0 0.0
      %427 = vmatprep.subr.mxu0 0.0
      %428 = vmatpush1.msra.mxu0 0.0
      %429 = vmatprep.subr.mxu0 0.0
      %430 = vmatpush1.msra.mxu0 0.0
      %431 = vmatprep.subr.mxu0 0.0
      %432 = vmatpush1.msra.mxu0 0.0
      %433 = vmatprep.subr.mxu0 0.0
      %434 = vmatpush1.msra.mxu0 0.0
      %435 = vmatprep.subr.mxu0 0.0
      %436 = vmatpush1.msra.mxu0 0.0
      %437 = vmatprep.subr.mxu0 0.0
      %438 = vmatpush1.msra.mxu0 0.0
      %439 = vmatprep.subr.mxu0 0.0
      %440 = vmatpush1.msra.mxu0 0.0
      %441 = vmatprep.subr.mxu0 0.0
      %442 = vmatpush1.msra.mxu0 0.0
      %443 = vmatprep.subr.mxu0 0.0
      %444 = vmatpush1.msra.mxu0 0.0
      %445 = vmatprep.subr.mxu0 0.0
      %446 = vmatpush1.msra.mxu0 0.0
      %447 = vmatprep.subr.mxu0 0.0
      %448 = vmatpush1.msra.mxu0 0.0
      %449 = vmatprep.subr.mxu0 0.0
      %450 = vmatpush1.msra.mxu0 0.0
      %451 = vmatprep.subr.mxu0 0.0
      %452 = vmatpush1.msra.mxu0 0.0
      %453 = vmatprep.subr.mxu0 0.0
      %454 = vmatpush1.msra.mxu0 0.0
      %455 = vmatprep.subr.mxu0 0.0
      %456 = vmatpush1.msra.mxu0 0.0
      %457 = vmatprep.subr.mxu0 0.0
      %458 = vmatpush1.msra.mxu0 0.0
      %459 = vmatprep.subr.mxu0 0.0
      %460 = vmatpush1.msra.mxu0 0.0
      %461 = vmatprep.subr.mxu0 0.0
      %462 = vmatpush1.msra.mxu0 0.0
      %463 = vmatprep.subr.mxu0 0.0
      %464 = vmatpush1.msra.mxu0 0.0
      %465 = vmatprep.subr.mxu0 0.0
      %466 = vmatpush1.msra.mxu0 0.0
      %467 = vmatprep.subr.mxu0 0.0
      %468 = vmatpush1.msra.mxu0 0.0
      %469 = vmatprep.subr.mxu0 0.0
      %470 = vmatpush1.msra.mxu0 0.0
      %471 = vmatprep.subr.mxu0 0.0
      %472 = vmatpush1.msra.mxu0 0.0
      %473 = vmatprep.subr.mxu0 0.0
      %474 = vmatpush1.msra.mxu0 0.0
      %475 = vmatprep.subr.mxu0 0.0
      %476 = vmatpush1.msra.mxu0 0.0
      %477 = vmatprep.subr.mxu0 0.0
      %478 = vmatpush1.msra.mxu0 0.0
      %479 = vmatprep.mubr.f32.mxu0 0.0
      %480 = vmatmul.mubr.f32.gmra.mrb[0].mxu0 %v315
      %v481 = vpop.f32.mrb[0].mxu0
      %v482 = vadd.f32 %v309, %v481
      %v483 = vpop.f32.mrb[0].mxu0
      %484 = vmatprep.mubr.f32.mxu0 0.0
      %485 = vmatmul.mubr.f32.gmra.mrb[0].mxu0 %v318
      %v486 = vpop.f32.mrb[0].mxu0
      %v487 = vadd.f32 %v309, %v486
      %v488 = vpop.f32.mrb[0].mxu0
      %489 = vmatprep.mubr.f32.mxu0 0.0
      %490 = vmatmul.mubr.f32.gmra.mrb[0].mxu0 %v321
      %v491 = vpop.f32.mrb[0].mxu0
      %v492 = vadd.f32 %v309, %v491
      %v493 = vpop.f32.mrb[0].mxu0
      %494 = vmatprep.mubr.f32.mxu0 0.0
      %495 = vmatmul.mubr.f32.gmra.mrb[0].mxu0 %v324
      %v496 = vpop.f32.mrb[0].mxu0
      %v497 = vadd.f32 %v309, %v496
      %v498 = vpop.f32.mrb[0].mxu0
      %499 = vdwg.mxu0
      %v500 = vld [vmem:[%s272] sm:$0xff]
      %v501 = vld [vmem:[%s272 + $0x8] sm:$0xff]
      %v502 = vld [vmem:[%s272 + $0x10] sm:$0xff]
      %v503 = vld [vmem:[%s272 + $0x18] sm:$0xff]
      %v504 = vld [vmem:[%s272 + $0x20] sm:$0xff]
      %v505 = vld [vmem:[%s272 + $0x28] sm:$0xff]
      %v506 = vld [vmem:[%s272 + $0x30] sm:$0xff]
      %v507 = vld [vmem:[%s272 + $0x38] sm:$0xff]
      %v508 = vld [vmem:[%s272 + $0x40] sm:$0xff]
      %v509 = vld [vmem:[%s272 + $0x48] sm:$0xff]
      %v510 = vld [vmem:[%s272 + $0x50] sm:$0xff]
      %v511 = vld [vmem:[%s272 + $0x58] sm:$0xff]
      %v512 = vadd.f32 %v393, %v500
      %v513 = vadd.f32 %v395, %v501
      %v514 = vadd.f32 %v482, %v502
      %v515 = vadd.f32 %v399, %v503
      %v516 = vadd.f32 %v401, %v504
      %v517 = vadd.f32 %v487, %v505
      %v518 = vadd.f32 %v405, %v506
      %v519 = vadd.f32 %v407, %v507
      %v520 = vadd.f32 %v492, %v508
      %v521 = vadd.f32 %v411, %v509
      %v522 = vadd.f32 %v413, %v510
      %v523 = vadd.f32 %v497, %v511
      %v524 = vlaneseq
      %v525 = vshrl.u32 %v524, 7
      %v526 = vadd.s32 %v525, 8
      %v527 = vadd.s32 %v525, 16
      %v528 = vadd.s32 %v525, 24
      %v529 = vcvt.s32.f32 %v525
      %v530 = vcvt.s32.f32 %v526
      %v531 = vcvt.s32.f32 %v527
      %v532 = vcvt.s32.f32 %v528
      %v533 = vlaneseq
      %v534 = vand.u32 %v533, 127
      %v535 = vcvt.s32.f32 %v534
      %v536 = vadd.f32 %v529, 0.5
      %v537 = vadd.f32 %v530, 0.5
      %v538 = vadd.f32 %v531, 0.5
      %v539 = vadd.f32 %v532, 0.5
      %v540 = vmul.f32 %v536, 0.125
      %v541 = vmul.f32 %v537, 0.125
      %v542 = vmul.f32 %v538, 0.125
      %v543 = vmul.f32 %v539, 0.125
      %v544 = vfloor.f32 %v540
      %v545 = vfloor.f32 %v541
      %v546 = vfloor.f32 %v542
      %v547 = vfloor.f32 %v543
      %v548 = vadd.f32 %v535, 0.5
      %v549 = vmul.f32 %v548, 0.125
      %v550 = vfloor.f32 %v549
      %vm551 = vcmp.eq.f32.partialorder %v544, %v550
      %vm552 = vcmp.eq.f32.partialorder %v545, %v550
      %vm553 = vcmp.eq.f32.partialorder %v546, %v550
      %vm554 = vcmp.eq.f32.partialorder %v547, %v550
      %559 = vrot.lane.b32.xlu0 %v512, 32
      %v560 = vpop.permute.xlu0 %559
      %561 = vrot.lane.b32.xlu0 %v515, 32
      %v562 = vpop.permute.xlu0 %561
      %563 = vrot.lane.b32.xlu0 %v518, 32
      %v564 = vpop.permute.xlu0 %563
      %565 = vrot.lane.b32.xlu0 %v521, 32
      %v566 = vpop.permute.xlu0 %565
      %v567 = vsel %vm313, %v512, 0
      %v569 = vsel %vm313, %v515, 0
      %v571 = vsel %vm313, %v518, 0
      %v573 = vsel %vm313, %v521, 0
      %v575 = vsel %vm313, %v560, 0
      %v577 = vsel %vm313, %v562, 0
      %v579 = vsel %vm313, %v564, 0
      %v581 = vsel %vm313, %v566, 0
      %583 = vmatprep.subr.mxu0 0.0
      %584 = vmatpush1.xpose.msra.mxu0 %v575
      %585 = vmatprep.subr.mxu0 0.0
      %586 = vmatpush1.xpose.msra.mxu0 %v577
      %587 = vmatprep.subr.mxu0 0.0
      %588 = vmatpush1.xpose.msra.mxu0 %v579
      %589 = vmatprep.subr.mxu0 0.0
      %590 = vmatpush1.xpose.msra.mxu0 %v581
      %591 = vmatprep.subr.mxu0 0.0
      %592 = vmatpush1.xpose.msra.mxu0 0.0
      %593 = vmatprep.subr.mxu0 0.0
      %594 = vmatpush1.xpose.msra.mxu0 0.0
      %595 = vmatprep.subr.mxu0 0.0
      %596 = vmatpush1.xpose.msra.mxu0 0.0
      %597 = vmatprep.subr.mxu0 0.0
      %598 = vmatpush1.xpose.msra.mxu0 0.0
      %599 = vmatprep.subr.mxu0 0.0
      %600 = vmatpush1.xpose.msra.mxu0 0.0
      %601 = vmatprep.subr.mxu0 0.0
      %602 = vmatpush1.xpose.msra.mxu0 0.0
      %603 = vmatprep.subr.mxu0 0.0
      %604 = vmatpush1.xpose.msra.mxu0 0.0
      %605 = vmatprep.subr.mxu0 0.0
      %606 = vmatpush1.xpose.msra.mxu0 0.0
      %607 = vmatprep.subr.mxu0 0.0
      %608 = vmatpush1.xpose.msra.mxu0 0.0
      %609 = vmatprep.subr.mxu0 0.0
      %610 = vmatpush1.xpose.msra.mxu0 0.0
      %611 = vmatprep.subr.mxu0 0.0
      %612 = vmatpush1.xpose.msra.mxu0 0.0
      %613 = vmatprep.subr.mxu0 0.0
      %614 = vmatpush1.xpose.msra.mxu0 0.0
      %615 = vmatprep.subr.mxu0 0.0
      %616 = vmatpush1.xpose.msra.mxu0 0.0
      %617 = vmatprep.subr.mxu0 0.0
      %618 = vmatpush1.xpose.msra.mxu0 0.0
      %619 = vmatprep.subr.mxu0 0.0
      %620 = vmatpush1.xpose.msra.mxu0 0.0
      %621 = vmatprep.subr.mxu0 0.0
      %622 = vmatpush1.xpose.msra.mxu0 0.0
      %623 = vmatprep.subr.mxu0 0.0
      %624 = vmatpush1.xpose.msra.mxu0 0.0
      %625 = vmatprep.subr.mxu0 0.0
      %626 = vmatpush1.xpose.msra.mxu0 0.0
      %627 = vmatprep.subr.mxu0 0.0
      %628 = vmatpush1.xpose.msra.mxu0 0.0
      %629 = vmatprep.subr.mxu0 0.0
      %630 = vmatpush1.xpose.msra.mxu0 0.0
      %631 = vmatprep.subr.mxu0 0.0
      %632 = vmatpush1.xpose.msra.mxu0 0.0
      %633 = vmatprep.subr.mxu0 0.0
      %634 = vmatpush1.xpose.msra.mxu0 0.0
      %635 = vmatprep.subr.mxu0 0.0
      %636 = vmatpush1.xpose.msra.mxu0 0.0
      %637 = vmatprep.subr.mxu0 0.0
      %638 = vmatpush1.xpose.msra.mxu0 0.0
      %639 = vmatprep.subr.mxu0 0.0
      %640 = vmatpush1.xpose.msra.mxu0 0.0
      %641 = vmatprep.subr.mxu0 0.0
      %642 = vmatpush1.xpose.msra.mxu0 0.0
      %643 = vmatprep.subr.mxu0 0.0
      %644 = vmatpush1.xpose.msra.mxu0 0.0
      %645 = vmatprep.subr.mxu0 0.0
      %646 = vmatpush1.xpose.msra.mxu0 0.0
      %647 = vmatprep.mubr.f32.mxu0 0.0
      %648 = vmatmul.mubr.f32.gmra.mrb[0].mxu0 %v567
      %v649 = vpop.f32.mrb[0].mxu0
      %v650 = vadd.f32 0.0, %v649
      %v651 = vpop.f32.mrb[0].mxu0
      %652 = vmatprep.mubr.f32.mxu0 0.0
      %653 = vmatmul.mubr.f32.gmra.mrb[0].mxu0 %v569
      %v654 = vpop.f32.mrb[0].mxu0
      %v655 = vadd.f32 0.0, %v654
      %v656 = vpop.f32.mrb[0].mxu0
      %657 = vmatprep.mubr.f32.mxu0 0.0
      %658 = vmatmul.mubr.f32.gmra.mrb[0].mxu0 %v571
      %v659 = vpop.f32.mrb[0].mxu0
      %v660 = vadd.f32 0.0, %v659
      %v661 = vpop.f32.mrb[0].mxu0
      %662 = vmatprep.mubr.f32.mxu0 0.0
      %663 = vmatmul.mubr.f32.gmra.mrb[0].mxu0 %v573
      %v664 = vpop.f32.mrb[0].mxu0
      %v665 = vadd.f32 0.0, %v664
      %v666 = vpop.f32.mrb[0].mxu0
      %667 = vdwg.mxu0
      %v668 = vsel %vm551, %v650, -1e+30
      %v669 = vsel %vm552, %v655, -1e+30
      %v670 = vsel %vm553, %v660, -1e+30
      %v671 = vsel %vm554, %v665, -1e+30
      %v672 = vsel %vm313, %v668, -inf
      %673 = vmax.xlane.f32.xlu0 %v672
      %v674 = vpop.xlane.xlu0 %673
      %v675 = vsel %vm313, %v669, -inf
      %676 = vmax.xlane.f32.xlu0 %v675
      %v677 = vpop.xlane.xlu0 %676
      %v678 = vsel %vm313, %v670, -inf
      %679 = vmax.xlane.f32.xlu0 %v678
      %v680 = vpop.xlane.xlu0 %679
      %v681 = vsel %vm313, %v671, -inf
      %682 = vmax.xlane.f32.xlu0 %v681
      %v683 = vpop.xlane.xlu0 %682
      %v684 = vsub.f32 %v668, %v674
      %v685 = vsub.f32 %v669, %v677
      %v686 = vsub.f32 %v670, %v680
      %v687 = vsub.f32 %v671, %v683
      %v688 = vmul.f32 %v684, 1.442695
      %v689 = vpow.pop %v688
      %v690 = vmul.f32 %v685, 1.442695
      %v691 = vpow.pop %v690
      %v692 = vmul.f32 %v686, 1.442695
      %v693 = vpow.pop %v692
      %v694 = vmul.f32 %v687, 1.442695
      %v695 = vpow.pop %v694
      %v696 = vsel %vm313, %v689, 0.0
      %697 = vadd.xlane.f32.xlu0 %v696
      %v698 = vpop.xlane.xlu0 %697
      %v699 = vsel %vm313, %v691, 0.0
      %700 = vadd.xlane.f32.xlu0 %v699
      %v701 = vpop.xlane.xlu0 %700
      %v702 = vsel %vm313, %v693, 0.0
      %703 = vadd.xlane.f32.xlu0 %v702
      %v704 = vpop.xlane.xlu0 %703
      %v705 = vsel %vm313, %v695, 0.0
      %706 = vadd.xlane.f32.xlu0 %v705
      %v707 = vpop.xlane.xlu0 %706
      %v708 = vrcp.pop %v698
      %v709 = vrcp.pop %v701
      %v710 = vrcp.pop %v704
      %v711 = vrcp.pop %v707
      %v712 = vmul.f32 %v689, %v708
      %v713 = vmul.f32 %v691, %v709
      %v714 = vmul.f32 %v693, %v710
      %v715 = vmul.f32 %v695, %v711
      %720 = vrot.lane.b32.xlu0 %v513, 64
      %v721 = vpop.permute.xlu0 %720
      %722 = vrot.lane.b32.xlu0 %v516, 64
      %v723 = vpop.permute.xlu0 %722
      %724 = vrot.lane.b32.xlu0 %v519, 64
      %v725 = vpop.permute.xlu0 %724
      %726 = vrot.lane.b32.xlu0 %v522, 64
      %v727 = vpop.permute.xlu0 %726
      %v733 = vsel %vm313, %v712, 0
      %v736 = vsel %vm313, %v713, 0
      %v739 = vsel %vm313, %v714, 0
      %v742 = vsel %vm313, %v715, 0
      %744 = vmatprep.subr.mxu0 0.0
      %745 = vmatpush1.msra.mxu0 %v721
      %746 = vmatprep.subr.mxu0 0.0
      %747 = vmatpush1.msra.mxu0 %v723
      %748 = vmatprep.subr.mxu0 0.0
      %749 = vmatpush1.msra.mxu0 %v725
      %750 = vmatprep.subr.mxu0 0.0
      %751 = vmatpush1.msra.mxu0 %v727
      %752 = vmatprep.subr.mxu0 0.0
      %753 = vmatpush1.msra.mxu0 0.0
      %754 = vmatprep.subr.mxu0 0.0
      %755 = vmatpush1.msra.mxu0 0.0
      %756 = vmatprep.subr.mxu0 0.0
      %757 = vmatpush1.msra.mxu0 0.0
      %758 = vmatprep.subr.mxu0 0.0
      %759 = vmatpush1.msra.mxu0 0.0
      %760 = vmatprep.subr.mxu0 0.0
      %761 = vmatpush1.msra.mxu0 0.0
      %762 = vmatprep.subr.mxu0 0.0
      %763 = vmatpush1.msra.mxu0 0.0
      %764 = vmatprep.subr.mxu0 0.0
      %765 = vmatpush1.msra.mxu0 0.0
      %766 = vmatprep.subr.mxu0 0.0
      %767 = vmatpush1.msra.mxu0 0.0
      %768 = vmatprep.subr.mxu0 0.0
      %769 = vmatpush1.msra.mxu0 0.0
      %770 = vmatprep.subr.mxu0 0.0
      %771 = vmatpush1.msra.mxu0 0.0
      %772 = vmatprep.subr.mxu0 0.0
      %773 = vmatpush1.msra.mxu0 0.0
      %774 = vmatprep.subr.mxu0 0.0
      %775 = vmatpush1.msra.mxu0 0.0
      %776 = vmatprep.subr.mxu0 0.0
      %777 = vmatpush1.msra.mxu0 0.0
      %778 = vmatprep.subr.mxu0 0.0
      %779 = vmatpush1.msra.mxu0 0.0
      %780 = vmatprep.subr.mxu0 0.0
      %781 = vmatpush1.msra.mxu0 0.0
      %782 = vmatprep.subr.mxu0 0.0
      %783 = vmatpush1.msra.mxu0 0.0
      %784 = vmatprep.subr.mxu0 0.0
      %785 = vmatpush1.msra.mxu0 0.0
      %786 = vmatprep.subr.mxu0 0.0
      %787 = vmatpush1.msra.mxu0 0.0
      %788 = vmatprep.subr.mxu0 0.0
      %789 = vmatpush1.msra.mxu0 0.0
      %790 = vmatprep.subr.mxu0 0.0
      %791 = vmatpush1.msra.mxu0 0.0
      %792 = vmatprep.subr.mxu0 0.0
      %793 = vmatpush1.msra.mxu0 0.0
      %794 = vmatprep.subr.mxu0 0.0
      %795 = vmatpush1.msra.mxu0 0.0
      %796 = vmatprep.subr.mxu0 0.0
      %797 = vmatpush1.msra.mxu0 0.0
      %798 = vmatprep.subr.mxu0 0.0
      %799 = vmatpush1.msra.mxu0 0.0
      %800 = vmatprep.subr.mxu0 0.0
      %801 = vmatpush1.msra.mxu0 0.0
      %802 = vmatprep.subr.mxu0 0.0
      %803 = vmatpush1.msra.mxu0 0.0
      %804 = vmatprep.subr.mxu0 0.0
      %805 = vmatpush1.msra.mxu0 0.0
      %806 = vmatprep.subr.mxu0 0.0
      %807 = vmatpush1.msra.mxu0 0.0
      %808 = vmatprep.mubr.f32.mxu0 0.0
      %809 = vmatmul.mubr.f32.gmra.mrb[0].mxu0 %v733
      %v810 = vpop.f32.mrb[0].mxu0
      %v811 = vadd.f32 0.0, %v810
      %v812 = vpop.f32.mrb[0].mxu0
      %813 = vmatprep.mubr.f32.mxu0 0.0
      %814 = vmatmul.mubr.f32.gmra.mrb[0].mxu0 %v736
      %v815 = vpop.f32.mrb[0].mxu0
      %v816 = vadd.f32 0.0, %v815
      %v817 = vpop.f32.mrb[0].mxu0
      %818 = vmatprep.mubr.f32.mxu0 0.0
      %819 = vmatmul.mubr.f32.gmra.mrb[0].mxu0 %v739
      %v820 = vpop.f32.mrb[0].mxu0
      %v821 = vadd.f32 0.0, %v820
      %v822 = vpop.f32.mrb[0].mxu0
      %823 = vmatprep.mubr.f32.mxu0 0.0
      %824 = vmatmul.mubr.f32.gmra.mrb[0].mxu0 %v742
      %v825 = vpop.f32.mrb[0].mxu0
      %v826 = vadd.f32 0.0, %v825
      %v827 = vpop.f32.mrb[0].mxu0
      %828 = vdwg.mxu0
      %829 = vrot.lane.b32.xlu0 %v512, 96
      %v830 = vpop.permute.xlu0 %829
      %831 = vrot.lane.b32.xlu0 %v515, 96
      %v832 = vpop.permute.xlu0 %831
      %833 = vrot.lane.b32.xlu0 %v518, 96
      %v834 = vpop.permute.xlu0 %833
      %835 = vrot.lane.b32.xlu0 %v521, 96
      %v836 = vpop.permute.xlu0 %835
      %v837 = vsel %vm313, %v830, 0
      %v839 = vsel %vm313, %v832, 0
      %v841 = vsel %vm313, %v834, 0
      %v843 = vsel %vm313, %v836, 0
      %v845 = vsel %vm313, %v513, 0
      %v847 = vsel %vm313, %v516, 0
      %v849 = vsel %vm313, %v519, 0
      %v851 = vsel %vm313, %v522, 0
      %853 = vmatprep.subr.mxu0 0.0
      %854 = vmatpush1.xpose.msra.mxu0 %v845
      %855 = vmatprep.subr.mxu0 0.0
      %856 = vmatpush1.xpose.msra.mxu0 %v847
      %857 = vmatprep.subr.mxu0 0.0
      %858 = vmatpush1.xpose.msra.mxu0 %v849
      %859 = vmatprep.subr.mxu0 0.0
      %860 = vmatpush1.xpose.msra.mxu0 %v851
      %861 = vmatprep.subr.mxu0 0.0
      %862 = vmatpush1.xpose.msra.mxu0 0.0
      %863 = vmatprep.subr.mxu0 0.0
      %864 = vmatpush1.xpose.msra.mxu0 0.0
      %865 = vmatprep.subr.mxu0 0.0
      %866 = vmatpush1.xpose.msra.mxu0 0.0
      %867 = vmatprep.subr.mxu0 0.0
      %868 = vmatpush1.xpose.msra.mxu0 0.0
      %869 = vmatprep.subr.mxu0 0.0
      %870 = vmatpush1.xpose.msra.mxu0 0.0
      %871 = vmatprep.subr.mxu0 0.0
      %872 = vmatpush1.xpose.msra.mxu0 0.0
      %873 = vmatprep.subr.mxu0 0.0
      %874 = vmatpush1.xpose.msra.mxu0 0.0
      %875 = vmatprep.subr.mxu0 0.0
      %876 = vmatpush1.xpose.msra.mxu0 0.0
      %877 = vmatprep.subr.mxu0 0.0
      %878 = vmatpush1.xpose.msra.mxu0 0.0
      %879 = vmatprep.subr.mxu0 0.0
      %880 = vmatpush1.xpose.msra.mxu0 0.0
      %881 = vmatprep.subr.mxu0 0.0
      %882 = vmatpush1.xpose.msra.mxu0 0.0
      %883 = vmatprep.subr.mxu0 0.0
      %884 = vmatpush1.xpose.msra.mxu0 0.0
      %885 = vmatprep.subr.mxu0 0.0
      %886 = vmatpush1.xpose.msra.mxu0 0.0
      %887 = vmatprep.subr.mxu0 0.0
      %888 = vmatpush1.xpose.msra.mxu0 0.0
      %889 = vmatprep.subr.mxu0 0.0
      %890 = vmatpush1.xpose.msra.mxu0 0.0
      %891 = vmatprep.subr.mxu0 0.0
      %892 = vmatpush1.xpose.msra.mxu0 0.0
      %893 = vmatprep.subr.mxu0 0.0
      %894 = vmatpush1.xpose.msra.mxu0 0.0
      %895 = vmatprep.subr.mxu0 0.0
      %896 = vmatpush1.xpose.msra.mxu0 0.0
      %897 = vmatprep.subr.mxu0 0.0
      %898 = vmatpush1.xpose.msra.mxu0 0.0
      %899 = vmatprep.subr.mxu0 0.0
      %900 = vmatpush1.xpose.msra.mxu0 0.0
      %901 = vmatprep.subr.mxu0 0.0
      %902 = vmatpush1.xpose.msra.mxu0 0.0
      %903 = vmatprep.subr.mxu0 0.0
      %904 = vmatpush1.xpose.msra.mxu0 0.0
      %905 = vmatprep.subr.mxu0 0.0
      %906 = vmatpush1.xpose.msra.mxu0 0.0
      %907 = vmatprep.subr.mxu0 0.0
      %908 = vmatpush1.xpose.msra.mxu0 0.0
      %909 = vmatprep.subr.mxu0 0.0
      %910 = vmatpush1.xpose.msra.mxu0 0.0
      %911 = vmatprep.subr.mxu0 0.0
      %912 = vmatpush1.xpose.msra.mxu0 0.0
      %913 = vmatprep.subr.mxu0 0.0
      %914 = vmatpush1.xpose.msra.mxu0 0.0
      %915 = vmatprep.subr.mxu0 0.0
      %916 = vmatpush1.xpose.msra.mxu0 0.0
      %917 = vmatprep.mubr.f32.mxu0 0.0
      %918 = vmatmul.mubr.f32.gmra.mrb[0].mxu0 %v837
      %v919 = vpop.f32.mrb[0].mxu0
      %v920 = vadd.f32 0.0, %v919
      %v921 = vpop.f32.mrb[0].mxu0
      %922 = vmatprep.mubr.f32.mxu0 0.0
      %923 = vmatmul.mubr.f32.gmra.mrb[0].mxu0 %v839
      %v924 = vpop.f32.mrb[0].mxu0
      %v925 = vadd.f32 0.0, %v924
      %v926 = vpop.f32.mrb[0].mxu0
      %927 = vmatprep.mubr.f32.mxu0 0.0
      %928 = vmatmul.mubr.f32.gmra.mrb[0].mxu0 %v841
      %v929 = vpop.f32.mrb[0].mxu0
      %v930 = vadd.f32 0.0, %v929
      %v931 = vpop.f32.mrb[0].mxu0
      %932 = vmatprep.mubr.f32.mxu0 0.0
      %933 = vmatmul.mubr.f32.gmra.mrb[0].mxu0 %v843
      %v934 = vpop.f32.mrb[0].mxu0
      %v935 = vadd.f32 0.0, %v934
      %v936 = vpop.f32.mrb[0].mxu0
      %937 = vdwg.mxu0
      %v938 = vsel %vm551, %v920, -1e+30
      %v939 = vsel %vm552, %v925, -1e+30
      %v940 = vsel %vm553, %v930, -1e+30
      %v941 = vsel %vm554, %v935, -1e+30
      %v942 = vsel %vm313, %v938, -inf
      %943 = vmax.xlane.f32.xlu0 %v942
      %v944 = vpop.xlane.xlu0 %943
      %v945 = vsel %vm313, %v939, -inf
      %946 = vmax.xlane.f32.xlu0 %v945
      %v947 = vpop.xlane.xlu0 %946
      %v948 = vsel %vm313, %v940, -inf
      %949 = vmax.xlane.f32.xlu0 %v948
      %v950 = vpop.xlane.xlu0 %949
      %v951 = vsel %vm313, %v941, -inf
      %952 = vmax.xlane.f32.xlu0 %v951
      %v953 = vpop.xlane.xlu0 %952
      %v954 = vsub.f32 %v938, %v944
      %v955 = vsub.f32 %v939, %v947
      %v956 = vsub.f32 %v940, %v950
      %v957 = vsub.f32 %v941, %v953
      %v958 = vmul.f32 %v954, 1.442695
      %v959 = vpow.pop %v958
      %v960 = vmul.f32 %v955, 1.442695
      %v961 = vpow.pop %v960
      %v962 = vmul.f32 %v956, 1.442695
      %v963 = vpow.pop %v962
      %v964 = vmul.f32 %v957, 1.442695
      %v965 = vpow.pop %v964
      %v966 = vsel %vm313, %v959, 0.0
      %967 = vadd.xlane.f32.xlu0 %v966
      %v968 = vpop.xlane.xlu0 %967
      %v969 = vsel %vm313, %v961, 0.0
      %970 = vadd.xlane.f32.xlu0 %v969
      %v971 = vpop.xlane.xlu0 %970
      %v972 = vsel %vm313, %v963, 0.0
      %973 = vadd.xlane.f32.xlu0 %v972
      %v974 = vpop.xlane.xlu0 %973
      %v975 = vsel %vm313, %v965, 0.0
      %976 = vadd.xlane.f32.xlu0 %v975
      %v977 = vpop.xlane.xlu0 %976
      %v978 = vrcp.pop %v968
      %v979 = vrcp.pop %v971
      %v980 = vrcp.pop %v974
      %v981 = vrcp.pop %v977
      %v982 = vmul.f32 %v959, %v978
      %v983 = vmul.f32 %v961, %v979
      %v984 = vmul.f32 %v963, %v980
      %v985 = vmul.f32 %v965, %v981
      %986 = vrot.lane.b32.xlu0 %v513, 32
      %v987 = vpop.permute.xlu0 %986
      %988 = vrot.lane.b32.xlu0 %v516, 32
      %v989 = vpop.permute.xlu0 %988
      %990 = vrot.lane.b32.xlu0 %v519, 32
      %v991 = vpop.permute.xlu0 %990
      %992 = vrot.lane.b32.xlu0 %v522, 32
      %v993 = vpop.permute.xlu0 %992
      %v999 = vsel %vm313, %v982, 0
      %v1002 = vsel %vm313, %v983, 0
      %v1005 = vsel %vm313, %v984, 0
      %v1008 = vsel %vm313, %v985, 0
      %1010 = vmatprep.subr.mxu0 0.0
      %1011 = vmatpush1.msra.mxu0 %v987
      %1012 = vmatprep.subr.mxu0 0.0
      %1013 = vmatpush1.msra.mxu0 %v989
      %1014 = vmatprep.subr.mxu0 0.0
      %1015 = vmatpush1.msra.mxu0 %v991
      %1016 = vmatprep.subr.mxu0 0.0
      %1017 = vmatpush1.msra.mxu0 %v993
      %1018 = vmatprep.subr.mxu0 0.0
      %1019 = vmatpush1.msra.mxu0 0.0
      %1020 = vmatprep.subr.mxu0 0.0
      %1021 = vmatpush1.msra.mxu0 0.0
      %1022 = vmatprep.subr.mxu0 0.0
      %1023 = vmatpush1.msra.mxu0 0.0
      %1024 = vmatprep.subr.mxu0 0.0
      %1025 = vmatpush1.msra.mxu0 0.0
      %1026 = vmatprep.subr.mxu0 0.0
      %1027 = vmatpush1.msra.mxu0 0.0
      %1028 = vmatprep.subr.mxu0 0.0
      %1029 = vmatpush1.msra.mxu0 0.0
      %1030 = vmatprep.subr.mxu0 0.0
      %1031 = vmatpush1.msra.mxu0 0.0
      %1032 = vmatprep.subr.mxu0 0.0
      %1033 = vmatpush1.msra.mxu0 0.0
      %1034 = vmatprep.subr.mxu0 0.0
      %1035 = vmatpush1.msra.mxu0 0.0
      %1036 = vmatprep.subr.mxu0 0.0
      %1037 = vmatpush1.msra.mxu0 0.0
      %1038 = vmatprep.subr.mxu0 0.0
      %1039 = vmatpush1.msra.mxu0 0.0
      %1040 = vmatprep.subr.mxu0 0.0
      %1041 = vmatpush1.msra.mxu0 0.0
      %1042 = vmatprep.subr.mxu0 0.0
      %1043 = vmatpush1.msra.mxu0 0.0
      %1044 = vmatprep.subr.mxu0 0.0
      %1045 = vmatpush1.msra.mxu0 0.0
      %1046 = vmatprep.subr.mxu0 0.0
      %1047 = vmatpush1.msra.mxu0 0.0
      %1048 = vmatprep.subr.mxu0 0.0
      %1049 = vmatpush1.msra.mxu0 0.0
      %1050 = vmatprep.subr.mxu0 0.0
      %1051 = vmatpush1.msra.mxu0 0.0
      %1052 = vmatprep.subr.mxu0 0.0
      %1053 = vmatpush1.msra.mxu0 0.0
      %1054 = vmatprep.subr.mxu0 0.0
      %1055 = vmatpush1.msra.mxu0 0.0
      %1056 = vmatprep.subr.mxu0 0.0
      %1057 = vmatpush1.msra.mxu0 0.0
      %1058 = vmatprep.subr.mxu0 0.0
      %1059 = vmatpush1.msra.mxu0 0.0
      %1060 = vmatprep.subr.mxu0 0.0
      %1061 = vmatpush1.msra.mxu0 0.0
      %1062 = vmatprep.subr.mxu0 0.0
      %1063 = vmatpush1.msra.mxu0 0.0
      %1064 = vmatprep.subr.mxu0 0.0
      %1065 = vmatpush1.msra.mxu0 0.0
      %1066 = vmatprep.subr.mxu0 0.0
      %1067 = vmatpush1.msra.mxu0 0.0
      %1068 = vmatprep.subr.mxu0 0.0
      %1069 = vmatpush1.msra.mxu0 0.0
      %1070 = vmatprep.subr.mxu0 0.0
      %1071 = vmatpush1.msra.mxu0 0.0
      %1072 = vmatprep.subr.mxu0 0.0
      %1073 = vmatpush1.msra.mxu0 0.0
      %1074 = vmatprep.mubr.f32.mxu0 0.0
      %1075 = vmatmul.mubr.f32.gmra.mrb[0].mxu0 %v999
      %v1076 = vpop.f32.mrb[0].mxu0
      %v1077 = vadd.f32 0.0, %v1076
      %v1078 = vpop.f32.mrb[0].mxu0
      %1079 = vmatprep.mubr.f32.mxu0 0.0
      %1080 = vmatmul.mubr.f32.gmra.mrb[0].mxu0 %v1002
      %v1081 = vpop.f32.mrb[0].mxu0
      %v1082 = vadd.f32 0.0, %v1081
      %v1083 = vpop.f32.mrb[0].mxu0
      %1084 = vmatprep.mubr.f32.mxu0 0.0
      %1085 = vmatmul.mubr.f32.gmra.mrb[0].mxu0 %v1005
      %v1086 = vpop.f32.mrb[0].mxu0
      %v1087 = vadd.f32 0.0, %v1086
      %v1088 = vpop.f32.mrb[0].mxu0
      %1089 = vmatprep.mubr.f32.mxu0 0.0
      %1090 = vmatmul.mubr.f32.gmra.mrb[0].mxu0 %v1008
      %v1091 = vpop.f32.mrb[0].mxu0
      %v1092 = vadd.f32 0.0, %v1091
      %v1093 = vpop.f32.mrb[0].mxu0
      %1094 = vdwg.mxu0
      %1095 = vrot.lane.b32.xlu0 %v512, 64
      %v1096 = vpop.permute.xlu0 %1095
      %1097 = vrot.lane.b32.xlu0 %v515, 64
      %v1098 = vpop.permute.xlu0 %1097
      %1099 = vrot.lane.b32.xlu0 %v518, 64
      %v1100 = vpop.permute.xlu0 %1099
      %1101 = vrot.lane.b32.xlu0 %v521, 64
      %v1102 = vpop.permute.xlu0 %1101
      %1103 = vrot.lane.b32.xlu0 %v513, 96
      %v1104 = vpop.permute.xlu0 %1103
      %1105 = vrot.lane.b32.xlu0 %v516, 96
      %v1106 = vpop.permute.xlu0 %1105
      %1107 = vrot.lane.b32.xlu0 %v519, 96
      %v1108 = vpop.permute.xlu0 %1107
      %1109 = vrot.lane.b32.xlu0 %v522, 96
      %v1110 = vpop.permute.xlu0 %1109
      %v1111 = vsel %vm313, %v1096, 0
      %v1113 = vsel %vm313, %v1098, 0
      %v1115 = vsel %vm313, %v1100, 0
      %v1117 = vsel %vm313, %v1102, 0
      %v1119 = vsel %vm313, %v1104, 0
      %v1121 = vsel %vm313, %v1106, 0
      %v1123 = vsel %vm313, %v1108, 0
      %v1125 = vsel %vm313, %v1110, 0
      %1127 = vmatprep.subr.mxu0 0.0
      %1128 = vmatpush1.xpose.msra.mxu0 %v1119
      %1129 = vmatprep.subr.mxu0 0.0
      %1130 = vmatpush1.xpose.msra.mxu0 %v1121
      %1131 = vmatprep.subr.mxu0 0.0
      %1132 = vmatpush1.xpose.msra.mxu0 %v1123
      %1133 = vmatprep.subr.mxu0 0.0
      %1134 = vmatpush1.xpose.msra.mxu0 %v1125
      %1135 = vmatprep.subr.mxu0 0.0
      %1136 = vmatpush1.xpose.msra.mxu0 0.0
      %1137 = vmatprep.subr.mxu0 0.0
      %1138 = vmatpush1.xpose.msra.mxu0 0.0
      %1139 = vmatprep.subr.mxu0 0.0
      %1140 = vmatpush1.xpose.msra.mxu0 0.0
      %1141 = vmatprep.subr.mxu0 0.0
      %1142 = vmatpush1.xpose.msra.mxu0 0.0
      %1143 = vmatprep.subr.mxu0 0.0
      %1144 = vmatpush1.xpose.msra.mxu0 0.0
      %1145 = vmatprep.subr.mxu0 0.0
      %1146 = vmatpush1.xpose.msra.mxu0 0.0
      %1147 = vmatprep.subr.mxu0 0.0
      %1148 = vmatpush1.xpose.msra.mxu0 0.0
      %1149 = vmatprep.subr.mxu0 0.0
      %1150 = vmatpush1.xpose.msra.mxu0 0.0
      %1151 = vmatprep.subr.mxu0 0.0
      %1152 = vmatpush1.xpose.msra.mxu0 0.0
      %1153 = vmatprep.subr.mxu0 0.0
      %1154 = vmatpush1.xpose.msra.mxu0 0.0
      %1155 = vmatprep.subr.mxu0 0.0
      %1156 = vmatpush1.xpose.msra.mxu0 0.0
      %1157 = vmatprep.subr.mxu0 0.0
      %1158 = vmatpush1.xpose.msra.mxu0 0.0
      %1159 = vmatprep.subr.mxu0 0.0
      %1160 = vmatpush1.xpose.msra.mxu0 0.0
      %1161 = vmatprep.subr.mxu0 0.0
      %1162 = vmatpush1.xpose.msra.mxu0 0.0
      %1163 = vmatprep.subr.mxu0 0.0
      %1164 = vmatpush1.xpose.msra.mxu0 0.0
      %1165 = vmatprep.subr.mxu0 0.0
      %1166 = vmatpush1.xpose.msra.mxu0 0.0
      %1167 = vmatprep.subr.mxu0 0.0
      %1168 = vmatpush1.xpose.msra.mxu0 0.0
      %1169 = vmatprep.subr.mxu0 0.0
      %1170 = vmatpush1.xpose.msra.mxu0 0.0
      %1171 = vmatprep.subr.mxu0 0.0
      %1172 = vmatpush1.xpose.msra.mxu0 0.0
      %1173 = vmatprep.subr.mxu0 0.0
      %1174 = vmatpush1.xpose.msra.mxu0 0.0
      %1175 = vmatprep.subr.mxu0 0.0
      %1176 = vmatpush1.xpose.msra.mxu0 0.0
      %1177 = vmatprep.subr.mxu0 0.0
      %1178 = vmatpush1.xpose.msra.mxu0 0.0
      %1179 = vmatprep.subr.mxu0 0.0
      %1180 = vmatpush1.xpose.msra.mxu0 0.0
      %1181 = vmatprep.subr.mxu0 0.0
      %1182 = vmatpush1.xpose.msra.mxu0 0.0
      %1183 = vmatprep.subr.mxu0 0.0
      %1184 = vmatpush1.xpose.msra.mxu0 0.0
      %1185 = vmatprep.subr.mxu0 0.0
      %1186 = vmatpush1.xpose.msra.mxu0 0.0
      %1187 = vmatprep.subr.mxu0 0.0
      %1188 = vmatpush1.xpose.msra.mxu0 0.0
      %1189 = vmatprep.subr.mxu0 0.0
      %1190 = vmatpush1.xpose.msra.mxu0 0.0
      %1191 = vmatprep.mubr.f32.mxu0 0.0
      %1192 = vmatmul.mubr.f32.gmra.mrb[0].mxu0 %v1111
      %v1193 = vpop.f32.mrb[0].mxu0
      %v1194 = vadd.f32 0.0, %v1193
      %v1195 = vpop.f32.mrb[0].mxu0
      %1196 = vmatprep.mubr.f32.mxu0 0.0
      %1197 = vmatmul.mubr.f32.gmra.mrb[0].mxu0 %v1113
      %v1198 = vpop.f32.mrb[0].mxu0
      %v1199 = vadd.f32 0.0, %v1198
      %v1200 = vpop.f32.mrb[0].mxu0
      %1201 = vmatprep.mubr.f32.mxu0 0.0
      %1202 = vmatmul.mubr.f32.gmra.mrb[0].mxu0 %v1115
      %v1203 = vpop.f32.mrb[0].mxu0
      %v1204 = vadd.f32 0.0, %v1203
      %v1205 = vpop.f32.mrb[0].mxu0
      %1206 = vmatprep.mubr.f32.mxu0 0.0
      %1207 = vmatmul.mubr.f32.gmra.mrb[0].mxu0 %v1117
      %v1208 = vpop.f32.mrb[0].mxu0
      %v1209 = vadd.f32 0.0, %v1208
      %v1210 = vpop.f32.mrb[0].mxu0
      %1211 = vdwg.mxu0
      %v1212 = vsel %vm551, %v1194, -1e+30
      %v1213 = vsel %vm552, %v1199, -1e+30
      %v1214 = vsel %vm553, %v1204, -1e+30
      %v1215 = vsel %vm554, %v1209, -1e+30
      %v1216 = vsel %vm313, %v1212, -inf
      %1217 = vmax.xlane.f32.xlu0 %v1216
      %v1218 = vpop.xlane.xlu0 %1217
      %v1219 = vsel %vm313, %v1213, -inf
      %1220 = vmax.xlane.f32.xlu0 %v1219
      %v1221 = vpop.xlane.xlu0 %1220
      %v1222 = vsel %vm313, %v1214, -inf
      %1223 = vmax.xlane.f32.xlu0 %v1222
      %v1224 = vpop.xlane.xlu0 %1223
      %v1225 = vsel %vm313, %v1215, -inf
      %1226 = vmax.xlane.f32.xlu0 %v1225
      %v1227 = vpop.xlane.xlu0 %1226
      %v1228 = vsub.f32 %v1212, %v1218
      %v1229 = vsub.f32 %v1213, %v1221
      %v1230 = vsub.f32 %v1214, %v1224
      %v1231 = vsub.f32 %v1215, %v1227
      %v1232 = vmul.f32 %v1228, 1.442695
      %v1233 = vpow.pop %v1232
      %v1234 = vmul.f32 %v1229, 1.442695
      %v1235 = vpow.pop %v1234
      %v1236 = vmul.f32 %v1230, 1.442695
      %v1237 = vpow.pop %v1236
      %v1238 = vmul.f32 %v1231, 1.442695
      %v1239 = vpow.pop %v1238
      %v1240 = vsel %vm313, %v1233, 0.0
      %1241 = vadd.xlane.f32.xlu0 %v1240
      %v1242 = vpop.xlane.xlu0 %1241
      %v1243 = vsel %vm313, %v1235, 0.0
      %1244 = vadd.xlane.f32.xlu0 %v1243
      %v1245 = vpop.xlane.xlu0 %1244
      %v1246 = vsel %vm313, %v1237, 0.0
      %1247 = vadd.xlane.f32.xlu0 %v1246
      %v1248 = vpop.xlane.xlu0 %1247
      %v1249 = vsel %vm313, %v1239, 0.0
      %1250 = vadd.xlane.f32.xlu0 %v1249
      %v1251 = vpop.xlane.xlu0 %1250
      %v1252 = vrcp.pop %v1242
      %v1253 = vrcp.pop %v1245
      %v1254 = vrcp.pop %v1248
      %v1255 = vrcp.pop %v1251
      %v1256 = vmul.f32 %v1233, %v1252
      %v1257 = vmul.f32 %v1235, %v1253
      %v1258 = vmul.f32 %v1237, %v1254
      %v1259 = vmul.f32 %v1239, %v1255
      %v1261 = vsel %vm313, %v1256, 0
      %v1264 = vsel %vm313, %v1257, 0
      %v1267 = vsel %vm313, %v1258, 0
      %v1270 = vsel %vm313, %v1259, 0
      %1272 = vmatprep.subr.mxu0 0.0
      %1273 = vmatpush1.msra.mxu0 %v514
      %1274 = vmatprep.subr.mxu0 0.0
      %1275 = vmatpush1.msra.mxu0 %v517
      %1276 = vmatprep.subr.mxu0 0.0
      %1277 = vmatpush1.msra.mxu0 %v520
      %1278 = vmatprep.subr.mxu0 0.0
      %1279 = vmatpush1.msra.mxu0 %v523
      %1280 = vmatprep.subr.mxu0 0.0
      %1281 = vmatpush1.msra.mxu0 0.0
      %1282 = vmatprep.subr.mxu0 0.0
      %1283 = vmatpush1.msra.mxu0 0.0
      %1284 = vmatprep.subr.mxu0 0.0
      %1285 = vmatpush1.msra.mxu0 0.0
      %1286 = vmatprep.subr.mxu0 0.0
      %1287 = vmatpush1.msra.mxu0 0.0
      %1288 = vmatprep.subr.mxu0 0.0
      %1289 = vmatpush1.msra.mxu0 0.0
      %1290 = vmatprep.subr.mxu0 0.0
      %1291 = vmatpush1.msra.mxu0 0.0
      %1292 = vmatprep.subr.mxu0 0.0
      %1293 = vmatpush1.msra.mxu0 0.0
      %1294 = vmatprep.subr.mxu0 0.0
      %1295 = vmatpush1.msra.mxu0 0.0
      %1296 = vmatprep.subr.mxu0 0.0
      %1297 = vmatpush1.msra.mxu0 0.0
      %1298 = vmatprep.subr.mxu0 0.0
      %1299 = vmatpush1.msra.mxu0 0.0
      %1300 = vmatprep.subr.mxu0 0.0
      %1301 = vmatpush1.msra.mxu0 0.0
      %1302 = vmatprep.subr.mxu0 0.0
      %1303 = vmatpush1.msra.mxu0 0.0
      %1304 = vmatprep.subr.mxu0 0.0
      %1305 = vmatpush1.msra.mxu0 0.0
      %1306 = vmatprep.subr.mxu0 0.0
      %1307 = vmatpush1.msra.mxu0 0.0
      %1308 = vmatprep.subr.mxu0 0.0
      %1309 = vmatpush1.msra.mxu0 0.0
      %1310 = vmatprep.subr.mxu0 0.0
      %1311 = vmatpush1.msra.mxu0 0.0
      %1312 = vmatprep.subr.mxu0 0.0
      %1313 = vmatpush1.msra.mxu0 0.0
      %1314 = vmatprep.subr.mxu0 0.0
      %1315 = vmatpush1.msra.mxu0 0.0
      %1316 = vmatprep.subr.mxu0 0.0
      %1317 = vmatpush1.msra.mxu0 0.0
      %1318 = vmatprep.subr.mxu0 0.0
      %1319 = vmatpush1.msra.mxu0 0.0
      %1320 = vmatprep.subr.mxu0 0.0
      %1321 = vmatpush1.msra.mxu0 0.0
      %1322 = vmatprep.subr.mxu0 0.0
      %1323 = vmatpush1.msra.mxu0 0.0
      %1324 = vmatprep.subr.mxu0 0.0
      %1325 = vmatpush1.msra.mxu0 0.0
      %1326 = vmatprep.subr.mxu0 0.0
      %1327 = vmatpush1.msra.mxu0 0.0
      %1328 = vmatprep.subr.mxu0 0.0
      %1329 = vmatpush1.msra.mxu0 0.0
      %1330 = vmatprep.subr.mxu0 0.0
      %1331 = vmatpush1.msra.mxu0 0.0
      %1332 = vmatprep.subr.mxu0 0.0
      %1333 = vmatpush1.msra.mxu0 0.0
      %1334 = vmatprep.subr.mxu0 0.0
      %1335 = vmatpush1.msra.mxu0 0.0
      %1336 = vmatprep.mubr.f32.mxu0 0.0
      %1337 = vmatmul.mubr.f32.gmra.mrb[0].mxu0 %v1261
      %v1338 = vpop.f32.mrb[0].mxu0
      %v1339 = vadd.f32 0.0, %v1338
      %v1340 = vpop.f32.mrb[0].mxu0
      %1341 = vmatprep.mubr.f32.mxu0 0.0
      %1342 = vmatmul.mubr.f32.gmra.mrb[0].mxu0 %v1264
      %v1343 = vpop.f32.mrb[0].mxu0
      %v1344 = vadd.f32 0.0, %v1343
      %v1345 = vpop.f32.mrb[0].mxu0
      %1346 = vmatprep.mubr.f32.mxu0 0.0
      %1347 = vmatmul.mubr.f32.gmra.mrb[0].mxu0 %v1267
      %v1348 = vpop.f32.mrb[0].mxu0
      %v1349 = vadd.f32 0.0, %v1348
      %v1350 = vpop.f32.mrb[0].mxu0
      %1351 = vmatprep.mubr.f32.mxu0 0.0
      %1352 = vmatmul.mubr.f32.gmra.mrb[0].mxu0 %v1270
      %v1353 = vpop.f32.mrb[0].mxu0
      %v1354 = vadd.f32 0.0, %v1353
      %v1355 = vpop.f32.mrb[0].mxu0
      %1356 = vdwg.mxu0
      %1361 = vrot.lane.b32.xlu0 %v1077, 32
      %v1362 = vpop.permute.xlu0 %1361
      %1363 = vrot.lane.b32.xlu0 %v1082, 32
      %v1364 = vpop.permute.xlu0 %1363
      %1365 = vrot.lane.b32.xlu0 %v1087, 32
      %v1366 = vpop.permute.xlu0 %1365
      %1367 = vrot.lane.b32.xlu0 %v1092, 32
      %v1368 = vpop.permute.xlu0 %1367
      %1377 = vrot.lane.b32.xlu0 %v1339, 64
      %v1378 = vpop.permute.xlu0 %1377
      %1379 = vrot.lane.b32.xlu0 %v1344, 64
      %v1380 = vpop.permute.xlu0 %1379
      %1381 = vrot.lane.b32.xlu0 %v1349, 64
      %v1382 = vpop.permute.xlu0 %1381
      %1383 = vrot.lane.b32.xlu0 %v1354, 64
      %v1384 = vpop.permute.xlu0 %1383
      %v1389 = vsel %vm313, %v811, %v1362
      %v1390 = vsel %vm313, %v816, %v1364
      %v1391 = vsel %vm313, %v821, %v1366
      %v1392 = vsel %vm313, %v826, %v1368
      %vm1393 = vcmask 523264
      %v1394 = vsel %vm1393, %v1389, %v1378
      %v1395 = vsel %vm1393, %v1390, %v1380
      %v1396 = vsel %vm1393, %v1391, %v1382
      %v1397 = vsel %vm1393, %v1392, %v1384
      %v1398 = vld [vmem:[%s4] sm:$0xff]
      %v1399 = vld [vmem:[%s4 + $0x8] sm:$0xff]
      %v1400 = vld [vmem:[%s4 + $0x10] sm:$0xff]
      %v1401 = vld [vmem:[%s4 + $0x18] sm:$0xff]
      %v1402 = vld [vmem:[%s4 + $0x20] sm:$0xff]
      %v1403 = vld [vmem:[%s4 + $0x28] sm:$0xff]
      %v1404 = vld [vmem:[%s4 + $0x30] sm:$0xff]
      %v1405 = vld [vmem:[%s4 + $0x38] sm:$0xff]
      %v1406 = vld [vmem:[%s4 + $0x40] sm:$0xff]
      %v1407 = vld [vmem:[%s4 + $0x48] sm:$0xff]
      %v1408 = vld [vmem:[%s4 + $0x50] sm:$0xff]
      %v1409 = vld [vmem:[%s4 + $0x58] sm:$0xff]
      %v1410 = vld [vmem:[%s5] sm:$0x1]
      %v1412 = vlaneseq
      %v1413 = vshrl.u32 %v1412, 7
      %v1414 = vsub.s32 0, %v1413
      %v1415 = vrot.slane %v1410, %v1414
      %vm1417 = vcmask 785408
      %v1419 = vsel %vm1417, %v1394, 0
      %v1422 = vsel %vm1417, %v1395, 0
      %v1425 = vsel %vm1417, %v1396, 0
      %v1428 = vsel %vm1417, %v1397, 0
      %1430 = vmatprep.subr.mxu0 0.0
      %1431 = vmatpush1.msra.mxu0 %v1398
      %1432 = vmatprep.subr.mxu0 0.0
      %1433 = vmatpush1.msra.mxu0 %v1399
      %1434 = vmatprep.subr.mxu0 0.0
      %1435 = vmatpush1.msra.mxu0 %v1400
      %1436 = vmatprep.subr.mxu0 0.0
      %1437 = vmatpush1.msra.mxu0 %v1401
      %1438 = vmatprep.subr.mxu0 0.0
      %1439 = vmatpush1.msra.mxu0 %v1402
      %1440 = vmatprep.subr.mxu0 0.0
      %1441 = vmatpush1.msra.mxu0 %v1403
      %1442 = vmatprep.subr.mxu0 0.0
      %1443 = vmatpush1.msra.mxu0 %v1404
      %1444 = vmatprep.subr.mxu0 0.0
      %1445 = vmatpush1.msra.mxu0 %v1405
      %1446 = vmatprep.subr.mxu0 0.0
      %1447 = vmatpush1.msra.mxu0 %v1406
      %1448 = vmatprep.subr.mxu0 0.0
      %1449 = vmatpush1.msra.mxu0 %v1407
      %1450 = vmatprep.subr.mxu0 0.0
      %1451 = vmatpush1.msra.mxu0 %v1408
      %1452 = vmatprep.subr.mxu0 0.0
      %1453 = vmatpush1.msra.mxu0 %v1409
      %1454 = vmatprep.subr.mxu0 0.0
      %1455 = vmatpush1.msra.mxu0 0.0
      %1456 = vmatprep.subr.mxu0 0.0
      %1457 = vmatpush1.msra.mxu0 0.0
      %1458 = vmatprep.subr.mxu0 0.0
      %1459 = vmatpush1.msra.mxu0 0.0
      %1460 = vmatprep.subr.mxu0 0.0
      %1461 = vmatpush1.msra.mxu0 0.0
      %1462 = vmatprep.subr.mxu0 0.0
      %1463 = vmatpush1.msra.mxu0 0.0
      %1464 = vmatprep.subr.mxu0 0.0
      %1465 = vmatpush1.msra.mxu0 0.0
      %1466 = vmatprep.subr.mxu0 0.0
      %1467 = vmatpush1.msra.mxu0 0.0
      %1468 = vmatprep.subr.mxu0 0.0
      %1469 = vmatpush1.msra.mxu0 0.0
      %1470 = vmatprep.subr.mxu0 0.0
      %1471 = vmatpush1.msra.mxu0 0.0
      %1472 = vmatprep.subr.mxu0 0.0
      %1473 = vmatpush1.msra.mxu0 0.0
      %1474 = vmatprep.subr.mxu0 0.0
      %1475 = vmatpush1.msra.mxu0 0.0
      %1476 = vmatprep.subr.mxu0 0.0
      %1477 = vmatpush1.msra.mxu0 0.0
      %1478 = vmatprep.subr.mxu0 0.0
      %1479 = vmatpush1.msra.mxu0 0.0
      %1480 = vmatprep.subr.mxu0 0.0
      %1481 = vmatpush1.msra.mxu0 0.0
      %1482 = vmatprep.subr.mxu0 0.0
      %1483 = vmatpush1.msra.mxu0 0.0
      %1484 = vmatprep.subr.mxu0 0.0
      %1485 = vmatpush1.msra.mxu0 0.0
      %1486 = vmatprep.subr.mxu0 0.0
      %1487 = vmatpush1.msra.mxu0 0.0
      %1488 = vmatprep.subr.mxu0 0.0
      %1489 = vmatpush1.msra.mxu0 0.0
      %1490 = vmatprep.subr.mxu0 0.0
      %1491 = vmatpush1.msra.mxu0 0.0
      %1492 = vmatprep.subr.mxu0 0.0
      %1493 = vmatpush1.msra.mxu0 0.0
      %1494 = vmatprep.mubr.f32.mxu0 0.0
      %1495 = vmatmul.mubr.f32.gmra.mrb[0].mxu0 %v1419
      %v1496 = vpop.f32.mrb[0].mxu0
      %v1497 = vadd.f32 %v1415, %v1496
      %v1498 = vpop.f32.mrb[0].mxu0
      %1499 = vmatprep.mubr.f32.mxu0 0.0
      %1500 = vmatmul.mubr.f32.gmra.mrb[0].mxu0 %v1422
      %v1501 = vpop.f32.mrb[0].mxu0
      %v1502 = vadd.f32 %v1415, %v1501
      %v1503 = vpop.f32.mrb[0].mxu0
      %1504 = vmatprep.mubr.f32.mxu0 0.0
      %1505 = vmatmul.mubr.f32.gmra.mrb[0].mxu0 %v1425
      %v1506 = vpop.f32.mrb[0].mxu0
      %v1507 = vadd.f32 %v1415, %v1506
      %v1508 = vpop.f32.mrb[0].mxu0
      %1509 = vmatprep.mubr.f32.mxu0 0.0
      %1510 = vmatmul.mubr.f32.gmra.mrb[0].mxu0 %v1428
      %v1511 = vpop.f32.mrb[0].mxu0
      %v1512 = vadd.f32 %v1415, %v1511
      %v1513 = vpop.f32.mrb[0].mxu0
      %1514 = vdwg.mxu0
      %1515 = vst.msk [vmem:[%s278] sm:$0xff] %vm313, %v1497
      %1516 = vst.msk [vmem:[%s278 + $0x8] sm:$0xff] %vm313, %v1502
      %1517 = vst.msk [vmem:[%s278 + $0x10] sm:$0xff] %vm313, %v1507
      %1518 = vst.msk [vmem:[%s278 + $0x18] sm:$0xff] %vm313, %v1512
      %s1519 = smul.u32 4, %s17
      %p1520 = scmp.lt.s32.totalorder %s1519, 7
      %s1521 = scalar_select %p1520, %s1519, 7
      %s1522 = smul.addr %s1521, 8
      %s1523 = scalar_lea.vmem %s6, %s1522
      // Predicated region
      $region45: #{stformer_forward.32} parent=43 // pred_check
        %p1524 = pneg %p171
      $region46: #{stformer_forward.32} parent=43 // pred_check_branch
        %1526 = sbr.rel (%p1524) target = $region48
      $region47: #{stformer_forward.32} parent=43 // pred_region
        %s1527 = smul.u32 4, %s17
      $region48: #{stformer_forward.32} parent=43 // pred_fallthru
        _
    $region44: #{stformer_forward.32} parent=5 // pred_fallthru
      _
    %p1528 = scmp.le.s32.totalorder 2, %s12
    // Predicated region
    $region49: #{stformer_forward.32} parent=5 // pred_check
      %p1529 = pneg %p1528
    $region50: #{stformer_forward.32} parent=5 // pred_check_branch
      %1531 = sbr.rel (%p1529) target = $region52
    $region51: #{stformer_forward.32} parent=5 // pred_region
      %s1532 = ssub.s32 %s12, 2
      // Predicated region
      $region53: #{stformer_forward.32} parent=51 // pred_check
        %p1533 = pneg %p177
      $region54: #{stformer_forward.32} parent=51 // pred_check_branch
        %1535 = sbr.rel (%p1533) target = $region56
      $region55: #{stformer_forward.32} parent=51 // pred_region
        %s1536 = smul.u32 4, %s18
        %p1537 = scmp.lt.s32.totalorder %s1536, 7
        %s1538 = scalar_select %p1537, %s1536, 7
        %s1539 = smul.addr %s1538, 8
        %s1540 = scalar_lea.vmem %s6, %s1539
      $region56: #{stformer_forward.32} parent=51 // pred_fallthru
        _
    $region52: #{stformer_forward.32} parent=5 // pred_fallthru
      _
  $region6: #{stformer_forward.32} parent=0 // loop_footer
    %s16 = sadd.s32 1, %s12
  $region7: #{stformer_forward.32} parent=0 // loop_footer_branch
    %11 = sbr.rel target = $region3
  $region8: #{stformer_forward.32} parent=0 // loop_exit
    _

// kernel: stformer_forward.43
$region0: #{stformer_forward.43}
  #allocation0 [shape = 'u32[]', space=smem, size = 0x4, offset = 0x4, fixed_abs, tag = 'smem constant byte address 0x4 - core index']
  #allocation1 [shape = 'u32[144,128]{1,0:T(1,128)}', space=vmem, size = 0x12000, scoped, tag = 'internal scratch']
  %s0 = inlined_call_operand.vmem [shape: f32[64,32], index: 0, kind: input, shape index: {}]
  %s1 = inlined_call_operand.vmem [shape: f32[32,128], index: 1, kind: input, shape index: {}]
  %s2 = inlined_call_operand.vmem [shape: f32[1,128], index: 2, kind: input, shape index: {}]
  %s3 = inlined_call_operand.vmem [shape: f32[128,32], index: 3, kind: input, shape index: {}]
  %s4 = inlined_call_operand.vmem [shape: f32[1,32], index: 4, kind: input, shape index: {}]
  %s5 = inlined_call_operand.vmem [shape: f32[32,6], index: 5, kind: input, shape index: {}]
  %s6 = inlined_call_operand.vmem [shape: f32[1,6], index: 6, kind: input, shape index: {}]
  %s7 = inlined_call_operand.vmem [shape: f32[64,6], index: 7, kind: output, shape index: {}]
  %s8 = sld [smem:[#allocation0]]
  $region61: #{stformer_forward.43} parent=0
    _
  %s10 = ssub.s32 1, %s8
  %s11 = scalar_select 0, %s10, %s8
  loop: start=0, step=1, limit=4
  $region2: #{stformer_forward.43} parent=0 // loop_pre_header
    _
  $region3: #{stformer_forward.43} parent=0 // loop_header
    %s13 = sphi 0, %s17
    %p14 = scmp.ge.s32.totalorder %s13, 4
    %s23 = sphi 0, %s25
    %s26 = sphi 0, %s23
    %s27 = sphi 0, %s26
    %s43 = sphi 0, %s27
    %s47 = sphi 0, %s47
    %s49 = sphi 0, %s47
    %s50 = sphi 0, %s49
    %s64 = sphi 0, %s50
    %s68 = sphi 0, %s68
    %s70 = sphi 0, %s68
    %s71 = sphi 0, %s70
    %s85 = sphi 0, %s71
    %s89 = sphi 0, %s89
    %s91 = sphi 0, %s89
    %s92 = sphi 0, %s91
    %s106 = sphi 0, %s92
    %s110 = sphi 0, %s110
    %s112 = sphi 0, %s110
    %s113 = sphi 0, %s112
    %s127 = sphi 0, %s113
    %s131 = sphi 0, %s131
    %s133 = sphi 0, %s131
    %s134 = sphi 0, %s133
    %s148 = sphi 0, %s134
    %s152 = sphi 0, %s152
    %s154 = sphi 0, %s152
    %s155 = sphi 0, %s154
    %s169 = sphi 0, %s155
    %s175 = sphi 0, %s177
    %s178 = sphi 0, %s175
    %s179 = sphi 0, %s178
    %s195 = sphi 0, %s179
  $region4: #{stformer_forward.43} parent=0 // loop_header_branch
    %16 = sbr.rel (%p14) target = $region8
  $region5: #{stformer_forward.43} parent=0 // loop_body
    %s18 = ssub.s32 %s13, 1
    %s19 = ssub.s32 %s13, 2
    %s20 = sadd.s32 %s13, 1
    %s21 = ssub.s32 %s13, %s20
    %p22 = scmp.eq.s32.totalorder %s21, 0
    %s24 = sadd.s32 %s23, 1
    %s25 = scalar_select %p22, %s23, %s24
    %p28 = pneg %p22
    %p29 = scmp.eq.s32.totalorder %s13, 1
    %p30 = por %p28, %p29
    %p31 = scmp.ne.s32.totalorder %s23, %s26
    %p32 = scmp.eq.s32.totalorder %s13, 0
    %p33 = por %p31, %p32
    %p34 = scmp.ne.s32.totalorder %s23, %s26
    %p35 = scmp.eq.s32.totalorder %s18, 1
    %p36 = por %p34, %p35
    %p37 = scmp.ne.s32.totalorder %s26, %s27
    %p38 = scmp.eq.s32.totalorder %s18, 0
    %p39 = por %p37, %p38
    %p40 = scmp.ne.s32.totalorder %s26, %s27
    %p41 = scmp.eq.s32.totalorder %s19, 1
    %p42 = por %p40, %p41
    %p44 = scmp.ne.s32.totalorder %s27, %s43
    %p45 = scmp.eq.s32.totalorder %s19, 0
    %p46 = por %p44, %p45
    %s48 = sadd.s32 %s47, 1
    %p51 = scmp.eq.s32.totalorder %s13, 1
    %p52 = scmp.ne.s32.totalorder %s47, %s49
    %p53 = scmp.eq.s32.totalorder %s13, 0
    %p54 = por %p52, %p53
    %p55 = scmp.ne.s32.totalorder %s47, %s49
    %p56 = scmp.eq.s32.totalorder %s18, 1
    %p57 = por %p55, %p56
    %p58 = scmp.ne.s32.totalorder %s49, %s50
    %p59 = scmp.eq.s32.totalorder %s18, 0
    %p60 = por %p58, %p59
    %p61 = scmp.ne.s32.totalorder %s49, %s50
    %p62 = scmp.eq.s32.totalorder %s19, 1
    %p63 = por %p61, %p62
    %p65 = scmp.ne.s32.totalorder %s50, %s64
    %p66 = scmp.eq.s32.totalorder %s19, 0
    %p67 = por %p65, %p66
    %s69 = sadd.s32 %s68, 1
    %p72 = scmp.eq.s32.totalorder %s13, 1
    %p73 = scmp.ne.s32.totalorder %s68, %s70
    %p74 = scmp.eq.s32.totalorder %s13, 0
    %p75 = por %p73, %p74
    %p76 = scmp.ne.s32.totalorder %s68, %s70
    %p77 = scmp.eq.s32.totalorder %s18, 1
    %p78 = por %p76, %p77
    %p79 = scmp.ne.s32.totalorder %s70, %s71
    %p80 = scmp.eq.s32.totalorder %s18, 0
    %p81 = por %p79, %p80
    %p82 = scmp.ne.s32.totalorder %s70, %s71
    %p83 = scmp.eq.s32.totalorder %s19, 1
    %p84 = por %p82, %p83
    %p86 = scmp.ne.s32.totalorder %s71, %s85
    %p87 = scmp.eq.s32.totalorder %s19, 0
    %p88 = por %p86, %p87
    %s90 = sadd.s32 %s89, 1
    %p93 = scmp.eq.s32.totalorder %s13, 1
    %p94 = scmp.ne.s32.totalorder %s89, %s91
    %p95 = scmp.eq.s32.totalorder %s13, 0
    %p96 = por %p94, %p95
    %p97 = scmp.ne.s32.totalorder %s89, %s91
    %p98 = scmp.eq.s32.totalorder %s18, 1
    %p99 = por %p97, %p98
    %p100 = scmp.ne.s32.totalorder %s91, %s92
    %p101 = scmp.eq.s32.totalorder %s18, 0
    %p102 = por %p100, %p101
    %p103 = scmp.ne.s32.totalorder %s91, %s92
    %p104 = scmp.eq.s32.totalorder %s19, 1
    %p105 = por %p103, %p104
    %p107 = scmp.ne.s32.totalorder %s92, %s106
    %p108 = scmp.eq.s32.totalorder %s19, 0
    %p109 = por %p107, %p108
    %s111 = sadd.s32 %s110, 1
    %p114 = scmp.eq.s32.totalorder %s13, 1
    %p115 = scmp.ne.s32.totalorder %s110, %s112
    %p116 = scmp.eq.s32.totalorder %s13, 0
    %p117 = por %p115, %p116
    %p118 = scmp.ne.s32.totalorder %s110, %s112
    %p119 = scmp.eq.s32.totalorder %s18, 1
    %p120 = por %p118, %p119
    %p121 = scmp.ne.s32.totalorder %s112, %s113
    %p122 = scmp.eq.s32.totalorder %s18, 0
    %p123 = por %p121, %p122
    %p124 = scmp.ne.s32.totalorder %s112, %s113
    %p125 = scmp.eq.s32.totalorder %s19, 1
    %p126 = por %p124, %p125
    %p128 = scmp.ne.s32.totalorder %s113, %s127
    %p129 = scmp.eq.s32.totalorder %s19, 0
    %p130 = por %p128, %p129
    %s132 = sadd.s32 %s131, 1
    %p135 = scmp.eq.s32.totalorder %s13, 1
    %p136 = scmp.ne.s32.totalorder %s131, %s133
    %p137 = scmp.eq.s32.totalorder %s13, 0
    %p138 = por %p136, %p137
    %p139 = scmp.ne.s32.totalorder %s131, %s133
    %p140 = scmp.eq.s32.totalorder %s18, 1
    %p141 = por %p139, %p140
    %p142 = scmp.ne.s32.totalorder %s133, %s134
    %p143 = scmp.eq.s32.totalorder %s18, 0
    %p144 = por %p142, %p143
    %p145 = scmp.ne.s32.totalorder %s133, %s134
    %p146 = scmp.eq.s32.totalorder %s19, 1
    %p147 = por %p145, %p146
    %p149 = scmp.ne.s32.totalorder %s134, %s148
    %p150 = scmp.eq.s32.totalorder %s19, 0
    %p151 = por %p149, %p150
    %s153 = sadd.s32 %s152, 1
    %p156 = scmp.eq.s32.totalorder %s13, 1
    %p157 = scmp.ne.s32.totalorder %s152, %s154
    %p158 = scmp.eq.s32.totalorder %s13, 0
    %p159 = por %p157, %p158
    %p160 = scmp.ne.s32.totalorder %s152, %s154
    %p161 = scmp.eq.s32.totalorder %s18, 1
    %p162 = por %p160, %p161
    %p163 = scmp.ne.s32.totalorder %s154, %s155
    %p164 = scmp.eq.s32.totalorder %s18, 0
    %p165 = por %p163, %p164
    %p166 = scmp.ne.s32.totalorder %s154, %s155
    %p167 = scmp.eq.s32.totalorder %s19, 1
    %p168 = por %p166, %p167
    %p170 = scmp.ne.s32.totalorder %s155, %s169
    %p171 = scmp.eq.s32.totalorder %s19, 0
    %p172 = por %p170, %p171
    %s173 = ssub.s32 %s13, %s20
    %p174 = scmp.eq.s32.totalorder %s173, 0
    %s176 = sadd.s32 %s175, 1
    %s177 = scalar_select %p174, %s175, %s176
    %p180 = pneg %p174
    %p181 = scmp.eq.s32.totalorder %s13, 1
    %p182 = por %p180, %p181
    %p183 = scmp.ne.s32.totalorder %s175, %s178
    %p184 = scmp.eq.s32.totalorder %s13, 0
    %p185 = por %p183, %p184
    %p186 = scmp.ne.s32.totalorder %s175, %s178
    %p187 = scmp.eq.s32.totalorder %s18, 1
    %p188 = por %p186, %p187
    %p189 = scmp.ne.s32.totalorder %s178, %s179
    %p190 = scmp.eq.s32.totalorder %s18, 0
    %p191 = por %p189, %p190
    %p192 = scmp.ne.s32.totalorder %s178, %s179
    %p193 = scmp.eq.s32.totalorder %s19, 1
    %p194 = por %p192, %p193
    %p196 = scmp.ne.s32.totalorder %s179, %s195
    %p197 = scmp.eq.s32.totalorder %s19, 0
    %p198 = por %p196, %p197
    %p199 = scmp.le.s32.totalorder 1, %s13
    %p200 = scmp.lt.s32.totalorder %s13, 3
    %p201 = pnand %p199, %p200
    %p202 = pneg %p201
    // Predicated region
    $region9: #{stformer_forward.43} parent=5 // pred_check
      _
    $region10: #{stformer_forward.43} parent=5 // pred_check_branch
      %204 = sbr.rel (%p201) target = $region12
    $region11: #{stformer_forward.43} parent=5 // pred_region
      %s205 = ssub.s32 %s13, 1
      // Predicated region
      $region13: #{stformer_forward.43} parent=11 // pred_check
        %p206 = pneg %p60
      $region14: #{stformer_forward.43} parent=11 // pred_check_branch
        %208 = sbr.rel (%p206) target = $region16
      $region15: #{stformer_forward.43} parent=11 // pred_region
        _
      $region16: #{stformer_forward.43} parent=11 // pred_fallthru
        _
      // Predicated region
      $region17: #{stformer_forward.43} parent=11 // pred_check
        %p209 = pneg %p81
      $region18: #{stformer_forward.43} parent=11 // pred_check_branch
        %211 = sbr.rel (%p209) target = $region20
      $region19: #{stformer_forward.43} parent=11 // pred_region
        _
      $region20: #{stformer_forward.43} parent=11 // pred_fallthru
        _
      // Predicated region
      $region21: #{stformer_forward.43} parent=11 // pred_check
        %p212 = pneg %p102
      $region22: #{stformer_forward.43} parent=11 // pred_check_branch
        %214 = sbr.rel (%p212) target = $region24
      $region23: #{stformer_forward.43} parent=11 // pred_region
        _
      $region24: #{stformer_forward.43} parent=11 // pred_fallthru
        _
      // Predicated region
      $region25: #{stformer_forward.43} parent=11 // pred_check
        %p215 = pneg %p123
      $region26: #{stformer_forward.43} parent=11 // pred_check_branch
        %217 = sbr.rel (%p215) target = $region28
      $region27: #{stformer_forward.43} parent=11 // pred_region
        _
      $region28: #{stformer_forward.43} parent=11 // pred_fallthru
        _
      // Predicated region
      $region29: #{stformer_forward.43} parent=11 // pred_check
        %p218 = pneg %p144
      $region30: #{stformer_forward.43} parent=11 // pred_check_branch
        %220 = sbr.rel (%p218) target = $region32
      $region31: #{stformer_forward.43} parent=11 // pred_region
        _
      $region32: #{stformer_forward.43} parent=11 // pred_fallthru
        _
      // Predicated region
      $region33: #{stformer_forward.43} parent=11 // pred_check
        %p221 = pneg %p165
      $region34: #{stformer_forward.43} parent=11 // pred_check_branch
        %223 = sbr.rel (%p221) target = $region36
      $region35: #{stformer_forward.43} parent=11 // pred_region
        _
      $region36: #{stformer_forward.43} parent=11 // pred_fallthru
        _
    $region12: #{stformer_forward.43} parent=5 // pred_fallthru
      _
    %p224 = scmp.lt.s32.totalorder %s13, 2
    // Predicated region
    $region37: #{stformer_forward.43} parent=5 // pred_check
      %p225 = pneg %p224
    $region38: #{stformer_forward.43} parent=5 // pred_check_branch
      %227 = sbr.rel (%p225) target = $region40
    $region39: #{stformer_forward.43} parent=5 // pred_region
      // Predicated region
      $region41: #{stformer_forward.43} parent=39 // pred_check
        %p228 = pneg %p33
      $region42: #{stformer_forward.43} parent=39 // pred_check_branch
        %230 = sbr.rel (%p228) target = $region44
      $region43: #{stformer_forward.43} parent=39 // pred_region
        %s231 = smul.u32 4, %s13
        %p232 = scmp.lt.s32.totalorder %s231, 7
        %s233 = scalar_select %p232, %s231, 7
        %s234 = smul.addr %s233, 8
        %s235 = scalar_lea.vmem %s0, %s234
        %s236 = smul.u32 4, %s13
      $region44: #{stformer_forward.43} parent=39 // pred_fallthru
        _
    $region40: #{stformer_forward.43} parent=5 // pred_fallthru
      _
    %p237 = scmp.le.s32.totalorder 1, %s13
    %p238 = scmp.lt.s32.totalorder %s13, 3
    %p239 = pnand %p237, %p238
    %p240 = pneg %p239
    // Predicated region
    $region45: #{stformer_forward.43} parent=5 // pred_check
      _
    $region46: #{stformer_forward.43} parent=5 // pred_check_branch
      %242 = sbr.rel (%p239) target = $region48
    $region47: #{stformer_forward.43} parent=5 // pred_region
      %s243 = ssub.s32 %s13, 1
      %s244 = smul.u32 4, %s18
      %p245 = scmp.lt.s32.totalorder %s244, 7
      %s246 = scalar_select %p245, %s244, 7
      %s247 = smul.addr %s246, 8
      %s248 = scalar_lea.vmem %s0, %s247
      %p249 = pneg %p39
      %p250 = pneg %p36
      %p251 = pneg %p60
      %p252 = pneg %p57
      %p253 = pneg %p81
      %p254 = pneg %p78
      %p255 = pneg %p102
      %p256 = pneg %p99
      %p257 = pneg %p123
      %p258 = pneg %p120
      %p259 = pneg %p144
      %p260 = pneg %p141
      %p261 = pneg %p165
      %p262 = pneg %p162
      %p263 = pneg %p191
      %p264 = pneg %p188
      %s265 = smul.u32 4, %s18
      %p266 = scmp.lt.s32.totalorder %s265, 7
      %s267 = scalar_select %p266, %s265, 7
      %s268 = smul.addr %s267, 8
      %s269 = scalar_lea.vmem %s7, %s268
      %s270 = smul.u32 4, %s18
      %p271 = scmp.lt.s32.totalorder %s270, 7
      %s272 = scalar_select %p271, %s270, 7
      %s273 = smul.addr %s272, 8
      %s274 = scalar_lea.vmem %s0, %s273
      %s275 = smul.u32 4, %s18
      %s276 = smul.u32 4, %s18
      %p277 = scmp.lt.s32.totalorder %s276, 7
      %s278 = scalar_select %p277, %s276, 7
      %s279 = smul.addr %s278, 8
      %s280 = scalar_lea.vmem %s7, %s279
      %s281 = smul.u32 4, %s18
      %v282 = vld [vmem:[%s274] sm:$0xff]
      %v283 = vld [vmem:[%s274 + $0x8] sm:$0xff]
      %v284 = vld [vmem:[%s274 + $0x10] sm:$0xff]
      %v285 = vld [vmem:[%s274 + $0x18] sm:$0xff]
      %v286 = vld [vmem:[%s1] sm:$0xff]
      %v287 = vld [vmem:[%s1 + $0x8] sm:$0xff]
      %v288 = vld [vmem:[%s1 + $0x10] sm:$0xff]
      %v289 = vld [vmem:[%s1 + $0x18] sm:$0xff]
      %v290 = vld [vmem:[%s2] sm:$0x1]
      %v292 = vlaneseq
      %v293 = vshrl.u32 %v292, 7
      %v294 = vsub.s32 0, %v293
      %v295 = vrot.slane %v290, %v294
      %vm297 = vcmask 261120
      %v299 = vsel %vm297, %v282, 0
      %v302 = vsel %vm297, %v283, 0
      %v305 = vsel %vm297, %v284, 0
      %v308 = vsel %vm297, %v285, 0
      %310 = vmatprep.subr.mxu0 0.0
      %311 = vmatpush1.msra.mxu0 %v286
      %312 = vmatprep.subr.mxu0 0.0
      %313 = vmatpush1.msra.mxu0 %v287
      %314 = vmatprep.subr.mxu0 0.0
      %315 = vmatpush1.msra.mxu0 %v288
      %316 = vmatprep.subr.mxu0 0.0
      %317 = vmatpush1.msra.mxu0 %v289
      %318 = vmatprep.subr.mxu0 0.0
      %319 = vmatpush1.msra.mxu0 0.0
      %320 = vmatprep.subr.mxu0 0.0
      %321 = vmatpush1.msra.mxu0 0.0
      %322 = vmatprep.subr.mxu0 0.0
      %323 = vmatpush1.msra.mxu0 0.0
      %324 = vmatprep.subr.mxu0 0.0
      %325 = vmatpush1.msra.mxu0 0.0
      %326 = vmatprep.subr.mxu0 0.0
      %327 = vmatpush1.msra.mxu0 0.0
      %328 = vmatprep.subr.mxu0 0.0
      %329 = vmatpush1.msra.mxu0 0.0
      %330 = vmatprep.subr.mxu0 0.0
      %331 = vmatpush1.msra.mxu0 0.0
      %332 = vmatprep.subr.mxu0 0.0
      %333 = vmatpush1.msra.mxu0 0.0
      %334 = vmatprep.subr.mxu0 0.0
      %335 = vmatpush1.msra.mxu0 0.0
      %336 = vmatprep.subr.mxu0 0.0
      %337 = vmatpush1.msra.mxu0 0.0
      %338 = vmatprep.subr.mxu0 0.0
      %339 = vmatpush1.msra.mxu0 0.0
      %340 = vmatprep.subr.mxu0 0.0
      %341 = vmatpush1.msra.mxu0 0.0
      %342 = vmatprep.subr.mxu0 0.0
      %343 = vmatpush1.msra.mxu0 0.0
      %344 = vmatprep.subr.mxu0 0.0
      %345 = vmatpush1.msra.mxu0 0.0
      %346 = vmatprep.subr.mxu0 0.0
      %347 = vmatpush1.msra.mxu0 0.0
      %348 = vmatprep.subr.mxu0 0.0
      %349 = vmatpush1.msra.mxu0 0.0
      %350 = vmatprep.subr.mxu0 0.0
      %351 = vmatpush1.msra.mxu0 0.0
      %352 = vmatprep.subr.mxu0 0.0
      %353 = vmatpush1.msra.mxu0 0.0
      %354 = vmatprep.subr.mxu0 0.0
      %355 = vmatpush1.msra.mxu0 0.0
      %356 = vmatprep.subr.mxu0 0.0
      %357 = vmatpush1.msra.mxu0 0.0
      %358 = vmatprep.subr.mxu0 0.0
      %359 = vmatpush1.msra.mxu0 0.0
      %360 = vmatprep.subr.mxu0 0.0
      %361 = vmatpush1.msra.mxu0 0.0
      %362 = vmatprep.subr.mxu0 0.0
      %363 = vmatpush1.msra.mxu0 0.0
      %364 = vmatprep.subr.mxu0 0.0
      %365 = vmatpush1.msra.mxu0 0.0
      %366 = vmatprep.subr.mxu0 0.0
      %367 = vmatpush1.msra.mxu0 0.0
      %368 = vmatprep.subr.mxu0 0.0
      %369 = vmatpush1.msra.mxu0 0.0
      %370 = vmatprep.subr.mxu0 0.0
      %371 = vmatpush1.msra.mxu0 0.0
      %372 = vmatprep.subr.mxu0 0.0
      %373 = vmatpush1.msra.mxu0 0.0
      %374 = vmatprep.mubr.f32.mxu0 0.0
      %375 = vmatmul.mubr.f32.gmra.mrb[0].mxu0 %v299
      %v376 = vpop.f32.mrb[0].mxu0
      %v377 = vadd.f32 %v295, %v376
      %v378 = vpop.f32.mrb[0].mxu0
      %379 = vmatprep.mubr.f32.mxu0 0.0
      %380 = vmatmul.mubr.f32.gmra.mrb[0].mxu0 %v302
      %v381 = vpop.f32.mrb[0].mxu0
      %v382 = vadd.f32 %v295, %v381
      %v383 = vpop.f32.mrb[0].mxu0
      %384 = vmatprep.mubr.f32.mxu0 0.0
      %385 = vmatmul.mubr.f32.gmra.mrb[0].mxu0 %v305
      %v386 = vpop.f32.mrb[0].mxu0
      %v387 = vadd.f32 %v295, %v386
      %v388 = vpop.f32.mrb[0].mxu0
      %389 = vmatprep.mubr.f32.mxu0 0.0
      %390 = vmatmul.mubr.f32.gmra.mrb[0].mxu0 %v308
      %v391 = vpop.f32.mrb[0].mxu0
      %v392 = vadd.f32 %v295, %v391
      %v393 = vpop.f32.mrb[0].mxu0
      %394 = vdwg.mxu0
      %v395 = vmax.f32 %v377, 0.0
      %v396 = vmax.f32 %v382, 0.0
      %v397 = vmax.f32 %v387, 0.0
      %v398 = vmax.f32 %v392, 0.0
      %v399 = vand.u32 2147483647, %v377
      %v400 = vand.u32 2147483647, %v382
      %v401 = vand.u32 2147483647, %v387
      %v402 = vand.u32 2147483647, %v392
      %v403 = vsub.f32 0.0, %v399
      %v404 = vsub.f32 0.0, %v400
      %v405 = vsub.f32 0.0, %v401
      %v406 = vsub.f32 0.0, %v402
      %v407 = vmul.f32 %v403, 1.442695
      %v408 = vpow.pop %v407
      %v409 = vmul.f32 %v404, 1.442695
      %v410 = vpow.pop %v409
      %v411 = vmul.f32 %v405, 1.442695
      %v412 = vpow.pop %v411
      %v413 = vmul.f32 %v406, 1.442695
      %v414 = vpow.pop %v413
      %v415 = vadd.f32 %v408, 1.0
      %v416 = vadd.f32 %v410, 1.0
      %v417 = vadd.f32 %v412, 1.0
      %v418 = vadd.f32 %v414, 1.0
      %v419 = vlog2.pop %v415
      %v420 = vmul.f32 %v419, 0.6931472
      %v421 = vlog2.pop %v416
      %v422 = vmul.f32 %v421, 0.6931472
      %v423 = vlog2.pop %v417
      %v424 = vmul.f32 %v423, 0.6931472
      %v425 = vlog2.pop %v418
      %v426 = vmul.f32 %v425, 0.6931472
      %v427 = vadd.f32 %v395, %v420
      %v428 = vadd.f32 %v396, %v422
      %v429 = vadd.f32 %v397, %v424
      %v430 = vadd.f32 %v398, %v426
      %v431 = vtanh.pop %v427
      %v432 = vtanh.pop %v428
      %v433 = vtanh.pop %v429
      %v434 = vtanh.pop %v430
      %v435 = vmul.f32 %v377, %v431
      %v436 = vmul.f32 %v382, %v432
      %v437 = vmul.f32 %v387, %v433
      %v438 = vmul.f32 %v392, %v434
      %v439 = vld [vmem:[%s3] sm:$0xff]
      %v440 = vld [vmem:[%s3 + $0x8] sm:$0xff]
      %v441 = vld [vmem:[%s3 + $0x10] sm:$0xff]
      %v442 = vld [vmem:[%s3 + $0x18] sm:$0xff]
      %v443 = vld [vmem:[%s3 + $0x20] sm:$0xff]
      %v444 = vld [vmem:[%s3 + $0x28] sm:$0xff]
      %v445 = vld [vmem:[%s3 + $0x30] sm:$0xff]
      %v446 = vld [vmem:[%s3 + $0x38] sm:$0xff]
      %v447 = vld [vmem:[%s3 + $0x40] sm:$0xff]
      %v448 = vld [vmem:[%s3 + $0x48] sm:$0xff]
      %v449 = vld [vmem:[%s3 + $0x50] sm:$0xff]
      %v450 = vld [vmem:[%s3 + $0x58] sm:$0xff]
      %v451 = vld [vmem:[%s3 + $0x60] sm:$0xff]
      %v452 = vld [vmem:[%s3 + $0x68] sm:$0xff]
      %v453 = vld [vmem:[%s3 + $0x70] sm:$0xff]
      %v454 = vld [vmem:[%s3 + $0x78] sm:$0xff]
      %v455 = vld [vmem:[%s4] sm:$0x1]
      %v457 = vlaneseq
      %v458 = vshrl.u32 %v457, 7
      %v459 = vsub.s32 0, %v458
      %v460 = vrot.slane %v455, %v459
      %462 = vmatprep.subr.mxu0 0.0
      %463 = vmatpush1.msra.mxu0 %v439
      %464 = vmatprep.subr.mxu0 0.0
      %465 = vmatpush1.msra.mxu0 %v440
      %466 = vmatprep.subr.mxu0 0.0
      %467 = vmatpush1.msra.mxu0 %v441
      %468 = vmatprep.subr.mxu0 0.0
      %469 = vmatpush1.msra.mxu0 %v442
      %470 = vmatprep.subr.mxu0 0.0
      %471 = vmatpush1.msra.mxu0 %v443
      %472 = vmatprep.subr.mxu0 0.0
      %473 = vmatpush1.msra.mxu0 %v444
      %474 = vmatprep.subr.mxu0 0.0
      %475 = vmatpush1.msra.mxu0 %v445
      %476 = vmatprep.subr.mxu0 0.0
      %477 = vmatpush1.msra.mxu0 %v446
      %478 = vmatprep.subr.mxu0 0.0
      %479 = vmatpush1.msra.mxu0 %v447
      %480 = vmatprep.subr.mxu0 0.0
      %481 = vmatpush1.msra.mxu0 %v448
      %482 = vmatprep.subr.mxu0 0.0
      %483 = vmatpush1.msra.mxu0 %v449
      %484 = vmatprep.subr.mxu0 0.0
      %485 = vmatpush1.msra.mxu0 %v450
      %486 = vmatprep.subr.mxu0 0.0
      %487 = vmatpush1.msra.mxu0 %v451
      %488 = vmatprep.subr.mxu0 0.0
      %489 = vmatpush1.msra.mxu0 %v452
      %490 = vmatprep.subr.mxu0 0.0
      %491 = vmatpush1.msra.mxu0 %v453
      %492 = vmatprep.subr.mxu0 0.0
      %493 = vmatpush1.msra.mxu0 %v454
      %494 = vmatprep.subr.mxu0 0.0
      %495 = vmatpush1.msra.mxu0 0.0
      %496 = vmatprep.subr.mxu0 0.0
      %497 = vmatpush1.msra.mxu0 0.0
      %498 = vmatprep.subr.mxu0 0.0
      %499 = vmatpush1.msra.mxu0 0.0
      %500 = vmatprep.subr.mxu0 0.0
      %501 = vmatpush1.msra.mxu0 0.0
      %502 = vmatprep.subr.mxu0 0.0
      %503 = vmatpush1.msra.mxu0 0.0
      %504 = vmatprep.subr.mxu0 0.0
      %505 = vmatpush1.msra.mxu0 0.0
      %506 = vmatprep.subr.mxu0 0.0
      %507 = vmatpush1.msra.mxu0 0.0
      %508 = vmatprep.subr.mxu0 0.0
      %509 = vmatpush1.msra.mxu0 0.0
      %510 = vmatprep.subr.mxu0 0.0
      %511 = vmatpush1.msra.mxu0 0.0
      %512 = vmatprep.subr.mxu0 0.0
      %513 = vmatpush1.msra.mxu0 0.0
      %514 = vmatprep.subr.mxu0 0.0
      %515 = vmatpush1.msra.mxu0 0.0
      %516 = vmatprep.subr.mxu0 0.0
      %517 = vmatpush1.msra.mxu0 0.0
      %518 = vmatprep.subr.mxu0 0.0
      %519 = vmatpush1.msra.mxu0 0.0
      %520 = vmatprep.subr.mxu0 0.0
      %521 = vmatpush1.msra.mxu0 0.0
      %522 = vmatprep.subr.mxu0 0.0
      %523 = vmatpush1.msra.mxu0 0.0
      %524 = vmatprep.subr.mxu0 0.0
      %525 = vmatpush1.msra.mxu0 0.0
      %526 = vmatprep.mubr.f32.mxu0 0.0
      %527 = vmatmul.mubr.f32.gmra.mrb[0].mxu0 %v435
      %v528 = vpop.f32.mrb[0].mxu0
      %v529 = vadd.f32 %v460, %v528
      %v530 = vpop.f32.mrb[0].mxu0
      %531 = vmatprep.mubr.f32.mxu0 0.0
      %532 = vmatmul.mubr.f32.gmra.mrb[0].mxu0 %v436
      %v533 = vpop.f32.mrb[0].mxu0
      %v534 = vadd.f32 %v460, %v533
      %v535 = vpop.f32.mrb[0].mxu0
      %536 = vmatprep.mubr.f32.mxu0 0.0
      %537 = vmatmul.mubr.f32.gmra.mrb[0].mxu0 %v437
      %v538 = vpop.f32.mrb[0].mxu0
      %v539 = vadd.f32 %v460, %v538
      %v540 = vpop.f32.mrb[0].mxu0
      %541 = vmatprep.mubr.f32.mxu0 0.0
      %542 = vmatmul.mubr.f32.gmra.mrb[0].mxu0 %v438
      %v543 = vpop.f32.mrb[0].mxu0
      %v544 = vadd.f32 %v460, %v543
      %v545 = vpop.f32.mrb[0].mxu0
      %546 = vdwg.mxu0
      %v547 = vmax.f32 %v529, 0.0
      %v548 = vmax.f32 %v534, 0.0
      %v549 = vmax.f32 %v539, 0.0
      %v550 = vmax.f32 %v544, 0.0
      %v551 = vand.u32 2147483647, %v529
      %v552 = vand.u32 2147483647, %v534
      %v553 = vand.u32 2147483647, %v539
      %v554 = vand.u32 2147483647, %v544
      %v555 = vsub.f32 0.0, %v551
      %v556 = vsub.f32 0.0, %v552
      %v557 = vsub.f32 0.0, %v553
      %v558 = vsub.f32 0.0, %v554
      %v559 = vmul.f32 %v555, 1.442695
      %v560 = vpow.pop %v559
      %v561 = vmul.f32 %v556, 1.442695
      %v562 = vpow.pop %v561
      %v563 = vmul.f32 %v557, 1.442695
      %v564 = vpow.pop %v563
      %v565 = vmul.f32 %v558, 1.442695
      %v566 = vpow.pop %v565
      %v567 = vadd.f32 %v560, 1.0
      %v568 = vadd.f32 %v562, 1.0
      %v569 = vadd.f32 %v564, 1.0
      %v570 = vadd.f32 %v566, 1.0
      %v571 = vlog2.pop %v567
      %v572 = vmul.f32 %v571, 0.6931472
      %v573 = vlog2.pop %v568
      %v574 = vmul.f32 %v573, 0.6931472
      %v575 = vlog2.pop %v569
      %v576 = vmul.f32 %v575, 0.6931472
      %v577 = vlog2.pop %v570
      %v578 = vmul.f32 %v577, 0.6931472
      %v579 = vadd.f32 %v547, %v572
      %v580 = vadd.f32 %v548, %v574
      %v581 = vadd.f32 %v549, %v576
      %v582 = vadd.f32 %v550, %v578
      %v583 = vtanh.pop %v579
      %v584 = vtanh.pop %v580
      %v585 = vtanh.pop %v581
      %v586 = vtanh.pop %v582
      %v587 = vmul.f32 %v529, %v583
      %v588 = vmul.f32 %v534, %v584
      %v589 = vmul.f32 %v539, %v585
      %v590 = vmul.f32 %v544, %v586
      %v591 = vld [vmem:[%s5] sm:$0xff]
      %v592 = vld [vmem:[%s5 + $0x8] sm:$0xff]
      %v593 = vld [vmem:[%s5 + $0x10] sm:$0xff]
      %v594 = vld [vmem:[%s5 + $0x18] sm:$0xff]
      %v595 = vld [vmem:[%s6] sm:$0x1]
      %v597 = vlaneseq
      %v598 = vshrl.u32 %v597, 7
      %v599 = vsub.s32 0, %v598
      %v600 = vrot.slane %v595, %v599
      %v603 = vsel %vm297, %v587, 0
      %v606 = vsel %vm297, %v588, 0
      %v609 = vsel %vm297, %v589, 0
      %v612 = vsel %vm297, %v590, 0
      %614 = vmatprep.subr.mxu0 0.0
      %615 = vmatpush1.msra.mxu0 %v591
      %616 = vmatprep.subr.mxu0 0.0
      %617 = vmatpush1.msra.mxu0 %v592
      %618 = vmatprep.subr.mxu0 0.0
      %619 = vmatpush1.msra.mxu0 %v593
      %620 = vmatprep.subr.mxu0 0.0
      %621 = vmatpush1.msra.mxu0 %v594
      %622 = vmatprep.subr.mxu0 0.0
      %623 = vmatpush1.msra.mxu0 0.0
      %624 = vmatprep.subr.mxu0 0.0
      %625 = vmatpush1.msra.mxu0 0.0
      %626 = vmatprep.subr.mxu0 0.0
      %627 = vmatpush1.msra.mxu0 0.0
      %628 = vmatprep.subr.mxu0 0.0
      %629 = vmatpush1.msra.mxu0 0.0
      %630 = vmatprep.subr.mxu0 0.0
      %631 = vmatpush1.msra.mxu0 0.0
      %632 = vmatprep.subr.mxu0 0.0
      %633 = vmatpush1.msra.mxu0 0.0
      %634 = vmatprep.subr.mxu0 0.0
      %635 = vmatpush1.msra.mxu0 0.0
      %636 = vmatprep.subr.mxu0 0.0
      %637 = vmatpush1.msra.mxu0 0.0
      %638 = vmatprep.subr.mxu0 0.0
      %639 = vmatpush1.msra.mxu0 0.0
      %640 = vmatprep.subr.mxu0 0.0
      %641 = vmatpush1.msra.mxu0 0.0
      %642 = vmatprep.subr.mxu0 0.0
      %643 = vmatpush1.msra.mxu0 0.0
      %644 = vmatprep.subr.mxu0 0.0
      %645 = vmatpush1.msra.mxu0 0.0
      %646 = vmatprep.subr.mxu0 0.0
      %647 = vmatpush1.msra.mxu0 0.0
      %648 = vmatprep.subr.mxu0 0.0
      %649 = vmatpush1.msra.mxu0 0.0
      %650 = vmatprep.subr.mxu0 0.0
      %651 = vmatpush1.msra.mxu0 0.0
      %652 = vmatprep.subr.mxu0 0.0
      %653 = vmatpush1.msra.mxu0 0.0
      %654 = vmatprep.subr.mxu0 0.0
      %655 = vmatpush1.msra.mxu0 0.0
      %656 = vmatprep.subr.mxu0 0.0
      %657 = vmatpush1.msra.mxu0 0.0
      %658 = vmatprep.subr.mxu0 0.0
      %659 = vmatpush1.msra.mxu0 0.0
      %660 = vmatprep.subr.mxu0 0.0
      %661 = vmatpush1.msra.mxu0 0.0
      %662 = vmatprep.subr.mxu0 0.0
      %663 = vmatpush1.msra.mxu0 0.0
      %664 = vmatprep.subr.mxu0 0.0
      %665 = vmatpush1.msra.mxu0 0.0
      %666 = vmatprep.subr.mxu0 0.0
      %667 = vmatpush1.msra.mxu0 0.0
      %668 = vmatprep.subr.mxu0 0.0
      %669 = vmatpush1.msra.mxu0 0.0
      %670 = vmatprep.subr.mxu0 0.0
      %671 = vmatpush1.msra.mxu0 0.0
      %672 = vmatprep.subr.mxu0 0.0
      %673 = vmatpush1.msra.mxu0 0.0
      %674 = vmatprep.subr.mxu0 0.0
      %675 = vmatpush1.msra.mxu0 0.0
      %676 = vmatprep.subr.mxu0 0.0
      %677 = vmatpush1.msra.mxu0 0.0
      %678 = vmatprep.mubr.f32.mxu0 0.0
      %679 = vmatmul.mubr.f32.gmra.mrb[0].mxu0 %v603
      %v680 = vpop.f32.mrb[0].mxu0
      %v681 = vadd.f32 %v600, %v680
      %v682 = vpop.f32.mrb[0].mxu0
      %683 = vmatprep.mubr.f32.mxu0 0.0
      %684 = vmatmul.mubr.f32.gmra.mrb[0].mxu0 %v606
      %v685 = vpop.f32.mrb[0].mxu0
      %v686 = vadd.f32 %v600, %v685
      %v687 = vpop.f32.mrb[0].mxu0
      %688 = vmatprep.mubr.f32.mxu0 0.0
      %689 = vmatmul.mubr.f32.gmra.mrb[0].mxu0 %v609
      %v690 = vpop.f32.mrb[0].mxu0
      %v691 = vadd.f32 %v600, %v690
      %v692 = vpop.f32.mrb[0].mxu0
      %693 = vmatprep.mubr.f32.mxu0 0.0
      %694 = vmatmul.mubr.f32.gmra.mrb[0].mxu0 %v612
      %v695 = vpop.f32.mrb[0].mxu0
      %v696 = vadd.f32 %v600, %v695
      %v697 = vpop.f32.mrb[0].mxu0
      %698 = vdwg.mxu0
      %vm699 = vcmask 48128
      %700 = vst.msk [vmem:[%s280] sm:$0xff] %vm699, %v681
      %701 = vst.msk [vmem:[%s280 + $0x8] sm:$0xff] %vm699, %v686
      %702 = vst.msk [vmem:[%s280 + $0x10] sm:$0xff] %vm699, %v691
      %703 = vst.msk [vmem:[%s280 + $0x18] sm:$0xff] %vm699, %v696
      %s704 = smul.u32 4, %s18
      %p705 = scmp.lt.s32.totalorder %s704, 7
      %s706 = scalar_select %p705, %s704, 7
      %s707 = smul.addr %s706, 8
      %s708 = scalar_lea.vmem %s7, %s707
      // Predicated region
      $region49: #{stformer_forward.43} parent=47 // pred_check
        %p709 = pneg %p188
      $region50: #{stformer_forward.43} parent=47 // pred_check_branch
        %711 = sbr.rel (%p709) target = $region52
      $region51: #{stformer_forward.43} parent=47 // pred_region
        %s712 = smul.u32 4, %s18
      $region52: #{stformer_forward.43} parent=47 // pred_fallthru
        _
    $region48: #{stformer_forward.43} parent=5 // pred_fallthru
      _
    %p713 = scmp.le.s32.totalorder 2, %s13
    // Predicated region
    $region53: #{stformer_forward.43} parent=5 // pred_check
      %p714 = pneg %p713
    $region54: #{stformer_forward.43} parent=5 // pred_check_branch
      %716 = sbr.rel (%p714) target = $region56
    $region55: #{stformer_forward.43} parent=5 // pred_region
      %s717 = ssub.s32 %s13, 2
      // Predicated region
      $region57: #{stformer_forward.43} parent=55 // pred_check
        %p718 = pneg %p194
      $region58: #{stformer_forward.43} parent=55 // pred_check_branch
        %720 = sbr.rel (%p718) target = $region60
      $region59: #{stformer_forward.43} parent=55 // pred_region
        %s721 = smul.u32 4, %s19
        %p722 = scmp.lt.s32.totalorder %s721, 7
        %s723 = scalar_select %p722, %s721, 7
        %s724 = smul.addr %s723, 8
        %s725 = scalar_lea.vmem %s7, %s724
      $region60: #{stformer_forward.43} parent=55 // pred_fallthru
        _
    $region56: #{stformer_forward.43} parent=5 // pred_fallthru
      _
  $region6: #{stformer_forward.43} parent=0 // loop_footer
    %s17 = sadd.s32 1, %s13
  $region7: #{stformer_forward.43} parent=0 // loop_footer_branch
    %12 = sbr.rel target = $region3
  $region8: #{stformer_forward.43} parent=0 // loop_exit
    _

</llo_original>
